<compile_context>
chip_gen: v6e
topology: v6e:2x2x1
jax: 0.10.0
libtpu: 0.0.40
codegen_flags: <defaults>
</compile_context>

<pallas_src>
import functools

import jax
import jax.numpy as jnp
from jax.experimental import pallas as pl
from jax.experimental.pallas import tpu as pltpu

NEG_INF_BIAS = -1e9  # padded fc7 lanes get this bias -> exp() underflows to 0
LANE = 128


def _round_up(x, m):
    return (x + m - 1) // m * m


def _default_batch_tile():
    # Per-generation constant: multiple of 256 (v6e/v7x MXU rows), of 128
    # (v5e MXU rows) and of 16 (bf16 sublane packing).  256-512 is the sweet
    # spot; 256 keeps >=2 grid tiles (both v7x TCs busy) at modest batches.
    return 256


def _vmem_limit_bytes():
    # Explicit scoped-VMEM budget so the resident bf16 weights fit.
    try:
        kind = jax.devices()[0].device_kind.lower()
    except Exception:
        kind = ""
    if "7" in kind:                 # v7x: 64 MiB per TensorCore, leave headroom
        return 56 * 1024 * 1024
    return 100 * 1024 * 1024        # v5e / v6e: 128 MiB physical VMEM


def net32_kernel(bias_offsets, bias_sizes,
                 x_ref, w1_ref, w2_ref, w3_ref, w4_ref, w5_ref, w6_ref, w7_ref,
                 b_ref, o_ref):
    """One batch tile of the 7-layer MLP: bf16 MXU matmuls with f32
    accumulation, bf16 LeakyReLU/residual adds, f32 softmax over the
    lane-padded fc7 outputs."""

    def bias(i):
        # Static, lane-aligned slice out of the concatenated (1, sum_N) bias.
        return b_ref[:, pl.ds(bias_offsets[i], bias_sizes[i])]

    def layer(h_bf16, w_ref, i, slope=0.01):
        acc = jnp.dot(h_bf16, w_ref[...],
                      preferred_element_type=jnp.float32) + bias(i)
        h = acc.astype(jnp.bfloat16)              # bf16 VPU ops on v6e/v7x
        return jnp.where(h >= 0, h, slope * h)    # LeakyReLU(0.01)

    x = x_ref[...]                                # already bf16 (cast host-side)
    out1 = layer(x, w1_ref, 0)                    # fc1
    out2 = layer(out1, w2_ref, 1)                 # fc2
    s12 = out1 + out2                             # incremental residual (bf16)
    out3 = layer(s12, w3_ref, 2)                  # fc3
    s123 = s12 + out3
    out4 = layer(s123, w4_ref, 3)                 # fc4
    out5 = layer(out4, w5_ref, 4)                 # fc5
    out6 = layer(out5, w6_ref, 5)                 # fc6 (default slope 0.01)

    # fc7 (lane-padded to 128 outputs): logits / softmax kept in f32.  Padded
    # lanes have zero weight columns and a -1e9 bias, so exp() is exactly 0
    # there and they drop out of the denominator.
    logits = jnp.dot(out6, w7_ref[...],
                     preferred_element_type=jnp.float32) + bias(6)
    m = jnp.max(logits, axis=1, keepdims=True)
    e = jnp.exp(logits - m)
    inv = pl.reciprocal(jnp.sum(e, axis=1, keepdims=True), approx=True)  # EUP
    o_ref[...] = (e * inv).astype(o_ref.dtype)


def net32_forward(x, params, *, n_out=2, batch_tile=None):
    """Fused Net32 forward. Returns (batch, n_out) softmax probabilities."""
    if batch_tile is None:
        batch_tile = _default_batch_tile()

    batch = x.shape[0]
    k_pad = params["w1"].shape[0]
    n_out_pad = params["w7"].shape[1]

    # Clamp the tile for tiny batches; keep it a multiple of 16 (bf16 packing).
    batch_tile = max(16, min(batch_tile, _round_up(batch, 16)))

    # Pad feature dim to w1's (lane-aligned) K and the batch to the tile size;
    # stream x in bf16 (half the HBM bytes, no in-kernel cast).
    if x.shape[1] != k_pad:
        x = jnp.pad(x, ((0, 0), (0, k_pad - x.shape[1])))
    b_pad = _round_up(batch, batch_tile)
    if b_pad != batch:
        x = jnp.pad(x, ((0, b_pad - batch), (0, 0)))
    x = x.astype(jnp.bfloat16)

    grid = (b_pad // batch_tile,)

    weight_names = ["w1", "w2", "w3", "w4", "w5", "w6", "w7"]
    # Concatenate the 7 biases into one (1, sum_N) f32 operand (fewer
    # BlockSpec inputs -> fewer DMA descriptors / less pipeline bookkeeping).
    biases = [params[f"b{i}"] for i in range(1, 8)]
    bias_sizes = tuple(int(b.shape[1]) for b in biases)
    bias_offsets = tuple(int(sum(bias_sizes[:i])) for i in range(7))
    b_all = jnp.concatenate(biases, axis=1)

    kernel = functools.partial(net32_kernel, bias_offsets, bias_sizes)
    flat = [x] + [params[n] for n in weight_names] + [b_all]

    # Advisory cost estimate (weights resident -> counted once).
    flops = sum(2 * b_pad * params[n].shape[0] * params[n].shape[1]
                for n in weight_names)
    bytes_accessed = (x.size * x.dtype.itemsize
                      + sum(params[n].size * params[n].dtype.itemsize
                            for n in weight_names)
                      + b_all.size * b_all.dtype.itemsize
                      + b_pad * n_out_pad * 4)
    cost = pl.CostEstimate(flops=flops,
                           transcendentals=b_pad * (n_out_pad + 1),
                           bytes_accessed=bytes_accessed)

    out_shape = jax.ShapeDtypeStruct((b_pad, n_out_pad), jnp.float32)
    x_spec = pl.BlockSpec((batch_tile, k_pad), lambda i: (i, 0))
    out_spec = pl.BlockSpec((batch_tile, n_out_pad), lambda i: (i, 0))
    compiler_params = pltpu.CompilerParams(
        dimension_semantics=("parallel",),        # v7x: 2 TCs split batch tiles
        vmem_limit_bytes=_vmem_limit_bytes())

    def call(single_buffer_weights):
        def resident_spec(shape):
            # Constant index_map: the block never changes across grid steps,
            # so the weights stay VMEM-resident (no re-DMA).  Single-buffering
            # halves their VMEM footprint (needed headroom on v7x's 64 MiB/TC).
            kwargs = ({"pipeline_mode": pl.Buffered(1)}
                      if single_buffer_weights else {})
            return pl.BlockSpec(shape, lambda i: (0, 0), **kwargs)

        in_specs = ([x_spec]
                    + [resident_spec(params[n].shape) for n in weight_names]
                    + [resident_spec(b_all.shape)])
        return pl.pallas_call(
            kernel,
            out_shape=out_shape,
            grid=grid,
            in_specs=in_specs,
            out_specs=out_spec,
            compiler_params=compiler_params,
            cost_estimate=cost,
        )(*flat)

    try:
        out = call(single_buffer_weights=True)
    except Exception:
        # Fallback for jax versions where BlockSpec(pipeline_mode=...) isn't
        # supported: default (double-buffered) constant-index weight specs.
        out = call(single_buffer_weights=False)

    return out[:batch, :n_out]


def net32_reference(x, params, *, n_out=2):
    """Pure-JAX reference using the same bf16-weight/bf16-activation,
    f32-accumulate math as the kernel."""
    k_pad = params["w1"].shape[0]
    if x.shape[1] != k_pad:
        x = jnp.pad(x, ((0, 0), (0, k_pad - x.shape[1])))
    x = x.astype(jnp.bfloat16)

    def layer(h, w, b, slope=0.01):
        acc = jnp.dot(h, w, preferred_element_type=jnp.float32) + b
        hh = acc.astype(jnp.bfloat16)
        return jnp.where(hh >= 0, hh, slope * hh)

    out1 = layer(x, params["w1"], params["b1"])
    out2 = layer(out1, params["w2"], params["b2"])
    out3 = layer(out1 + out2, params["w3"], params["b3"])
    out4 = layer(out1 + out2 + out3, params["w4"], params["b4"])
    out5 = layer(out4, params["w5"], params["b5"])
    out6 = layer(out5, params["w6"], params["b6"])
    logits = (jnp.dot(out6, params["w7"], preferred_element_type=jnp.float32)
              + params["b7"])[:, :n_out]
    return jax.nn.softmax(logits, axis=1)


def init_params(key, in_feature, hidden_dim, d5, d6, n_out):
    """PyTorch-Linear-style U(-1/sqrt(fan_in), 1/sqrt(fan_in)) init.

    Weights are stored pre-transposed as (in, out) in bf16; w1 is K-padded to a
    multiple of 128 with zero rows; w7/b7 are lane-padded to 128 outputs (zero
    weight columns, -1e9 bias) so the kernel output store is lane-dense and the
    in-kernel softmax needs no mask.  Biases stay f32 (tiny)."""
    in_pad = _round_up(in_feature, LANE)
    n_out_pad = _round_up(max(n_out, LANE), LANE)
    dims = [(in_feature, hidden_dim),   # fc1
            (hidden_dim, hidden_dim),   # fc2
            (hidden_dim, hidden_dim),   # fc3
            (hidden_dim, hidden_dim),   # fc4
            (hidden_dim, d5),           # fc5
            (d5, d6),                   # fc6
            (d6, n_out)]                # fc7
    params = {}
    for i, (fan_in, fan_out) in enumerate(dims, start=1):
        key, kw, kb = jax.random.split(key, 3)
        bound = 1.0 / jnp.sqrt(jnp.float32(fan_in))
        w = jax.random.uniform(kw, (fan_in, fan_out), jnp.float32, -bound, bound)
        b = jax.random.uniform(kb, (1, fan_out), jnp.float32, -bound, bound)
        if i == 1 and in_pad != fan_in:
            w = jnp.pad(w, ((0, in_pad - fan_in), (0, 0)))            # zero K rows
        if i == 7 and n_out_pad != fan_out:
            w = jnp.pad(w, ((0, 0), (0, n_out_pad - fan_out)))        # zero N cols
            b = jnp.pad(b, ((0, 0), (0, n_out_pad - fan_out)),
                        constant_values=NEG_INF_BIAS)
        params[f"w{i}"] = w.astype(jnp.bfloat16)   # bf16 weight stream
        params[f"b{i}"] = b                        # biases stay f32
    return params


if __name__ == "__main__":
    # Small shapes consistent with the module's structure
    # (original: in_feature=1307, hidden=2048, fc5->1024, fc6->128, fc7->2).
    # batch=500 -> 2 batch tiles of 256 (keeps both v7x TCs busy) and
    # exercises the batch-padding / row-slicing path; in_feature=160
    # exercises the K padding (1307 -> 1408 at production shapes).
    batch = 500
    in_feature = 160
    hidden_dim = 256
    d5 = 128
    d6 = 128
    n_out = 2

    key = jax.random.PRNGKey(0)
    key, kx = jax.random.split(key)
    x = jax.random.normal(kx, (batch, in_feature), jnp.float32)
    params = init_params(key, in_feature, hidden_dim, d5, d6, n_out)

    out = net32_forward(x, params, n_out=n_out)
    out = jax.block_until_ready(out)

    ref = net32_reference(x, params, n_out=n_out)
    assert out.shape == (batch, n_out)
    assert jnp.allclose(out, ref, atol=3e-2, rtol=3e-2), "mismatch vs JAX reference"
    assert jnp.allclose(jnp.sum(out, axis=1), 1.0, atol=5e-3), "softmax rows must ~sum to 1"

    print("KERNEL_OK")
</pallas_src>

<mosaic_0001>
module attributes {stable_mosaic.version = 11 : i64} {
  func.func @net32_kernel(%arg0: i32, %arg1: memref<256x256xbf16, #tpu.memory_space<vmem>>, %arg2: memref<256x256xbf16, #tpu.memory_space<vmem>>, %arg3: memref<256x256xbf16, #tpu.memory_space<vmem>>, %arg4: memref<256x256xbf16, #tpu.memory_space<vmem>>, %arg5: memref<256x256xbf16, #tpu.memory_space<vmem>>, %arg6: memref<256x128xbf16, #tpu.memory_space<vmem>>, %arg7: memref<128x128xbf16, #tpu.memory_space<vmem>>, %arg8: memref<128x128xbf16, #tpu.memory_space<vmem>>, %arg9: memref<1x1408xf32, #tpu.memory_space<vmem>>, %arg10: memref<256x128xf32, #tpu.memory_space<vmem>>) attributes {dimension_semantics = [#tpu.dimension_semantics<parallel>], iteration_bounds = array<i64: 2>, scalar_prefetch = 0 : i64, scratch_operands = 0 : i64, tpu.core_type = #tpu.core_type<tc>, window_params = [{transform_indices = @transform_0, window_bounds = array<i64: 256, 256>}, {pipeline_mode = #tpu.pipeline_mode<synchronous>, transform_indices = @transform_1, window_bounds = array<i64: 256, 256>}, {pipeline_mode = #tpu.pipeline_mode<synchronous>, transform_indices = @transform_2, window_bounds = array<i64: 256, 256>}, {pipeline_mode = #tpu.pipeline_mode<synchronous>, transform_indices = @transform_3, window_bounds = array<i64: 256, 256>}, {pipeline_mode = #tpu.pipeline_mode<synchronous>, transform_indices = @transform_4, window_bounds = array<i64: 256, 256>}, {pipeline_mode = #tpu.pipeline_mode<synchronous>, transform_indices = @transform_5, window_bounds = array<i64: 256, 128>}, {pipeline_mode = #tpu.pipeline_mode<synchronous>, transform_indices = @transform_6, window_bounds = array<i64: 128, 128>}, {pipeline_mode = #tpu.pipeline_mode<synchronous>, transform_indices = @transform_7, window_bounds = array<i64: 128, 128>}, {pipeline_mode = #tpu.pipeline_mode<synchronous>, transform_indices = @transform_8, window_bounds = array<i64: 1, 1408>}, {transform_indices = @transform_9, window_bounds = array<i64: 256, 128>}]} {
    %c0 = arith.constant 0 : index
    %c0_0 = arith.constant 0 : index
    %0 = vector.load %arg1[%c0, %c0_0] : memref<256x256xbf16, #tpu.memory_space<vmem>>, vector<256x256xbf16>
    %c0_1 = arith.constant 0 : index
    %c0_2 = arith.constant 0 : index
    %1 = vector.load %arg2[%c0_1, %c0_2] : memref<256x256xbf16, #tpu.memory_space<vmem>>, vector<256x256xbf16>
    %cst = arith.constant dense<0.000000e+00> : vector<256x256xf32>
    %2 = tpu.matmul %0, %1, %cst {dimension_numbers = #tpu.dot_dimension_numbers<[1], [0], [0], [1], [0, 0, 1, 1], [], []>} : vector<256x256xbf16>, vector<256x256xbf16>, vector<256x256xf32> -> vector<256x256xf32>
    %c0_3 = arith.constant 0 : index
    %c0_4 = arith.constant 0 : index
    %3 = vector.load %arg9[%c0_3, %c0_4] : memref<1x1408xf32, #tpu.memory_space<vmem>>, vector<1x256xf32>
    %4 = vector.broadcast %3 : vector<1x256xf32> to vector<256x256xf32>
    %5 = arith.addf %2, %4 : vector<256x256xf32>
    %6 = arith.truncf %5 : vector<256x256xf32> to vector<256x256xbf16>
    %cst_5 = arith.constant 0.000000e+00 : bf16
    %7 = vector.broadcast %cst_5 : bf16 to vector<256x256xbf16>
    %8 = arith.cmpf oge, %6, %7 : vector<256x256xbf16>
    %cst_6 = arith.constant 1.000980e-02 : bf16
    %9 = vector.broadcast %cst_6 : bf16 to vector<256x256xbf16>
    %10 = arith.mulf %9, %6 : vector<256x256xbf16>
    %11 = arith.select %8, %6, %10 : vector<256x256xi1>, vector<256x256xbf16>
    %c0_7 = arith.constant 0 : index
    %c0_8 = arith.constant 0 : index
    %12 = vector.load %arg3[%c0_7, %c0_8] : memref<256x256xbf16, #tpu.memory_space<vmem>>, vector<256x256xbf16>
    %cst_9 = arith.constant dense<0.000000e+00> : vector<256x256xf32>
    %13 = tpu.matmul %11, %12, %cst_9 {dimension_numbers = #tpu.dot_dimension_numbers<[1], [0], [0], [1], [0, 0, 1, 1], [], []>} : vector<256x256xbf16>, vector<256x256xbf16>, vector<256x256xf32> -> vector<256x256xf32>
    %c0_10 = arith.constant 0 : index
    %c256 = arith.constant 256 : index
    %14 = vector.load %arg9[%c0_10, %c256] : memref<1x1408xf32, #tpu.memory_space<vmem>>, vector<1x256xf32>
    %15 = vector.broadcast %14 : vector<1x256xf32> to vector<256x256xf32>
    %16 = arith.addf %13, %15 : vector<256x256xf32>
    %17 = arith.truncf %16 : vector<256x256xf32> to vector<256x256xbf16>
    %cst_11 = arith.constant 0.000000e+00 : bf16
    %18 = vector.broadcast %cst_11 : bf16 to vector<256x256xbf16>
    %19 = arith.cmpf oge, %17, %18 : vector<256x256xbf16>
    %cst_12 = arith.constant 1.000980e-02 : bf16
    %20 = vector.broadcast %cst_12 : bf16 to vector<256x256xbf16>
    %21 = arith.mulf %20, %17 : vector<256x256xbf16>
    %22 = arith.select %19, %17, %21 : vector<256x256xi1>, vector<256x256xbf16>
    %23 = arith.addf %11, %22 : vector<256x256xbf16>
    %c0_13 = arith.constant 0 : index
    %c0_14 = arith.constant 0 : index
    %24 = vector.load %arg4[%c0_13, %c0_14] : memref<256x256xbf16, #tpu.memory_space<vmem>>, vector<256x256xbf16>
    %cst_15 = arith.constant dense<0.000000e+00> : vector<256x256xf32>
    %25 = tpu.matmul %23, %24, %cst_15 {dimension_numbers = #tpu.dot_dimension_numbers<[1], [0], [0], [1], [0, 0, 1, 1], [], []>} : vector<256x256xbf16>, vector<256x256xbf16>, vector<256x256xf32> -> vector<256x256xf32>
    %c0_16 = arith.constant 0 : index
    %c512 = arith.constant 512 : index
    %26 = vector.load %arg9[%c0_16, %c512] : memref<1x1408xf32, #tpu.memory_space<vmem>>, vector<1x256xf32>
    %27 = vector.broadcast %26 : vector<1x256xf32> to vector<256x256xf32>
    %28 = arith.addf %25, %27 : vector<256x256xf32>
    %29 = arith.truncf %28 : vector<256x256xf32> to vector<256x256xbf16>
    %cst_17 = arith.constant 0.000000e+00 : bf16
    %30 = vector.broadcast %cst_17 : bf16 to vector<256x256xbf16>
    %31 = arith.cmpf oge, %29, %30 : vector<256x256xbf16>
    %cst_18 = arith.constant 1.000980e-02 : bf16
    %32 = vector.broadcast %cst_18 : bf16 to vector<256x256xbf16>
    %33 = arith.mulf %32, %29 : vector<256x256xbf16>
    %34 = arith.select %31, %29, %33 : vector<256x256xi1>, vector<256x256xbf16>
    %35 = arith.addf %23, %34 : vector<256x256xbf16>
    %c0_19 = arith.constant 0 : index
    %c0_20 = arith.constant 0 : index
    %36 = vector.load %arg5[%c0_19, %c0_20] : memref<256x256xbf16, #tpu.memory_space<vmem>>, vector<256x256xbf16>
    %cst_21 = arith.constant dense<0.000000e+00> : vector<256x256xf32>
    %37 = tpu.matmul %35, %36, %cst_21 {dimension_numbers = #tpu.dot_dimension_numbers<[1], [0], [0], [1], [0, 0, 1, 1], [], []>} : vector<256x256xbf16>, vector<256x256xbf16>, vector<256x256xf32> -> vector<256x256xf32>
    %c0_22 = arith.constant 0 : index
    %c768 = arith.constant 768 : index
    %38 = vector.load %arg9[%c0_22, %c768] : memref<1x1408xf32, #tpu.memory_space<vmem>>, vector<1x256xf32>
    %39 = vector.broadcast %38 : vector<1x256xf32> to vector<256x256xf32>
    %40 = arith.addf %37, %39 : vector<256x256xf32>
    %41 = arith.truncf %40 : vector<256x256xf32> to vector<256x256xbf16>
    %cst_23 = arith.constant 0.000000e+00 : bf16
    %42 = vector.broadcast %cst_23 : bf16 to vector<256x256xbf16>
    %43 = arith.cmpf oge, %41, %42 : vector<256x256xbf16>
    %cst_24 = arith.constant 1.000980e-02 : bf16
    %44 = vector.broadcast %cst_24 : bf16 to vector<256x256xbf16>
    %45 = arith.mulf %44, %41 : vector<256x256xbf16>
    %46 = arith.select %43, %41, %45 : vector<256x256xi1>, vector<256x256xbf16>
    %c0_25 = arith.constant 0 : index
    %c0_26 = arith.constant 0 : index
    %47 = vector.load %arg6[%c0_25, %c0_26] : memref<256x128xbf16, #tpu.memory_space<vmem>>, vector<256x128xbf16>
    %cst_27 = arith.constant dense<0.000000e+00> : vector<256x128xf32>
    %48 = tpu.matmul %46, %47, %cst_27 {dimension_numbers = #tpu.dot_dimension_numbers<[1], [0], [0], [1], [0, 0, 1, 1], [], []>} : vector<256x256xbf16>, vector<256x128xbf16>, vector<256x128xf32> -> vector<256x128xf32>
    %c0_28 = arith.constant 0 : index
    %c1024 = arith.constant 1024 : index
    %49 = vector.load %arg9[%c0_28, %c1024] : memref<1x1408xf32, #tpu.memory_space<vmem>>, vector<1x128xf32>
    %50 = vector.broadcast %49 : vector<1x128xf32> to vector<256x128xf32>
    %51 = arith.addf %48, %50 : vector<256x128xf32>
    %52 = arith.truncf %51 : vector<256x128xf32> to vector<256x128xbf16>
    %cst_29 = arith.constant 0.000000e+00 : bf16
    %53 = vector.broadcast %cst_29 : bf16 to vector<256x128xbf16>
    %54 = arith.cmpf oge, %52, %53 : vector<256x128xbf16>
    %cst_30 = arith.constant 1.000980e-02 : bf16
    %55 = vector.broadcast %cst_30 : bf16 to vector<256x128xbf16>
    %56 = arith.mulf %55, %52 : vector<256x128xbf16>
    %57 = arith.select %54, %52, %56 : vector<256x128xi1>, vector<256x128xbf16>
    %c0_31 = arith.constant 0 : index
    %c0_32 = arith.constant 0 : index
    %58 = vector.load %arg7[%c0_31, %c0_32] : memref<128x128xbf16, #tpu.memory_space<vmem>>, vector<128x128xbf16>
    %cst_33 = arith.constant dense<0.000000e+00> : vector<256x128xf32>
    %59 = tpu.matmul %57, %58, %cst_33 {dimension_numbers = #tpu.dot_dimension_numbers<[1], [0], [0], [1], [0, 0, 1, 1], [], []>} : vector<256x128xbf16>, vector<128x128xbf16>, vector<256x128xf32> -> vector<256x128xf32>
    %c0_34 = arith.constant 0 : index
    %c1152 = arith.constant 1152 : index
    %60 = vector.load %arg9[%c0_34, %c1152] : memref<1x1408xf32, #tpu.memory_space<vmem>>, vector<1x128xf32>
    %61 = vector.broadcast %60 : vector<1x128xf32> to vector<256x128xf32>
    %62 = arith.addf %59, %61 : vector<256x128xf32>
    %63 = arith.truncf %62 : vector<256x128xf32> to vector<256x128xbf16>
    %cst_35 = arith.constant 0.000000e+00 : bf16
    %64 = vector.broadcast %cst_35 : bf16 to vector<256x128xbf16>
    %65 = arith.cmpf oge, %63, %64 : vector<256x128xbf16>
    %cst_36 = arith.constant 1.000980e-02 : bf16
    %66 = vector.broadcast %cst_36 : bf16 to vector<256x128xbf16>
    %67 = arith.mulf %66, %63 : vector<256x128xbf16>
    %68 = arith.select %65, %63, %67 : vector<256x128xi1>, vector<256x128xbf16>
    %c0_37 = arith.constant 0 : index
    %c0_38 = arith.constant 0 : index
    %69 = vector.load %arg8[%c0_37, %c0_38] : memref<128x128xbf16, #tpu.memory_space<vmem>>, vector<128x128xbf16>
    %cst_39 = arith.constant dense<0.000000e+00> : vector<256x128xf32>
    %70 = tpu.matmul %68, %69, %cst_39 {dimension_numbers = #tpu.dot_dimension_numbers<[1], [0], [0], [1], [0, 0, 1, 1], [], []>} : vector<256x128xbf16>, vector<128x128xbf16>, vector<256x128xf32> -> vector<256x128xf32>
    %c0_40 = arith.constant 0 : index
    %c1280 = arith.constant 1280 : index
    %71 = vector.load %arg9[%c0_40, %c1280] : memref<1x1408xf32, #tpu.memory_space<vmem>>, vector<1x128xf32>
    %72 = vector.broadcast %71 : vector<1x128xf32> to vector<256x128xf32>
    %73 = arith.addf %70, %72 : vector<256x128xf32>
    %cst_41 = arith.constant dense<0xFF800000> : vector<256xf32>
    %74 = vector.multi_reduction <maximumf>, %73, %cst_41 [1] : vector<256x128xf32> to vector<256xf32>
    %75 = vector.shape_cast %74 : vector<256xf32> to vector<256x1xf32>
    %76 = vector.broadcast %75 : vector<256x1xf32> to vector<256x128xf32>
    %77 = arith.subf %73, %76 : vector<256x128xf32>
    %78 = math.exp %77 : vector<256x128xf32>
    %cst_42 = arith.constant dense<0.000000e+00> : vector<256xf32>
    %79 = vector.multi_reduction <add>, %78, %cst_42 [1] : vector<256x128xf32> to vector<256xf32>
    %80 = vector.shape_cast %79 : vector<256xf32> to vector<256x1xf32>
    %81 = tpu.reciprocal %80 {approx = true} : vector<256x1xf32> -> vector<256x1xf32>
    %82 = vector.broadcast %81 : vector<256x1xf32> to vector<256x128xf32>
    %83 = arith.mulf %78, %82 : vector<256x128xf32>
    %c0_43 = arith.constant 0 : index
    %c0_44 = arith.constant 0 : index
    %84 = vector.load %arg10[%c0_43, %c0_44] : memref<256x128xf32, #tpu.memory_space<vmem>>, vector<256x128xf32>
    tpu.vector_store %arg10[%c0_43, %c0_44], %83 {strides = array<i32>} : memref<256x128xf32, #tpu.memory_space<vmem>>, vector<256x128xf32>,
    return
  }
  func.func @transform_0(%arg0: i32) -> (i32, i32) {
    %c0_i32 = arith.constant 0 : i32
    %c0_i32_0 = arith.constant 0 : i32
    return %arg0, %c0_i32 : i32, i32
  }
  func.func @transform_1(%arg0: i32) -> (i32, i32) {
    %c0_i32 = arith.constant 0 : i32
    %c0_i32_0 = arith.constant 0 : i32
    %c0_i32_1 = arith.constant 0 : i32
    return %c0_i32, %c0_i32_0 : i32, i32
  }
  func.func @transform_2(%arg0: i32) -> (i32, i32) {
    %c0_i32 = arith.constant 0 : i32
    %c0_i32_0 = arith.constant 0 : i32
    %c0_i32_1 = arith.constant 0 : i32
    return %c0_i32, %c0_i32_0 : i32, i32
  }
  func.func @transform_3(%arg0: i32) -> (i32, i32) {
    %c0_i32 = arith.constant 0 : i32
    %c0_i32_0 = arith.constant 0 : i32
    %c0_i32_1 = arith.constant 0 : i32
    return %c0_i32, %c0_i32_0 : i32, i32
  }
  func.func @transform_4(%arg0: i32) -> (i32, i32) {
    %c0_i32 = arith.constant 0 : i32
    %c0_i32_0 = arith.constant 0 : i32
    %c0_i32_1 = arith.constant 0 : i32
    return %c0_i32, %c0_i32_0 : i32, i32
  }
  func.func @transform_5(%arg0: i32) -> (i32, i32) {
    %c0_i32 = arith.constant 0 : i32
    %c0_i32_0 = arith.constant 0 : i32
    %c0_i32_1 = arith.constant 0 : i32
    return %c0_i32, %c0_i32_0 : i32, i32
  }
  func.func @transform_6(%arg0: i32) -> (i32, i32) {
    %c0_i32 = arith.constant 0 : i32
    %c0_i32_0 = arith.constant 0 : i32
    %c0_i32_1 = arith.constant 0 : i32
    return %c0_i32, %c0_i32_0 : i32, i32
  }
  func.func @transform_7(%arg0: i32) -> (i32, i32) {
    %c0_i32 = arith.constant 0 : i32
    %c0_i32_0 = arith.constant 0 : i32
    %c0_i32_1 = arith.constant 0 : i32
    return %c0_i32, %c0_i32_0 : i32, i32
  }
  func.func @transform_8(%arg0: i32) -> (i32, i32) {
    %c0_i32 = arith.constant 0 : i32
    %c0_i32_0 = arith.constant 0 : i32
    %c0_i32_1 = arith.constant 0 : i32
    return %c0_i32, %c0_i32_0 : i32, i32
  }
  func.func @transform_9(%arg0: i32) -> (i32, i32) {
    %c0_i32 = arith.constant 0 : i32
    %c0_i32_0 = arith.constant 0 : i32
    return %arg0, %c0_i32 : i32, i32
  }
}

module attributes {stable_mosaic.version = 11 : i64} {
  func.func @net32_kernel(%arg0: i32, %arg1: memref<256x256xbf16, #tpu.memory_space<vmem>>, %arg2: memref<256x256xbf16, #tpu.memory_space<vmem>>, %arg3: memref<256x256xbf16, #tpu.memory_space<vmem>>, %arg4: memref<256x256xbf16, #tpu.memory_space<vmem>>, %arg5: memref<256x256xbf16, #tpu.memory_space<vmem>>, %arg6: memref<256x128xbf16, #tpu.memory_space<vmem>>, %arg7: memref<128x128xbf16, #tpu.memory_space<vmem>>, %arg8: memref<128x128xbf16, #tpu.memory_space<vmem>>, %arg9: memref<1x1408xf32, #tpu.memory_space<vmem>>, %arg10: memref<256x128xf32, #tpu.memory_space<vmem>>) attributes {dimension_semantics = [#tpu.dimension_semantics<parallel>], iteration_bounds = array<i64: 2>, scalar_prefetch = 0 : i64, scratch_operands = 0 : i64, tpu.core_type = #tpu.core_type<tc>, window_params = [{transform_indices = @transform_0, window_bounds = array<i64: 256, 256>}, {pipeline_mode = #tpu.pipeline_mode<synchronous>, transform_indices = @transform_1, window_bounds = array<i64: 256, 256>}, {pipeline_mode = #tpu.pipeline_mode<synchronous>, transform_indices = @transform_2, window_bounds = array<i64: 256, 256>}, {pipeline_mode = #tpu.pipeline_mode<synchronous>, transform_indices = @transform_3, window_bounds = array<i64: 256, 256>}, {pipeline_mode = #tpu.pipeline_mode<synchronous>, transform_indices = @transform_4, window_bounds = array<i64: 256, 256>}, {pipeline_mode = #tpu.pipeline_mode<synchronous>, transform_indices = @transform_5, window_bounds = array<i64: 256, 128>}, {pipeline_mode = #tpu.pipeline_mode<synchronous>, transform_indices = @transform_6, window_bounds = array<i64: 128, 128>}, {pipeline_mode = #tpu.pipeline_mode<synchronous>, transform_indices = @transform_7, window_bounds = array<i64: 128, 128>}, {pipeline_mode = #tpu.pipeline_mode<synchronous>, transform_indices = @transform_8, window_bounds = array<i64: 1, 1408>}, {transform_indices = @transform_9, window_bounds = array<i64: 256, 128>}]} {
    %c0 = arith.constant 0 : index
    %c0_0 = arith.constant 0 : index
    %0 = vector.load %arg1[%c0, %c0_0] : memref<256x256xbf16, #tpu.memory_space<vmem>>, vector<256x256xbf16>
    %c0_1 = arith.constant 0 : index
    %c0_2 = arith.constant 0 : index
    %1 = vector.load %arg2[%c0_1, %c0_2] : memref<256x256xbf16, #tpu.memory_space<vmem>>, vector<256x256xbf16>
    %cst = arith.constant dense<0.000000e+00> : vector<256x256xf32>
    %2 = tpu.matmul %0, %1, %cst {dimension_numbers = #tpu.dot_dimension_numbers<[1], [0], [0], [1], [0, 0, 1, 1], [], []>} : vector<256x256xbf16>, vector<256x256xbf16>, vector<256x256xf32> -> vector<256x256xf32>
    %c0_3 = arith.constant 0 : index
    %c0_4 = arith.constant 0 : index
    %3 = vector.load %arg9[%c0_3, %c0_4] : memref<1x1408xf32, #tpu.memory_space<vmem>>, vector<1x256xf32>
    %4 = vector.broadcast %3 : vector<1x256xf32> to vector<256x256xf32>
    %5 = arith.addf %2, %4 : vector<256x256xf32>
    %6 = arith.truncf %5 : vector<256x256xf32> to vector<256x256xbf16>
    %cst_5 = arith.constant 0.000000e+00 : bf16
    %7 = vector.broadcast %cst_5 : bf16 to vector<256x256xbf16>
    %8 = arith.cmpf oge, %6, %7 : vector<256x256xbf16>
    %cst_6 = arith.constant 1.000980e-02 : bf16
    %9 = vector.broadcast %cst_6 : bf16 to vector<256x256xbf16>
    %10 = arith.mulf %9, %6 : vector<256x256xbf16>
    %11 = arith.select %8, %6, %10 : vector<256x256xi1>, vector<256x256xbf16>
    %c0_7 = arith.constant 0 : index
    %c0_8 = arith.constant 0 : index
    %12 = vector.load %arg3[%c0_7, %c0_8] : memref<256x256xbf16, #tpu.memory_space<vmem>>, vector<256x256xbf16>
    %cst_9 = arith.constant dense<0.000000e+00> : vector<256x256xf32>
    %13 = tpu.matmul %11, %12, %cst_9 {dimension_numbers = #tpu.dot_dimension_numbers<[1], [0], [0], [1], [0, 0, 1, 1], [], []>} : vector<256x256xbf16>, vector<256x256xbf16>, vector<256x256xf32> -> vector<256x256xf32>
    %c0_10 = arith.constant 0 : index
    %c256 = arith.constant 256 : index
    %14 = vector.load %arg9[%c0_10, %c256] : memref<1x1408xf32, #tpu.memory_space<vmem>>, vector<1x256xf32>
    %15 = vector.broadcast %14 : vector<1x256xf32> to vector<256x256xf32>
    %16 = arith.addf %13, %15 : vector<256x256xf32>
    %17 = arith.truncf %16 : vector<256x256xf32> to vector<256x256xbf16>
    %cst_11 = arith.constant 0.000000e+00 : bf16
    %18 = vector.broadcast %cst_11 : bf16 to vector<256x256xbf16>
    %19 = arith.cmpf oge, %17, %18 : vector<256x256xbf16>
    %cst_12 = arith.constant 1.000980e-02 : bf16
    %20 = vector.broadcast %cst_12 : bf16 to vector<256x256xbf16>
    %21 = arith.mulf %20, %17 : vector<256x256xbf16>
    %22 = arith.select %19, %17, %21 : vector<256x256xi1>, vector<256x256xbf16>
    %23 = arith.addf %11, %22 : vector<256x256xbf16>
    %c0_13 = arith.constant 0 : index
    %c0_14 = arith.constant 0 : index
    %24 = vector.load %arg4[%c0_13, %c0_14] : memref<256x256xbf16, #tpu.memory_space<vmem>>, vector<256x256xbf16>
    %cst_15 = arith.constant dense<0.000000e+00> : vector<256x256xf32>
    %25 = tpu.matmul %23, %24, %cst_15 {dimension_numbers = #tpu.dot_dimension_numbers<[1], [0], [0], [1], [0, 0, 1, 1], [], []>} : vector<256x256xbf16>, vector<256x256xbf16>, vector<256x256xf32> -> vector<256x256xf32>
    %c0_16 = arith.constant 0 : index
    %c512 = arith.constant 512 : index
    %26 = vector.load %arg9[%c0_16, %c512] : memref<1x1408xf32, #tpu.memory_space<vmem>>, vector<1x256xf32>
    %27 = vector.broadcast %26 : vector<1x256xf32> to vector<256x256xf32>
    %28 = arith.addf %25, %27 : vector<256x256xf32>
    %29 = arith.truncf %28 : vector<256x256xf32> to vector<256x256xbf16>
    %cst_17 = arith.constant 0.000000e+00 : bf16
    %30 = vector.broadcast %cst_17 : bf16 to vector<256x256xbf16>
    %31 = arith.cmpf oge, %29, %30 : vector<256x256xbf16>
    %cst_18 = arith.constant 1.000980e-02 : bf16
    %32 = vector.broadcast %cst_18 : bf16 to vector<256x256xbf16>
    %33 = arith.mulf %32, %29 : vector<256x256xbf16>
    %34 = arith.select %31, %29, %33 : vector<256x256xi1>, vector<256x256xbf16>
    %35 = arith.addf %23, %34 : vector<256x256xbf16>
    %c0_19 = arith.constant 0 : index
    %c0_20 = arith.constant 0 : index
    %36 = vector.load %arg5[%c0_19, %c0_20] : memref<256x256xbf16, #tpu.memory_space<vmem>>, vector<256x256xbf16>
    %cst_21 = arith.constant dense<0.000000e+00> : vector<256x256xf32>
    %37 = tpu.matmul %35, %36, %cst_21 {dimension_numbers = #tpu.dot_dimension_numbers<[1], [0], [0], [1], [0, 0, 1, 1], [], []>} : vector<256x256xbf16>, vector<256x256xbf16>, vector<256x256xf32> -> vector<256x256xf32>
    %c0_22 = arith.constant 0 : index
    %c768 = arith.constant 768 : index
    %38 = vector.load %arg9[%c0_22, %c768] : memref<1x1408xf32, #tpu.memory_space<vmem>>, vector<1x256xf32>
    %39 = vector.broadcast %38 : vector<1x256xf32> to vector<256x256xf32>
    %40 = arith.addf %37, %39 : vector<256x256xf32>
    %41 = arith.truncf %40 : vector<256x256xf32> to vector<256x256xbf16>
    %cst_23 = arith.constant 0.000000e+00 : bf16
    %42 = vector.broadcast %cst_23 : bf16 to vector<256x256xbf16>
    %43 = arith.cmpf oge, %41, %42 : vector<256x256xbf16>
    %cst_24 = arith.constant 1.000980e-02 : bf16
    %44 = vector.broadcast %cst_24 : bf16 to vector<256x256xbf16>
    %45 = arith.mulf %44, %41 : vector<256x256xbf16>
    %46 = arith.select %43, %41, %45 : vector<256x256xi1>, vector<256x256xbf16>
    %c0_25 = arith.constant 0 : index
    %c0_26 = arith.constant 0 : index
    %47 = vector.load %arg6[%c0_25, %c0_26] : memref<256x128xbf16, #tpu.memory_space<vmem>>, vector<256x128xbf16>
    %cst_27 = arith.constant dense<0.000000e+00> : vector<256x128xf32>
    %48 = tpu.matmul %46, %47, %cst_27 {dimension_numbers = #tpu.dot_dimension_numbers<[1], [0], [0], [1], [0, 0, 1, 1], [], []>} : vector<256x256xbf16>, vector<256x128xbf16>, vector<256x128xf32> -> vector<256x128xf32>
    %c0_28 = arith.constant 0 : index
    %c1024 = arith.constant 1024 : index
    %49 = vector.load %arg9[%c0_28, %c1024] : memref<1x1408xf32, #tpu.memory_space<vmem>>, vector<1x128xf32>
    %50 = vector.broadcast %49 : vector<1x128xf32> to vector<256x128xf32>
    %51 = arith.addf %48, %50 : vector<256x128xf32>
    %52 = arith.truncf %51 : vector<256x128xf32> to vector<256x128xbf16>
    %cst_29 = arith.constant 0.000000e+00 : bf16
    %53 = vector.broadcast %cst_29 : bf16 to vector<256x128xbf16>
    %54 = arith.cmpf oge, %52, %53 : vector<256x128xbf16>
    %cst_30 = arith.constant 1.000980e-02 : bf16
    %55 = vector.broadcast %cst_30 : bf16 to vector<256x128xbf16>
    %56 = arith.mulf %55, %52 : vector<256x128xbf16>
    %57 = arith.select %54, %52, %56 : vector<256x128xi1>, vector<256x128xbf16>
    %c0_31 = arith.constant 0 : index
    %c0_32 = arith.constant 0 : index
    %58 = vector.load %arg7[%c0_31, %c0_32] : memref<128x128xbf16, #tpu.memory_space<vmem>>, vector<128x128xbf16>
    %cst_33 = arith.constant dense<0.000000e+00> : vector<256x128xf32>
    %59 = tpu.matmul %57, %58, %cst_33 {dimension_numbers = #tpu.dot_dimension_numbers<[1], [0], [0], [1], [0, 0, 1, 1], [], []>} : vector<256x128xbf16>, vector<128x128xbf16>, vector<256x128xf32> -> vector<256x128xf32>
    %c0_34 = arith.constant 0 : index
    %c1152 = arith.constant 1152 : index
    %60 = vector.load %arg9[%c0_34, %c1152] : memref<1x1408xf32, #tpu.memory_space<vmem>>, vector<1x128xf32>
    %61 = vector.broadcast %60 : vector<1x128xf32> to vector<256x128xf32>
    %62 = arith.addf %59, %61 : vector<256x128xf32>
    %63 = arith.truncf %62 : vector<256x128xf32> to vector<256x128xbf16>
    %cst_35 = arith.constant 0.000000e+00 : bf16
    %64 = vector.broadcast %cst_35 : bf16 to vector<256x128xbf16>
    %65 = arith.cmpf oge, %63, %64 : vector<256x128xbf16>
    %cst_36 = arith.constant 1.000980e-02 : bf16
    %66 = vector.broadcast %cst_36 : bf16 to vector<256x128xbf16>
    %67 = arith.mulf %66, %63 : vector<256x128xbf16>
    %68 = arith.select %65, %63, %67 : vector<256x128xi1>, vector<256x128xbf16>
    %c0_37 = arith.constant 0 : index
    %c0_38 = arith.constant 0 : index
    %69 = vector.load %arg8[%c0_37, %c0_38] : memref<128x128xbf16, #tpu.memory_space<vmem>>, vector<128x128xbf16>
    %cst_39 = arith.constant dense<0.000000e+00> : vector<256x128xf32>
    %70 = tpu.matmul %68, %69, %cst_39 {dimension_numbers = #tpu.dot_dimension_numbers<[1], [0], [0], [1], [0, 0, 1, 1], [], []>} : vector<256x128xbf16>, vector<128x128xbf16>, vector<256x128xf32> -> vector<256x128xf32>
    %c0_40 = arith.constant 0 : index
    %c1280 = arith.constant 1280 : index
    %71 = vector.load %arg9[%c0_40, %c1280] : memref<1x1408xf32, #tpu.memory_space<vmem>>, vector<1x128xf32>
    %72 = vector.broadcast %71 : vector<1x128xf32> to vector<256x128xf32>
    %73 = arith.addf %70, %72 : vector<256x128xf32>
    %cst_41 = arith.constant dense<0xFF800000> : vector<256xf32>
    %74 = vector.multi_reduction <maximumf>, %73, %cst_41 [1] : vector<256x128xf32> to vector<256xf32>
    %75 = vector.shape_cast %74 : vector<256xf32> to vector<256x1xf32>
    %76 = vector.broadcast %75 : vector<256x1xf32> to vector<256x128xf32>
    %77 = arith.subf %73, %76 : vector<256x128xf32>
    %78 = math.exp %77 : vector<256x128xf32>
    %cst_42 = arith.constant dense<0.000000e+00> : vector<256xf32>
    %79 = vector.multi_reduction <add>, %78, %cst_42 [1] : vector<256x128xf32> to vector<256xf32>
    %80 = vector.shape_cast %79 : vector<256xf32> to vector<256x1xf32>
    %81 = tpu.reciprocal %80 {approx = true} : vector<256x1xf32> -> vector<256x1xf32>
    %82 = vector.broadcast %81 : vector<256x1xf32> to vector<256x128xf32>
    %83 = arith.mulf %78, %82 : vector<256x128xf32>
    %c0_43 = arith.constant 0 : index
    %c0_44 = arith.constant 0 : index
    %84 = vector.load %arg10[%c0_43, %c0_44] : memref<256x128xf32, #tpu.memory_space<vmem>>, vector<256x128xf32>
    tpu.vector_store %arg10[%c0_43, %c0_44], %83 {strides = array<i32>} : memref<256x128xf32, #tpu.memory_space<vmem>>, vector<256x128xf32>,
    return
  }
  func.func @transform_0(%arg0: i32) -> (i32, i32) {
    %c0_i32 = arith.constant 0 : i32
    %c0_i32_0 = arith.constant 0 : i32
    return %arg0, %c0_i32 : i32, i32
  }
  func.func @transform_1(%arg0: i32) -> (i32, i32) {
    %c0_i32 = arith.constant 0 : i32
    %c0_i32_0 = arith.constant 0 : i32
    %c0_i32_1 = arith.constant 0 : i32
    return %c0_i32, %c0_i32_0 : i32, i32
  }
  func.func @transform_2(%arg0: i32) -> (i32, i32) {
    %c0_i32 = arith.constant 0 : i32
    %c0_i32_0 = arith.constant 0 : i32
    %c0_i32_1 = arith.constant 0 : i32
    return %c0_i32, %c0_i32_0 : i32, i32
  }
  func.func @transform_3(%arg0: i32) -> (i32, i32) {
    %c0_i32 = arith.constant 0 : i32
    %c0_i32_0 = arith.constant 0 : i32
    %c0_i32_1 = arith.constant 0 : i32
    return %c0_i32, %c0_i32_0 : i32, i32
  }
  func.func @transform_4(%arg0: i32) -> (i32, i32) {
    %c0_i32 = arith.constant 0 : i32
    %c0_i32_0 = arith.constant 0 : i32
    %c0_i32_1 = arith.constant 0 : i32
    return %c0_i32, %c0_i32_0 : i32, i32
  }
  func.func @transform_5(%arg0: i32) -> (i32, i32) {
    %c0_i32 = arith.constant 0 : i32
    %c0_i32_0 = arith.constant 0 : i32
    %c0_i32_1 = arith.constant 0 : i32
    return %c0_i32, %c0_i32_0 : i32, i32
  }
  func.func @transform_6(%arg0: i32) -> (i32, i32) {
    %c0_i32 = arith.constant 0 : i32
    %c0_i32_0 = arith.constant 0 : i32
    %c0_i32_1 = arith.constant 0 : i32
    return %c0_i32, %c0_i32_0 : i32, i32
  }
  func.func @transform_7(%arg0: i32) -> (i32, i32) {
    %c0_i32 = arith.constant 0 : i32
    %c0_i32_0 = arith.constant 0 : i32
    %c0_i32_1 = arith.constant 0 : i32
    return %c0_i32, %c0_i32_0 : i32, i32
  }
  func.func @transform_8(%arg0: i32) -> (i32, i32) {
    %c0_i32 = arith.constant 0 : i32
    %c0_i32_0 = arith.constant 0 : i32
    %c0_i32_1 = arith.constant 0 : i32
    return %c0_i32, %c0_i32_0 : i32, i32
  }
  func.func @transform_9(%arg0: i32) -> (i32, i32) {
    %c0_i32 = arith.constant 0 : i32
    %c0_i32_0 = arith.constant 0 : i32
    return %arg0, %c0_i32 : i32, i32
  }
}

</mosaic_0001>

<llo_original>
// kernel: tpu_custom_call.1
$region0: #{tpu_custom_call.1}
  #allocation0 [shape = 'u32[]', space=smem, size = 0x4, offset = 0x4, fixed_abs, tag = 'smem constant byte address 0x4 - core index']
  #allocation1 [shape = 'u32[144,128]{1,0:T(1,128)}', space=vmem, size = 0x12000, scoped, tag = 'internal scratch']
  %s0 = inlined_call_operand.hbm [shape: bf16[512,256], index: 0, kind: input, shape index: {}]
  %s1 = inlined_call_operand.hbm [shape: bf16[256,256], index: 1, kind: input, shape index: {}]
  %s2 = inlined_call_operand.hbm [shape: bf16[256,256], index: 2, kind: input, shape index: {}]
  %s3 = inlined_call_operand.hbm [shape: bf16[256,256], index: 3, kind: input, shape index: {}]
  %s4 = inlined_call_operand.hbm [shape: bf16[256,256], index: 4, kind: input, shape index: {}]
  %s5 = inlined_call_operand.hbm [shape: bf16[256,128], index: 5, kind: input, shape index: {}]
  %s6 = inlined_call_operand.hbm [shape: bf16[128,128], index: 6, kind: input, shape index: {}]
  %s7 = inlined_call_operand.hbm [shape: bf16[128,128], index: 7, kind: input, shape index: {}]
  %s8 = inlined_call_operand.vmem [shape: f32[1,1408], index: 8, kind: input, shape index: {}]
  %s9 = inlined_call_operand.hbm [shape: f32[512,128], index: 9, kind: output, shape index: {}]
  %s10 = sld [smem:[#allocation0]]
  $region101: #{tpu_custom_call.1} parent=0
    _
  %s12 = ssub.s32 1, %s10
  %s13 = scalar_select 0, %s12, %s10
  $region1: #{tpu_custom_call.1} parent=0
    #allocation2 [shape = 'u8[262144]{0}', space=vmem, size = 0x40000, scoped, tag = 'input window, operand 0']
    #allocation3 [shape = 's32[2]{0}', space=sflag, size = 0x8, scoped, tag = 'scoped memory for tpu_custom_call.1']
    #allocation4 [shape = 's32[2]{0}', space=sflag, size = 0x8, scoped, tag = 'scoped memory for tpu_custom_call.1']
    #allocation5 [shape = 'u8[131072]{0}', space=vmem, size = 0x20000, scoped, tag = 'input window, operand 1, single buffered']
    #allocation6 [shape = 's32[1]{0}', space=sflag, size = 0x4, scoped, tag = 'scoped memory for tpu_custom_call.1']
    #allocation7 [shape = 'u8[131072]{0}', space=vmem, size = 0x20000, scoped, tag = 'input window, operand 2, single buffered']
    #allocation8 [shape = 'u8[131072]{0}', space=vmem, size = 0x20000, scoped, tag = 'input window, operand 3, single buffered']
    #allocation9 [shape = 's32[1]{0}', space=sflag, size = 0x4, scoped, tag = 'scoped memory for tpu_custom_call.1']
    #allocation10 [shape = 'u8[131072]{0}', space=vmem, size = 0x20000, scoped, tag = 'input window, operand 4, single buffered']
    #allocation11 [shape = 'u8[65536]{0}', space=vmem, size = 0x10000, scoped, tag = 'input window, operand 5, single buffered']
    #allocation12 [shape = 's32[1]{0}', space=sflag, size = 0x4, scoped, tag = 'scoped memory for tpu_custom_call.1']
    #allocation13 [shape = 'u8[32768]{0}', space=vmem, size = 0x8000, scoped, tag = 'input window, operand 6, single buffered']
    #allocation14 [shape = 'u8[32768]{0}', space=vmem, size = 0x8000, scoped, tag = 'input window, operand 7, single buffered']
    #allocation15 [shape = 's32[1]{0}', space=sflag, size = 0x4, scoped, tag = 'scoped memory for tpu_custom_call.1']
    #allocation16 [shape = 'u8[262144]{0}', space=vmem, size = 0x40000, scoped, tag = 'output window, operand 0']
    %14 = vsyncpa [#allocation3], 0
    %s15 = scalar_lea.sflag [#allocation3], 1
    %16 = vsyncpa %s15, 0
    %17 = vsyncpa [#allocation6], 0
    %18 = vsyncpa [#allocation9], 0
    %19 = vsyncpa [#allocation12], 0
    %20 = vsyncpa [#allocation15], 0
    %21 = vsyncpa [#allocation4], 0
    %s22 = scalar_lea.sflag [#allocation4], 1
    %23 = vsyncpa %s22, 0
    loop: start=0, step=1, limit=4
    $region2: #{tpu_custom_call.1} parent=1 // loop_pre_header
      _
    $region3: #{tpu_custom_call.1} parent=1 // loop_header
      %s25 = sphi 0, %s29
      %p26 = scmp.ge.s32.totalorder %s25, 4
      %s35 = sphi 0, %s37
      %s38 = sphi 0, %s35
      %s39 = sphi 0, %s38
      %s55 = sphi 0, %s39
      %s59 = sphi 0, %s59
      %s61 = sphi 0, %s59
      %s62 = sphi 0, %s61
      %s76 = sphi 0, %s62
      %s80 = sphi 0, %s80
      %s82 = sphi 0, %s80
      %s83 = sphi 0, %s82
      %s97 = sphi 0, %s83
      %s101 = sphi 0, %s101
      %s103 = sphi 0, %s101
      %s104 = sphi 0, %s103
      %s118 = sphi 0, %s104
      %s122 = sphi 0, %s122
      %s124 = sphi 0, %s122
      %s125 = sphi 0, %s124
      %s139 = sphi 0, %s125
      %s143 = sphi 0, %s143
      %s145 = sphi 0, %s143
      %s146 = sphi 0, %s145
      %s160 = sphi 0, %s146
      %s164 = sphi 0, %s164
      %s166 = sphi 0, %s164
      %s167 = sphi 0, %s166
      %s181 = sphi 0, %s167
      %s185 = sphi 0, %s185
      %s187 = sphi 0, %s185
      %s188 = sphi 0, %s187
      %s202 = sphi 0, %s188
      %s206 = sphi 0, %s206
      %s208 = sphi 0, %s206
      %s209 = sphi 0, %s208
      %s223 = sphi 0, %s209
      %s229 = sphi 0, %s231
      %s232 = sphi 0, %s229
      %s233 = sphi 0, %s232
      %s249 = sphi 0, %s233
    $region4: #{tpu_custom_call.1} parent=1 // loop_header_branch
      %28 = sbr.rel (%p26) target = $region8
    $region5: #{tpu_custom_call.1} parent=1 // loop_body
      %s30 = ssub.s32 %s25, 1
      %s31 = ssub.s32 %s25, 2
      %s32 = sadd.s32 %s25, 1
      %s33 = ssub.s32 %s25, %s32
      %p34 = scmp.eq.s32.totalorder %s33, 0
      %s36 = sadd.s32 %s35, 1
      %s37 = scalar_select %p34, %s35, %s36
      %p40 = pneg %p34
      %p41 = scmp.eq.s32.totalorder %s25, 1
      %p42 = por %p40, %p41
      %p43 = scmp.ne.s32.totalorder %s35, %s38
      %p44 = scmp.eq.s32.totalorder %s25, 0
      %p45 = por %p43, %p44
      %p46 = scmp.ne.s32.totalorder %s35, %s38
      %p47 = scmp.eq.s32.totalorder %s30, 1
      %p48 = por %p46, %p47
      %p49 = scmp.ne.s32.totalorder %s38, %s39
      %p50 = scmp.eq.s32.totalorder %s30, 0
      %p51 = por %p49, %p50
      %p52 = scmp.ne.s32.totalorder %s38, %s39
      %p53 = scmp.eq.s32.totalorder %s31, 1
      %p54 = por %p52, %p53
      %p56 = scmp.ne.s32.totalorder %s39, %s55
      %p57 = scmp.eq.s32.totalorder %s31, 0
      %p58 = por %p56, %p57
      %s60 = sadd.s32 %s59, 1
      %p63 = scmp.eq.s32.totalorder %s25, 1
      %p64 = scmp.ne.s32.totalorder %s59, %s61
      %p65 = scmp.eq.s32.totalorder %s25, 0
      %p66 = por %p64, %p65
      %p67 = scmp.ne.s32.totalorder %s59, %s61
      %p68 = scmp.eq.s32.totalorder %s30, 1
      %p69 = por %p67, %p68
      %p70 = scmp.ne.s32.totalorder %s61, %s62
      %p71 = scmp.eq.s32.totalorder %s30, 0
      %p72 = por %p70, %p71
      %p73 = scmp.ne.s32.totalorder %s61, %s62
      %p74 = scmp.eq.s32.totalorder %s31, 1
      %p75 = por %p73, %p74
      %p77 = scmp.ne.s32.totalorder %s62, %s76
      %p78 = scmp.eq.s32.totalorder %s31, 0
      %p79 = por %p77, %p78
      %s81 = sadd.s32 %s80, 1
      %p84 = scmp.eq.s32.totalorder %s25, 1
      %p85 = scmp.ne.s32.totalorder %s80, %s82
      %p86 = scmp.eq.s32.totalorder %s25, 0
      %p87 = por %p85, %p86
      %p88 = scmp.ne.s32.totalorder %s80, %s82
      %p89 = scmp.eq.s32.totalorder %s30, 1
      %p90 = por %p88, %p89
      %p91 = scmp.ne.s32.totalorder %s82, %s83
      %p92 = scmp.eq.s32.totalorder %s30, 0
      %p93 = por %p91, %p92
      %p94 = scmp.ne.s32.totalorder %s82, %s83
      %p95 = scmp.eq.s32.totalorder %s31, 1
      %p96 = por %p94, %p95
      %p98 = scmp.ne.s32.totalorder %s83, %s97
      %p99 = scmp.eq.s32.totalorder %s31, 0
      %p100 = por %p98, %p99
      %s102 = sadd.s32 %s101, 1
      %p105 = scmp.eq.s32.totalorder %s25, 1
      %p106 = scmp.ne.s32.totalorder %s101, %s103
      %p107 = scmp.eq.s32.totalorder %s25, 0
      %p108 = por %p106, %p107
      %p109 = scmp.ne.s32.totalorder %s101, %s103
      %p110 = scmp.eq.s32.totalorder %s30, 1
      %p111 = por %p109, %p110
      %p112 = scmp.ne.s32.totalorder %s103, %s104
      %p113 = scmp.eq.s32.totalorder %s30, 0
      %p114 = por %p112, %p113
      %p115 = scmp.ne.s32.totalorder %s103, %s104
      %p116 = scmp.eq.s32.totalorder %s31, 1
      %p117 = por %p115, %p116
      %p119 = scmp.ne.s32.totalorder %s104, %s118
      %p120 = scmp.eq.s32.totalorder %s31, 0
      %p121 = por %p119, %p120
      %s123 = sadd.s32 %s122, 1
      %p126 = scmp.eq.s32.totalorder %s25, 1
      %p127 = scmp.ne.s32.totalorder %s122, %s124
      %p128 = scmp.eq.s32.totalorder %s25, 0
      %p129 = por %p127, %p128
      %p130 = scmp.ne.s32.totalorder %s122, %s124
      %p131 = scmp.eq.s32.totalorder %s30, 1
      %p132 = por %p130, %p131
      %p133 = scmp.ne.s32.totalorder %s124, %s125
      %p134 = scmp.eq.s32.totalorder %s30, 0
      %p135 = por %p133, %p134
      %p136 = scmp.ne.s32.totalorder %s124, %s125
      %p137 = scmp.eq.s32.totalorder %s31, 1
      %p138 = por %p136, %p137
      %p140 = scmp.ne.s32.totalorder %s125, %s139
      %p141 = scmp.eq.s32.totalorder %s31, 0
      %p142 = por %p140, %p141
      %s144 = sadd.s32 %s143, 1
      %p147 = scmp.eq.s32.totalorder %s25, 1
      %p148 = scmp.ne.s32.totalorder %s143, %s145
      %p149 = scmp.eq.s32.totalorder %s25, 0
      %p150 = por %p148, %p149
      %p151 = scmp.ne.s32.totalorder %s143, %s145
      %p152 = scmp.eq.s32.totalorder %s30, 1
      %p153 = por %p151, %p152
      %p154 = scmp.ne.s32.totalorder %s145, %s146
      %p155 = scmp.eq.s32.totalorder %s30, 0
      %p156 = por %p154, %p155
      %p157 = scmp.ne.s32.totalorder %s145, %s146
      %p158 = scmp.eq.s32.totalorder %s31, 1
      %p159 = por %p157, %p158
      %p161 = scmp.ne.s32.totalorder %s146, %s160
      %p162 = scmp.eq.s32.totalorder %s31, 0
      %p163 = por %p161, %p162
      %s165 = sadd.s32 %s164, 1
      %p168 = scmp.eq.s32.totalorder %s25, 1
      %p169 = scmp.ne.s32.totalorder %s164, %s166
      %p170 = scmp.eq.s32.totalorder %s25, 0
      %p171 = por %p169, %p170
      %p172 = scmp.ne.s32.totalorder %s164, %s166
      %p173 = scmp.eq.s32.totalorder %s30, 1
      %p174 = por %p172, %p173
      %p175 = scmp.ne.s32.totalorder %s166, %s167
      %p176 = scmp.eq.s32.totalorder %s30, 0
      %p177 = por %p175, %p176
      %p178 = scmp.ne.s32.totalorder %s166, %s167
      %p179 = scmp.eq.s32.totalorder %s31, 1
      %p180 = por %p178, %p179
      %p182 = scmp.ne.s32.totalorder %s167, %s181
      %p183 = scmp.eq.s32.totalorder %s31, 0
      %p184 = por %p182, %p183
      %s186 = sadd.s32 %s185, 1
      %p189 = scmp.eq.s32.totalorder %s25, 1
      %p190 = scmp.ne.s32.totalorder %s185, %s187
      %p191 = scmp.eq.s32.totalorder %s25, 0
      %p192 = por %p190, %p191
      %p193 = scmp.ne.s32.totalorder %s185, %s187
      %p194 = scmp.eq.s32.totalorder %s30, 1
      %p195 = por %p193, %p194
      %p196 = scmp.ne.s32.totalorder %s187, %s188
      %p197 = scmp.eq.s32.totalorder %s30, 0
      %p198 = por %p196, %p197
      %p199 = scmp.ne.s32.totalorder %s187, %s188
      %p200 = scmp.eq.s32.totalorder %s31, 1
      %p201 = por %p199, %p200
      %p203 = scmp.ne.s32.totalorder %s188, %s202
      %p204 = scmp.eq.s32.totalorder %s31, 0
      %p205 = por %p203, %p204
      %s207 = sadd.s32 %s206, 1
      %p210 = scmp.eq.s32.totalorder %s25, 1
      %p211 = scmp.ne.s32.totalorder %s206, %s208
      %p212 = scmp.eq.s32.totalorder %s25, 0
      %p213 = por %p211, %p212
      %p214 = scmp.ne.s32.totalorder %s206, %s208
      %p215 = scmp.eq.s32.totalorder %s30, 1
      %p216 = por %p214, %p215
      %p217 = scmp.ne.s32.totalorder %s208, %s209
      %p218 = scmp.eq.s32.totalorder %s30, 0
      %p219 = por %p217, %p218
      %p220 = scmp.ne.s32.totalorder %s208, %s209
      %p221 = scmp.eq.s32.totalorder %s31, 1
      %p222 = por %p220, %p221
      %p224 = scmp.ne.s32.totalorder %s209, %s223
      %p225 = scmp.eq.s32.totalorder %s31, 0
      %p226 = por %p224, %p225
      %s227 = ssub.s32 %s25, %s32
      %p228 = scmp.eq.s32.totalorder %s227, 0
      %s230 = sadd.s32 %s229, 1
      %s231 = scalar_select %p228, %s229, %s230
      %p234 = pneg %p228
      %p235 = scmp.eq.s32.totalorder %s25, 1
      %p236 = por %p234, %p235
      %p237 = scmp.ne.s32.totalorder %s229, %s232
      %p238 = scmp.eq.s32.totalorder %s25, 0
      %p239 = por %p237, %p238
      %p240 = scmp.ne.s32.totalorder %s229, %s232
      %p241 = scmp.eq.s32.totalorder %s30, 1
      %p242 = por %p240, %p241
      %p243 = scmp.ne.s32.totalorder %s232, %s233
      %p244 = scmp.eq.s32.totalorder %s30, 0
      %p245 = por %p243, %p244
      %p246 = scmp.ne.s32.totalorder %s232, %s233
      %p247 = scmp.eq.s32.totalorder %s31, 1
      %p248 = por %p246, %p247
      %p250 = scmp.ne.s32.totalorder %s233, %s249
      %p251 = scmp.eq.s32.totalorder %s31, 0
      %p252 = por %p250, %p251
      %p253 = scmp.le.s32.totalorder 1, %s25
      %p254 = scmp.lt.s32.totalorder %s25, 3
      %p255 = pnand %p253, %p254
      %p256 = pneg %p255
      // Predicated region
      $region9: #{tpu_custom_call.1} parent=5 // pred_check
        _
      $region10: #{tpu_custom_call.1} parent=5 // pred_check_branch
        %258 = sbr.rel (%p255) target = $region12
      $region11: #{tpu_custom_call.1} parent=5 // pred_region
        %s259 = ssub.s32 %s25, 1
        // Predicated region
        $region13: #{tpu_custom_call.1} parent=11 // pred_check
          %p260 = pneg %p72
        $region14: #{tpu_custom_call.1} parent=11 // pred_check_branch
          %262 = sbr.rel (%p260) target = $region16
        $region15: #{tpu_custom_call.1} parent=11 // pred_region
          %s264 = ssub.s32 4096, 4096
          %265 = vsyncadd [#allocation6], %s264
          %s266 = sshll.u32 [#allocation5], 4
          %s267 = int_to_ptr.vmem [resolvable:$true] %s266
          %272 = dma.hbm_to_vmem [thread:$0]  %s1, 4096, %s267, [#allocation6], 128, 128, 8
        $region16: #{tpu_custom_call.1} parent=11 // pred_fallthru
          _
        // Predicated region
        $region17: #{tpu_custom_call.1} parent=11 // pred_check
          %p273 = pneg %p93
        $region18: #{tpu_custom_call.1} parent=11 // pred_check_branch
          %275 = sbr.rel (%p273) target = $region20
        $region19: #{tpu_custom_call.1} parent=11 // pred_region
          %s277 = ssub.s32 4096, 4096
          %278 = vsyncadd [#allocation6], %s277
          %s279 = sshll.u32 [#allocation7], 4
          %s280 = int_to_ptr.vmem [resolvable:$true] %s279
          %285 = dma.hbm_to_vmem [thread:$0]  %s2, 4096, %s280, [#allocation6], 128, 128, 8
        $region20: #{tpu_custom_call.1} parent=11 // pred_fallthru
          _
        // Predicated region
        $region21: #{tpu_custom_call.1} parent=11 // pred_check
          %p286 = pneg %p114
        $region22: #{tpu_custom_call.1} parent=11 // pred_check_branch
          %288 = sbr.rel (%p286) target = $region24
        $region23: #{tpu_custom_call.1} parent=11 // pred_region
          %s290 = ssub.s32 4096, 4096
          %291 = vsyncadd [#allocation9], %s290
          %s292 = sshll.u32 [#allocation8], 4
          %s293 = int_to_ptr.vmem [resolvable:$true] %s292
          %298 = dma.hbm_to_vmem [thread:$0]  %s3, 4096, %s293, [#allocation9], 128, 128, 8
        $region24: #{tpu_custom_call.1} parent=11 // pred_fallthru
          _
        // Predicated region
        $region25: #{tpu_custom_call.1} parent=11 // pred_check
          %p299 = pneg %p135
        $region26: #{tpu_custom_call.1} parent=11 // pred_check_branch
          %301 = sbr.rel (%p299) target = $region28
        $region27: #{tpu_custom_call.1} parent=11 // pred_region
          %s303 = ssub.s32 4096, 4096
          %304 = vsyncadd [#allocation9], %s303
          %s305 = sshll.u32 [#allocation10], 4
          %s306 = int_to_ptr.vmem [resolvable:$true] %s305
          %311 = dma.hbm_to_vmem [thread:$0]  %s4, 4096, %s306, [#allocation9], 128, 128, 8
        $region28: #{tpu_custom_call.1} parent=11 // pred_fallthru
          _
        // Predicated region
        $region29: #{tpu_custom_call.1} parent=11 // pred_check
          %p312 = pneg %p156
        $region30: #{tpu_custom_call.1} parent=11 // pred_check_branch
          %314 = sbr.rel (%p312) target = $region32
        $region31: #{tpu_custom_call.1} parent=11 // pred_region
          %s316 = ssub.s32 2048, 2048
          %317 = vsyncadd [#allocation12], %s316
          %s318 = sshll.u32 [#allocation11], 4
          %s319 = int_to_ptr.vmem [resolvable:$true] %s318
          %324 = dma.hbm_to_vmem [thread:$0]  %s5, 2048, %s319, [#allocation12], 64, 64, 4
        $region32: #{tpu_custom_call.1} parent=11 // pred_fallthru
          _
        // Predicated region
        $region33: #{tpu_custom_call.1} parent=11 // pred_check
          %p325 = pneg %p177
        $region34: #{tpu_custom_call.1} parent=11 // pred_check_branch
          %327 = sbr.rel (%p325) target = $region36
        $region35: #{tpu_custom_call.1} parent=11 // pred_region
          %s329 = ssub.s32 1024, 1024
          %330 = vsyncadd [#allocation12], %s329
          %s331 = sshll.u32 [#allocation13], 4
          %s332 = int_to_ptr.vmem [resolvable:$true] %s331
          %337 = dma.hbm_to_vmem [thread:$0]  %s6, 1024, %s332, [#allocation12], 64, 64, 4
        $region36: #{tpu_custom_call.1} parent=11 // pred_fallthru
          _
        // Predicated region
        $region37: #{tpu_custom_call.1} parent=11 // pred_check
          %p338 = pneg %p198
        $region38: #{tpu_custom_call.1} parent=11 // pred_check_branch
          %340 = sbr.rel (%p338) target = $region40
        $region39: #{tpu_custom_call.1} parent=11 // pred_region
          %s342 = ssub.s32 1024, 1024
          %343 = vsyncadd [#allocation15], %s342
          %s344 = sshll.u32 [#allocation14], 4
          %s345 = int_to_ptr.vmem [resolvable:$true] %s344
          %350 = dma.hbm_to_vmem [thread:$0]  %s7, 1024, %s345, [#allocation15], 64, 64, 4
        $region40: #{tpu_custom_call.1} parent=11 // pred_fallthru
          _
        // Predicated region
        $region41: #{tpu_custom_call.1} parent=11 // pred_check
          %p351 = pneg %p219
        $region42: #{tpu_custom_call.1} parent=11 // pred_check_branch
          %353 = sbr.rel (%p351) target = $region44
        $region43: #{tpu_custom_call.1} parent=11 // pred_region
          _
        $region44: #{tpu_custom_call.1} parent=11 // pred_fallthru
          _
      $region12: #{tpu_custom_call.1} parent=5 // pred_fallthru
        _
      %p354 = scmp.lt.s32.totalorder %s25, 2
      // Predicated region
      $region45: #{tpu_custom_call.1} parent=5 // pred_check
        %p355 = pneg %p354
      $region46: #{tpu_custom_call.1} parent=5 // pred_check_branch
        %357 = sbr.rel (%p355) target = $region48
      $region47: #{tpu_custom_call.1} parent=5 // pred_region
        // Predicated region
        $region49: #{tpu_custom_call.1} parent=47 // pred_check
          %p358 = pneg %p45
        $region50: #{tpu_custom_call.1} parent=47 // pred_check_branch
          %360 = sbr.rel (%p358) target = $region52
        $region51: #{tpu_custom_call.1} parent=47 // pred_region
          %s361 = sand.u32 %s35, 1
          %s362 = scalar_lea.sflag [#allocation3], %s361
          %s363 = sand.u32 %s35, 1
          %s364 = smul.addr %s363, 256
          %s365 = scalar_lea.vmem [#allocation2], %s364
          %s366 = smul.u32 32, %s25
          %s368 = ssub.s32 4096, 4096
          %369 = vsyncadd %s362, %s368
          %s370 = smul.addr %s366, 2
          %s371 = smul.addr %s370, 64
          %s372 = scalar_lea.hbm %s0, %s371
          %s373 = sshll.u32 %s365, 4
          %s374 = int_to_ptr.vmem [resolvable:$true] %s373
          %379 = dma.hbm_to_vmem [thread:$0]  %s372, 4096, %s374, %s362, 128, 128, 8
        $region52: #{tpu_custom_call.1} parent=47 // pred_fallthru
          _
      $region48: #{tpu_custom_call.1} parent=5 // pred_fallthru
        _
      %p380 = scmp.le.s32.totalorder 1, %s25
      %p381 = scmp.lt.s32.totalorder %s25, 3
      %p382 = pnand %p380, %p381
      %p383 = pneg %p382
      // Predicated region
      $region53: #{tpu_custom_call.1} parent=5 // pred_check
        _
      $region54: #{tpu_custom_call.1} parent=5 // pred_check_branch
        %385 = sbr.rel (%p382) target = $region56
      $region55: #{tpu_custom_call.1} parent=5 // pred_region
        %s386 = ssub.s32 %s25, 1
        %s387 = sand.u32 %s38, 1
        %s388 = scalar_lea.sflag [#allocation3], %s387
        %s389 = sand.u32 %s38, 1
        %s390 = smul.addr %s389, 256
        %s391 = scalar_lea.vmem [#allocation2], %s390
        // Predicated region
        $region57: #{tpu_custom_call.1} parent=55 // pred_check
          %p392 = pneg %p51
        $region58: #{tpu_custom_call.1} parent=55 // pred_check_branch
          %394 = sbr.rel (%p392) target = $region60
        $region59: #{tpu_custom_call.1} parent=55 // pred_region
          %395 = dma.done %s388, 4096
        $region60: #{tpu_custom_call.1} parent=55 // pred_fallthru
          _
        // Predicated region
        $region61: #{tpu_custom_call.1} parent=55 // pred_check
          %p396 = pneg %p72
        $region62: #{tpu_custom_call.1} parent=55 // pred_check_branch
          %398 = sbr.rel (%p396) target = $region64
        $region63: #{tpu_custom_call.1} parent=55 // pred_region
          %399 = dma.done [#allocation6], 4096
        $region64: #{tpu_custom_call.1} parent=55 // pred_fallthru
          _
        // Predicated region
        $region65: #{tpu_custom_call.1} parent=55 // pred_check
          %p400 = pneg %p93
        $region66: #{tpu_custom_call.1} parent=55 // pred_check_branch
          %402 = sbr.rel (%p400) target = $region68
        $region67: #{tpu_custom_call.1} parent=55 // pred_region
          %403 = dma.done [#allocation6], 4096
        $region68: #{tpu_custom_call.1} parent=55 // pred_fallthru
          _
        // Predicated region
        $region69: #{tpu_custom_call.1} parent=55 // pred_check
          %p404 = pneg %p114
        $region70: #{tpu_custom_call.1} parent=55 // pred_check_branch
          %406 = sbr.rel (%p404) target = $region72
        $region71: #{tpu_custom_call.1} parent=55 // pred_region
          %407 = dma.done [#allocation9], 4096
        $region72: #{tpu_custom_call.1} parent=55 // pred_fallthru
          _
        // Predicated region
        $region73: #{tpu_custom_call.1} parent=55 // pred_check
          %p408 = pneg %p135
        $region74: #{tpu_custom_call.1} parent=55 // pred_check_branch
          %410 = sbr.rel (%p408) target = $region76
        $region75: #{tpu_custom_call.1} parent=55 // pred_region
          %411 = dma.done [#allocation9], 4096
        $region76: #{tpu_custom_call.1} parent=55 // pred_fallthru
          _
        // Predicated region
        $region77: #{tpu_custom_call.1} parent=55 // pred_check
          %p412 = pneg %p156
        $region78: #{tpu_custom_call.1} parent=55 // pred_check_branch
          %414 = sbr.rel (%p412) target = $region80
        $region79: #{tpu_custom_call.1} parent=55 // pred_region
          %415 = dma.done [#allocation12], 2048
        $region80: #{tpu_custom_call.1} parent=55 // pred_fallthru
          _
        // Predicated region
        $region81: #{tpu_custom_call.1} parent=55 // pred_check
          %p416 = pneg %p177
        $region82: #{tpu_custom_call.1} parent=55 // pred_check_branch
          %418 = sbr.rel (%p416) target = $region84
        $region83: #{tpu_custom_call.1} parent=55 // pred_region
          %419 = dma.done [#allocation12], 1024
        $region84: #{tpu_custom_call.1} parent=55 // pred_fallthru
          _
        // Predicated region
        $region85: #{tpu_custom_call.1} parent=55 // pred_check
          %p420 = pneg %p198
        $region86: #{tpu_custom_call.1} parent=55 // pred_check_branch
          %422 = sbr.rel (%p420) target = $region88
        $region87: #{tpu_custom_call.1} parent=55 // pred_region
          %423 = dma.done [#allocation15], 1024
        $region88: #{tpu_custom_call.1} parent=55 // pred_fallthru
          _
        %s424 = sand.u32 %s38, 1
        %s425 = scalar_lea.sflag [#allocation3], %s424
        %s426 = sand.u32 %s38, 1
        %s427 = smul.addr %s426, 256
        %s428 = scalar_lea.vmem [#allocation2], %s427
        %p429 = pneg %p51
        %p430 = pneg %p48
        %p431 = pneg %p72
        %p432 = pneg %p69
        %p433 = pneg %p93
        %p434 = pneg %p90
        %p435 = pneg %p114
        %p436 = pneg %p111
        %p437 = pneg %p135
        %p438 = pneg %p132
        %p439 = pneg %p156
        %p440 = pneg %p153
        %p441 = pneg %p177
        %p442 = pneg %p174
        %p443 = pneg %p198
        %p444 = pneg %p195
        %p445 = pneg %p219
        %p446 = pneg %p216
        %p447 = pneg %p245
        %p448 = pneg %p242
        %s449 = sand.u32 %s232, 1
        %s450 = scalar_lea.sflag [#allocation4], %s449
        %s451 = sand.u32 %s232, 1
        %s452 = smul.addr %s451, 256
        %s453 = scalar_lea.vmem [#allocation16], %s452
        %s454 = smul.u32 32, %s30
        %s455 = smul.u32 32, %s30
        %v458 = vld [vmem:[%s391] sm:$0xff]
        %v459 = vld [vmem:[%s391 + $0x8] sm:$0xff]
        %v460 = vld [vmem:[%s391 + $0x10] sm:$0xff]
        %v461 = vld [vmem:[%s391 + $0x18] sm:$0xff]
        %v462 = vld [vmem:[%s391 + $0x20] sm:$0xff]
        %v463 = vld [vmem:[%s391 + $0x28] sm:$0xff]
        %v464 = vld [vmem:[%s391 + $0x30] sm:$0xff]
        %v465 = vld [vmem:[%s391 + $0x38] sm:$0xff]
        %v466 = vld [vmem:[%s391 + $0x40] sm:$0xff]
        %v467 = vld [vmem:[%s391 + $0x48] sm:$0xff]
        %v468 = vld [vmem:[%s391 + $0x50] sm:$0xff]
        %v469 = vld [vmem:[%s391 + $0x58] sm:$0xff]
        %v470 = vld [vmem:[%s391 + $0x60] sm:$0xff]
        %v471 = vld [vmem:[%s391 + $0x68] sm:$0xff]
        %v472 = vld [vmem:[%s391 + $0x70] sm:$0xff]
        %v473 = vld [vmem:[%s391 + $0x78] sm:$0xff]
        %v474 = vld [vmem:[%s391 + $0x80] sm:$0xff]
        %v475 = vld [vmem:[%s391 + $0x88] sm:$0xff]
        %v476 = vld [vmem:[%s391 + $0x90] sm:$0xff]
        %v477 = vld [vmem:[%s391 + $0x98] sm:$0xff]
        %v478 = vld [vmem:[%s391 + $0xa0] sm:$0xff]
        %v479 = vld [vmem:[%s391 + $0xa8] sm:$0xff]
        %v480 = vld [vmem:[%s391 + $0xb0] sm:$0xff]
        %v481 = vld [vmem:[%s391 + $0xb8] sm:$0xff]
        %v482 = vld [vmem:[%s391 + $0xc0] sm:$0xff]
        %v483 = vld [vmem:[%s391 + $0xc8] sm:$0xff]
        %v484 = vld [vmem:[%s391 + $0xd0] sm:$0xff]
        %v485 = vld [vmem:[%s391 + $0xd8] sm:$0xff]
        %v486 = vld [vmem:[%s391 + $0xe0] sm:$0xff]
        %v487 = vld [vmem:[%s391 + $0xe8] sm:$0xff]
        %v488 = vld [vmem:[%s391 + $0xf0] sm:$0xff]
        %v489 = vld [vmem:[%s391 + $0xf8] sm:$0xff]
        %v490 = vld [vmem:[#allocation5] sm:$0xff]
        %v491 = vld [vmem:[#allocation5 + $0x8] sm:$0xff]
        %v492 = vld [vmem:[#allocation5 + $0x10] sm:$0xff]
        %v493 = vld [vmem:[#allocation5 + $0x18] sm:$0xff]
        %v494 = vld [vmem:[#allocation5 + $0x20] sm:$0xff]
        %v495 = vld [vmem:[#allocation5 + $0x28] sm:$0xff]
        %v496 = vld [vmem:[#allocation5 + $0x30] sm:$0xff]
        %v497 = vld [vmem:[#allocation5 + $0x38] sm:$0xff]
        %v498 = vld [vmem:[#allocation5 + $0x40] sm:$0xff]
        %v499 = vld [vmem:[#allocation5 + $0x48] sm:$0xff]
        %v500 = vld [vmem:[#allocation5 + $0x50] sm:$0xff]
        %v501 = vld [vmem:[#allocation5 + $0x58] sm:$0xff]
        %v502 = vld [vmem:[#allocation5 + $0x60] sm:$0xff]
        %v503 = vld [vmem:[#allocation5 + $0x68] sm:$0xff]
        %v504 = vld [vmem:[#allocation5 + $0x70] sm:$0xff]
        %v505 = vld [vmem:[#allocation5 + $0x78] sm:$0xff]
        %v506 = vld [vmem:[#allocation5 + $0x80] sm:$0xff]
        %v507 = vld [vmem:[#allocation5 + $0x88] sm:$0xff]
        %v508 = vld [vmem:[#allocation5 + $0x90] sm:$0xff]
        %v509 = vld [vmem:[#allocation5 + $0x98] sm:$0xff]
        %v510 = vld [vmem:[#allocation5 + $0xa0] sm:$0xff]
        %v511 = vld [vmem:[#allocation5 + $0xa8] sm:$0xff]
        %v512 = vld [vmem:[#allocation5 + $0xb0] sm:$0xff]
        %v513 = vld [vmem:[#allocation5 + $0xb8] sm:$0xff]
        %v514 = vld [vmem:[#allocation5 + $0xc0] sm:$0xff]
        %v515 = vld [vmem:[#allocation5 + $0xc8] sm:$0xff]
        %v516 = vld [vmem:[#allocation5 + $0xd0] sm:$0xff]
        %v517 = vld [vmem:[#allocation5 + $0xd8] sm:$0xff]
        %v518 = vld [vmem:[#allocation5 + $0xe0] sm:$0xff]
        %v519 = vld [vmem:[#allocation5 + $0xe8] sm:$0xff]
        %v520 = vld [vmem:[#allocation5 + $0xf0] sm:$0xff]
        %v521 = vld [vmem:[#allocation5 + $0xf8] sm:$0xff]
        %v522 = vld [vmem:[%s8] sm:$0x3]
        %v524 = vlaneseq
        %v525 = vshrl.u32 %v524, 7
        %v526 = vsub.s32 0, %v525
        %v527 = vrot.slane %v522, %v526
        %v528 = vlaneseq
        %v529 = vshrl.u32 %v528, 7
        %v530 = vsub.s32 1, %v529
        %v531 = vrot.slane %v522, %v530
        %v566 = vunpack.c.l.b16 %v458
        %v567 = vunpack.c.h.b16 %v458
        %v568 = vunpack.c.l.b16 %v459
        %v569 = vunpack.c.h.b16 %v459
        %v570 = vunpack.c.l.b16 %v460
        %v571 = vunpack.c.h.b16 %v460
        %v572 = vunpack.c.l.b16 %v461
        %v573 = vunpack.c.h.b16 %v461
        %v574 = vunpack.c.l.b16 %v462
        %v575 = vunpack.c.h.b16 %v462
        %v576 = vunpack.c.l.b16 %v463
        %v577 = vunpack.c.h.b16 %v463
        %v578 = vunpack.c.l.b16 %v464
        %v579 = vunpack.c.h.b16 %v464
        %v580 = vunpack.c.l.b16 %v465
        %v581 = vunpack.c.h.b16 %v465
        %v582 = vunpack.c.l.b16 %v466
        %v583 = vunpack.c.h.b16 %v466
        %v584 = vunpack.c.l.b16 %v467
        %v585 = vunpack.c.h.b16 %v467
        %v586 = vunpack.c.l.b16 %v468
        %v587 = vunpack.c.h.b16 %v468
        %v588 = vunpack.c.l.b16 %v469
        %v589 = vunpack.c.h.b16 %v469
        %v590 = vunpack.c.l.b16 %v470
        %v591 = vunpack.c.h.b16 %v470
        %v592 = vunpack.c.l.b16 %v471
        %v593 = vunpack.c.h.b16 %v471
        %v594 = vunpack.c.l.b16 %v472
        %v595 = vunpack.c.h.b16 %v472
        %v596 = vunpack.c.l.b16 %v473
        %v597 = vunpack.c.h.b16 %v473
        %v598 = vunpack.c.l.b16 %v474
        %v599 = vunpack.c.h.b16 %v474
        %v600 = vunpack.c.l.b16 %v475
        %v601 = vunpack.c.h.b16 %v475
        %v602 = vunpack.c.l.b16 %v476
        %v603 = vunpack.c.h.b16 %v476
        %v604 = vunpack.c.l.b16 %v477
        %v605 = vunpack.c.h.b16 %v477
        %v606 = vunpack.c.l.b16 %v478
        %v607 = vunpack.c.h.b16 %v478
        %v608 = vunpack.c.l.b16 %v479
        %v609 = vunpack.c.h.b16 %v479
        %v610 = vunpack.c.l.b16 %v480
        %v611 = vunpack.c.h.b16 %v480
        %v612 = vunpack.c.l.b16 %v481
        %v613 = vunpack.c.h.b16 %v481
        %v614 = vunpack.c.l.b16 %v482
        %v615 = vunpack.c.h.b16 %v482
        %v616 = vunpack.c.l.b16 %v483
        %v617 = vunpack.c.h.b16 %v483
        %v618 = vunpack.c.l.b16 %v484
        %v619 = vunpack.c.h.b16 %v484
        %v620 = vunpack.c.l.b16 %v485
        %v621 = vunpack.c.h.b16 %v485
        %v622 = vunpack.c.l.b16 %v486
        %v623 = vunpack.c.h.b16 %v486
        %v624 = vunpack.c.l.b16 %v487
        %v625 = vunpack.c.h.b16 %v487
        %v626 = vunpack.c.l.b16 %v488
        %v627 = vunpack.c.h.b16 %v488
        %v628 = vunpack.c.l.b16 %v489
        %v629 = vunpack.c.h.b16 %v489
        %v630 = vpack.c.b16 %v568, %v566
        %v631 = vpack.c.b16 %v569, %v567
        %v632 = vpack.c.b16 %v572, %v570
        %v633 = vpack.c.b16 %v573, %v571
        %v634 = vpack.c.b16 %v576, %v574
        %v635 = vpack.c.b16 %v577, %v575
        %v636 = vpack.c.b16 %v580, %v578
        %v637 = vpack.c.b16 %v581, %v579
        %v638 = vpack.c.b16 %v584, %v582
        %v639 = vpack.c.b16 %v585, %v583
        %v640 = vpack.c.b16 %v588, %v586
        %v641 = vpack.c.b16 %v589, %v587
        %v642 = vpack.c.b16 %v592, %v590
        %v643 = vpack.c.b16 %v593, %v591
        %v644 = vpack.c.b16 %v596, %v594
        %v645 = vpack.c.b16 %v597, %v595
        %v646 = vpack.c.b16 %v600, %v598
        %v647 = vpack.c.b16 %v601, %v599
        %v648 = vpack.c.b16 %v604, %v602
        %v649 = vpack.c.b16 %v605, %v603
        %v650 = vpack.c.b16 %v608, %v606
        %v651 = vpack.c.b16 %v609, %v607
        %v652 = vpack.c.b16 %v612, %v610
        %v653 = vpack.c.b16 %v613, %v611
        %v654 = vpack.c.b16 %v616, %v614
        %v655 = vpack.c.b16 %v617, %v615
        %v656 = vpack.c.b16 %v620, %v618
        %v657 = vpack.c.b16 %v621, %v619
        %v658 = vpack.c.b16 %v624, %v622
        %v659 = vpack.c.b16 %v625, %v623
        %v660 = vpack.c.b16 %v628, %v626
        %v661 = vpack.c.b16 %v629, %v627
        %v726 = vunpack.c.l.b16 %v490
        %v727 = vunpack.c.h.b16 %v490
        %v728 = vunpack.c.l.b16 %v491
        %v729 = vunpack.c.h.b16 %v491
        %v730 = vunpack.c.l.b16 %v492
        %v731 = vunpack.c.h.b16 %v492
        %v732 = vunpack.c.l.b16 %v493
        %v733 = vunpack.c.h.b16 %v493
        %v734 = vunpack.c.l.b16 %v494
        %v735 = vunpack.c.h.b16 %v494
        %v736 = vunpack.c.l.b16 %v495
        %v737 = vunpack.c.h.b16 %v495
        %v738 = vunpack.c.l.b16 %v496
        %v739 = vunpack.c.h.b16 %v496
        %v740 = vunpack.c.l.b16 %v497
        %v741 = vunpack.c.h.b16 %v497
        %v742 = vunpack.c.l.b16 %v498
        %v743 = vunpack.c.h.b16 %v498
        %v744 = vunpack.c.l.b16 %v499
        %v745 = vunpack.c.h.b16 %v499
        %v746 = vunpack.c.l.b16 %v500
        %v747 = vunpack.c.h.b16 %v500
        %v748 = vunpack.c.l.b16 %v501
        %v749 = vunpack.c.h.b16 %v501
        %v750 = vunpack.c.l.b16 %v502
        %v751 = vunpack.c.h.b16 %v502
        %v752 = vunpack.c.l.b16 %v503
        %v753 = vunpack.c.h.b16 %v503
        %v754 = vunpack.c.l.b16 %v504
        %v755 = vunpack.c.h.b16 %v504
        %v756 = vunpack.c.l.b16 %v505
        %v757 = vunpack.c.h.b16 %v505
        %v758 = vunpack.c.l.b16 %v506
        %v759 = vunpack.c.h.b16 %v506
        %v760 = vunpack.c.l.b16 %v507
        %v761 = vunpack.c.h.b16 %v507
        %v762 = vunpack.c.l.b16 %v508
        %v763 = vunpack.c.h.b16 %v508
        %v764 = vunpack.c.l.b16 %v509
        %v765 = vunpack.c.h.b16 %v509
        %v766 = vunpack.c.l.b16 %v510
        %v767 = vunpack.c.h.b16 %v510
        %v768 = vunpack.c.l.b16 %v511
        %v769 = vunpack.c.h.b16 %v511
        %v770 = vunpack.c.l.b16 %v512
        %v771 = vunpack.c.h.b16 %v512
        %v772 = vunpack.c.l.b16 %v513
        %v773 = vunpack.c.h.b16 %v513
        %v774 = vunpack.c.l.b16 %v514
        %v775 = vunpack.c.h.b16 %v514
        %v776 = vunpack.c.l.b16 %v515
        %v777 = vunpack.c.h.b16 %v515
        %v778 = vunpack.c.l.b16 %v516
        %v779 = vunpack.c.h.b16 %v516
        %v780 = vunpack.c.l.b16 %v517
        %v781 = vunpack.c.h.b16 %v517
        %v782 = vunpack.c.l.b16 %v518
        %v783 = vunpack.c.h.b16 %v518
        %v784 = vunpack.c.l.b16 %v519
        %v785 = vunpack.c.h.b16 %v519
        %v786 = vunpack.c.l.b16 %v520
        %v787 = vunpack.c.h.b16 %v520
        %v788 = vunpack.c.l.b16 %v521
        %v789 = vunpack.c.h.b16 %v521
        %v790 = vpack.c.b16 %v728, %v726
        %v791 = vpack.c.b16 %v729, %v727
        %v792 = vpack.c.b16 %v732, %v730
        %v793 = vpack.c.b16 %v733, %v731
        %v794 = vpack.c.b16 %v736, %v734
        %v795 = vpack.c.b16 %v737, %v735
        %v796 = vpack.c.b16 %v740, %v738
        %v797 = vpack.c.b16 %v741, %v739
        %v798 = vpack.c.b16 %v744, %v742
        %v799 = vpack.c.b16 %v745, %v743
        %v800 = vpack.c.b16 %v748, %v746
        %v801 = vpack.c.b16 %v749, %v747
        %v802 = vpack.c.b16 %v752, %v750
        %v803 = vpack.c.b16 %v753, %v751
        %v804 = vpack.c.b16 %v756, %v754
        %v805 = vpack.c.b16 %v757, %v755
        %v806 = vpack.c.b16 %v760, %v758
        %v807 = vpack.c.b16 %v761, %v759
        %v808 = vpack.c.b16 %v764, %v762
        %v809 = vpack.c.b16 %v765, %v763
        %v810 = vpack.c.b16 %v768, %v766
        %v811 = vpack.c.b16 %v769, %v767
        %v812 = vpack.c.b16 %v772, %v770
        %v813 = vpack.c.b16 %v773, %v771
        %v814 = vpack.c.b16 %v776, %v774
        %v815 = vpack.c.b16 %v777, %v775
        %v816 = vpack.c.b16 %v780, %v778
        %v817 = vpack.c.b16 %v781, %v779
        %v818 = vpack.c.b16 %v784, %v782
        %v819 = vpack.c.b16 %v785, %v783
        %v820 = vpack.c.b16 %v788, %v786
        %v821 = vpack.c.b16 %v789, %v787
        %854 = vmatprep.subr.bf16.mxu0 %v805
        %855 = vmatpush1.bf16.msra.mxu0 %v804
        %856 = vmatprep.subr.bf16.mxu0 %v803
        %857 = vmatpush1.bf16.msra.mxu0 %v802
        %858 = vmatprep.subr.bf16.mxu0 %v801
        %859 = vmatpush1.bf16.msra.mxu0 %v800
        %860 = vmatprep.subr.bf16.mxu0 %v799
        %861 = vmatpush1.bf16.msra.mxu0 %v798
        %862 = vmatprep.subr.bf16.mxu0 %v797
        %863 = vmatpush1.bf16.msra.mxu0 %v796
        %864 = vmatprep.subr.bf16.mxu0 %v795
        %865 = vmatpush1.bf16.msra.mxu0 %v794
        %866 = vmatprep.subr.bf16.mxu0 %v793
        %867 = vmatpush1.bf16.msra.mxu0 %v792
        %868 = vmatprep.subr.bf16.mxu0 %v791
        %869 = vmatpush1.bf16.msra.mxu0 %v790
        %870 = vmatprep.subr.bf16.mxu0 %v821
        %871 = vmatpush2.bf16.msra.mxu0 %v820
        %872 = vmatprep.subr.bf16.mxu0 %v819
        %873 = vmatpush2.bf16.msra.mxu0 %v818
        %874 = vmatprep.subr.bf16.mxu0 %v817
        %875 = vmatpush2.bf16.msra.mxu0 %v816
        %876 = vmatprep.subr.bf16.mxu0 %v815
        %877 = vmatpush2.bf16.msra.mxu0 %v814
        %878 = vmatprep.subr.bf16.mxu0 %v813
        %879 = vmatpush2.bf16.msra.mxu0 %v812
        %880 = vmatprep.subr.bf16.mxu0 %v811
        %881 = vmatpush2.bf16.msra.mxu0 %v810
        %882 = vmatprep.subr.bf16.mxu0 %v809
        %883 = vmatpush2.bf16.msra.mxu0 %v808
        %884 = vmatprep.subr.bf16.mxu0 %v807
        %885 = vmatpush2.bf16.msra.mxu0 %v806
        %886 = vmatprep.mubr.bf16.mxu0 %v631
        %887 = vmatmul.mubr.bf16.gmra.mxu0 %v630
        %v888 = vpop.f32.mrf.mxu0
        %v889 = vadd.f32 %v527, %v888
        %v890 = vpop.f32.mrf.mxu0
        %v891 = vadd.f32 %v531, %v890
        %v892 = vpop.f32.mrf.mxu0
        %v893 = vadd.f32 %v527, %v892
        %v894 = vpop.f32.mrf.mxu0
        %v895 = vadd.f32 %v531, %v894
        %896 = vmatprep.mubr.bf16.mxu0 %v633
        %897 = vmatmul.mubr.bf16.gmra.mxu0 %v632
        %v898 = vpop.f32.mrf.mxu0
        %v899 = vadd.f32 %v527, %v898
        %v900 = vpop.f32.mrf.mxu0
        %v901 = vadd.f32 %v531, %v900
        %v902 = vpop.f32.mrf.mxu0
        %v903 = vadd.f32 %v527, %v902
        %v904 = vpop.f32.mrf.mxu0
        %v905 = vadd.f32 %v531, %v904
        %906 = vmatprep.mubr.bf16.mxu0 %v635
        %907 = vmatmul.mubr.bf16.gmra.mxu0 %v634
        %v908 = vpop.f32.mrf.mxu0
        %v909 = vadd.f32 %v527, %v908
        %v910 = vpop.f32.mrf.mxu0
        %v911 = vadd.f32 %v531, %v910
        %v912 = vpop.f32.mrf.mxu0
        %v913 = vadd.f32 %v527, %v912
        %v914 = vpop.f32.mrf.mxu0
        %v915 = vadd.f32 %v531, %v914
        %916 = vmatprep.mubr.bf16.mxu0 %v637
        %917 = vmatmul.mubr.bf16.gmra.mxu0 %v636
        %v918 = vpop.f32.mrf.mxu0
        %v919 = vadd.f32 %v527, %v918
        %v920 = vpop.f32.mrf.mxu0
        %v921 = vadd.f32 %v531, %v920
        %v922 = vpop.f32.mrf.mxu0
        %v923 = vadd.f32 %v527, %v922
        %v924 = vpop.f32.mrf.mxu0
        %v925 = vadd.f32 %v531, %v924
        %926 = vmatprep.mubr.bf16.mxu0 %v639
        %927 = vmatmul.mubr.bf16.gmra.mxu0 %v638
        %v928 = vpop.f32.mrf.mxu0
        %v929 = vadd.f32 %v527, %v928
        %v930 = vpop.f32.mrf.mxu0
        %v931 = vadd.f32 %v531, %v930
        %v932 = vpop.f32.mrf.mxu0
        %v933 = vadd.f32 %v527, %v932
        %v934 = vpop.f32.mrf.mxu0
        %v935 = vadd.f32 %v531, %v934
        %936 = vmatprep.mubr.bf16.mxu0 %v641
        %937 = vmatmul.mubr.bf16.gmra.mxu0 %v640
        %v938 = vpop.f32.mrf.mxu0
        %v939 = vadd.f32 %v527, %v938
        %v940 = vpop.f32.mrf.mxu0
        %v941 = vadd.f32 %v531, %v940
        %v942 = vpop.f32.mrf.mxu0
        %v943 = vadd.f32 %v527, %v942
        %v944 = vpop.f32.mrf.mxu0
        %v945 = vadd.f32 %v531, %v944
        %946 = vmatprep.mubr.bf16.mxu0 %v643
        %947 = vmatmul.mubr.bf16.gmra.mxu0 %v642
        %v948 = vpop.f32.mrf.mxu0
        %v949 = vadd.f32 %v527, %v948
        %v950 = vpop.f32.mrf.mxu0
        %v951 = vadd.f32 %v531, %v950
        %v952 = vpop.f32.mrf.mxu0
        %v953 = vadd.f32 %v527, %v952
        %v954 = vpop.f32.mrf.mxu0
        %v955 = vadd.f32 %v531, %v954
        %956 = vmatprep.mubr.bf16.mxu0 %v645
        %957 = vmatmul.mubr.bf16.gmra.mxu0 %v644
        %v958 = vpop.f32.mrf.mxu0
        %v959 = vadd.f32 %v527, %v958
        %v960 = vpop.f32.mrf.mxu0
        %v961 = vadd.f32 %v531, %v960
        %v962 = vpop.f32.mrf.mxu0
        %v963 = vadd.f32 %v527, %v962
        %v964 = vpop.f32.mrf.mxu0
        %v965 = vadd.f32 %v531, %v964
        %966 = vmatprep.mubr.bf16.mxu0 %v647
        %967 = vmatmul.mubr.bf16.gmra.mxu0 %v646
        %v968 = vpop.f32.mrf.mxu0
        %v969 = vadd.f32 %v527, %v968
        %v970 = vpop.f32.mrf.mxu0
        %v971 = vadd.f32 %v531, %v970
        %v972 = vpop.f32.mrf.mxu0
        %v973 = vadd.f32 %v527, %v972
        %v974 = vpop.f32.mrf.mxu0
        %v975 = vadd.f32 %v531, %v974
        %976 = vmatprep.mubr.bf16.mxu0 %v649
        %977 = vmatmul.mubr.bf16.gmra.mxu0 %v648
        %v978 = vpop.f32.mrf.mxu0
        %v979 = vadd.f32 %v527, %v978
        %v980 = vpop.f32.mrf.mxu0
        %v981 = vadd.f32 %v531, %v980
        %v982 = vpop.f32.mrf.mxu0
        %v983 = vadd.f32 %v527, %v982
        %v984 = vpop.f32.mrf.mxu0
        %v985 = vadd.f32 %v531, %v984
        %986 = vmatprep.mubr.bf16.mxu0 %v651
        %987 = vmatmul.mubr.bf16.gmra.mxu0 %v650
        %v988 = vpop.f32.mrf.mxu0
        %v989 = vadd.f32 %v527, %v988
        %v990 = vpop.f32.mrf.mxu0
        %v991 = vadd.f32 %v531, %v990
        %v992 = vpop.f32.mrf.mxu0
        %v993 = vadd.f32 %v527, %v992
        %v994 = vpop.f32.mrf.mxu0
        %v995 = vadd.f32 %v531, %v994
        %996 = vmatprep.mubr.bf16.mxu0 %v653
        %997 = vmatmul.mubr.bf16.gmra.mxu0 %v652
        %v998 = vpop.f32.mrf.mxu0
        %v999 = vadd.f32 %v527, %v998
        %v1000 = vpop.f32.mrf.mxu0
        %v1001 = vadd.f32 %v531, %v1000
        %v1002 = vpop.f32.mrf.mxu0
        %v1003 = vadd.f32 %v527, %v1002
        %v1004 = vpop.f32.mrf.mxu0
        %v1005 = vadd.f32 %v531, %v1004
        %1006 = vmatprep.mubr.bf16.mxu0 %v655
        %1007 = vmatmul.mubr.bf16.gmra.mxu0 %v654
        %v1008 = vpop.f32.mrf.mxu0
        %v1009 = vadd.f32 %v527, %v1008
        %v1010 = vpop.f32.mrf.mxu0
        %v1011 = vadd.f32 %v531, %v1010
        %v1012 = vpop.f32.mrf.mxu0
        %v1013 = vadd.f32 %v527, %v1012
        %v1014 = vpop.f32.mrf.mxu0
        %v1015 = vadd.f32 %v531, %v1014
        %1016 = vmatprep.mubr.bf16.mxu0 %v657
        %1017 = vmatmul.mubr.bf16.gmra.mxu0 %v656
        %v1018 = vpop.f32.mrf.mxu0
        %v1019 = vadd.f32 %v527, %v1018
        %v1020 = vpop.f32.mrf.mxu0
        %v1021 = vadd.f32 %v531, %v1020
        %v1022 = vpop.f32.mrf.mxu0
        %v1023 = vadd.f32 %v527, %v1022
        %v1024 = vpop.f32.mrf.mxu0
        %v1025 = vadd.f32 %v531, %v1024
        %1026 = vmatprep.mubr.bf16.mxu0 %v659
        %1027 = vmatmul.mubr.bf16.gmra.mxu0 %v658
        %v1028 = vpop.f32.mrf.mxu0
        %v1029 = vadd.f32 %v527, %v1028
        %v1030 = vpop.f32.mrf.mxu0
        %v1031 = vadd.f32 %v531, %v1030
        %v1032 = vpop.f32.mrf.mxu0
        %v1033 = vadd.f32 %v527, %v1032
        %v1034 = vpop.f32.mrf.mxu0
        %v1035 = vadd.f32 %v531, %v1034
        %1036 = vmatprep.mubr.bf16.mxu0 %v661
        %1037 = vmatmul.mubr.bf16.gmra.mxu0 %v660
        %v1038 = vpop.f32.mrf.mxu0
        %v1039 = vadd.f32 %v527, %v1038
        %v1040 = vpop.f32.mrf.mxu0
        %v1041 = vadd.f32 %v531, %v1040
        %v1042 = vpop.f32.mrf.mxu0
        %v1043 = vadd.f32 %v527, %v1042
        %v1044 = vpop.f32.mrf.mxu0
        %v1045 = vadd.f32 %v531, %v1044
        %1046 = vdwg.mxu0
        %v1047 = vpack.c.bf16 %v893, %v889
        %v1048 = vpack.c.bf16 %v895, %v891
        %v1049 = vpack.c.bf16 %v903, %v899
        %v1050 = vpack.c.bf16 %v905, %v901
        %v1051 = vpack.c.bf16 %v913, %v909
        %v1052 = vpack.c.bf16 %v915, %v911
        %v1053 = vpack.c.bf16 %v923, %v919
        %v1054 = vpack.c.bf16 %v925, %v921
        %v1055 = vpack.c.bf16 %v933, %v929
        %v1056 = vpack.c.bf16 %v935, %v931
        %v1057 = vpack.c.bf16 %v943, %v939
        %v1058 = vpack.c.bf16 %v945, %v941
        %v1059 = vpack.c.bf16 %v953, %v949
        %v1060 = vpack.c.bf16 %v955, %v951
        %v1061 = vpack.c.bf16 %v963, %v959
        %v1062 = vpack.c.bf16 %v965, %v961
        %v1063 = vpack.c.bf16 %v973, %v969
        %v1064 = vpack.c.bf16 %v975, %v971
        %v1065 = vpack.c.bf16 %v983, %v979
        %v1066 = vpack.c.bf16 %v985, %v981
        %v1067 = vpack.c.bf16 %v993, %v989
        %v1068 = vpack.c.bf16 %v995, %v991
        %v1069 = vpack.c.bf16 %v1003, %v999
        %v1070 = vpack.c.bf16 %v1005, %v1001
        %v1071 = vpack.c.bf16 %v1013, %v1009
        %v1072 = vpack.c.bf16 %v1015, %v1011
        %v1073 = vpack.c.bf16 %v1023, %v1019
        %v1074 = vpack.c.bf16 %v1025, %v1021
        %v1075 = vpack.c.bf16 %v1033, %v1029
        %v1076 = vpack.c.bf16 %v1035, %v1031
        %v1077 = vpack.c.bf16 %v1043, %v1039
        %v1078 = vpack.c.bf16 %v1045, %v1041
        %vm1079 = vcmp.ge.bf16.partialorder %v1047, 0
        %vm1080 = vcmp.ge.bf16.partialorder %v1048, 0
        %vm1081 = vcmp.ge.bf16.partialorder %v1049, 0
        %vm1082 = vcmp.ge.bf16.partialorder %v1050, 0
        %vm1083 = vcmp.ge.bf16.partialorder %v1051, 0
        %vm1084 = vcmp.ge.bf16.partialorder %v1052, 0
        %vm1085 = vcmp.ge.bf16.partialorder %v1053, 0
        %vm1086 = vcmp.ge.bf16.partialorder %v1054, 0
        %vm1087 = vcmp.ge.bf16.partialorder %v1055, 0
        %vm1088 = vcmp.ge.bf16.partialorder %v1056, 0
        %vm1089 = vcmp.ge.bf16.partialorder %v1057, 0
        %vm1090 = vcmp.ge.bf16.partialorder %v1058, 0
        %vm1091 = vcmp.ge.bf16.partialorder %v1059, 0
        %vm1092 = vcmp.ge.bf16.partialorder %v1060, 0
        %vm1093 = vcmp.ge.bf16.partialorder %v1061, 0
        %vm1094 = vcmp.ge.bf16.partialorder %v1062, 0
        %vm1095 = vcmp.ge.bf16.partialorder %v1063, 0
        %vm1096 = vcmp.ge.bf16.partialorder %v1064, 0
        %vm1097 = vcmp.ge.bf16.partialorder %v1065, 0
        %vm1098 = vcmp.ge.bf16.partialorder %v1066, 0
        %vm1099 = vcmp.ge.bf16.partialorder %v1067, 0
        %vm1100 = vcmp.ge.bf16.partialorder %v1068, 0
        %vm1101 = vcmp.ge.bf16.partialorder %v1069, 0
        %vm1102 = vcmp.ge.bf16.partialorder %v1070, 0
        %vm1103 = vcmp.ge.bf16.partialorder %v1071, 0
        %vm1104 = vcmp.ge.bf16.partialorder %v1072, 0
        %vm1105 = vcmp.ge.bf16.partialorder %v1073, 0
        %vm1106 = vcmp.ge.bf16.partialorder %v1074, 0
        %vm1107 = vcmp.ge.bf16.partialorder %v1075, 0
        %vm1108 = vcmp.ge.bf16.partialorder %v1076, 0
        %vm1109 = vcmp.ge.bf16.partialorder %v1077, 0
        %vm1110 = vcmp.ge.bf16.partialorder %v1078, 0
        %v1111 = vmul.bf16 %v1047, 1009007652
        %v1112 = vmul.bf16 %v1048, 1009007652
        %v1113 = vmul.bf16 %v1049, 1009007652
        %v1114 = vmul.bf16 %v1050, 1009007652
        %v1115 = vmul.bf16 %v1051, 1009007652
        %v1116 = vmul.bf16 %v1052, 1009007652
        %v1117 = vmul.bf16 %v1053, 1009007652
        %v1118 = vmul.bf16 %v1054, 1009007652
        %v1119 = vmul.bf16 %v1055, 1009007652
        %v1120 = vmul.bf16 %v1056, 1009007652
        %v1121 = vmul.bf16 %v1057, 1009007652
        %v1122 = vmul.bf16 %v1058, 1009007652
        %v1123 = vmul.bf16 %v1059, 1009007652
        %v1124 = vmul.bf16 %v1060, 1009007652
        %v1125 = vmul.bf16 %v1061, 1009007652
        %v1126 = vmul.bf16 %v1062, 1009007652
        %v1127 = vmul.bf16 %v1063, 1009007652
        %v1128 = vmul.bf16 %v1064, 1009007652
        %v1129 = vmul.bf16 %v1065, 1009007652
        %v1130 = vmul.bf16 %v1066, 1009007652
        %v1131 = vmul.bf16 %v1067, 1009007652
        %v1132 = vmul.bf16 %v1068, 1009007652
        %v1133 = vmul.bf16 %v1069, 1009007652
        %v1134 = vmul.bf16 %v1070, 1009007652
        %v1135 = vmul.bf16 %v1071, 1009007652
        %v1136 = vmul.bf16 %v1072, 1009007652
        %v1137 = vmul.bf16 %v1073, 1009007652
        %v1138 = vmul.bf16 %v1074, 1009007652
        %v1139 = vmul.bf16 %v1075, 1009007652
        %v1140 = vmul.bf16 %v1076, 1009007652
        %v1141 = vmul.bf16 %v1077, 1009007652
        %v1142 = vmul.bf16 %v1078, 1009007652
        %v1143 = vsel %vm1079, %v1047, %v1111
        %v1144 = vsel %vm1080, %v1048, %v1112
        %v1145 = vsel %vm1081, %v1049, %v1113
        %v1146 = vsel %vm1082, %v1050, %v1114
        %v1147 = vsel %vm1083, %v1051, %v1115
        %v1148 = vsel %vm1084, %v1052, %v1116
        %v1149 = vsel %vm1085, %v1053, %v1117
        %v1150 = vsel %vm1086, %v1054, %v1118
        %v1151 = vsel %vm1087, %v1055, %v1119
        %v1152 = vsel %vm1088, %v1056, %v1120
        %v1153 = vsel %vm1089, %v1057, %v1121
        %v1154 = vsel %vm1090, %v1058, %v1122
        %v1155 = vsel %vm1091, %v1059, %v1123
        %v1156 = vsel %vm1092, %v1060, %v1124
        %v1157 = vsel %vm1093, %v1061, %v1125
        %v1158 = vsel %vm1094, %v1062, %v1126
        %v1159 = vsel %vm1095, %v1063, %v1127
        %v1160 = vsel %vm1096, %v1064, %v1128
        %v1161 = vsel %vm1097, %v1065, %v1129
        %v1162 = vsel %vm1098, %v1066, %v1130
        %v1163 = vsel %vm1099, %v1067, %v1131
        %v1164 = vsel %vm1100, %v1068, %v1132
        %v1165 = vsel %vm1101, %v1069, %v1133
        %v1166 = vsel %vm1102, %v1070, %v1134
        %v1167 = vsel %vm1103, %v1071, %v1135
        %v1168 = vsel %vm1104, %v1072, %v1136
        %v1169 = vsel %vm1105, %v1073, %v1137
        %v1170 = vsel %vm1106, %v1074, %v1138
        %v1171 = vsel %vm1107, %v1075, %v1139
        %v1172 = vsel %vm1108, %v1076, %v1140
        %v1173 = vsel %vm1109, %v1077, %v1141
        %v1174 = vsel %vm1110, %v1078, %v1142
        %v1175 = vld [vmem:[#allocation7] sm:$0xff]
        %v1176 = vld [vmem:[#allocation7 + $0x8] sm:$0xff]
        %v1177 = vld [vmem:[#allocation7 + $0x10] sm:$0xff]
        %v1178 = vld [vmem:[#allocation7 + $0x18] sm:$0xff]
        %v1179 = vld [vmem:[#allocation7 + $0x20] sm:$0xff]
        %v1180 = vld [vmem:[#allocation7 + $0x28] sm:$0xff]
        %v1181 = vld [vmem:[#allocation7 + $0x30] sm:$0xff]
        %v1182 = vld [vmem:[#allocation7 + $0x38] sm:$0xff]
        %v1183 = vld [vmem:[#allocation7 + $0x40] sm:$0xff]
        %v1184 = vld [vmem:[#allocation7 + $0x48] sm:$0xff]
        %v1185 = vld [vmem:[#allocation7 + $0x50] sm:$0xff]
        %v1186 = vld [vmem:[#allocation7 + $0x58] sm:$0xff]
        %v1187 = vld [vmem:[#allocation7 + $0x60] sm:$0xff]
        %v1188 = vld [vmem:[#allocation7 + $0x68] sm:$0xff]
        %v1189 = vld [vmem:[#allocation7 + $0x70] sm:$0xff]
        %v1190 = vld [vmem:[#allocation7 + $0x78] sm:$0xff]
        %v1191 = vld [vmem:[#allocation7 + $0x80] sm:$0xff]
        %v1192 = vld [vmem:[#allocation7 + $0x88] sm:$0xff]
        %v1193 = vld [vmem:[#allocation7 + $0x90] sm:$0xff]
        %v1194 = vld [vmem:[#allocation7 + $0x98] sm:$0xff]
        %v1195 = vld [vmem:[#allocation7 + $0xa0] sm:$0xff]
        %v1196 = vld [vmem:[#allocation7 + $0xa8] sm:$0xff]
        %v1197 = vld [vmem:[#allocation7 + $0xb0] sm:$0xff]
        %v1198 = vld [vmem:[#allocation7 + $0xb8] sm:$0xff]
        %v1199 = vld [vmem:[#allocation7 + $0xc0] sm:$0xff]
        %v1200 = vld [vmem:[#allocation7 + $0xc8] sm:$0xff]
        %v1201 = vld [vmem:[#allocation7 + $0xd0] sm:$0xff]
        %v1202 = vld [vmem:[#allocation7 + $0xd8] sm:$0xff]
        %v1203 = vld [vmem:[#allocation7 + $0xe0] sm:$0xff]
        %v1204 = vld [vmem:[#allocation7 + $0xe8] sm:$0xff]
        %v1205 = vld [vmem:[#allocation7 + $0xf0] sm:$0xff]
        %v1206 = vld [vmem:[#allocation7 + $0xf8] sm:$0xff]
        %v1207 = vld [vmem:[%s8 + $0x2] sm:$0x3]
        %v1209 = vlaneseq
        %v1210 = vshrl.u32 %v1209, 7
        %v1211 = vsub.s32 0, %v1210
        %v1212 = vrot.slane %v1207, %v1211
        %v1213 = vlaneseq
        %v1214 = vshrl.u32 %v1213, 7
        %v1215 = vsub.s32 1, %v1214
        %v1216 = vrot.slane %v1207, %v1215
        %v1251 = vunpack.c.l.b16 %v1175
        %v1252 = vunpack.c.h.b16 %v1175
        %v1253 = vunpack.c.l.b16 %v1176
        %v1254 = vunpack.c.h.b16 %v1176
        %v1255 = vunpack.c.l.b16 %v1177
        %v1256 = vunpack.c.h.b16 %v1177
        %v1257 = vunpack.c.l.b16 %v1178
        %v1258 = vunpack.c.h.b16 %v1178
        %v1259 = vunpack.c.l.b16 %v1179
        %v1260 = vunpack.c.h.b16 %v1179
        %v1261 = vunpack.c.l.b16 %v1180
        %v1262 = vunpack.c.h.b16 %v1180
        %v1263 = vunpack.c.l.b16 %v1181
        %v1264 = vunpack.c.h.b16 %v1181
        %v1265 = vunpack.c.l.b16 %v1182
        %v1266 = vunpack.c.h.b16 %v1182
        %v1267 = vunpack.c.l.b16 %v1183
        %v1268 = vunpack.c.h.b16 %v1183
        %v1269 = vunpack.c.l.b16 %v1184
        %v1270 = vunpack.c.h.b16 %v1184
        %v1271 = vunpack.c.l.b16 %v1185
        %v1272 = vunpack.c.h.b16 %v1185
        %v1273 = vunpack.c.l.b16 %v1186
        %v1274 = vunpack.c.h.b16 %v1186
        %v1275 = vunpack.c.l.b16 %v1187
        %v1276 = vunpack.c.h.b16 %v1187
        %v1277 = vunpack.c.l.b16 %v1188
        %v1278 = vunpack.c.h.b16 %v1188
        %v1279 = vunpack.c.l.b16 %v1189
        %v1280 = vunpack.c.h.b16 %v1189
        %v1281 = vunpack.c.l.b16 %v1190
        %v1282 = vunpack.c.h.b16 %v1190
        %v1283 = vunpack.c.l.b16 %v1191
        %v1284 = vunpack.c.h.b16 %v1191
        %v1285 = vunpack.c.l.b16 %v1192
        %v1286 = vunpack.c.h.b16 %v1192
        %v1287 = vunpack.c.l.b16 %v1193
        %v1288 = vunpack.c.h.b16 %v1193
        %v1289 = vunpack.c.l.b16 %v1194
        %v1290 = vunpack.c.h.b16 %v1194
        %v1291 = vunpack.c.l.b16 %v1195
        %v1292 = vunpack.c.h.b16 %v1195
        %v1293 = vunpack.c.l.b16 %v1196
        %v1294 = vunpack.c.h.b16 %v1196
        %v1295 = vunpack.c.l.b16 %v1197
        %v1296 = vunpack.c.h.b16 %v1197
        %v1297 = vunpack.c.l.b16 %v1198
        %v1298 = vunpack.c.h.b16 %v1198
        %v1299 = vunpack.c.l.b16 %v1199
        %v1300 = vunpack.c.h.b16 %v1199
        %v1301 = vunpack.c.l.b16 %v1200
        %v1302 = vunpack.c.h.b16 %v1200
        %v1303 = vunpack.c.l.b16 %v1201
        %v1304 = vunpack.c.h.b16 %v1201
        %v1305 = vunpack.c.l.b16 %v1202
        %v1306 = vunpack.c.h.b16 %v1202
        %v1307 = vunpack.c.l.b16 %v1203
        %v1308 = vunpack.c.h.b16 %v1203
        %v1309 = vunpack.c.l.b16 %v1204
        %v1310 = vunpack.c.h.b16 %v1204
        %v1311 = vunpack.c.l.b16 %v1205
        %v1312 = vunpack.c.h.b16 %v1205
        %v1313 = vunpack.c.l.b16 %v1206
        %v1314 = vunpack.c.h.b16 %v1206
        %v1315 = vpack.c.b16 %v1253, %v1251
        %v1316 = vpack.c.b16 %v1254, %v1252
        %v1317 = vpack.c.b16 %v1257, %v1255
        %v1318 = vpack.c.b16 %v1258, %v1256
        %v1319 = vpack.c.b16 %v1261, %v1259
        %v1320 = vpack.c.b16 %v1262, %v1260
        %v1321 = vpack.c.b16 %v1265, %v1263
        %v1322 = vpack.c.b16 %v1266, %v1264
        %v1323 = vpack.c.b16 %v1269, %v1267
        %v1324 = vpack.c.b16 %v1270, %v1268
        %v1325 = vpack.c.b16 %v1273, %v1271
        %v1326 = vpack.c.b16 %v1274, %v1272
        %v1327 = vpack.c.b16 %v1277, %v1275
        %v1328 = vpack.c.b16 %v1278, %v1276
        %v1329 = vpack.c.b16 %v1281, %v1279
        %v1330 = vpack.c.b16 %v1282, %v1280
        %v1331 = vpack.c.b16 %v1285, %v1283
        %v1332 = vpack.c.b16 %v1286, %v1284
        %v1333 = vpack.c.b16 %v1289, %v1287
        %v1334 = vpack.c.b16 %v1290, %v1288
        %v1335 = vpack.c.b16 %v1293, %v1291
        %v1336 = vpack.c.b16 %v1294, %v1292
        %v1337 = vpack.c.b16 %v1297, %v1295
        %v1338 = vpack.c.b16 %v1298, %v1296
        %v1339 = vpack.c.b16 %v1301, %v1299
        %v1340 = vpack.c.b16 %v1302, %v1300
        %v1341 = vpack.c.b16 %v1305, %v1303
        %v1342 = vpack.c.b16 %v1306, %v1304
        %v1343 = vpack.c.b16 %v1309, %v1307
        %v1344 = vpack.c.b16 %v1310, %v1308
        %v1345 = vpack.c.b16 %v1313, %v1311
        %v1346 = vpack.c.b16 %v1314, %v1312
        %1379 = vmatprep.subr.bf16.mxu0 %v1330
        %1380 = vmatpush1.bf16.msra.mxu0 %v1329
        %1381 = vmatprep.subr.bf16.mxu0 %v1328
        %1382 = vmatpush1.bf16.msra.mxu0 %v1327
        %1383 = vmatprep.subr.bf16.mxu0 %v1326
        %1384 = vmatpush1.bf16.msra.mxu0 %v1325
        %1385 = vmatprep.subr.bf16.mxu0 %v1324
        %1386 = vmatpush1.bf16.msra.mxu0 %v1323
        %1387 = vmatprep.subr.bf16.mxu0 %v1322
        %1388 = vmatpush1.bf16.msra.mxu0 %v1321
        %1389 = vmatprep.subr.bf16.mxu0 %v1320
        %1390 = vmatpush1.bf16.msra.mxu0 %v1319
        %1391 = vmatprep.subr.bf16.mxu0 %v1318
        %1392 = vmatpush1.bf16.msra.mxu0 %v1317
        %1393 = vmatprep.subr.bf16.mxu0 %v1316
        %1394 = vmatpush1.bf16.msra.mxu0 %v1315
        %1395 = vmatprep.subr.bf16.mxu0 %v1346
        %1396 = vmatpush2.bf16.msra.mxu0 %v1345
        %1397 = vmatprep.subr.bf16.mxu0 %v1344
        %1398 = vmatpush2.bf16.msra.mxu0 %v1343
        %1399 = vmatprep.subr.bf16.mxu0 %v1342
        %1400 = vmatpush2.bf16.msra.mxu0 %v1341
        %1401 = vmatprep.subr.bf16.mxu0 %v1340
        %1402 = vmatpush2.bf16.msra.mxu0 %v1339
        %1403 = vmatprep.subr.bf16.mxu0 %v1338
        %1404 = vmatpush2.bf16.msra.mxu0 %v1337
        %1405 = vmatprep.subr.bf16.mxu0 %v1336
        %1406 = vmatpush2.bf16.msra.mxu0 %v1335
        %1407 = vmatprep.subr.bf16.mxu0 %v1334
        %1408 = vmatpush2.bf16.msra.mxu0 %v1333
        %1409 = vmatprep.subr.bf16.mxu0 %v1332
        %1410 = vmatpush2.bf16.msra.mxu0 %v1331
        %1411 = vmatprep.mubr.bf16.mxu0 %v1144
        %1412 = vmatmul.mubr.bf16.gmra.mxu0 %v1143
        %v1413 = vpop.f32.mrf.mxu0
        %v1414 = vadd.f32 %v1212, %v1413
        %v1415 = vpop.f32.mrf.mxu0
        %v1416 = vadd.f32 %v1216, %v1415
        %v1417 = vpop.f32.mrf.mxu0
        %v1418 = vadd.f32 %v1212, %v1417
        %v1419 = vpop.f32.mrf.mxu0
        %v1420 = vadd.f32 %v1216, %v1419
        %1421 = vmatprep.mubr.bf16.mxu0 %v1146
        %1422 = vmatmul.mubr.bf16.gmra.mxu0 %v1145
        %v1423 = vpop.f32.mrf.mxu0
        %v1424 = vadd.f32 %v1212, %v1423
        %v1425 = vpop.f32.mrf.mxu0
        %v1426 = vadd.f32 %v1216, %v1425
        %v1427 = vpop.f32.mrf.mxu0
        %v1428 = vadd.f32 %v1212, %v1427
        %v1429 = vpop.f32.mrf.mxu0
        %v1430 = vadd.f32 %v1216, %v1429
        %1431 = vmatprep.mubr.bf16.mxu0 %v1148
        %1432 = vmatmul.mubr.bf16.gmra.mxu0 %v1147
        %v1433 = vpop.f32.mrf.mxu0
        %v1434 = vadd.f32 %v1212, %v1433
        %v1435 = vpop.f32.mrf.mxu0
        %v1436 = vadd.f32 %v1216, %v1435
        %v1437 = vpop.f32.mrf.mxu0
        %v1438 = vadd.f32 %v1212, %v1437
        %v1439 = vpop.f32.mrf.mxu0
        %v1440 = vadd.f32 %v1216, %v1439
        %1441 = vmatprep.mubr.bf16.mxu0 %v1150
        %1442 = vmatmul.mubr.bf16.gmra.mxu0 %v1149
        %v1443 = vpop.f32.mrf.mxu0
        %v1444 = vadd.f32 %v1212, %v1443
        %v1445 = vpop.f32.mrf.mxu0
        %v1446 = vadd.f32 %v1216, %v1445
        %v1447 = vpop.f32.mrf.mxu0
        %v1448 = vadd.f32 %v1212, %v1447
        %v1449 = vpop.f32.mrf.mxu0
        %v1450 = vadd.f32 %v1216, %v1449
        %1451 = vmatprep.mubr.bf16.mxu0 %v1152
        %1452 = vmatmul.mubr.bf16.gmra.mxu0 %v1151
        %v1453 = vpop.f32.mrf.mxu0
        %v1454 = vadd.f32 %v1212, %v1453
        %v1455 = vpop.f32.mrf.mxu0
        %v1456 = vadd.f32 %v1216, %v1455
        %v1457 = vpop.f32.mrf.mxu0
        %v1458 = vadd.f32 %v1212, %v1457
        %v1459 = vpop.f32.mrf.mxu0
        %v1460 = vadd.f32 %v1216, %v1459
        %1461 = vmatprep.mubr.bf16.mxu0 %v1154
        %1462 = vmatmul.mubr.bf16.gmra.mxu0 %v1153
        %v1463 = vpop.f32.mrf.mxu0
        %v1464 = vadd.f32 %v1212, %v1463
        %v1465 = vpop.f32.mrf.mxu0
        %v1466 = vadd.f32 %v1216, %v1465
        %v1467 = vpop.f32.mrf.mxu0
        %v1468 = vadd.f32 %v1212, %v1467
        %v1469 = vpop.f32.mrf.mxu0
        %v1470 = vadd.f32 %v1216, %v1469
        %1471 = vmatprep.mubr.bf16.mxu0 %v1156
        %1472 = vmatmul.mubr.bf16.gmra.mxu0 %v1155
        %v1473 = vpop.f32.mrf.mxu0
        %v1474 = vadd.f32 %v1212, %v1473
        %v1475 = vpop.f32.mrf.mxu0
        %v1476 = vadd.f32 %v1216, %v1475
        %v1477 = vpop.f32.mrf.mxu0
        %v1478 = vadd.f32 %v1212, %v1477
        %v1479 = vpop.f32.mrf.mxu0
        %v1480 = vadd.f32 %v1216, %v1479
        %1481 = vmatprep.mubr.bf16.mxu0 %v1158
        %1482 = vmatmul.mubr.bf16.gmra.mxu0 %v1157
        %v1483 = vpop.f32.mrf.mxu0
        %v1484 = vadd.f32 %v1212, %v1483
        %v1485 = vpop.f32.mrf.mxu0
        %v1486 = vadd.f32 %v1216, %v1485
        %v1487 = vpop.f32.mrf.mxu0
        %v1488 = vadd.f32 %v1212, %v1487
        %v1489 = vpop.f32.mrf.mxu0
        %v1490 = vadd.f32 %v1216, %v1489
        %1491 = vmatprep.mubr.bf16.mxu0 %v1160
        %1492 = vmatmul.mubr.bf16.gmra.mxu0 %v1159
        %v1493 = vpop.f32.mrf.mxu0
        %v1494 = vadd.f32 %v1212, %v1493
        %v1495 = vpop.f32.mrf.mxu0
        %v1496 = vadd.f32 %v1216, %v1495
        %v1497 = vpop.f32.mrf.mxu0
        %v1498 = vadd.f32 %v1212, %v1497
        %v1499 = vpop.f32.mrf.mxu0
        %v1500 = vadd.f32 %v1216, %v1499
        %1501 = vmatprep.mubr.bf16.mxu0 %v1162
        %1502 = vmatmul.mubr.bf16.gmra.mxu0 %v1161
        %v1503 = vpop.f32.mrf.mxu0
        %v1504 = vadd.f32 %v1212, %v1503
        %v1505 = vpop.f32.mrf.mxu0
        %v1506 = vadd.f32 %v1216, %v1505
        %v1507 = vpop.f32.mrf.mxu0
        %v1508 = vadd.f32 %v1212, %v1507
        %v1509 = vpop.f32.mrf.mxu0
        %v1510 = vadd.f32 %v1216, %v1509
        %1511 = vmatprep.mubr.bf16.mxu0 %v1164
        %1512 = vmatmul.mubr.bf16.gmra.mxu0 %v1163
        %v1513 = vpop.f32.mrf.mxu0
        %v1514 = vadd.f32 %v1212, %v1513
        %v1515 = vpop.f32.mrf.mxu0
        %v1516 = vadd.f32 %v1216, %v1515
        %v1517 = vpop.f32.mrf.mxu0
        %v1518 = vadd.f32 %v1212, %v1517
        %v1519 = vpop.f32.mrf.mxu0
        %v1520 = vadd.f32 %v1216, %v1519
        %1521 = vmatprep.mubr.bf16.mxu0 %v1166
        %1522 = vmatmul.mubr.bf16.gmra.mxu0 %v1165
        %v1523 = vpop.f32.mrf.mxu0
        %v1524 = vadd.f32 %v1212, %v1523
        %v1525 = vpop.f32.mrf.mxu0
        %v1526 = vadd.f32 %v1216, %v1525
        %v1527 = vpop.f32.mrf.mxu0
        %v1528 = vadd.f32 %v1212, %v1527
        %v1529 = vpop.f32.mrf.mxu0
        %v1530 = vadd.f32 %v1216, %v1529
        %1531 = vmatprep.mubr.bf16.mxu0 %v1168
        %1532 = vmatmul.mubr.bf16.gmra.mxu0 %v1167
        %v1533 = vpop.f32.mrf.mxu0
        %v1534 = vadd.f32 %v1212, %v1533
        %v1535 = vpop.f32.mrf.mxu0
        %v1536 = vadd.f32 %v1216, %v1535
        %v1537 = vpop.f32.mrf.mxu0
        %v1538 = vadd.f32 %v1212, %v1537
        %v1539 = vpop.f32.mrf.mxu0
        %v1540 = vadd.f32 %v1216, %v1539
        %1541 = vmatprep.mubr.bf16.mxu0 %v1170
        %1542 = vmatmul.mubr.bf16.gmra.mxu0 %v1169
        %v1543 = vpop.f32.mrf.mxu0
        %v1544 = vadd.f32 %v1212, %v1543
        %v1545 = vpop.f32.mrf.mxu0
        %v1546 = vadd.f32 %v1216, %v1545
        %v1547 = vpop.f32.mrf.mxu0
        %v1548 = vadd.f32 %v1212, %v1547
        %v1549 = vpop.f32.mrf.mxu0
        %v1550 = vadd.f32 %v1216, %v1549
        %1551 = vmatprep.mubr.bf16.mxu0 %v1172
        %1552 = vmatmul.mubr.bf16.gmra.mxu0 %v1171
        %v1553 = vpop.f32.mrf.mxu0
        %v1554 = vadd.f32 %v1212, %v1553
        %v1555 = vpop.f32.mrf.mxu0
        %v1556 = vadd.f32 %v1216, %v1555
        %v1557 = vpop.f32.mrf.mxu0
        %v1558 = vadd.f32 %v1212, %v1557
        %v1559 = vpop.f32.mrf.mxu0
        %v1560 = vadd.f32 %v1216, %v1559
        %1561 = vmatprep.mubr.bf16.mxu0 %v1174
        %1562 = vmatmul.mubr.bf16.gmra.mxu0 %v1173
        %v1563 = vpop.f32.mrf.mxu0
        %v1564 = vadd.f32 %v1212, %v1563
        %v1565 = vpop.f32.mrf.mxu0
        %v1566 = vadd.f32 %v1216, %v1565
        %v1567 = vpop.f32.mrf.mxu0
        %v1568 = vadd.f32 %v1212, %v1567
        %v1569 = vpop.f32.mrf.mxu0
        %v1570 = vadd.f32 %v1216, %v1569
        %1571 = vdwg.mxu0
        %v1572 = vpack.c.bf16 %v1418, %v1414
        %v1573 = vpack.c.bf16 %v1420, %v1416
        %v1574 = vpack.c.bf16 %v1428, %v1424
        %v1575 = vpack.c.bf16 %v1430, %v1426
        %v1576 = vpack.c.bf16 %v1438, %v1434
        %v1577 = vpack.c.bf16 %v1440, %v1436
        %v1578 = vpack.c.bf16 %v1448, %v1444
        %v1579 = vpack.c.bf16 %v1450, %v1446
        %v1580 = vpack.c.bf16 %v1458, %v1454
        %v1581 = vpack.c.bf16 %v1460, %v1456
        %v1582 = vpack.c.bf16 %v1468, %v1464
        %v1583 = vpack.c.bf16 %v1470, %v1466
        %v1584 = vpack.c.bf16 %v1478, %v1474
        %v1585 = vpack.c.bf16 %v1480, %v1476
        %v1586 = vpack.c.bf16 %v1488, %v1484
        %v1587 = vpack.c.bf16 %v1490, %v1486
        %v1588 = vpack.c.bf16 %v1498, %v1494
        %v1589 = vpack.c.bf16 %v1500, %v1496
        %v1590 = vpack.c.bf16 %v1508, %v1504
        %v1591 = vpack.c.bf16 %v1510, %v1506
        %v1592 = vpack.c.bf16 %v1518, %v1514
        %v1593 = vpack.c.bf16 %v1520, %v1516
        %v1594 = vpack.c.bf16 %v1528, %v1524
        %v1595 = vpack.c.bf16 %v1530, %v1526
        %v1596 = vpack.c.bf16 %v1538, %v1534
        %v1597 = vpack.c.bf16 %v1540, %v1536
        %v1598 = vpack.c.bf16 %v1548, %v1544
        %v1599 = vpack.c.bf16 %v1550, %v1546
        %v1600 = vpack.c.bf16 %v1558, %v1554
        %v1601 = vpack.c.bf16 %v1560, %v1556
        %v1602 = vpack.c.bf16 %v1568, %v1564
        %v1603 = vpack.c.bf16 %v1570, %v1566
        %vm1604 = vcmp.ge.bf16.partialorder %v1572, 0
        %vm1605 = vcmp.ge.bf16.partialorder %v1573, 0
        %vm1606 = vcmp.ge.bf16.partialorder %v1574, 0
        %vm1607 = vcmp.ge.bf16.partialorder %v1575, 0
        %vm1608 = vcmp.ge.bf16.partialorder %v1576, 0
        %vm1609 = vcmp.ge.bf16.partialorder %v1577, 0
        %vm1610 = vcmp.ge.bf16.partialorder %v1578, 0
        %vm1611 = vcmp.ge.bf16.partialorder %v1579, 0
        %vm1612 = vcmp.ge.bf16.partialorder %v1580, 0
        %vm1613 = vcmp.ge.bf16.partialorder %v1581, 0
        %vm1614 = vcmp.ge.bf16.partialorder %v1582, 0
        %vm1615 = vcmp.ge.bf16.partialorder %v1583, 0
        %vm1616 = vcmp.ge.bf16.partialorder %v1584, 0
        %vm1617 = vcmp.ge.bf16.partialorder %v1585, 0
        %vm1618 = vcmp.ge.bf16.partialorder %v1586, 0
        %vm1619 = vcmp.ge.bf16.partialorder %v1587, 0
        %vm1620 = vcmp.ge.bf16.partialorder %v1588, 0
        %vm1621 = vcmp.ge.bf16.partialorder %v1589, 0
        %vm1622 = vcmp.ge.bf16.partialorder %v1590, 0
        %vm1623 = vcmp.ge.bf16.partialorder %v1591, 0
        %vm1624 = vcmp.ge.bf16.partialorder %v1592, 0
        %vm1625 = vcmp.ge.bf16.partialorder %v1593, 0
        %vm1626 = vcmp.ge.bf16.partialorder %v1594, 0
        %vm1627 = vcmp.ge.bf16.partialorder %v1595, 0
        %vm1628 = vcmp.ge.bf16.partialorder %v1596, 0
        %vm1629 = vcmp.ge.bf16.partialorder %v1597, 0
        %vm1630 = vcmp.ge.bf16.partialorder %v1598, 0
        %vm1631 = vcmp.ge.bf16.partialorder %v1599, 0
        %vm1632 = vcmp.ge.bf16.partialorder %v1600, 0
        %vm1633 = vcmp.ge.bf16.partialorder %v1601, 0
        %vm1634 = vcmp.ge.bf16.partialorder %v1602, 0
        %vm1635 = vcmp.ge.bf16.partialorder %v1603, 0
        %v1636 = vmul.bf16 %v1572, 1009007652
        %v1637 = vmul.bf16 %v1573, 1009007652
        %v1638 = vmul.bf16 %v1574, 1009007652
        %v1639 = vmul.bf16 %v1575, 1009007652
        %v1640 = vmul.bf16 %v1576, 1009007652
        %v1641 = vmul.bf16 %v1577, 1009007652
        %v1642 = vmul.bf16 %v1578, 1009007652
        %v1643 = vmul.bf16 %v1579, 1009007652
        %v1644 = vmul.bf16 %v1580, 1009007652
        %v1645 = vmul.bf16 %v1581, 1009007652
        %v1646 = vmul.bf16 %v1582, 1009007652
        %v1647 = vmul.bf16 %v1583, 1009007652
        %v1648 = vmul.bf16 %v1584, 1009007652
        %v1649 = vmul.bf16 %v1585, 1009007652
        %v1650 = vmul.bf16 %v1586, 1009007652
        %v1651 = vmul.bf16 %v1587, 1009007652
        %v1652 = vmul.bf16 %v1588, 1009007652
        %v1653 = vmul.bf16 %v1589, 1009007652
        %v1654 = vmul.bf16 %v1590, 1009007652
        %v1655 = vmul.bf16 %v1591, 1009007652
        %v1656 = vmul.bf16 %v1592, 1009007652
        %v1657 = vmul.bf16 %v1593, 1009007652
        %v1658 = vmul.bf16 %v1594, 1009007652
        %v1659 = vmul.bf16 %v1595, 1009007652
        %v1660 = vmul.bf16 %v1596, 1009007652
        %v1661 = vmul.bf16 %v1597, 1009007652
        %v1662 = vmul.bf16 %v1598, 1009007652
        %v1663 = vmul.bf16 %v1599, 1009007652
        %v1664 = vmul.bf16 %v1600, 1009007652
        %v1665 = vmul.bf16 %v1601, 1009007652
        %v1666 = vmul.bf16 %v1602, 1009007652
        %v1667 = vmul.bf16 %v1603, 1009007652
        %v1668 = vsel %vm1604, %v1572, %v1636
        %v1669 = vsel %vm1605, %v1573, %v1637
        %v1670 = vsel %vm1606, %v1574, %v1638
        %v1671 = vsel %vm1607, %v1575, %v1639
        %v1672 = vsel %vm1608, %v1576, %v1640
        %v1673 = vsel %vm1609, %v1577, %v1641
        %v1674 = vsel %vm1610, %v1578, %v1642
        %v1675 = vsel %vm1611, %v1579, %v1643
        %v1676 = vsel %vm1612, %v1580, %v1644
        %v1677 = vsel %vm1613, %v1581, %v1645
        %v1678 = vsel %vm1614, %v1582, %v1646
        %v1679 = vsel %vm1615, %v1583, %v1647
        %v1680 = vsel %vm1616, %v1584, %v1648
        %v1681 = vsel %vm1617, %v1585, %v1649
        %v1682 = vsel %vm1618, %v1586, %v1650
        %v1683 = vsel %vm1619, %v1587, %v1651
        %v1684 = vsel %vm1620, %v1588, %v1652
        %v1685 = vsel %vm1621, %v1589, %v1653
        %v1686 = vsel %vm1622, %v1590, %v1654
        %v1687 = vsel %vm1623, %v1591, %v1655
        %v1688 = vsel %vm1624, %v1592, %v1656
        %v1689 = vsel %vm1625, %v1593, %v1657
        %v1690 = vsel %vm1626, %v1594, %v1658
        %v1691 = vsel %vm1627, %v1595, %v1659
        %v1692 = vsel %vm1628, %v1596, %v1660
        %v1693 = vsel %vm1629, %v1597, %v1661
        %v1694 = vsel %vm1630, %v1598, %v1662
        %v1695 = vsel %vm1631, %v1599, %v1663
        %v1696 = vsel %vm1632, %v1600, %v1664
        %v1697 = vsel %vm1633, %v1601, %v1665
        %v1698 = vsel %vm1634, %v1602, %v1666
        %v1699 = vsel %vm1635, %v1603, %v1667
        %v1700 = vadd.bf16 %v1143, %v1668
        %v1701 = vadd.bf16 %v1144, %v1669
        %v1702 = vadd.bf16 %v1145, %v1670
        %v1703 = vadd.bf16 %v1146, %v1671
        %v1704 = vadd.bf16 %v1147, %v1672
        %v1705 = vadd.bf16 %v1148, %v1673
        %v1706 = vadd.bf16 %v1149, %v1674
        %v1707 = vadd.bf16 %v1150, %v1675
        %v1708 = vadd.bf16 %v1151, %v1676
        %v1709 = vadd.bf16 %v1152, %v1677
        %v1710 = vadd.bf16 %v1153, %v1678
        %v1711 = vadd.bf16 %v1154, %v1679
        %v1712 = vadd.bf16 %v1155, %v1680
        %v1713 = vadd.bf16 %v1156, %v1681
        %v1714 = vadd.bf16 %v1157, %v1682
        %v1715 = vadd.bf16 %v1158, %v1683
        %v1716 = vadd.bf16 %v1159, %v1684
        %v1717 = vadd.bf16 %v1160, %v1685
        %v1718 = vadd.bf16 %v1161, %v1686
        %v1719 = vadd.bf16 %v1162, %v1687
        %v1720 = vadd.bf16 %v1163, %v1688
        %v1721 = vadd.bf16 %v1164, %v1689
        %v1722 = vadd.bf16 %v1165, %v1690
        %v1723 = vadd.bf16 %v1166, %v1691
        %v1724 = vadd.bf16 %v1167, %v1692
        %v1725 = vadd.bf16 %v1168, %v1693
        %v1726 = vadd.bf16 %v1169, %v1694
        %v1727 = vadd.bf16 %v1170, %v1695
        %v1728 = vadd.bf16 %v1171, %v1696
        %v1729 = vadd.bf16 %v1172, %v1697
        %v1730 = vadd.bf16 %v1173, %v1698
        %v1731 = vadd.bf16 %v1174, %v1699
        %v1732 = vld [vmem:[#allocation8] sm:$0xff]
        %v1733 = vld [vmem:[#allocation8 + $0x8] sm:$0xff]
        %v1734 = vld [vmem:[#allocation8 + $0x10] sm:$0xff]
        %v1735 = vld [vmem:[#allocation8 + $0x18] sm:$0xff]
        %v1736 = vld [vmem:[#allocation8 + $0x20] sm:$0xff]
        %v1737 = vld [vmem:[#allocation8 + $0x28] sm:$0xff]
        %v1738 = vld [vmem:[#allocation8 + $0x30] sm:$0xff]
        %v1739 = vld [vmem:[#allocation8 + $0x38] sm:$0xff]
        %v1740 = vld [vmem:[#allocation8 + $0x40] sm:$0xff]
        %v1741 = vld [vmem:[#allocation8 + $0x48] sm:$0xff]
        %v1742 = vld [vmem:[#allocation8 + $0x50] sm:$0xff]
        %v1743 = vld [vmem:[#allocation8 + $0x58] sm:$0xff]
        %v1744 = vld [vmem:[#allocation8 + $0x60] sm:$0xff]
        %v1745 = vld [vmem:[#allocation8 + $0x68] sm:$0xff]
        %v1746 = vld [vmem:[#allocation8 + $0x70] sm:$0xff]
        %v1747 = vld [vmem:[#allocation8 + $0x78] sm:$0xff]
        %v1748 = vld [vmem:[#allocation8 + $0x80] sm:$0xff]
        %v1749 = vld [vmem:[#allocation8 + $0x88] sm:$0xff]
        %v1750 = vld [vmem:[#allocation8 + $0x90] sm:$0xff]
        %v1751 = vld [vmem:[#allocation8 + $0x98] sm:$0xff]
        %v1752 = vld [vmem:[#allocation8 + $0xa0] sm:$0xff]
        %v1753 = vld [vmem:[#allocation8 + $0xa8] sm:$0xff]
        %v1754 = vld [vmem:[#allocation8 + $0xb0] sm:$0xff]
        %v1755 = vld [vmem:[#allocation8 + $0xb8] sm:$0xff]
        %v1756 = vld [vmem:[#allocation8 + $0xc0] sm:$0xff]
        %v1757 = vld [vmem:[#allocation8 + $0xc8] sm:$0xff]
        %v1758 = vld [vmem:[#allocation8 + $0xd0] sm:$0xff]
        %v1759 = vld [vmem:[#allocation8 + $0xd8] sm:$0xff]
        %v1760 = vld [vmem:[#allocation8 + $0xe0] sm:$0xff]
        %v1761 = vld [vmem:[#allocation8 + $0xe8] sm:$0xff]
        %v1762 = vld [vmem:[#allocation8 + $0xf0] sm:$0xff]
        %v1763 = vld [vmem:[#allocation8 + $0xf8] sm:$0xff]
        %v1764 = vld [vmem:[%s8 + $0x4] sm:$0x3]
        %v1766 = vlaneseq
        %v1767 = vshrl.u32 %v1766, 7
        %v1768 = vsub.s32 0, %v1767
        %v1769 = vrot.slane %v1764, %v1768
        %v1770 = vlaneseq
        %v1771 = vshrl.u32 %v1770, 7
        %v1772 = vsub.s32 1, %v1771
        %v1773 = vrot.slane %v1764, %v1772
        %v1808 = vunpack.c.l.b16 %v1732
        %v1809 = vunpack.c.h.b16 %v1732
        %v1810 = vunpack.c.l.b16 %v1733
        %v1811 = vunpack.c.h.b16 %v1733
        %v1812 = vunpack.c.l.b16 %v1734
        %v1813 = vunpack.c.h.b16 %v1734
        %v1814 = vunpack.c.l.b16 %v1735
        %v1815 = vunpack.c.h.b16 %v1735
        %v1816 = vunpack.c.l.b16 %v1736
        %v1817 = vunpack.c.h.b16 %v1736
        %v1818 = vunpack.c.l.b16 %v1737
        %v1819 = vunpack.c.h.b16 %v1737
        %v1820 = vunpack.c.l.b16 %v1738
        %v1821 = vunpack.c.h.b16 %v1738
        %v1822 = vunpack.c.l.b16 %v1739
        %v1823 = vunpack.c.h.b16 %v1739
        %v1824 = vunpack.c.l.b16 %v1740
        %v1825 = vunpack.c.h.b16 %v1740
        %v1826 = vunpack.c.l.b16 %v1741
        %v1827 = vunpack.c.h.b16 %v1741
        %v1828 = vunpack.c.l.b16 %v1742
        %v1829 = vunpack.c.h.b16 %v1742
        %v1830 = vunpack.c.l.b16 %v1743
        %v1831 = vunpack.c.h.b16 %v1743
        %v1832 = vunpack.c.l.b16 %v1744
        %v1833 = vunpack.c.h.b16 %v1744
        %v1834 = vunpack.c.l.b16 %v1745
        %v1835 = vunpack.c.h.b16 %v1745
        %v1836 = vunpack.c.l.b16 %v1746
        %v1837 = vunpack.c.h.b16 %v1746
        %v1838 = vunpack.c.l.b16 %v1747
        %v1839 = vunpack.c.h.b16 %v1747
        %v1840 = vunpack.c.l.b16 %v1748
        %v1841 = vunpack.c.h.b16 %v1748
        %v1842 = vunpack.c.l.b16 %v1749
        %v1843 = vunpack.c.h.b16 %v1749
        %v1844 = vunpack.c.l.b16 %v1750
        %v1845 = vunpack.c.h.b16 %v1750
        %v1846 = vunpack.c.l.b16 %v1751
        %v1847 = vunpack.c.h.b16 %v1751
        %v1848 = vunpack.c.l.b16 %v1752
        %v1849 = vunpack.c.h.b16 %v1752
        %v1850 = vunpack.c.l.b16 %v1753
        %v1851 = vunpack.c.h.b16 %v1753
        %v1852 = vunpack.c.l.b16 %v1754
        %v1853 = vunpack.c.h.b16 %v1754
        %v1854 = vunpack.c.l.b16 %v1755
        %v1855 = vunpack.c.h.b16 %v1755
        %v1856 = vunpack.c.l.b16 %v1756
        %v1857 = vunpack.c.h.b16 %v1756
        %v1858 = vunpack.c.l.b16 %v1757
        %v1859 = vunpack.c.h.b16 %v1757
        %v1860 = vunpack.c.l.b16 %v1758
        %v1861 = vunpack.c.h.b16 %v1758
        %v1862 = vunpack.c.l.b16 %v1759
        %v1863 = vunpack.c.h.b16 %v1759
        %v1864 = vunpack.c.l.b16 %v1760
        %v1865 = vunpack.c.h.b16 %v1760
        %v1866 = vunpack.c.l.b16 %v1761
        %v1867 = vunpack.c.h.b16 %v1761
        %v1868 = vunpack.c.l.b16 %v1762
        %v1869 = vunpack.c.h.b16 %v1762
        %v1870 = vunpack.c.l.b16 %v1763
        %v1871 = vunpack.c.h.b16 %v1763
        %v1872 = vpack.c.b16 %v1810, %v1808
        %v1873 = vpack.c.b16 %v1811, %v1809
        %v1874 = vpack.c.b16 %v1814, %v1812
        %v1875 = vpack.c.b16 %v1815, %v1813
        %v1876 = vpack.c.b16 %v1818, %v1816
        %v1877 = vpack.c.b16 %v1819, %v1817
        %v1878 = vpack.c.b16 %v1822, %v1820
        %v1879 = vpack.c.b16 %v1823, %v1821
        %v1880 = vpack.c.b16 %v1826, %v1824
        %v1881 = vpack.c.b16 %v1827, %v1825
        %v1882 = vpack.c.b16 %v1830, %v1828
        %v1883 = vpack.c.b16 %v1831, %v1829
        %v1884 = vpack.c.b16 %v1834, %v1832
        %v1885 = vpack.c.b16 %v1835, %v1833
        %v1886 = vpack.c.b16 %v1838, %v1836
        %v1887 = vpack.c.b16 %v1839, %v1837
        %v1888 = vpack.c.b16 %v1842, %v1840
        %v1889 = vpack.c.b16 %v1843, %v1841
        %v1890 = vpack.c.b16 %v1846, %v1844
        %v1891 = vpack.c.b16 %v1847, %v1845
        %v1892 = vpack.c.b16 %v1850, %v1848
        %v1893 = vpack.c.b16 %v1851, %v1849
        %v1894 = vpack.c.b16 %v1854, %v1852
        %v1895 = vpack.c.b16 %v1855, %v1853
        %v1896 = vpack.c.b16 %v1858, %v1856
        %v1897 = vpack.c.b16 %v1859, %v1857
        %v1898 = vpack.c.b16 %v1862, %v1860
        %v1899 = vpack.c.b16 %v1863, %v1861
        %v1900 = vpack.c.b16 %v1866, %v1864
        %v1901 = vpack.c.b16 %v1867, %v1865
        %v1902 = vpack.c.b16 %v1870, %v1868
        %v1903 = vpack.c.b16 %v1871, %v1869
        %1936 = vmatprep.subr.bf16.mxu0 %v1887
        %1937 = vmatpush1.bf16.msra.mxu0 %v1886
        %1938 = vmatprep.subr.bf16.mxu0 %v1885
        %1939 = vmatpush1.bf16.msra.mxu0 %v1884
        %1940 = vmatprep.subr.bf16.mxu0 %v1883
        %1941 = vmatpush1.bf16.msra.mxu0 %v1882
        %1942 = vmatprep.subr.bf16.mxu0 %v1881
        %1943 = vmatpush1.bf16.msra.mxu0 %v1880
        %1944 = vmatprep.subr.bf16.mxu0 %v1879
        %1945 = vmatpush1.bf16.msra.mxu0 %v1878
        %1946 = vmatprep.subr.bf16.mxu0 %v1877
        %1947 = vmatpush1.bf16.msra.mxu0 %v1876
        %1948 = vmatprep.subr.bf16.mxu0 %v1875
        %1949 = vmatpush1.bf16.msra.mxu0 %v1874
        %1950 = vmatprep.subr.bf16.mxu0 %v1873
        %1951 = vmatpush1.bf16.msra.mxu0 %v1872
        %1952 = vmatprep.subr.bf16.mxu0 %v1903
        %1953 = vmatpush2.bf16.msra.mxu0 %v1902
        %1954 = vmatprep.subr.bf16.mxu0 %v1901
        %1955 = vmatpush2.bf16.msra.mxu0 %v1900
        %1956 = vmatprep.subr.bf16.mxu0 %v1899
        %1957 = vmatpush2.bf16.msra.mxu0 %v1898
        %1958 = vmatprep.subr.bf16.mxu0 %v1897
        %1959 = vmatpush2.bf16.msra.mxu0 %v1896
        %1960 = vmatprep.subr.bf16.mxu0 %v1895
        %1961 = vmatpush2.bf16.msra.mxu0 %v1894
        %1962 = vmatprep.subr.bf16.mxu0 %v1893
        %1963 = vmatpush2.bf16.msra.mxu0 %v1892
        %1964 = vmatprep.subr.bf16.mxu0 %v1891
        %1965 = vmatpush2.bf16.msra.mxu0 %v1890
        %1966 = vmatprep.subr.bf16.mxu0 %v1889
        %1967 = vmatpush2.bf16.msra.mxu0 %v1888
        %1968 = vmatprep.mubr.bf16.mxu0 %v1701
        %1969 = vmatmul.mubr.bf16.gmra.mxu0 %v1700
        %v1970 = vpop.f32.mrf.mxu0
        %v1971 = vadd.f32 %v1769, %v1970
        %v1972 = vpop.f32.mrf.mxu0
        %v1973 = vadd.f32 %v1773, %v1972
        %v1974 = vpop.f32.mrf.mxu0
        %v1975 = vadd.f32 %v1769, %v1974
        %v1976 = vpop.f32.mrf.mxu0
        %v1977 = vadd.f32 %v1773, %v1976
        %1978 = vmatprep.mubr.bf16.mxu0 %v1703
        %1979 = vmatmul.mubr.bf16.gmra.mxu0 %v1702
        %v1980 = vpop.f32.mrf.mxu0
        %v1981 = vadd.f32 %v1769, %v1980
        %v1982 = vpop.f32.mrf.mxu0
        %v1983 = vadd.f32 %v1773, %v1982
        %v1984 = vpop.f32.mrf.mxu0
        %v1985 = vadd.f32 %v1769, %v1984
        %v1986 = vpop.f32.mrf.mxu0
        %v1987 = vadd.f32 %v1773, %v1986
        %1988 = vmatprep.mubr.bf16.mxu0 %v1705
        %1989 = vmatmul.mubr.bf16.gmra.mxu0 %v1704
        %v1990 = vpop.f32.mrf.mxu0
        %v1991 = vadd.f32 %v1769, %v1990
        %v1992 = vpop.f32.mrf.mxu0
        %v1993 = vadd.f32 %v1773, %v1992
        %v1994 = vpop.f32.mrf.mxu0
        %v1995 = vadd.f32 %v1769, %v1994
        %v1996 = vpop.f32.mrf.mxu0
        %v1997 = vadd.f32 %v1773, %v1996
        %1998 = vmatprep.mubr.bf16.mxu0 %v1707
        %1999 = vmatmul.mubr.bf16.gmra.mxu0 %v1706
        %v2000 = vpop.f32.mrf.mxu0
        %v2001 = vadd.f32 %v1769, %v2000
        %v2002 = vpop.f32.mrf.mxu0
        %v2003 = vadd.f32 %v1773, %v2002
        %v2004 = vpop.f32.mrf.mxu0
        %v2005 = vadd.f32 %v1769, %v2004
        %v2006 = vpop.f32.mrf.mxu0
        %v2007 = vadd.f32 %v1773, %v2006
        %2008 = vmatprep.mubr.bf16.mxu0 %v1709
        %2009 = vmatmul.mubr.bf16.gmra.mxu0 %v1708
        %v2010 = vpop.f32.mrf.mxu0
        %v2011 = vadd.f32 %v1769, %v2010
        %v2012 = vpop.f32.mrf.mxu0
        %v2013 = vadd.f32 %v1773, %v2012
        %v2014 = vpop.f32.mrf.mxu0
        %v2015 = vadd.f32 %v1769, %v2014
        %v2016 = vpop.f32.mrf.mxu0
        %v2017 = vadd.f32 %v1773, %v2016
        %2018 = vmatprep.mubr.bf16.mxu0 %v1711
        %2019 = vmatmul.mubr.bf16.gmra.mxu0 %v1710
        %v2020 = vpop.f32.mrf.mxu0
        %v2021 = vadd.f32 %v1769, %v2020
        %v2022 = vpop.f32.mrf.mxu0
        %v2023 = vadd.f32 %v1773, %v2022
        %v2024 = vpop.f32.mrf.mxu0
        %v2025 = vadd.f32 %v1769, %v2024
        %v2026 = vpop.f32.mrf.mxu0
        %v2027 = vadd.f32 %v1773, %v2026
        %2028 = vmatprep.mubr.bf16.mxu0 %v1713
        %2029 = vmatmul.mubr.bf16.gmra.mxu0 %v1712
        %v2030 = vpop.f32.mrf.mxu0
        %v2031 = vadd.f32 %v1769, %v2030
        %v2032 = vpop.f32.mrf.mxu0
        %v2033 = vadd.f32 %v1773, %v2032
        %v2034 = vpop.f32.mrf.mxu0
        %v2035 = vadd.f32 %v1769, %v2034
        %v2036 = vpop.f32.mrf.mxu0
        %v2037 = vadd.f32 %v1773, %v2036
        %2038 = vmatprep.mubr.bf16.mxu0 %v1715
        %2039 = vmatmul.mubr.bf16.gmra.mxu0 %v1714
        %v2040 = vpop.f32.mrf.mxu0
        %v2041 = vadd.f32 %v1769, %v2040
        %v2042 = vpop.f32.mrf.mxu0
        %v2043 = vadd.f32 %v1773, %v2042
        %v2044 = vpop.f32.mrf.mxu0
        %v2045 = vadd.f32 %v1769, %v2044
        %v2046 = vpop.f32.mrf.mxu0
        %v2047 = vadd.f32 %v1773, %v2046
        %2048 = vmatprep.mubr.bf16.mxu0 %v1717
        %2049 = vmatmul.mubr.bf16.gmra.mxu0 %v1716
        %v2050 = vpop.f32.mrf.mxu0
        %v2051 = vadd.f32 %v1769, %v2050
        %v2052 = vpop.f32.mrf.mxu0
        %v2053 = vadd.f32 %v1773, %v2052
        %v2054 = vpop.f32.mrf.mxu0
        %v2055 = vadd.f32 %v1769, %v2054
        %v2056 = vpop.f32.mrf.mxu0
        %v2057 = vadd.f32 %v1773, %v2056
        %2058 = vmatprep.mubr.bf16.mxu0 %v1719
        %2059 = vmatmul.mubr.bf16.gmra.mxu0 %v1718
        %v2060 = vpop.f32.mrf.mxu0
        %v2061 = vadd.f32 %v1769, %v2060
        %v2062 = vpop.f32.mrf.mxu0
        %v2063 = vadd.f32 %v1773, %v2062
        %v2064 = vpop.f32.mrf.mxu0
        %v2065 = vadd.f32 %v1769, %v2064
        %v2066 = vpop.f32.mrf.mxu0
        %v2067 = vadd.f32 %v1773, %v2066
        %2068 = vmatprep.mubr.bf16.mxu0 %v1721
        %2069 = vmatmul.mubr.bf16.gmra.mxu0 %v1720
        %v2070 = vpop.f32.mrf.mxu0
        %v2071 = vadd.f32 %v1769, %v2070
        %v2072 = vpop.f32.mrf.mxu0
        %v2073 = vadd.f32 %v1773, %v2072
        %v2074 = vpop.f32.mrf.mxu0
        %v2075 = vadd.f32 %v1769, %v2074
        %v2076 = vpop.f32.mrf.mxu0
        %v2077 = vadd.f32 %v1773, %v2076
        %2078 = vmatprep.mubr.bf16.mxu0 %v1723
        %2079 = vmatmul.mubr.bf16.gmra.mxu0 %v1722
        %v2080 = vpop.f32.mrf.mxu0
        %v2081 = vadd.f32 %v1769, %v2080
        %v2082 = vpop.f32.mrf.mxu0
        %v2083 = vadd.f32 %v1773, %v2082
        %v2084 = vpop.f32.mrf.mxu0
        %v2085 = vadd.f32 %v1769, %v2084
        %v2086 = vpop.f32.mrf.mxu0
        %v2087 = vadd.f32 %v1773, %v2086
        %2088 = vmatprep.mubr.bf16.mxu0 %v1725
        %2089 = vmatmul.mubr.bf16.gmra.mxu0 %v1724
        %v2090 = vpop.f32.mrf.mxu0
        %v2091 = vadd.f32 %v1769, %v2090
        %v2092 = vpop.f32.mrf.mxu0
        %v2093 = vadd.f32 %v1773, %v2092
        %v2094 = vpop.f32.mrf.mxu0
        %v2095 = vadd.f32 %v1769, %v2094
        %v2096 = vpop.f32.mrf.mxu0
        %v2097 = vadd.f32 %v1773, %v2096
        %2098 = vmatprep.mubr.bf16.mxu0 %v1727
        %2099 = vmatmul.mubr.bf16.gmra.mxu0 %v1726
        %v2100 = vpop.f32.mrf.mxu0
        %v2101 = vadd.f32 %v1769, %v2100
        %v2102 = vpop.f32.mrf.mxu0
        %v2103 = vadd.f32 %v1773, %v2102
        %v2104 = vpop.f32.mrf.mxu0
        %v2105 = vadd.f32 %v1769, %v2104
        %v2106 = vpop.f32.mrf.mxu0
        %v2107 = vadd.f32 %v1773, %v2106
        %2108 = vmatprep.mubr.bf16.mxu0 %v1729
        %2109 = vmatmul.mubr.bf16.gmra.mxu0 %v1728
        %v2110 = vpop.f32.mrf.mxu0
        %v2111 = vadd.f32 %v1769, %v2110
        %v2112 = vpop.f32.mrf.mxu0
        %v2113 = vadd.f32 %v1773, %v2112
        %v2114 = vpop.f32.mrf.mxu0
        %v2115 = vadd.f32 %v1769, %v2114
        %v2116 = vpop.f32.mrf.mxu0
        %v2117 = vadd.f32 %v1773, %v2116
        %2118 = vmatprep.mubr.bf16.mxu0 %v1731
        %2119 = vmatmul.mubr.bf16.gmra.mxu0 %v1730
        %v2120 = vpop.f32.mrf.mxu0
        %v2121 = vadd.f32 %v1769, %v2120
        %v2122 = vpop.f32.mrf.mxu0
        %v2123 = vadd.f32 %v1773, %v2122
        %v2124 = vpop.f32.mrf.mxu0
        %v2125 = vadd.f32 %v1769, %v2124
        %v2126 = vpop.f32.mrf.mxu0
        %v2127 = vadd.f32 %v1773, %v2126
        %2128 = vdwg.mxu0
        %v2129 = vpack.c.bf16 %v1975, %v1971
        %v2130 = vpack.c.bf16 %v1977, %v1973
        %v2131 = vpack.c.bf16 %v1985, %v1981
        %v2132 = vpack.c.bf16 %v1987, %v1983
        %v2133 = vpack.c.bf16 %v1995, %v1991
        %v2134 = vpack.c.bf16 %v1997, %v1993
        %v2135 = vpack.c.bf16 %v2005, %v2001
        %v2136 = vpack.c.bf16 %v2007, %v2003
        %v2137 = vpack.c.bf16 %v2015, %v2011
        %v2138 = vpack.c.bf16 %v2017, %v2013
        %v2139 = vpack.c.bf16 %v2025, %v2021
        %v2140 = vpack.c.bf16 %v2027, %v2023
        %v2141 = vpack.c.bf16 %v2035, %v2031
        %v2142 = vpack.c.bf16 %v2037, %v2033
        %v2143 = vpack.c.bf16 %v2045, %v2041
        %v2144 = vpack.c.bf16 %v2047, %v2043
        %v2145 = vpack.c.bf16 %v2055, %v2051
        %v2146 = vpack.c.bf16 %v2057, %v2053
        %v2147 = vpack.c.bf16 %v2065, %v2061
        %v2148 = vpack.c.bf16 %v2067, %v2063
        %v2149 = vpack.c.bf16 %v2075, %v2071
        %v2150 = vpack.c.bf16 %v2077, %v2073
        %v2151 = vpack.c.bf16 %v2085, %v2081
        %v2152 = vpack.c.bf16 %v2087, %v2083
        %v2153 = vpack.c.bf16 %v2095, %v2091
        %v2154 = vpack.c.bf16 %v2097, %v2093
        %v2155 = vpack.c.bf16 %v2105, %v2101
        %v2156 = vpack.c.bf16 %v2107, %v2103
        %v2157 = vpack.c.bf16 %v2115, %v2111
        %v2158 = vpack.c.bf16 %v2117, %v2113
        %v2159 = vpack.c.bf16 %v2125, %v2121
        %v2160 = vpack.c.bf16 %v2127, %v2123
        %vm2161 = vcmp.ge.bf16.partialorder %v2129, 0
        %vm2162 = vcmp.ge.bf16.partialorder %v2130, 0
        %vm2163 = vcmp.ge.bf16.partialorder %v2131, 0
        %vm2164 = vcmp.ge.bf16.partialorder %v2132, 0
        %vm2165 = vcmp.ge.bf16.partialorder %v2133, 0
        %vm2166 = vcmp.ge.bf16.partialorder %v2134, 0
        %vm2167 = vcmp.ge.bf16.partialorder %v2135, 0
        %vm2168 = vcmp.ge.bf16.partialorder %v2136, 0
        %vm2169 = vcmp.ge.bf16.partialorder %v2137, 0
        %vm2170 = vcmp.ge.bf16.partialorder %v2138, 0
        %vm2171 = vcmp.ge.bf16.partialorder %v2139, 0
        %vm2172 = vcmp.ge.bf16.partialorder %v2140, 0
        %vm2173 = vcmp.ge.bf16.partialorder %v2141, 0
        %vm2174 = vcmp.ge.bf16.partialorder %v2142, 0
        %vm2175 = vcmp.ge.bf16.partialorder %v2143, 0
        %vm2176 = vcmp.ge.bf16.partialorder %v2144, 0
        %vm2177 = vcmp.ge.bf16.partialorder %v2145, 0
        %vm2178 = vcmp.ge.bf16.partialorder %v2146, 0
        %vm2179 = vcmp.ge.bf16.partialorder %v2147, 0
        %vm2180 = vcmp.ge.bf16.partialorder %v2148, 0
        %vm2181 = vcmp.ge.bf16.partialorder %v2149, 0
        %vm2182 = vcmp.ge.bf16.partialorder %v2150, 0
        %vm2183 = vcmp.ge.bf16.partialorder %v2151, 0
        %vm2184 = vcmp.ge.bf16.partialorder %v2152, 0
        %vm2185 = vcmp.ge.bf16.partialorder %v2153, 0
        %vm2186 = vcmp.ge.bf16.partialorder %v2154, 0
        %vm2187 = vcmp.ge.bf16.partialorder %v2155, 0
        %vm2188 = vcmp.ge.bf16.partialorder %v2156, 0
        %vm2189 = vcmp.ge.bf16.partialorder %v2157, 0
        %vm2190 = vcmp.ge.bf16.partialorder %v2158, 0
        %vm2191 = vcmp.ge.bf16.partialorder %v2159, 0
        %vm2192 = vcmp.ge.bf16.partialorder %v2160, 0
        %v2193 = vmul.bf16 %v2129, 1009007652
        %v2194 = vmul.bf16 %v2130, 1009007652
        %v2195 = vmul.bf16 %v2131, 1009007652
        %v2196 = vmul.bf16 %v2132, 1009007652
        %v2197 = vmul.bf16 %v2133, 1009007652
        %v2198 = vmul.bf16 %v2134, 1009007652
        %v2199 = vmul.bf16 %v2135, 1009007652
        %v2200 = vmul.bf16 %v2136, 1009007652
        %v2201 = vmul.bf16 %v2137, 1009007652
        %v2202 = vmul.bf16 %v2138, 1009007652
        %v2203 = vmul.bf16 %v2139, 1009007652
        %v2204 = vmul.bf16 %v2140, 1009007652
        %v2205 = vmul.bf16 %v2141, 1009007652
        %v2206 = vmul.bf16 %v2142, 1009007652
        %v2207 = vmul.bf16 %v2143, 1009007652
        %v2208 = vmul.bf16 %v2144, 1009007652
        %v2209 = vmul.bf16 %v2145, 1009007652
        %v2210 = vmul.bf16 %v2146, 1009007652
        %v2211 = vmul.bf16 %v2147, 1009007652
        %v2212 = vmul.bf16 %v2148, 1009007652
        %v2213 = vmul.bf16 %v2149, 1009007652
        %v2214 = vmul.bf16 %v2150, 1009007652
        %v2215 = vmul.bf16 %v2151, 1009007652
        %v2216 = vmul.bf16 %v2152, 1009007652
        %v2217 = vmul.bf16 %v2153, 1009007652
        %v2218 = vmul.bf16 %v2154, 1009007652
        %v2219 = vmul.bf16 %v2155, 1009007652
        %v2220 = vmul.bf16 %v2156, 1009007652
        %v2221 = vmul.bf16 %v2157, 1009007652
        %v2222 = vmul.bf16 %v2158, 1009007652
        %v2223 = vmul.bf16 %v2159, 1009007652
        %v2224 = vmul.bf16 %v2160, 1009007652
        %v2225 = vsel %vm2161, %v2129, %v2193
        %v2226 = vsel %vm2162, %v2130, %v2194
        %v2227 = vsel %vm2163, %v2131, %v2195
        %v2228 = vsel %vm2164, %v2132, %v2196
        %v2229 = vsel %vm2165, %v2133, %v2197
        %v2230 = vsel %vm2166, %v2134, %v2198
        %v2231 = vsel %vm2167, %v2135, %v2199
        %v2232 = vsel %vm2168, %v2136, %v2200
        %v2233 = vsel %vm2169, %v2137, %v2201
        %v2234 = vsel %vm2170, %v2138, %v2202
        %v2235 = vsel %vm2171, %v2139, %v2203
        %v2236 = vsel %vm2172, %v2140, %v2204
        %v2237 = vsel %vm2173, %v2141, %v2205
        %v2238 = vsel %vm2174, %v2142, %v2206
        %v2239 = vsel %vm2175, %v2143, %v2207
        %v2240 = vsel %vm2176, %v2144, %v2208
        %v2241 = vsel %vm2177, %v2145, %v2209
        %v2242 = vsel %vm2178, %v2146, %v2210
        %v2243 = vsel %vm2179, %v2147, %v2211
        %v2244 = vsel %vm2180, %v2148, %v2212
        %v2245 = vsel %vm2181, %v2149, %v2213
        %v2246 = vsel %vm2182, %v2150, %v2214
        %v2247 = vsel %vm2183, %v2151, %v2215
        %v2248 = vsel %vm2184, %v2152, %v2216
        %v2249 = vsel %vm2185, %v2153, %v2217
        %v2250 = vsel %vm2186, %v2154, %v2218
        %v2251 = vsel %vm2187, %v2155, %v2219
        %v2252 = vsel %vm2188, %v2156, %v2220
        %v2253 = vsel %vm2189, %v2157, %v2221
        %v2254 = vsel %vm2190, %v2158, %v2222
        %v2255 = vsel %vm2191, %v2159, %v2223
        %v2256 = vsel %vm2192, %v2160, %v2224
        %v2257 = vadd.bf16 %v1700, %v2225
        %v2258 = vadd.bf16 %v1701, %v2226
        %v2259 = vadd.bf16 %v1702, %v2227
        %v2260 = vadd.bf16 %v1703, %v2228
        %v2261 = vadd.bf16 %v1704, %v2229
        %v2262 = vadd.bf16 %v1705, %v2230
        %v2263 = vadd.bf16 %v1706, %v2231
        %v2264 = vadd.bf16 %v1707, %v2232
        %v2265 = vadd.bf16 %v1708, %v2233
        %v2266 = vadd.bf16 %v1709, %v2234
        %v2267 = vadd.bf16 %v1710, %v2235
        %v2268 = vadd.bf16 %v1711, %v2236
        %v2269 = vadd.bf16 %v1712, %v2237
        %v2270 = vadd.bf16 %v1713, %v2238
        %v2271 = vadd.bf16 %v1714, %v2239
        %v2272 = vadd.bf16 %v1715, %v2240
        %v2273 = vadd.bf16 %v1716, %v2241
        %v2274 = vadd.bf16 %v1717, %v2242
        %v2275 = vadd.bf16 %v1718, %v2243
        %v2276 = vadd.bf16 %v1719, %v2244
        %v2277 = vadd.bf16 %v1720, %v2245
        %v2278 = vadd.bf16 %v1721, %v2246
        %v2279 = vadd.bf16 %v1722, %v2247
        %v2280 = vadd.bf16 %v1723, %v2248
        %v2281 = vadd.bf16 %v1724, %v2249
        %v2282 = vadd.bf16 %v1725, %v2250
        %v2283 = vadd.bf16 %v1726, %v2251
        %v2284 = vadd.bf16 %v1727, %v2252
        %v2285 = vadd.bf16 %v1728, %v2253
        %v2286 = vadd.bf16 %v1729, %v2254
        %v2287 = vadd.bf16 %v1730, %v2255
        %v2288 = vadd.bf16 %v1731, %v2256
        %v2289 = vld [vmem:[#allocation10] sm:$0xff]
        %v2290 = vld [vmem:[#allocation10 + $0x8] sm:$0xff]
        %v2291 = vld [vmem:[#allocation10 + $0x10] sm:$0xff]
        %v2292 = vld [vmem:[#allocation10 + $0x18] sm:$0xff]
        %v2293 = vld [vmem:[#allocation10 + $0x20] sm:$0xff]
        %v2294 = vld [vmem:[#allocation10 + $0x28] sm:$0xff]
        %v2295 = vld [vmem:[#allocation10 + $0x30] sm:$0xff]
        %v2296 = vld [vmem:[#allocation10 + $0x38] sm:$0xff]
        %v2297 = vld [vmem:[#allocation10 + $0x40] sm:$0xff]
        %v2298 = vld [vmem:[#allocation10 + $0x48] sm:$0xff]
        %v2299 = vld [vmem:[#allocation10 + $0x50] sm:$0xff]
        %v2300 = vld [vmem:[#allocation10 + $0x58] sm:$0xff]
        %v2301 = vld [vmem:[#allocation10 + $0x60] sm:$0xff]
        %v2302 = vld [vmem:[#allocation10 + $0x68] sm:$0xff]
        %v2303 = vld [vmem:[#allocation10 + $0x70] sm:$0xff]
        %v2304 = vld [vmem:[#allocation10 + $0x78] sm:$0xff]
        %v2305 = vld [vmem:[#allocation10 + $0x80] sm:$0xff]
        %v2306 = vld [vmem:[#allocation10 + $0x88] sm:$0xff]
        %v2307 = vld [vmem:[#allocation10 + $0x90] sm:$0xff]
        %v2308 = vld [vmem:[#allocation10 + $0x98] sm:$0xff]
        %v2309 = vld [vmem:[#allocation10 + $0xa0] sm:$0xff]
        %v2310 = vld [vmem:[#allocation10 + $0xa8] sm:$0xff]
        %v2311 = vld [vmem:[#allocation10 + $0xb0] sm:$0xff]
        %v2312 = vld [vmem:[#allocation10 + $0xb8] sm:$0xff]
        %v2313 = vld [vmem:[#allocation10 + $0xc0] sm:$0xff]
        %v2314 = vld [vmem:[#allocation10 + $0xc8] sm:$0xff]
        %v2315 = vld [vmem:[#allocation10 + $0xd0] sm:$0xff]
        %v2316 = vld [vmem:[#allocation10 + $0xd8] sm:$0xff]
        %v2317 = vld [vmem:[#allocation10 + $0xe0] sm:$0xff]
        %v2318 = vld [vmem:[#allocation10 + $0xe8] sm:$0xff]
        %v2319 = vld [vmem:[#allocation10 + $0xf0] sm:$0xff]
        %v2320 = vld [vmem:[#allocation10 + $0xf8] sm:$0xff]
        %v2321 = vld [vmem:[%s8 + $0x6] sm:$0x3]
        %v2323 = vlaneseq
        %v2324 = vshrl.u32 %v2323, 7
        %v2325 = vsub.s32 0, %v2324
        %v2326 = vrot.slane %v2321, %v2325
        %v2327 = vlaneseq
        %v2328 = vshrl.u32 %v2327, 7
        %v2329 = vsub.s32 1, %v2328
        %v2330 = vrot.slane %v2321, %v2329
        %v2365 = vunpack.c.l.b16 %v2289
        %v2366 = vunpack.c.h.b16 %v2289
        %v2367 = vunpack.c.l.b16 %v2290
        %v2368 = vunpack.c.h.b16 %v2290
        %v2369 = vunpack.c.l.b16 %v2291
        %v2370 = vunpack.c.h.b16 %v2291
        %v2371 = vunpack.c.l.b16 %v2292
        %v2372 = vunpack.c.h.b16 %v2292
        %v2373 = vunpack.c.l.b16 %v2293
        %v2374 = vunpack.c.h.b16 %v2293
        %v2375 = vunpack.c.l.b16 %v2294
        %v2376 = vunpack.c.h.b16 %v2294
        %v2377 = vunpack.c.l.b16 %v2295
        %v2378 = vunpack.c.h.b16 %v2295
        %v2379 = vunpack.c.l.b16 %v2296
        %v2380 = vunpack.c.h.b16 %v2296
        %v2381 = vunpack.c.l.b16 %v2297
        %v2382 = vunpack.c.h.b16 %v2297
        %v2383 = vunpack.c.l.b16 %v2298
        %v2384 = vunpack.c.h.b16 %v2298
        %v2385 = vunpack.c.l.b16 %v2299
        %v2386 = vunpack.c.h.b16 %v2299
        %v2387 = vunpack.c.l.b16 %v2300
        %v2388 = vunpack.c.h.b16 %v2300
        %v2389 = vunpack.c.l.b16 %v2301
        %v2390 = vunpack.c.h.b16 %v2301
        %v2391 = vunpack.c.l.b16 %v2302
        %v2392 = vunpack.c.h.b16 %v2302
        %v2393 = vunpack.c.l.b16 %v2303
        %v2394 = vunpack.c.h.b16 %v2303
        %v2395 = vunpack.c.l.b16 %v2304
        %v2396 = vunpack.c.h.b16 %v2304
        %v2397 = vunpack.c.l.b16 %v2305
        %v2398 = vunpack.c.h.b16 %v2305
        %v2399 = vunpack.c.l.b16 %v2306
        %v2400 = vunpack.c.h.b16 %v2306
        %v2401 = vunpack.c.l.b16 %v2307
        %v2402 = vunpack.c.h.b16 %v2307
        %v2403 = vunpack.c.l.b16 %v2308
        %v2404 = vunpack.c.h.b16 %v2308
        %v2405 = vunpack.c.l.b16 %v2309
        %v2406 = vunpack.c.h.b16 %v2309
        %v2407 = vunpack.c.l.b16 %v2310
        %v2408 = vunpack.c.h.b16 %v2310
        %v2409 = vunpack.c.l.b16 %v2311
        %v2410 = vunpack.c.h.b16 %v2311
        %v2411 = vunpack.c.l.b16 %v2312
        %v2412 = vunpack.c.h.b16 %v2312
        %v2413 = vunpack.c.l.b16 %v2313
        %v2414 = vunpack.c.h.b16 %v2313
        %v2415 = vunpack.c.l.b16 %v2314
        %v2416 = vunpack.c.h.b16 %v2314
        %v2417 = vunpack.c.l.b16 %v2315
        %v2418 = vunpack.c.h.b16 %v2315
        %v2419 = vunpack.c.l.b16 %v2316
        %v2420 = vunpack.c.h.b16 %v2316
        %v2421 = vunpack.c.l.b16 %v2317
        %v2422 = vunpack.c.h.b16 %v2317
        %v2423 = vunpack.c.l.b16 %v2318
        %v2424 = vunpack.c.h.b16 %v2318
        %v2425 = vunpack.c.l.b16 %v2319
        %v2426 = vunpack.c.h.b16 %v2319
        %v2427 = vunpack.c.l.b16 %v2320
        %v2428 = vunpack.c.h.b16 %v2320
        %v2429 = vpack.c.b16 %v2367, %v2365
        %v2430 = vpack.c.b16 %v2368, %v2366
        %v2431 = vpack.c.b16 %v2371, %v2369
        %v2432 = vpack.c.b16 %v2372, %v2370
        %v2433 = vpack.c.b16 %v2375, %v2373
        %v2434 = vpack.c.b16 %v2376, %v2374
        %v2435 = vpack.c.b16 %v2379, %v2377
        %v2436 = vpack.c.b16 %v2380, %v2378
        %v2437 = vpack.c.b16 %v2383, %v2381
        %v2438 = vpack.c.b16 %v2384, %v2382
        %v2439 = vpack.c.b16 %v2387, %v2385
        %v2440 = vpack.c.b16 %v2388, %v2386
        %v2441 = vpack.c.b16 %v2391, %v2389
        %v2442 = vpack.c.b16 %v2392, %v2390
        %v2443 = vpack.c.b16 %v2395, %v2393
        %v2444 = vpack.c.b16 %v2396, %v2394
        %v2445 = vpack.c.b16 %v2399, %v2397
        %v2446 = vpack.c.b16 %v2400, %v2398
        %v2447 = vpack.c.b16 %v2403, %v2401
        %v2448 = vpack.c.b16 %v2404, %v2402
        %v2449 = vpack.c.b16 %v2407, %v2405
        %v2450 = vpack.c.b16 %v2408, %v2406
        %v2451 = vpack.c.b16 %v2411, %v2409
        %v2452 = vpack.c.b16 %v2412, %v2410
        %v2453 = vpack.c.b16 %v2415, %v2413
        %v2454 = vpack.c.b16 %v2416, %v2414
        %v2455 = vpack.c.b16 %v2419, %v2417
        %v2456 = vpack.c.b16 %v2420, %v2418
        %v2457 = vpack.c.b16 %v2423, %v2421
        %v2458 = vpack.c.b16 %v2424, %v2422
        %v2459 = vpack.c.b16 %v2427, %v2425
        %v2460 = vpack.c.b16 %v2428, %v2426
        %2493 = vmatprep.subr.bf16.mxu0 %v2444
        %2494 = vmatpush1.bf16.msra.mxu0 %v2443
        %2495 = vmatprep.subr.bf16.mxu0 %v2442
        %2496 = vmatpush1.bf16.msra.mxu0 %v2441
        %2497 = vmatprep.subr.bf16.mxu0 %v2440
        %2498 = vmatpush1.bf16.msra.mxu0 %v2439
        %2499 = vmatprep.subr.bf16.mxu0 %v2438
        %2500 = vmatpush1.bf16.msra.mxu0 %v2437
        %2501 = vmatprep.subr.bf16.mxu0 %v2436
        %2502 = vmatpush1.bf16.msra.mxu0 %v2435
        %2503 = vmatprep.subr.bf16.mxu0 %v2434
        %2504 = vmatpush1.bf16.msra.mxu0 %v2433
        %2505 = vmatprep.subr.bf16.mxu0 %v2432
        %2506 = vmatpush1.bf16.msra.mxu0 %v2431
        %2507 = vmatprep.subr.bf16.mxu0 %v2430
        %2508 = vmatpush1.bf16.msra.mxu0 %v2429
        %2509 = vmatprep.subr.bf16.mxu0 %v2460
        %2510 = vmatpush2.bf16.msra.mxu0 %v2459
        %2511 = vmatprep.subr.bf16.mxu0 %v2458
        %2512 = vmatpush2.bf16.msra.mxu0 %v2457
        %2513 = vmatprep.subr.bf16.mxu0 %v2456
        %2514 = vmatpush2.bf16.msra.mxu0 %v2455
        %2515 = vmatprep.subr.bf16.mxu0 %v2454
        %2516 = vmatpush2.bf16.msra.mxu0 %v2453
        %2517 = vmatprep.subr.bf16.mxu0 %v2452
        %2518 = vmatpush2.bf16.msra.mxu0 %v2451
        %2519 = vmatprep.subr.bf16.mxu0 %v2450
        %2520 = vmatpush2.bf16.msra.mxu0 %v2449
        %2521 = vmatprep.subr.bf16.mxu0 %v2448
        %2522 = vmatpush2.bf16.msra.mxu0 %v2447
        %2523 = vmatprep.subr.bf16.mxu0 %v2446
        %2524 = vmatpush2.bf16.msra.mxu0 %v2445
        %2525 = vmatprep.mubr.bf16.mxu0 %v2258
        %2526 = vmatmul.mubr.bf16.gmra.mxu0 %v2257
        %v2527 = vpop.f32.mrf.mxu0
        %v2528 = vadd.f32 %v2326, %v2527
        %v2529 = vpop.f32.mrf.mxu0
        %v2530 = vadd.f32 %v2330, %v2529
        %v2531 = vpop.f32.mrf.mxu0
        %v2532 = vadd.f32 %v2326, %v2531
        %v2533 = vpop.f32.mrf.mxu0
        %v2534 = vadd.f32 %v2330, %v2533
        %2535 = vmatprep.mubr.bf16.mxu0 %v2260
        %2536 = vmatmul.mubr.bf16.gmra.mxu0 %v2259
        %v2537 = vpop.f32.mrf.mxu0
        %v2538 = vadd.f32 %v2326, %v2537
        %v2539 = vpop.f32.mrf.mxu0
        %v2540 = vadd.f32 %v2330, %v2539
        %v2541 = vpop.f32.mrf.mxu0
        %v2542 = vadd.f32 %v2326, %v2541
        %v2543 = vpop.f32.mrf.mxu0
        %v2544 = vadd.f32 %v2330, %v2543
        %2545 = vmatprep.mubr.bf16.mxu0 %v2262
        %2546 = vmatmul.mubr.bf16.gmra.mxu0 %v2261
        %v2547 = vpop.f32.mrf.mxu0
        %v2548 = vadd.f32 %v2326, %v2547
        %v2549 = vpop.f32.mrf.mxu0
        %v2550 = vadd.f32 %v2330, %v2549
        %v2551 = vpop.f32.mrf.mxu0
        %v2552 = vadd.f32 %v2326, %v2551
        %v2553 = vpop.f32.mrf.mxu0
        %v2554 = vadd.f32 %v2330, %v2553
        %2555 = vmatprep.mubr.bf16.mxu0 %v2264
        %2556 = vmatmul.mubr.bf16.gmra.mxu0 %v2263
        %v2557 = vpop.f32.mrf.mxu0
        %v2558 = vadd.f32 %v2326, %v2557
        %v2559 = vpop.f32.mrf.mxu0
        %v2560 = vadd.f32 %v2330, %v2559
        %v2561 = vpop.f32.mrf.mxu0
        %v2562 = vadd.f32 %v2326, %v2561
        %v2563 = vpop.f32.mrf.mxu0
        %v2564 = vadd.f32 %v2330, %v2563
        %2565 = vmatprep.mubr.bf16.mxu0 %v2266
        %2566 = vmatmul.mubr.bf16.gmra.mxu0 %v2265
        %v2567 = vpop.f32.mrf.mxu0
        %v2568 = vadd.f32 %v2326, %v2567
        %v2569 = vpop.f32.mrf.mxu0
        %v2570 = vadd.f32 %v2330, %v2569
        %v2571 = vpop.f32.mrf.mxu0
        %v2572 = vadd.f32 %v2326, %v2571
        %v2573 = vpop.f32.mrf.mxu0
        %v2574 = vadd.f32 %v2330, %v2573
        %2575 = vmatprep.mubr.bf16.mxu0 %v2268
        %2576 = vmatmul.mubr.bf16.gmra.mxu0 %v2267
        %v2577 = vpop.f32.mrf.mxu0
        %v2578 = vadd.f32 %v2326, %v2577
        %v2579 = vpop.f32.mrf.mxu0
        %v2580 = vadd.f32 %v2330, %v2579
        %v2581 = vpop.f32.mrf.mxu0
        %v2582 = vadd.f32 %v2326, %v2581
        %v2583 = vpop.f32.mrf.mxu0
        %v2584 = vadd.f32 %v2330, %v2583
        %2585 = vmatprep.mubr.bf16.mxu0 %v2270
        %2586 = vmatmul.mubr.bf16.gmra.mxu0 %v2269
        %v2587 = vpop.f32.mrf.mxu0
        %v2588 = vadd.f32 %v2326, %v2587
        %v2589 = vpop.f32.mrf.mxu0
        %v2590 = vadd.f32 %v2330, %v2589
        %v2591 = vpop.f32.mrf.mxu0
        %v2592 = vadd.f32 %v2326, %v2591
        %v2593 = vpop.f32.mrf.mxu0
        %v2594 = vadd.f32 %v2330, %v2593
        %2595 = vmatprep.mubr.bf16.mxu0 %v2272
        %2596 = vmatmul.mubr.bf16.gmra.mxu0 %v2271
        %v2597 = vpop.f32.mrf.mxu0
        %v2598 = vadd.f32 %v2326, %v2597
        %v2599 = vpop.f32.mrf.mxu0
        %v2600 = vadd.f32 %v2330, %v2599
        %v2601 = vpop.f32.mrf.mxu0
        %v2602 = vadd.f32 %v2326, %v2601
        %v2603 = vpop.f32.mrf.mxu0
        %v2604 = vadd.f32 %v2330, %v2603
        %2605 = vmatprep.mubr.bf16.mxu0 %v2274
        %2606 = vmatmul.mubr.bf16.gmra.mxu0 %v2273
        %v2607 = vpop.f32.mrf.mxu0
        %v2608 = vadd.f32 %v2326, %v2607
        %v2609 = vpop.f32.mrf.mxu0
        %v2610 = vadd.f32 %v2330, %v2609
        %v2611 = vpop.f32.mrf.mxu0
        %v2612 = vadd.f32 %v2326, %v2611
        %v2613 = vpop.f32.mrf.mxu0
        %v2614 = vadd.f32 %v2330, %v2613
        %2615 = vmatprep.mubr.bf16.mxu0 %v2276
        %2616 = vmatmul.mubr.bf16.gmra.mxu0 %v2275
        %v2617 = vpop.f32.mrf.mxu0
        %v2618 = vadd.f32 %v2326, %v2617
        %v2619 = vpop.f32.mrf.mxu0
        %v2620 = vadd.f32 %v2330, %v2619
        %v2621 = vpop.f32.mrf.mxu0
        %v2622 = vadd.f32 %v2326, %v2621
        %v2623 = vpop.f32.mrf.mxu0
        %v2624 = vadd.f32 %v2330, %v2623
        %2625 = vmatprep.mubr.bf16.mxu0 %v2278
        %2626 = vmatmul.mubr.bf16.gmra.mxu0 %v2277
        %v2627 = vpop.f32.mrf.mxu0
        %v2628 = vadd.f32 %v2326, %v2627
        %v2629 = vpop.f32.mrf.mxu0
        %v2630 = vadd.f32 %v2330, %v2629
        %v2631 = vpop.f32.mrf.mxu0
        %v2632 = vadd.f32 %v2326, %v2631
        %v2633 = vpop.f32.mrf.mxu0
        %v2634 = vadd.f32 %v2330, %v2633
        %2635 = vmatprep.mubr.bf16.mxu0 %v2280
        %2636 = vmatmul.mubr.bf16.gmra.mxu0 %v2279
        %v2637 = vpop.f32.mrf.mxu0
        %v2638 = vadd.f32 %v2326, %v2637
        %v2639 = vpop.f32.mrf.mxu0
        %v2640 = vadd.f32 %v2330, %v2639
        %v2641 = vpop.f32.mrf.mxu0
        %v2642 = vadd.f32 %v2326, %v2641
        %v2643 = vpop.f32.mrf.mxu0
        %v2644 = vadd.f32 %v2330, %v2643
        %2645 = vmatprep.mubr.bf16.mxu0 %v2282
        %2646 = vmatmul.mubr.bf16.gmra.mxu0 %v2281
        %v2647 = vpop.f32.mrf.mxu0
        %v2648 = vadd.f32 %v2326, %v2647
        %v2649 = vpop.f32.mrf.mxu0
        %v2650 = vadd.f32 %v2330, %v2649
        %v2651 = vpop.f32.mrf.mxu0
        %v2652 = vadd.f32 %v2326, %v2651
        %v2653 = vpop.f32.mrf.mxu0
        %v2654 = vadd.f32 %v2330, %v2653
        %2655 = vmatprep.mubr.bf16.mxu0 %v2284
        %2656 = vmatmul.mubr.bf16.gmra.mxu0 %v2283
        %v2657 = vpop.f32.mrf.mxu0
        %v2658 = vadd.f32 %v2326, %v2657
        %v2659 = vpop.f32.mrf.mxu0
        %v2660 = vadd.f32 %v2330, %v2659
        %v2661 = vpop.f32.mrf.mxu0
        %v2662 = vadd.f32 %v2326, %v2661
        %v2663 = vpop.f32.mrf.mxu0
        %v2664 = vadd.f32 %v2330, %v2663
        %2665 = vmatprep.mubr.bf16.mxu0 %v2286
        %2666 = vmatmul.mubr.bf16.gmra.mxu0 %v2285
        %v2667 = vpop.f32.mrf.mxu0
        %v2668 = vadd.f32 %v2326, %v2667
        %v2669 = vpop.f32.mrf.mxu0
        %v2670 = vadd.f32 %v2330, %v2669
        %v2671 = vpop.f32.mrf.mxu0
        %v2672 = vadd.f32 %v2326, %v2671
        %v2673 = vpop.f32.mrf.mxu0
        %v2674 = vadd.f32 %v2330, %v2673
        %2675 = vmatprep.mubr.bf16.mxu0 %v2288
        %2676 = vmatmul.mubr.bf16.gmra.mxu0 %v2287
        %v2677 = vpop.f32.mrf.mxu0
        %v2678 = vadd.f32 %v2326, %v2677
        %v2679 = vpop.f32.mrf.mxu0
        %v2680 = vadd.f32 %v2330, %v2679
        %v2681 = vpop.f32.mrf.mxu0
        %v2682 = vadd.f32 %v2326, %v2681
        %v2683 = vpop.f32.mrf.mxu0
        %v2684 = vadd.f32 %v2330, %v2683
        %2685 = vdwg.mxu0
        %v2686 = vpack.c.bf16 %v2532, %v2528
        %v2687 = vpack.c.bf16 %v2534, %v2530
        %v2688 = vpack.c.bf16 %v2542, %v2538
        %v2689 = vpack.c.bf16 %v2544, %v2540
        %v2690 = vpack.c.bf16 %v2552, %v2548
        %v2691 = vpack.c.bf16 %v2554, %v2550
        %v2692 = vpack.c.bf16 %v2562, %v2558
        %v2693 = vpack.c.bf16 %v2564, %v2560
        %v2694 = vpack.c.bf16 %v2572, %v2568
        %v2695 = vpack.c.bf16 %v2574, %v2570
        %v2696 = vpack.c.bf16 %v2582, %v2578
        %v2697 = vpack.c.bf16 %v2584, %v2580
        %v2698 = vpack.c.bf16 %v2592, %v2588
        %v2699 = vpack.c.bf16 %v2594, %v2590
        %v2700 = vpack.c.bf16 %v2602, %v2598
        %v2701 = vpack.c.bf16 %v2604, %v2600
        %v2702 = vpack.c.bf16 %v2612, %v2608
        %v2703 = vpack.c.bf16 %v2614, %v2610
        %v2704 = vpack.c.bf16 %v2622, %v2618
        %v2705 = vpack.c.bf16 %v2624, %v2620
        %v2706 = vpack.c.bf16 %v2632, %v2628
        %v2707 = vpack.c.bf16 %v2634, %v2630
        %v2708 = vpack.c.bf16 %v2642, %v2638
        %v2709 = vpack.c.bf16 %v2644, %v2640
        %v2710 = vpack.c.bf16 %v2652, %v2648
        %v2711 = vpack.c.bf16 %v2654, %v2650
        %v2712 = vpack.c.bf16 %v2662, %v2658
        %v2713 = vpack.c.bf16 %v2664, %v2660
        %v2714 = vpack.c.bf16 %v2672, %v2668
        %v2715 = vpack.c.bf16 %v2674, %v2670
        %v2716 = vpack.c.bf16 %v2682, %v2678
        %v2717 = vpack.c.bf16 %v2684, %v2680
        %vm2718 = vcmp.ge.bf16.partialorder %v2686, 0
        %vm2719 = vcmp.ge.bf16.partialorder %v2687, 0
        %vm2720 = vcmp.ge.bf16.partialorder %v2688, 0
        %vm2721 = vcmp.ge.bf16.partialorder %v2689, 0
        %vm2722 = vcmp.ge.bf16.partialorder %v2690, 0
        %vm2723 = vcmp.ge.bf16.partialorder %v2691, 0
        %vm2724 = vcmp.ge.bf16.partialorder %v2692, 0
        %vm2725 = vcmp.ge.bf16.partialorder %v2693, 0
        %vm2726 = vcmp.ge.bf16.partialorder %v2694, 0
        %vm2727 = vcmp.ge.bf16.partialorder %v2695, 0
        %vm2728 = vcmp.ge.bf16.partialorder %v2696, 0
        %vm2729 = vcmp.ge.bf16.partialorder %v2697, 0
        %vm2730 = vcmp.ge.bf16.partialorder %v2698, 0
        %vm2731 = vcmp.ge.bf16.partialorder %v2699, 0
        %vm2732 = vcmp.ge.bf16.partialorder %v2700, 0
        %vm2733 = vcmp.ge.bf16.partialorder %v2701, 0
        %vm2734 = vcmp.ge.bf16.partialorder %v2702, 0
        %vm2735 = vcmp.ge.bf16.partialorder %v2703, 0
        %vm2736 = vcmp.ge.bf16.partialorder %v2704, 0
        %vm2737 = vcmp.ge.bf16.partialorder %v2705, 0
        %vm2738 = vcmp.ge.bf16.partialorder %v2706, 0
        %vm2739 = vcmp.ge.bf16.partialorder %v2707, 0
        %vm2740 = vcmp.ge.bf16.partialorder %v2708, 0
        %vm2741 = vcmp.ge.bf16.partialorder %v2709, 0
        %vm2742 = vcmp.ge.bf16.partialorder %v2710, 0
        %vm2743 = vcmp.ge.bf16.partialorder %v2711, 0
        %vm2744 = vcmp.ge.bf16.partialorder %v2712, 0
        %vm2745 = vcmp.ge.bf16.partialorder %v2713, 0
        %vm2746 = vcmp.ge.bf16.partialorder %v2714, 0
        %vm2747 = vcmp.ge.bf16.partialorder %v2715, 0
        %vm2748 = vcmp.ge.bf16.partialorder %v2716, 0
        %vm2749 = vcmp.ge.bf16.partialorder %v2717, 0
        %v2750 = vmul.bf16 %v2686, 1009007652
        %v2751 = vmul.bf16 %v2687, 1009007652
        %v2752 = vmul.bf16 %v2688, 1009007652
        %v2753 = vmul.bf16 %v2689, 1009007652
        %v2754 = vmul.bf16 %v2690, 1009007652
        %v2755 = vmul.bf16 %v2691, 1009007652
        %v2756 = vmul.bf16 %v2692, 1009007652
        %v2757 = vmul.bf16 %v2693, 1009007652
        %v2758 = vmul.bf16 %v2694, 1009007652
        %v2759 = vmul.bf16 %v2695, 1009007652
        %v2760 = vmul.bf16 %v2696, 1009007652
        %v2761 = vmul.bf16 %v2697, 1009007652
        %v2762 = vmul.bf16 %v2698, 1009007652
        %v2763 = vmul.bf16 %v2699, 1009007652
        %v2764 = vmul.bf16 %v2700, 1009007652
        %v2765 = vmul.bf16 %v2701, 1009007652
        %v2766 = vmul.bf16 %v2702, 1009007652
        %v2767 = vmul.bf16 %v2703, 1009007652
        %v2768 = vmul.bf16 %v2704, 1009007652
        %v2769 = vmul.bf16 %v2705, 1009007652
        %v2770 = vmul.bf16 %v2706, 1009007652
        %v2771 = vmul.bf16 %v2707, 1009007652
        %v2772 = vmul.bf16 %v2708, 1009007652
        %v2773 = vmul.bf16 %v2709, 1009007652
        %v2774 = vmul.bf16 %v2710, 1009007652
        %v2775 = vmul.bf16 %v2711, 1009007652
        %v2776 = vmul.bf16 %v2712, 1009007652
        %v2777 = vmul.bf16 %v2713, 1009007652
        %v2778 = vmul.bf16 %v2714, 1009007652
        %v2779 = vmul.bf16 %v2715, 1009007652
        %v2780 = vmul.bf16 %v2716, 1009007652
        %v2781 = vmul.bf16 %v2717, 1009007652
        %v2782 = vsel %vm2718, %v2686, %v2750
        %v2783 = vsel %vm2719, %v2687, %v2751
        %v2784 = vsel %vm2720, %v2688, %v2752
        %v2785 = vsel %vm2721, %v2689, %v2753
        %v2786 = vsel %vm2722, %v2690, %v2754
        %v2787 = vsel %vm2723, %v2691, %v2755
        %v2788 = vsel %vm2724, %v2692, %v2756
        %v2789 = vsel %vm2725, %v2693, %v2757
        %v2790 = vsel %vm2726, %v2694, %v2758
        %v2791 = vsel %vm2727, %v2695, %v2759
        %v2792 = vsel %vm2728, %v2696, %v2760
        %v2793 = vsel %vm2729, %v2697, %v2761
        %v2794 = vsel %vm2730, %v2698, %v2762
        %v2795 = vsel %vm2731, %v2699, %v2763
        %v2796 = vsel %vm2732, %v2700, %v2764
        %v2797 = vsel %vm2733, %v2701, %v2765
        %v2798 = vsel %vm2734, %v2702, %v2766
        %v2799 = vsel %vm2735, %v2703, %v2767
        %v2800 = vsel %vm2736, %v2704, %v2768
        %v2801 = vsel %vm2737, %v2705, %v2769
        %v2802 = vsel %vm2738, %v2706, %v2770
        %v2803 = vsel %vm2739, %v2707, %v2771
        %v2804 = vsel %vm2740, %v2708, %v2772
        %v2805 = vsel %vm2741, %v2709, %v2773
        %v2806 = vsel %vm2742, %v2710, %v2774
        %v2807 = vsel %vm2743, %v2711, %v2775
        %v2808 = vsel %vm2744, %v2712, %v2776
        %v2809 = vsel %vm2745, %v2713, %v2777
        %v2810 = vsel %vm2746, %v2714, %v2778
        %v2811 = vsel %vm2747, %v2715, %v2779
        %v2812 = vsel %vm2748, %v2716, %v2780
        %v2813 = vsel %vm2749, %v2717, %v2781
        %v2814 = vld [vmem:[#allocation11] sm:$0xf]
        %v2815 = vld [vmem:[#allocation11 + $0x4] sm:$0xf]
        %v2816 = vld [vmem:[#allocation11 + $0x8] sm:$0xf]
        %v2817 = vld [vmem:[#allocation11 + $0xc] sm:$0xf]
        %v2818 = vld [vmem:[#allocation11 + $0x10] sm:$0xf]
        %v2819 = vld [vmem:[#allocation11 + $0x14] sm:$0xf]
        %v2820 = vld [vmem:[#allocation11 + $0x18] sm:$0xf]
        %v2821 = vld [vmem:[#allocation11 + $0x1c] sm:$0xf]
        %v2822 = vld [vmem:[#allocation11 + $0x20] sm:$0xf]
        %v2823 = vld [vmem:[#allocation11 + $0x24] sm:$0xf]
        %v2824 = vld [vmem:[#allocation11 + $0x28] sm:$0xf]
        %v2825 = vld [vmem:[#allocation11 + $0x2c] sm:$0xf]
        %v2826 = vld [vmem:[#allocation11 + $0x30] sm:$0xf]
        %v2827 = vld [vmem:[#allocation11 + $0x34] sm:$0xf]
        %v2828 = vld [vmem:[#allocation11 + $0x38] sm:$0xf]
        %v2829 = vld [vmem:[#allocation11 + $0x3c] sm:$0xf]
        %v2830 = vld [vmem:[#allocation11 + $0x40] sm:$0xf]
        %v2831 = vld [vmem:[#allocation11 + $0x44] sm:$0xf]
        %v2832 = vld [vmem:[#allocation11 + $0x48] sm:$0xf]
        %v2833 = vld [vmem:[#allocation11 + $0x4c] sm:$0xf]
        %v2834 = vld [vmem:[#allocation11 + $0x50] sm:$0xf]
        %v2835 = vld [vmem:[#allocation11 + $0x54] sm:$0xf]
        %v2836 = vld [vmem:[#allocation11 + $0x58] sm:$0xf]
        %v2837 = vld [vmem:[#allocation11 + $0x5c] sm:$0xf]
        %v2838 = vld [vmem:[#allocation11 + $0x60] sm:$0xf]
        %v2839 = vld [vmem:[#allocation11 + $0x64] sm:$0xf]
        %v2840 = vld [vmem:[#allocation11 + $0x68] sm:$0xf]
        %v2841 = vld [vmem:[#allocation11 + $0x6c] sm:$0xf]
        %v2842 = vld [vmem:[#allocation11 + $0x70] sm:$0xf]
        %v2843 = vld [vmem:[#allocation11 + $0x74] sm:$0xf]
        %v2844 = vld [vmem:[#allocation11 + $0x78] sm:$0xf]
        %v2845 = vld [vmem:[#allocation11 + $0x7c] sm:$0xf]
        %v2846 = vld [vmem:[%s8 + $0x8] sm:$0x1]
        %v2848 = vlaneseq
        %v2849 = vshrl.u32 %v2848, 7
        %v2850 = vsub.s32 0, %v2849
        %v2851 = vrot.slane %v2846, %v2850
        %v2885 = vunpack.c.l.b16 %v2814
        %v2886 = vunpack.c.l.b16 %v2815
        %v2887 = vunpack.c.l.b16 %v2816
        %v2888 = vunpack.c.l.b16 %v2817
        %v2889 = vunpack.c.l.b16 %v2818
        %v2890 = vunpack.c.l.b16 %v2819
        %v2891 = vunpack.c.l.b16 %v2820
        %v2892 = vunpack.c.l.b16 %v2821
        %v2893 = vunpack.c.l.b16 %v2822
        %v2894 = vunpack.c.l.b16 %v2823
        %v2895 = vunpack.c.l.b16 %v2824
        %v2896 = vunpack.c.l.b16 %v2825
        %v2897 = vunpack.c.l.b16 %v2826
        %v2898 = vunpack.c.l.b16 %v2827
        %v2899 = vunpack.c.l.b16 %v2828
        %v2900 = vunpack.c.l.b16 %v2829
        %v2901 = vunpack.c.l.b16 %v2830
        %v2902 = vunpack.c.l.b16 %v2831
        %v2903 = vunpack.c.l.b16 %v2832
        %v2904 = vunpack.c.l.b16 %v2833
        %v2905 = vunpack.c.l.b16 %v2834
        %v2906 = vunpack.c.l.b16 %v2835
        %v2907 = vunpack.c.l.b16 %v2836
        %v2908 = vunpack.c.l.b16 %v2837
        %v2909 = vunpack.c.l.b16 %v2838
        %v2910 = vunpack.c.l.b16 %v2839
        %v2911 = vunpack.c.l.b16 %v2840
        %v2912 = vunpack.c.l.b16 %v2841
        %v2913 = vunpack.c.l.b16 %v2842
        %v2914 = vunpack.c.l.b16 %v2843
        %v2915 = vunpack.c.l.b16 %v2844
        %v2916 = vunpack.c.l.b16 %v2845
        %v2917 = vpack.c.b16 %v2886, %v2885
        %v2918 = vpack.c.b16 %v2888, %v2887
        %v2919 = vpack.c.b16 %v2890, %v2889
        %v2920 = vpack.c.b16 %v2892, %v2891
        %v2921 = vpack.c.b16 %v2894, %v2893
        %v2922 = vpack.c.b16 %v2896, %v2895
        %v2923 = vpack.c.b16 %v2898, %v2897
        %v2924 = vpack.c.b16 %v2900, %v2899
        %v2925 = vpack.c.b16 %v2902, %v2901
        %v2926 = vpack.c.b16 %v2904, %v2903
        %v2927 = vpack.c.b16 %v2906, %v2905
        %v2928 = vpack.c.b16 %v2908, %v2907
        %v2929 = vpack.c.b16 %v2910, %v2909
        %v2930 = vpack.c.b16 %v2912, %v2911
        %v2931 = vpack.c.b16 %v2914, %v2913
        %v2932 = vpack.c.b16 %v2916, %v2915
        %2949 = vmatprep.subr.bf16.mxu0 0
        %2950 = vmatpush1.bf16.msra.mxu0 %v2924
        %2951 = vmatprep.subr.bf16.mxu0 0
        %2952 = vmatpush1.bf16.msra.mxu0 %v2923
        %2953 = vmatprep.subr.bf16.mxu0 0
        %2954 = vmatpush1.bf16.msra.mxu0 %v2922
        %2955 = vmatprep.subr.bf16.mxu0 0
        %2956 = vmatpush1.bf16.msra.mxu0 %v2921
        %2957 = vmatprep.subr.bf16.mxu0 0
        %2958 = vmatpush1.bf16.msra.mxu0 %v2920
        %2959 = vmatprep.subr.bf16.mxu0 0
        %2960 = vmatpush1.bf16.msra.mxu0 %v2919
        %2961 = vmatprep.subr.bf16.mxu0 0
        %2962 = vmatpush1.bf16.msra.mxu0 %v2918
        %2963 = vmatprep.subr.bf16.mxu0 0
        %2964 = vmatpush1.bf16.msra.mxu0 %v2917
        %2965 = vmatprep.subr.bf16.mxu0 0
        %2966 = vmatpush2.bf16.msra.mxu0 %v2932
        %2967 = vmatprep.subr.bf16.mxu0 0
        %2968 = vmatpush2.bf16.msra.mxu0 %v2931
        %2969 = vmatprep.subr.bf16.mxu0 0
        %2970 = vmatpush2.bf16.msra.mxu0 %v2930
        %2971 = vmatprep.subr.bf16.mxu0 0
        %2972 = vmatpush2.bf16.msra.mxu0 %v2929
        %2973 = vmatprep.subr.bf16.mxu0 0
        %2974 = vmatpush2.bf16.msra.mxu0 %v2928
        %2975 = vmatprep.subr.bf16.mxu0 0
        %2976 = vmatpush2.bf16.msra.mxu0 %v2927
        %2977 = vmatprep.subr.bf16.mxu0 0
        %2978 = vmatpush2.bf16.msra.mxu0 %v2926
        %2979 = vmatprep.subr.bf16.mxu0 0
        %2980 = vmatpush2.bf16.msra.mxu0 %v2925
        %2981 = vmatprep.mubr.bf16.mxu0 %v2783
        %2982 = vmatmul.mubr.bf16.gmra.mxu0 %v2782
        %v2983 = vpop.f32.mrf.mxu0
        %v2984 = vadd.f32 %v2851, %v2983
        %v2985 = vpop.f32.mrf.mxu0
        %v2986 = vpop.f32.mrf.mxu0
        %v2987 = vadd.f32 %v2851, %v2986
        %v2988 = vpop.f32.mrf.mxu0
        %2989 = vmatprep.mubr.bf16.mxu0 %v2785
        %2990 = vmatmul.mubr.bf16.gmra.mxu0 %v2784
        %v2991 = vpop.f32.mrf.mxu0
        %v2992 = vadd.f32 %v2851, %v2991
        %v2993 = vpop.f32.mrf.mxu0
        %v2994 = vpop.f32.mrf.mxu0
        %v2995 = vadd.f32 %v2851, %v2994
        %v2996 = vpop.f32.mrf.mxu0
        %2997 = vmatprep.mubr.bf16.mxu0 %v2787
        %2998 = vmatmul.mubr.bf16.gmra.mxu0 %v2786
        %v2999 = vpop.f32.mrf.mxu0
        %v3000 = vadd.f32 %v2851, %v2999
        %v3001 = vpop.f32.mrf.mxu0
        %v3002 = vpop.f32.mrf.mxu0
        %v3003 = vadd.f32 %v2851, %v3002
        %v3004 = vpop.f32.mrf.mxu0
        %3005 = vmatprep.mubr.bf16.mxu0 %v2789
        %3006 = vmatmul.mubr.bf16.gmra.mxu0 %v2788
        %v3007 = vpop.f32.mrf.mxu0
        %v3008 = vadd.f32 %v2851, %v3007
        %v3009 = vpop.f32.mrf.mxu0
        %v3010 = vpop.f32.mrf.mxu0
        %v3011 = vadd.f32 %v2851, %v3010
        %v3012 = vpop.f32.mrf.mxu0
        %3013 = vmatprep.mubr.bf16.mxu0 %v2791
        %3014 = vmatmul.mubr.bf16.gmra.mxu0 %v2790
        %v3015 = vpop.f32.mrf.mxu0
        %v3016 = vadd.f32 %v2851, %v3015
        %v3017 = vpop.f32.mrf.mxu0
        %v3018 = vpop.f32.mrf.mxu0
        %v3019 = vadd.f32 %v2851, %v3018
        %v3020 = vpop.f32.mrf.mxu0
        %3021 = vmatprep.mubr.bf16.mxu0 %v2793
        %3022 = vmatmul.mubr.bf16.gmra.mxu0 %v2792
        %v3023 = vpop.f32.mrf.mxu0
        %v3024 = vadd.f32 %v2851, %v3023
        %v3025 = vpop.f32.mrf.mxu0
        %v3026 = vpop.f32.mrf.mxu0
        %v3027 = vadd.f32 %v2851, %v3026
        %v3028 = vpop.f32.mrf.mxu0
        %3029 = vmatprep.mubr.bf16.mxu0 %v2795
        %3030 = vmatmul.mubr.bf16.gmra.mxu0 %v2794
        %v3031 = vpop.f32.mrf.mxu0
        %v3032 = vadd.f32 %v2851, %v3031
        %v3033 = vpop.f32.mrf.mxu0
        %v3034 = vpop.f32.mrf.mxu0
        %v3035 = vadd.f32 %v2851, %v3034
        %v3036 = vpop.f32.mrf.mxu0
        %3037 = vmatprep.mubr.bf16.mxu0 %v2797
        %3038 = vmatmul.mubr.bf16.gmra.mxu0 %v2796
        %v3039 = vpop.f32.mrf.mxu0
        %v3040 = vadd.f32 %v2851, %v3039
        %v3041 = vpop.f32.mrf.mxu0
        %v3042 = vpop.f32.mrf.mxu0
        %v3043 = vadd.f32 %v2851, %v3042
        %v3044 = vpop.f32.mrf.mxu0
        %3045 = vmatprep.mubr.bf16.mxu0 %v2799
        %3046 = vmatmul.mubr.bf16.gmra.mxu0 %v2798
        %v3047 = vpop.f32.mrf.mxu0
        %v3048 = vadd.f32 %v2851, %v3047
        %v3049 = vpop.f32.mrf.mxu0
        %v3050 = vpop.f32.mrf.mxu0
        %v3051 = vadd.f32 %v2851, %v3050
        %v3052 = vpop.f32.mrf.mxu0
        %3053 = vmatprep.mubr.bf16.mxu0 %v2801
        %3054 = vmatmul.mubr.bf16.gmra.mxu0 %v2800
        %v3055 = vpop.f32.mrf.mxu0
        %v3056 = vadd.f32 %v2851, %v3055
        %v3057 = vpop.f32.mrf.mxu0
        %v3058 = vpop.f32.mrf.mxu0
        %v3059 = vadd.f32 %v2851, %v3058
        %v3060 = vpop.f32.mrf.mxu0
        %3061 = vmatprep.mubr.bf16.mxu0 %v2803
        %3062 = vmatmul.mubr.bf16.gmra.mxu0 %v2802
        %v3063 = vpop.f32.mrf.mxu0
        %v3064 = vadd.f32 %v2851, %v3063
        %v3065 = vpop.f32.mrf.mxu0
        %v3066 = vpop.f32.mrf.mxu0
        %v3067 = vadd.f32 %v2851, %v3066
        %v3068 = vpop.f32.mrf.mxu0
        %3069 = vmatprep.mubr.bf16.mxu0 %v2805
        %3070 = vmatmul.mubr.bf16.gmra.mxu0 %v2804
        %v3071 = vpop.f32.mrf.mxu0
        %v3072 = vadd.f32 %v2851, %v3071
        %v3073 = vpop.f32.mrf.mxu0
        %v3074 = vpop.f32.mrf.mxu0
        %v3075 = vadd.f32 %v2851, %v3074
        %v3076 = vpop.f32.mrf.mxu0
        %3077 = vmatprep.mubr.bf16.mxu0 %v2807
        %3078 = vmatmul.mubr.bf16.gmra.mxu0 %v2806
        %v3079 = vpop.f32.mrf.mxu0
        %v3080 = vadd.f32 %v2851, %v3079
        %v3081 = vpop.f32.mrf.mxu0
        %v3082 = vpop.f32.mrf.mxu0
        %v3083 = vadd.f32 %v2851, %v3082
        %v3084 = vpop.f32.mrf.mxu0
        %3085 = vmatprep.mubr.bf16.mxu0 %v2809
        %3086 = vmatmul.mubr.bf16.gmra.mxu0 %v2808
        %v3087 = vpop.f32.mrf.mxu0
        %v3088 = vadd.f32 %v2851, %v3087
        %v3089 = vpop.f32.mrf.mxu0
        %v3090 = vpop.f32.mrf.mxu0
        %v3091 = vadd.f32 %v2851, %v3090
        %v3092 = vpop.f32.mrf.mxu0
        %3093 = vmatprep.mubr.bf16.mxu0 %v2811
        %3094 = vmatmul.mubr.bf16.gmra.mxu0 %v2810
        %v3095 = vpop.f32.mrf.mxu0
        %v3096 = vadd.f32 %v2851, %v3095
        %v3097 = vpop.f32.mrf.mxu0
        %v3098 = vpop.f32.mrf.mxu0
        %v3099 = vadd.f32 %v2851, %v3098
        %v3100 = vpop.f32.mrf.mxu0
        %3101 = vmatprep.mubr.bf16.mxu0 %v2813
        %3102 = vmatmul.mubr.bf16.gmra.mxu0 %v2812
        %v3103 = vpop.f32.mrf.mxu0
        %v3104 = vadd.f32 %v2851, %v3103
        %v3105 = vpop.f32.mrf.mxu0
        %v3106 = vpop.f32.mrf.mxu0
        %v3107 = vadd.f32 %v2851, %v3106
        %v3108 = vpop.f32.mrf.mxu0
        %3109 = vdwg.mxu0
        %v3110 = vpack.c.bf16 %v2987, %v2984
        %v3111 = vpack.c.bf16 %v2995, %v2992
        %v3112 = vpack.c.bf16 %v3003, %v3000
        %v3113 = vpack.c.bf16 %v3011, %v3008
        %v3114 = vpack.c.bf16 %v3019, %v3016
        %v3115 = vpack.c.bf16 %v3027, %v3024
        %v3116 = vpack.c.bf16 %v3035, %v3032
        %v3117 = vpack.c.bf16 %v3043, %v3040
        %v3118 = vpack.c.bf16 %v3051, %v3048
        %v3119 = vpack.c.bf16 %v3059, %v3056
        %v3120 = vpack.c.bf16 %v3067, %v3064
        %v3121 = vpack.c.bf16 %v3075, %v3072
        %v3122 = vpack.c.bf16 %v3083, %v3080
        %v3123 = vpack.c.bf16 %v3091, %v3088
        %v3124 = vpack.c.bf16 %v3099, %v3096
        %v3125 = vpack.c.bf16 %v3107, %v3104
        %vm3126 = vcmp.ge.bf16.partialorder %v3110, 0
        %vm3127 = vcmp.ge.bf16.partialorder %v3111, 0
        %vm3128 = vcmp.ge.bf16.partialorder %v3112, 0
        %vm3129 = vcmp.ge.bf16.partialorder %v3113, 0
        %vm3130 = vcmp.ge.bf16.partialorder %v3114, 0
        %vm3131 = vcmp.ge.bf16.partialorder %v3115, 0
        %vm3132 = vcmp.ge.bf16.partialorder %v3116, 0
        %vm3133 = vcmp.ge.bf16.partialorder %v3117, 0
        %vm3134 = vcmp.ge.bf16.partialorder %v3118, 0
        %vm3135 = vcmp.ge.bf16.partialorder %v3119, 0
        %vm3136 = vcmp.ge.bf16.partialorder %v3120, 0
        %vm3137 = vcmp.ge.bf16.partialorder %v3121, 0
        %vm3138 = vcmp.ge.bf16.partialorder %v3122, 0
        %vm3139 = vcmp.ge.bf16.partialorder %v3123, 0
        %vm3140 = vcmp.ge.bf16.partialorder %v3124, 0
        %vm3141 = vcmp.ge.bf16.partialorder %v3125, 0
        %v3142 = vmul.bf16 %v3110, 1009007652
        %v3143 = vmul.bf16 %v3111, 1009007652
        %v3144 = vmul.bf16 %v3112, 1009007652
        %v3145 = vmul.bf16 %v3113, 1009007652
        %v3146 = vmul.bf16 %v3114, 1009007652
        %v3147 = vmul.bf16 %v3115, 1009007652
        %v3148 = vmul.bf16 %v3116, 1009007652
        %v3149 = vmul.bf16 %v3117, 1009007652
        %v3150 = vmul.bf16 %v3118, 1009007652
        %v3151 = vmul.bf16 %v3119, 1009007652
        %v3152 = vmul.bf16 %v3120, 1009007652
        %v3153 = vmul.bf16 %v3121, 1009007652
        %v3154 = vmul.bf16 %v3122, 1009007652
        %v3155 = vmul.bf16 %v3123, 1009007652
        %v3156 = vmul.bf16 %v3124, 1009007652
        %v3157 = vmul.bf16 %v3125, 1009007652
        %v3158 = vsel %vm3126, %v3110, %v3142
        %v3159 = vsel %vm3127, %v3111, %v3143
        %v3160 = vsel %vm3128, %v3112, %v3144
        %v3161 = vsel %vm3129, %v3113, %v3145
        %v3162 = vsel %vm3130, %v3114, %v3146
        %v3163 = vsel %vm3131, %v3115, %v3147
        %v3164 = vsel %vm3132, %v3116, %v3148
        %v3165 = vsel %vm3133, %v3117, %v3149
        %v3166 = vsel %vm3134, %v3118, %v3150
        %v3167 = vsel %vm3135, %v3119, %v3151
        %v3168 = vsel %vm3136, %v3120, %v3152
        %v3169 = vsel %vm3137, %v3121, %v3153
        %v3170 = vsel %vm3138, %v3122, %v3154
        %v3171 = vsel %vm3139, %v3123, %v3155
        %v3172 = vsel %vm3140, %v3124, %v3156
        %v3173 = vsel %vm3141, %v3125, %v3157
        %v3174 = vld [vmem:[#allocation13] sm:$0xf]
        %v3175 = vld [vmem:[#allocation13 + $0x4] sm:$0xf]
        %v3176 = vld [vmem:[#allocation13 + $0x8] sm:$0xf]
        %v3177 = vld [vmem:[#allocation13 + $0xc] sm:$0xf]
        %v3178 = vld [vmem:[#allocation13 + $0x10] sm:$0xf]
        %v3179 = vld [vmem:[#allocation13 + $0x14] sm:$0xf]
        %v3180 = vld [vmem:[#allocation13 + $0x18] sm:$0xf]
        %v3181 = vld [vmem:[#allocation13 + $0x1c] sm:$0xf]
        %v3182 = vld [vmem:[#allocation13 + $0x20] sm:$0xf]
        %v3183 = vld [vmem:[#allocation13 + $0x24] sm:$0xf]
        %v3184 = vld [vmem:[#allocation13 + $0x28] sm:$0xf]
        %v3185 = vld [vmem:[#allocation13 + $0x2c] sm:$0xf]
        %v3186 = vld [vmem:[#allocation13 + $0x30] sm:$0xf]
        %v3187 = vld [vmem:[#allocation13 + $0x34] sm:$0xf]
        %v3188 = vld [vmem:[#allocation13 + $0x38] sm:$0xf]
        %v3189 = vld [vmem:[#allocation13 + $0x3c] sm:$0xf]
        %v3190 = vld [vmem:[%s8 + $0x9] sm:$0x1]
        %v3192 = vlaneseq
        %v3193 = vshrl.u32 %v3192, 7
        %v3194 = vsub.s32 0, %v3193
        %v3195 = vrot.slane %v3190, %v3194
        %v3213 = vunpack.c.l.b16 %v3174
        %v3214 = vunpack.c.l.b16 %v3175
        %v3215 = vunpack.c.l.b16 %v3176
        %v3216 = vunpack.c.l.b16 %v3177
        %v3217 = vunpack.c.l.b16 %v3178
        %v3218 = vunpack.c.l.b16 %v3179
        %v3219 = vunpack.c.l.b16 %v3180
        %v3220 = vunpack.c.l.b16 %v3181
        %v3221 = vunpack.c.l.b16 %v3182
        %v3222 = vunpack.c.l.b16 %v3183
        %v3223 = vunpack.c.l.b16 %v3184
        %v3224 = vunpack.c.l.b16 %v3185
        %v3225 = vunpack.c.l.b16 %v3186
        %v3226 = vunpack.c.l.b16 %v3187
        %v3227 = vunpack.c.l.b16 %v3188
        %v3228 = vunpack.c.l.b16 %v3189
        %v3229 = vpack.c.b16 %v3214, %v3213
        %v3230 = vpack.c.b16 %v3216, %v3215
        %v3231 = vpack.c.b16 %v3218, %v3217
        %v3232 = vpack.c.b16 %v3220, %v3219
        %v3233 = vpack.c.b16 %v3222, %v3221
        %v3234 = vpack.c.b16 %v3224, %v3223
        %v3235 = vpack.c.b16 %v3226, %v3225
        %v3236 = vpack.c.b16 %v3228, %v3227
        %3245 = vmatprep.subr.bf16.mxu0 0
        %3246 = vmatpush1.bf16.msra.mxu0 %v3236
        %3247 = vmatprep.subr.bf16.mxu0 0
        %3248 = vmatpush1.bf16.msra.mxu0 %v3235
        %3249 = vmatprep.subr.bf16.mxu0 0
        %3250 = vmatpush1.bf16.msra.mxu0 %v3234
        %3251 = vmatprep.subr.bf16.mxu0 0
        %3252 = vmatpush1.bf16.msra.mxu0 %v3233
        %3253 = vmatprep.subr.bf16.mxu0 0
        %3254 = vmatpush1.bf16.msra.mxu0 %v3232
        %3255 = vmatprep.subr.bf16.mxu0 0
        %3256 = vmatpush1.bf16.msra.mxu0 %v3231
        %3257 = vmatprep.subr.bf16.mxu0 0
        %3258 = vmatpush1.bf16.msra.mxu0 %v3230
        %3259 = vmatprep.subr.bf16.mxu0 0
        %3260 = vmatpush1.bf16.msra.mxu0 %v3229
        %3261 = vmatprep.subr.bf16.mxu0 0
        %3262 = vmatpush2.bf16.msra.mxu0 0
        %3263 = vmatprep.subr.bf16.mxu0 0
        %3264 = vmatpush2.bf16.msra.mxu0 0
        %3265 = vmatprep.subr.bf16.mxu0 0
        %3266 = vmatpush2.bf16.msra.mxu0 0
        %3267 = vmatprep.subr.bf16.mxu0 0
        %3268 = vmatpush2.bf16.msra.mxu0 0
        %3269 = vmatprep.subr.bf16.mxu0 0
        %3270 = vmatpush2.bf16.msra.mxu0 0
        %3271 = vmatprep.subr.bf16.mxu0 0
        %3272 = vmatpush2.bf16.msra.mxu0 0
        %3273 = vmatprep.subr.bf16.mxu0 0
        %3274 = vmatpush2.bf16.msra.mxu0 0
        %3275 = vmatprep.subr.bf16.mxu0 0
        %3276 = vmatpush2.bf16.msra.mxu0 0
        %3277 = vmatprep.mubr.bf16.mxu0 0
        %3278 = vmatmul.mubr.bf16.gmra.mxu0 %v3158
        %v3279 = vpop.f32.mrf.mxu0
        %v3280 = vadd.f32 %v3195, %v3279
        %v3281 = vpop.f32.mrf.mxu0
        %v3282 = vpop.f32.mrf.mxu0
        %v3283 = vadd.f32 %v3195, %v3282
        %v3284 = vpop.f32.mrf.mxu0
        %3285 = vmatprep.mubr.bf16.mxu0 0
        %3286 = vmatmul.mubr.bf16.gmra.mxu0 %v3159
        %v3287 = vpop.f32.mrf.mxu0
        %v3288 = vadd.f32 %v3195, %v3287
        %v3289 = vpop.f32.mrf.mxu0
        %v3290 = vpop.f32.mrf.mxu0
        %v3291 = vadd.f32 %v3195, %v3290
        %v3292 = vpop.f32.mrf.mxu0
        %3293 = vmatprep.mubr.bf16.mxu0 0
        %3294 = vmatmul.mubr.bf16.gmra.mxu0 %v3160
        %v3295 = vpop.f32.mrf.mxu0
        %v3296 = vadd.f32 %v3195, %v3295
        %v3297 = vpop.f32.mrf.mxu0
        %v3298 = vpop.f32.mrf.mxu0
        %v3299 = vadd.f32 %v3195, %v3298
        %v3300 = vpop.f32.mrf.mxu0
        %3301 = vmatprep.mubr.bf16.mxu0 0
        %3302 = vmatmul.mubr.bf16.gmra.mxu0 %v3161
        %v3303 = vpop.f32.mrf.mxu0
        %v3304 = vadd.f32 %v3195, %v3303
        %v3305 = vpop.f32.mrf.mxu0
        %v3306 = vpop.f32.mrf.mxu0
        %v3307 = vadd.f32 %v3195, %v3306
        %v3308 = vpop.f32.mrf.mxu0
        %3309 = vmatprep.mubr.bf16.mxu0 0
        %3310 = vmatmul.mubr.bf16.gmra.mxu0 %v3162
        %v3311 = vpop.f32.mrf.mxu0
        %v3312 = vadd.f32 %v3195, %v3311
        %v3313 = vpop.f32.mrf.mxu0
        %v3314 = vpop.f32.mrf.mxu0
        %v3315 = vadd.f32 %v3195, %v3314
        %v3316 = vpop.f32.mrf.mxu0
        %3317 = vmatprep.mubr.bf16.mxu0 0
        %3318 = vmatmul.mubr.bf16.gmra.mxu0 %v3163
        %v3319 = vpop.f32.mrf.mxu0
        %v3320 = vadd.f32 %v3195, %v3319
        %v3321 = vpop.f32.mrf.mxu0
        %v3322 = vpop.f32.mrf.mxu0
        %v3323 = vadd.f32 %v3195, %v3322
        %v3324 = vpop.f32.mrf.mxu0
        %3325 = vmatprep.mubr.bf16.mxu0 0
        %3326 = vmatmul.mubr.bf16.gmra.mxu0 %v3164
        %v3327 = vpop.f32.mrf.mxu0
        %v3328 = vadd.f32 %v3195, %v3327
        %v3329 = vpop.f32.mrf.mxu0
        %v3330 = vpop.f32.mrf.mxu0
        %v3331 = vadd.f32 %v3195, %v3330
        %v3332 = vpop.f32.mrf.mxu0
        %3333 = vmatprep.mubr.bf16.mxu0 0
        %3334 = vmatmul.mubr.bf16.gmra.mxu0 %v3165
        %v3335 = vpop.f32.mrf.mxu0
        %v3336 = vadd.f32 %v3195, %v3335
        %v3337 = vpop.f32.mrf.mxu0
        %v3338 = vpop.f32.mrf.mxu0
        %v3339 = vadd.f32 %v3195, %v3338
        %v3340 = vpop.f32.mrf.mxu0
        %3341 = vmatprep.mubr.bf16.mxu0 0
        %3342 = vmatmul.mubr.bf16.gmra.mxu0 %v3166
        %v3343 = vpop.f32.mrf.mxu0
        %v3344 = vadd.f32 %v3195, %v3343
        %v3345 = vpop.f32.mrf.mxu0
        %v3346 = vpop.f32.mrf.mxu0
        %v3347 = vadd.f32 %v3195, %v3346
        %v3348 = vpop.f32.mrf.mxu0
        %3349 = vmatprep.mubr.bf16.mxu0 0
        %3350 = vmatmul.mubr.bf16.gmra.mxu0 %v3167
        %v3351 = vpop.f32.mrf.mxu0
        %v3352 = vadd.f32 %v3195, %v3351
        %v3353 = vpop.f32.mrf.mxu0
        %v3354 = vpop.f32.mrf.mxu0
        %v3355 = vadd.f32 %v3195, %v3354
        %v3356 = vpop.f32.mrf.mxu0
        %3357 = vmatprep.mubr.bf16.mxu0 0
        %3358 = vmatmul.mubr.bf16.gmra.mxu0 %v3168
        %v3359 = vpop.f32.mrf.mxu0
        %v3360 = vadd.f32 %v3195, %v3359
        %v3361 = vpop.f32.mrf.mxu0
        %v3362 = vpop.f32.mrf.mxu0
        %v3363 = vadd.f32 %v3195, %v3362
        %v3364 = vpop.f32.mrf.mxu0
        %3365 = vmatprep.mubr.bf16.mxu0 0
        %3366 = vmatmul.mubr.bf16.gmra.mxu0 %v3169
        %v3367 = vpop.f32.mrf.mxu0
        %v3368 = vadd.f32 %v3195, %v3367
        %v3369 = vpop.f32.mrf.mxu0
        %v3370 = vpop.f32.mrf.mxu0
        %v3371 = vadd.f32 %v3195, %v3370
        %v3372 = vpop.f32.mrf.mxu0
        %3373 = vmatprep.mubr.bf16.mxu0 0
        %3374 = vmatmul.mubr.bf16.gmra.mxu0 %v3170
        %v3375 = vpop.f32.mrf.mxu0
        %v3376 = vadd.f32 %v3195, %v3375
        %v3377 = vpop.f32.mrf.mxu0
        %v3378 = vpop.f32.mrf.mxu0
        %v3379 = vadd.f32 %v3195, %v3378
        %v3380 = vpop.f32.mrf.mxu0
        %3381 = vmatprep.mubr.bf16.mxu0 0
        %3382 = vmatmul.mubr.bf16.gmra.mxu0 %v3171
        %v3383 = vpop.f32.mrf.mxu0
        %v3384 = vadd.f32 %v3195, %v3383
        %v3385 = vpop.f32.mrf.mxu0
        %v3386 = vpop.f32.mrf.mxu0
        %v3387 = vadd.f32 %v3195, %v3386
        %v3388 = vpop.f32.mrf.mxu0
        %3389 = vmatprep.mubr.bf16.mxu0 0
        %3390 = vmatmul.mubr.bf16.gmra.mxu0 %v3172
        %v3391 = vpop.f32.mrf.mxu0
        %v3392 = vadd.f32 %v3195, %v3391
        %v3393 = vpop.f32.mrf.mxu0
        %v3394 = vpop.f32.mrf.mxu0
        %v3395 = vadd.f32 %v3195, %v3394
        %v3396 = vpop.f32.mrf.mxu0
        %3397 = vmatprep.mubr.bf16.mxu0 0
        %3398 = vmatmul.mubr.bf16.gmra.mxu0 %v3173
        %v3399 = vpop.f32.mrf.mxu0
        %v3400 = vadd.f32 %v3195, %v3399
        %v3401 = vpop.f32.mrf.mxu0
        %v3402 = vpop.f32.mrf.mxu0
        %v3403 = vadd.f32 %v3195, %v3402
        %v3404 = vpop.f32.mrf.mxu0
        %3405 = vdwg.mxu0
        %v3406 = vpack.c.bf16 %v3283, %v3280
        %v3407 = vpack.c.bf16 %v3291, %v3288
        %v3408 = vpack.c.bf16 %v3299, %v3296
        %v3409 = vpack.c.bf16 %v3307, %v3304
        %v3410 = vpack.c.bf16 %v3315, %v3312
        %v3411 = vpack.c.bf16 %v3323, %v3320
        %v3412 = vpack.c.bf16 %v3331, %v3328
        %v3413 = vpack.c.bf16 %v3339, %v3336
        %v3414 = vpack.c.bf16 %v3347, %v3344
        %v3415 = vpack.c.bf16 %v3355, %v3352
        %v3416 = vpack.c.bf16 %v3363, %v3360
        %v3417 = vpack.c.bf16 %v3371, %v3368
        %v3418 = vpack.c.bf16 %v3379, %v3376
        %v3419 = vpack.c.bf16 %v3387, %v3384
        %v3420 = vpack.c.bf16 %v3395, %v3392
        %v3421 = vpack.c.bf16 %v3403, %v3400
        %vm3422 = vcmp.ge.bf16.partialorder %v3406, 0
        %vm3423 = vcmp.ge.bf16.partialorder %v3407, 0
        %vm3424 = vcmp.ge.bf16.partialorder %v3408, 0
        %vm3425 = vcmp.ge.bf16.partialorder %v3409, 0
        %vm3426 = vcmp.ge.bf16.partialorder %v3410, 0
        %vm3427 = vcmp.ge.bf16.partialorder %v3411, 0
        %vm3428 = vcmp.ge.bf16.partialorder %v3412, 0
        %vm3429 = vcmp.ge.bf16.partialorder %v3413, 0
        %vm3430 = vcmp.ge.bf16.partialorder %v3414, 0
        %vm3431 = vcmp.ge.bf16.partialorder %v3415, 0
        %vm3432 = vcmp.ge.bf16.partialorder %v3416, 0
        %vm3433 = vcmp.ge.bf16.partialorder %v3417, 0
        %vm3434 = vcmp.ge.bf16.partialorder %v3418, 0
        %vm3435 = vcmp.ge.bf16.partialorder %v3419, 0
        %vm3436 = vcmp.ge.bf16.partialorder %v3420, 0
        %vm3437 = vcmp.ge.bf16.partialorder %v3421, 0
        %v3438 = vmul.bf16 %v3406, 1009007652
        %v3439 = vmul.bf16 %v3407, 1009007652
        %v3440 = vmul.bf16 %v3408, 1009007652
        %v3441 = vmul.bf16 %v3409, 1009007652
        %v3442 = vmul.bf16 %v3410, 1009007652
        %v3443 = vmul.bf16 %v3411, 1009007652
        %v3444 = vmul.bf16 %v3412, 1009007652
        %v3445 = vmul.bf16 %v3413, 1009007652
        %v3446 = vmul.bf16 %v3414, 1009007652
        %v3447 = vmul.bf16 %v3415, 1009007652
        %v3448 = vmul.bf16 %v3416, 1009007652
        %v3449 = vmul.bf16 %v3417, 1009007652
        %v3450 = vmul.bf16 %v3418, 1009007652
        %v3451 = vmul.bf16 %v3419, 1009007652
        %v3452 = vmul.bf16 %v3420, 1009007652
        %v3453 = vmul.bf16 %v3421, 1009007652
        %v3454 = vsel %vm3422, %v3406, %v3438
        %v3455 = vsel %vm3423, %v3407, %v3439
        %v3456 = vsel %vm3424, %v3408, %v3440
        %v3457 = vsel %vm3425, %v3409, %v3441
        %v3458 = vsel %vm3426, %v3410, %v3442
        %v3459 = vsel %vm3427, %v3411, %v3443
        %v3460 = vsel %vm3428, %v3412, %v3444
        %v3461 = vsel %vm3429, %v3413, %v3445
        %v3462 = vsel %vm3430, %v3414, %v3446
        %v3463 = vsel %vm3431, %v3415, %v3447
        %v3464 = vsel %vm3432, %v3416, %v3448
        %v3465 = vsel %vm3433, %v3417, %v3449
        %v3466 = vsel %vm3434, %v3418, %v3450
        %v3467 = vsel %vm3435, %v3419, %v3451
        %v3468 = vsel %vm3436, %v3420, %v3452
        %v3469 = vsel %vm3437, %v3421, %v3453
        %v3470 = vld [vmem:[#allocation14] sm:$0xf]
        %v3471 = vld [vmem:[#allocation14 + $0x4] sm:$0xf]
        %v3472 = vld [vmem:[#allocation14 + $0x8] sm:$0xf]
        %v3473 = vld [vmem:[#allocation14 + $0xc] sm:$0xf]
        %v3474 = vld [vmem:[#allocation14 + $0x10] sm:$0xf]
        %v3475 = vld [vmem:[#allocation14 + $0x14] sm:$0xf]
        %v3476 = vld [vmem:[#allocation14 + $0x18] sm:$0xf]
        %v3477 = vld [vmem:[#allocation14 + $0x1c] sm:$0xf]
        %v3478 = vld [vmem:[#allocation14 + $0x20] sm:$0xf]
        %v3479 = vld [vmem:[#allocation14 + $0x24] sm:$0xf]
        %v3480 = vld [vmem:[#allocation14 + $0x28] sm:$0xf]
        %v3481 = vld [vmem:[#allocation14 + $0x2c] sm:$0xf]
        %v3482 = vld [vmem:[#allocation14 + $0x30] sm:$0xf]
        %v3483 = vld [vmem:[#allocation14 + $0x34] sm:$0xf]
        %v3484 = vld [vmem:[#allocation14 + $0x38] sm:$0xf]
        %v3485 = vld [vmem:[#allocation14 + $0x3c] sm:$0xf]
        %v3486 = vld [vmem:[%s8 + $0xa] sm:$0x1]
        %v3488 = vlaneseq
        %v3489 = vshrl.u32 %v3488, 7
        %v3490 = vsub.s32 0, %v3489
        %v3491 = vrot.slane %v3486, %v3490
        %v3509 = vunpack.c.l.b16 %v3470
        %v3510 = vunpack.c.l.b16 %v3471
        %v3511 = vunpack.c.l.b16 %v3472
        %v3512 = vunpack.c.l.b16 %v3473
        %v3513 = vunpack.c.l.b16 %v3474
        %v3514 = vunpack.c.l.b16 %v3475
        %v3515 = vunpack.c.l.b16 %v3476
        %v3516 = vunpack.c.l.b16 %v3477
        %v3517 = vunpack.c.l.b16 %v3478
        %v3518 = vunpack.c.l.b16 %v3479
        %v3519 = vunpack.c.l.b16 %v3480
        %v3520 = vunpack.c.l.b16 %v3481
        %v3521 = vunpack.c.l.b16 %v3482
        %v3522 = vunpack.c.l.b16 %v3483
        %v3523 = vunpack.c.l.b16 %v3484
        %v3524 = vunpack.c.l.b16 %v3485
        %v3525 = vpack.c.b16 %v3510, %v3509
        %v3526 = vpack.c.b16 %v3512, %v3511
        %v3527 = vpack.c.b16 %v3514, %v3513
        %v3528 = vpack.c.b16 %v3516, %v3515
        %v3529 = vpack.c.b16 %v3518, %v3517
        %v3530 = vpack.c.b16 %v3520, %v3519
        %v3531 = vpack.c.b16 %v3522, %v3521
        %v3532 = vpack.c.b16 %v3524, %v3523
        %3541 = vmatprep.subr.bf16.mxu0 0
        %3542 = vmatpush1.bf16.msra.mxu0 %v3532
        %3543 = vmatprep.subr.bf16.mxu0 0
        %3544 = vmatpush1.bf16.msra.mxu0 %v3531
        %3545 = vmatprep.subr.bf16.mxu0 0
        %3546 = vmatpush1.bf16.msra.mxu0 %v3530
        %3547 = vmatprep.subr.bf16.mxu0 0
        %3548 = vmatpush1.bf16.msra.mxu0 %v3529
        %3549 = vmatprep.subr.bf16.mxu0 0
        %3550 = vmatpush1.bf16.msra.mxu0 %v3528
        %3551 = vmatprep.subr.bf16.mxu0 0
        %3552 = vmatpush1.bf16.msra.mxu0 %v3527
        %3553 = vmatprep.subr.bf16.mxu0 0
        %3554 = vmatpush1.bf16.msra.mxu0 %v3526
        %3555 = vmatprep.subr.bf16.mxu0 0
        %3556 = vmatpush1.bf16.msra.mxu0 %v3525
        %3557 = vmatprep.subr.bf16.mxu0 0
        %3558 = vmatpush2.bf16.msra.mxu0 0
        %3559 = vmatprep.subr.bf16.mxu0 0
        %3560 = vmatpush2.bf16.msra.mxu0 0
        %3561 = vmatprep.subr.bf16.mxu0 0
        %3562 = vmatpush2.bf16.msra.mxu0 0
        %3563 = vmatprep.subr.bf16.mxu0 0
        %3564 = vmatpush2.bf16.msra.mxu0 0
        %3565 = vmatprep.subr.bf16.mxu0 0
        %3566 = vmatpush2.bf16.msra.mxu0 0
        %3567 = vmatprep.subr.bf16.mxu0 0
        %3568 = vmatpush2.bf16.msra.mxu0 0
        %3569 = vmatprep.subr.bf16.mxu0 0
        %3570 = vmatpush2.bf16.msra.mxu0 0
        %3571 = vmatprep.subr.bf16.mxu0 0
        %3572 = vmatpush2.bf16.msra.mxu0 0
        %3573 = vmatprep.mubr.bf16.mxu0 0
        %3574 = vmatmul.mubr.bf16.gmra.mxu0 %v3454
        %v3575 = vpop.f32.mrf.mxu0
        %v3576 = vadd.f32 %v3491, %v3575
        %v3577 = vpop.f32.mrf.mxu0
        %v3578 = vpop.f32.mrf.mxu0
        %v3579 = vadd.f32 %v3491, %v3578
        %v3580 = vpop.f32.mrf.mxu0
        %3581 = vmatprep.mubr.bf16.mxu0 0
        %3582 = vmatmul.mubr.bf16.gmra.mxu0 %v3455
        %v3583 = vpop.f32.mrf.mxu0
        %v3584 = vadd.f32 %v3491, %v3583
        %v3585 = vpop.f32.mrf.mxu0
        %v3586 = vpop.f32.mrf.mxu0
        %v3587 = vadd.f32 %v3491, %v3586
        %v3588 = vpop.f32.mrf.mxu0
        %3589 = vmatprep.mubr.bf16.mxu0 0
        %3590 = vmatmul.mubr.bf16.gmra.mxu0 %v3456
        %v3591 = vpop.f32.mrf.mxu0
        %v3592 = vadd.f32 %v3491, %v3591
        %v3593 = vpop.f32.mrf.mxu0
        %v3594 = vpop.f32.mrf.mxu0
        %v3595 = vadd.f32 %v3491, %v3594
        %v3596 = vpop.f32.mrf.mxu0
        %3597 = vmatprep.mubr.bf16.mxu0 0
        %3598 = vmatmul.mubr.bf16.gmra.mxu0 %v3457
        %v3599 = vpop.f32.mrf.mxu0
        %v3600 = vadd.f32 %v3491, %v3599
        %v3601 = vpop.f32.mrf.mxu0
        %v3602 = vpop.f32.mrf.mxu0
        %v3603 = vadd.f32 %v3491, %v3602
        %v3604 = vpop.f32.mrf.mxu0
        %3605 = vmatprep.mubr.bf16.mxu0 0
        %3606 = vmatmul.mubr.bf16.gmra.mxu0 %v3458
        %v3607 = vpop.f32.mrf.mxu0
        %v3608 = vadd.f32 %v3491, %v3607
        %v3609 = vpop.f32.mrf.mxu0
        %v3610 = vpop.f32.mrf.mxu0
        %v3611 = vadd.f32 %v3491, %v3610
        %v3612 = vpop.f32.mrf.mxu0
        %3613 = vmatprep.mubr.bf16.mxu0 0
        %3614 = vmatmul.mubr.bf16.gmra.mxu0 %v3459
        %v3615 = vpop.f32.mrf.mxu0
        %v3616 = vadd.f32 %v3491, %v3615
        %v3617 = vpop.f32.mrf.mxu0
        %v3618 = vpop.f32.mrf.mxu0
        %v3619 = vadd.f32 %v3491, %v3618
        %v3620 = vpop.f32.mrf.mxu0
        %3621 = vmatprep.mubr.bf16.mxu0 0
        %3622 = vmatmul.mubr.bf16.gmra.mxu0 %v3460
        %v3623 = vpop.f32.mrf.mxu0
        %v3624 = vadd.f32 %v3491, %v3623
        %v3625 = vpop.f32.mrf.mxu0
        %v3626 = vpop.f32.mrf.mxu0
        %v3627 = vadd.f32 %v3491, %v3626
        %v3628 = vpop.f32.mrf.mxu0
        %3629 = vmatprep.mubr.bf16.mxu0 0
        %3630 = vmatmul.mubr.bf16.gmra.mxu0 %v3461
        %v3631 = vpop.f32.mrf.mxu0
        %v3632 = vadd.f32 %v3491, %v3631
        %v3633 = vpop.f32.mrf.mxu0
        %v3634 = vpop.f32.mrf.mxu0
        %v3635 = vadd.f32 %v3491, %v3634
        %v3636 = vpop.f32.mrf.mxu0
        %3637 = vmatprep.mubr.bf16.mxu0 0
        %3638 = vmatmul.mubr.bf16.gmra.mxu0 %v3462
        %v3639 = vpop.f32.mrf.mxu0
        %v3640 = vadd.f32 %v3491, %v3639
        %v3641 = vpop.f32.mrf.mxu0
        %v3642 = vpop.f32.mrf.mxu0
        %v3643 = vadd.f32 %v3491, %v3642
        %v3644 = vpop.f32.mrf.mxu0
        %3645 = vmatprep.mubr.bf16.mxu0 0
        %3646 = vmatmul.mubr.bf16.gmra.mxu0 %v3463
        %v3647 = vpop.f32.mrf.mxu0
        %v3648 = vadd.f32 %v3491, %v3647
        %v3649 = vpop.f32.mrf.mxu0
        %v3650 = vpop.f32.mrf.mxu0
        %v3651 = vadd.f32 %v3491, %v3650
        %v3652 = vpop.f32.mrf.mxu0
        %3653 = vmatprep.mubr.bf16.mxu0 0
        %3654 = vmatmul.mubr.bf16.gmra.mxu0 %v3464
        %v3655 = vpop.f32.mrf.mxu0
        %v3656 = vadd.f32 %v3491, %v3655
        %v3657 = vpop.f32.mrf.mxu0
        %v3658 = vpop.f32.mrf.mxu0
        %v3659 = vadd.f32 %v3491, %v3658
        %v3660 = vpop.f32.mrf.mxu0
        %3661 = vmatprep.mubr.bf16.mxu0 0
        %3662 = vmatmul.mubr.bf16.gmra.mxu0 %v3465
        %v3663 = vpop.f32.mrf.mxu0
        %v3664 = vadd.f32 %v3491, %v3663
        %v3665 = vpop.f32.mrf.mxu0
        %v3666 = vpop.f32.mrf.mxu0
        %v3667 = vadd.f32 %v3491, %v3666
        %v3668 = vpop.f32.mrf.mxu0
        %3669 = vmatprep.mubr.bf16.mxu0 0
        %3670 = vmatmul.mubr.bf16.gmra.mxu0 %v3466
        %v3671 = vpop.f32.mrf.mxu0
        %v3672 = vadd.f32 %v3491, %v3671
        %v3673 = vpop.f32.mrf.mxu0
        %v3674 = vpop.f32.mrf.mxu0
        %v3675 = vadd.f32 %v3491, %v3674
        %v3676 = vpop.f32.mrf.mxu0
        %3677 = vmatprep.mubr.bf16.mxu0 0
        %3678 = vmatmul.mubr.bf16.gmra.mxu0 %v3467
        %v3679 = vpop.f32.mrf.mxu0
        %v3680 = vadd.f32 %v3491, %v3679
        %v3681 = vpop.f32.mrf.mxu0
        %v3682 = vpop.f32.mrf.mxu0
        %v3683 = vadd.f32 %v3491, %v3682
        %v3684 = vpop.f32.mrf.mxu0
        %3685 = vmatprep.mubr.bf16.mxu0 0
        %3686 = vmatmul.mubr.bf16.gmra.mxu0 %v3468
        %v3687 = vpop.f32.mrf.mxu0
        %v3688 = vadd.f32 %v3491, %v3687
        %v3689 = vpop.f32.mrf.mxu0
        %v3690 = vpop.f32.mrf.mxu0
        %v3691 = vadd.f32 %v3491, %v3690
        %v3692 = vpop.f32.mrf.mxu0
        %3693 = vmatprep.mubr.bf16.mxu0 0
        %3694 = vmatmul.mubr.bf16.gmra.mxu0 %v3469
        %v3695 = vpop.f32.mrf.mxu0
        %v3696 = vadd.f32 %v3491, %v3695
        %v3697 = vpop.f32.mrf.mxu0
        %v3698 = vpop.f32.mrf.mxu0
        %v3699 = vadd.f32 %v3491, %v3698
        %v3700 = vpop.f32.mrf.mxu0
        %3701 = vdwg.mxu0
        %3702 = vmax.xlane.f32.xlu0 %v3576
        %v3703 = vpop.xlane.xlu0 %3702
        %3704 = vmax.xlane.f32.xlu0 %v3579
        %v3705 = vpop.xlane.xlu0 %3704
        %3706 = vmax.xlane.f32.xlu0 %v3584
        %v3707 = vpop.xlane.xlu0 %3706
        %3708 = vmax.xlane.f32.xlu0 %v3587
        %v3709 = vpop.xlane.xlu0 %3708
        %3710 = vmax.xlane.f32.xlu0 %v3592
        %v3711 = vpop.xlane.xlu0 %3710
        %3712 = vmax.xlane.f32.xlu0 %v3595
        %v3713 = vpop.xlane.xlu0 %3712
        %3714 = vmax.xlane.f32.xlu0 %v3600
        %v3715 = vpop.xlane.xlu0 %3714
        %3716 = vmax.xlane.f32.xlu0 %v3603
        %v3717 = vpop.xlane.xlu0 %3716
        %3718 = vmax.xlane.f32.xlu0 %v3608
        %v3719 = vpop.xlane.xlu0 %3718
        %3720 = vmax.xlane.f32.xlu0 %v3611
        %v3721 = vpop.xlane.xlu0 %3720
        %3722 = vmax.xlane.f32.xlu0 %v3616
        %v3723 = vpop.xlane.xlu0 %3722
        %3724 = vmax.xlane.f32.xlu0 %v3619
        %v3725 = vpop.xlane.xlu0 %3724
        %3726 = vmax.xlane.f32.xlu0 %v3624
        %v3727 = vpop.xlane.xlu0 %3726
        %3728 = vmax.xlane.f32.xlu0 %v3627
        %v3729 = vpop.xlane.xlu0 %3728
        %3730 = vmax.xlane.f32.xlu0 %v3632
        %v3731 = vpop.xlane.xlu0 %3730
        %3732 = vmax.xlane.f32.xlu0 %v3635
        %v3733 = vpop.xlane.xlu0 %3732
        %3734 = vmax.xlane.f32.xlu0 %v3640
        %v3735 = vpop.xlane.xlu0 %3734
        %3736 = vmax.xlane.f32.xlu0 %v3643
        %v3737 = vpop.xlane.xlu0 %3736
        %3738 = vmax.xlane.f32.xlu0 %v3648
        %v3739 = vpop.xlane.xlu0 %3738
        %3740 = vmax.xlane.f32.xlu0 %v3651
        %v3741 = vpop.xlane.xlu0 %3740
        %3742 = vmax.xlane.f32.xlu0 %v3656
        %v3743 = vpop.xlane.xlu0 %3742
        %3744 = vmax.xlane.f32.xlu0 %v3659
        %v3745 = vpop.xlane.xlu0 %3744
        %3746 = vmax.xlane.f32.xlu0 %v3664
        %v3747 = vpop.xlane.xlu0 %3746
        %3748 = vmax.xlane.f32.xlu0 %v3667
        %v3749 = vpop.xlane.xlu0 %3748
        %3750 = vmax.xlane.f32.xlu0 %v3672
        %v3751 = vpop.xlane.xlu0 %3750
        %3752 = vmax.xlane.f32.xlu0 %v3675
        %v3753 = vpop.xlane.xlu0 %3752
        %3754 = vmax.xlane.f32.xlu0 %v3680
        %v3755 = vpop.xlane.xlu0 %3754
        %3756 = vmax.xlane.f32.xlu0 %v3683
        %v3757 = vpop.xlane.xlu0 %3756
        %3758 = vmax.xlane.f32.xlu0 %v3688
        %v3759 = vpop.xlane.xlu0 %3758
        %3760 = vmax.xlane.f32.xlu0 %v3691
        %v3761 = vpop.xlane.xlu0 %3760
        %3762 = vmax.xlane.f32.xlu0 %v3696
        %v3763 = vpop.xlane.xlu0 %3762
        %3764 = vmax.xlane.f32.xlu0 %v3699
        %v3765 = vpop.xlane.xlu0 %3764
        %v3766 = vsub.f32 %v3576, %v3703
        %v3767 = vsub.f32 %v3579, %v3705
        %v3768 = vsub.f32 %v3584, %v3707
        %v3769 = vsub.f32 %v3587, %v3709
        %v3770 = vsub.f32 %v3592, %v3711
        %v3771 = vsub.f32 %v3595, %v3713
        %v3772 = vsub.f32 %v3600, %v3715
        %v3773 = vsub.f32 %v3603, %v3717
        %v3774 = vsub.f32 %v3608, %v3719
        %v3775 = vsub.f32 %v3611, %v3721
        %v3776 = vsub.f32 %v3616, %v3723
        %v3777 = vsub.f32 %v3619, %v3725
        %v3778 = vsub.f32 %v3624, %v3727
        %v3779 = vsub.f32 %v3627, %v3729
        %v3780 = vsub.f32 %v3632, %v3731
        %v3781 = vsub.f32 %v3635, %v3733
        %v3782 = vsub.f32 %v3640, %v3735
        %v3783 = vsub.f32 %v3643, %v3737
        %v3784 = vsub.f32 %v3648, %v3739
        %v3785 = vsub.f32 %v3651, %v3741
        %v3786 = vsub.f32 %v3656, %v3743
        %v3787 = vsub.f32 %v3659, %v3745
        %v3788 = vsub.f32 %v3664, %v3747
        %v3789 = vsub.f32 %v3667, %v3749
        %v3790 = vsub.f32 %v3672, %v3751
        %v3791 = vsub.f32 %v3675, %v3753
        %v3792 = vsub.f32 %v3680, %v3755
        %v3793 = vsub.f32 %v3683, %v3757
        %v3794 = vsub.f32 %v3688, %v3759
        %v3795 = vsub.f32 %v3691, %v3761
        %v3796 = vsub.f32 %v3696, %v3763
        %v3797 = vsub.f32 %v3699, %v3765
        %v3798 = vmul.f32 %v3766, 1.442695
        %v3799 = vpow.pop %v3798
        %v3800 = vmul.f32 %v3767, 1.442695
        %v3801 = vpow.pop %v3800
        %v3802 = vmul.f32 %v3768, 1.442695
        %v3803 = vpow.pop %v3802
        %v3804 = vmul.f32 %v3769, 1.442695
        %v3805 = vpow.pop %v3804
        %v3806 = vmul.f32 %v3770, 1.442695
        %v3807 = vpow.pop %v3806
        %v3808 = vmul.f32 %v3771, 1.442695
        %v3809 = vpow.pop %v3808
        %v3810 = vmul.f32 %v3772, 1.442695
        %v3811 = vpow.pop %v3810
        %v3812 = vmul.f32 %v3773, 1.442695
        %v3813 = vpow.pop %v3812
        %v3814 = vmul.f32 %v3774, 1.442695
        %v3815 = vpow.pop %v3814
        %v3816 = vmul.f32 %v3775, 1.442695
        %v3817 = vpow.pop %v3816
        %v3818 = vmul.f32 %v3776, 1.442695
        %v3819 = vpow.pop %v3818
        %v3820 = vmul.f32 %v3777, 1.442695
        %v3821 = vpow.pop %v3820
        %v3822 = vmul.f32 %v3778, 1.442695
        %v3823 = vpow.pop %v3822
        %v3824 = vmul.f32 %v3779, 1.442695
        %v3825 = vpow.pop %v3824
        %v3826 = vmul.f32 %v3780, 1.442695
        %v3827 = vpow.pop %v3826
        %v3828 = vmul.f32 %v3781, 1.442695
        %v3829 = vpow.pop %v3828
        %v3830 = vmul.f32 %v3782, 1.442695
        %v3831 = vpow.pop %v3830
        %v3832 = vmul.f32 %v3783, 1.442695
        %v3833 = vpow.pop %v3832
        %v3834 = vmul.f32 %v3784, 1.442695
        %v3835 = vpow.pop %v3834
        %v3836 = vmul.f32 %v3785, 1.442695
        %v3837 = vpow.pop %v3836
        %v3838 = vmul.f32 %v3786, 1.442695
        %v3839 = vpow.pop %v3838
        %v3840 = vmul.f32 %v3787, 1.442695
        %v3841 = vpow.pop %v3840
        %v3842 = vmul.f32 %v3788, 1.442695
        %v3843 = vpow.pop %v3842
        %v3844 = vmul.f32 %v3789, 1.442695
        %v3845 = vpow.pop %v3844
        %v3846 = vmul.f32 %v3790, 1.442695
        %v3847 = vpow.pop %v3846
        %v3848 = vmul.f32 %v3791, 1.442695
        %v3849 = vpow.pop %v3848
        %v3850 = vmul.f32 %v3792, 1.442695
        %v3851 = vpow.pop %v3850
        %v3852 = vmul.f32 %v3793, 1.442695
        %v3853 = vpow.pop %v3852
        %v3854 = vmul.f32 %v3794, 1.442695
        %v3855 = vpow.pop %v3854
        %v3856 = vmul.f32 %v3795, 1.442695
        %v3857 = vpow.pop %v3856
        %v3858 = vmul.f32 %v3796, 1.442695
        %v3859 = vpow.pop %v3858
        %v3860 = vmul.f32 %v3797, 1.442695
        %v3861 = vpow.pop %v3860
        %3862 = vadd.xlane.f32.xlu0 %v3799
        %v3863 = vpop.xlane.xlu0 %3862
        %3864 = vadd.xlane.f32.xlu0 %v3801
        %v3865 = vpop.xlane.xlu0 %3864
        %3866 = vadd.xlane.f32.xlu0 %v3803
        %v3867 = vpop.xlane.xlu0 %3866
        %3868 = vadd.xlane.f32.xlu0 %v3805
        %v3869 = vpop.xlane.xlu0 %3868
        %3870 = vadd.xlane.f32.xlu0 %v3807
        %v3871 = vpop.xlane.xlu0 %3870
        %3872 = vadd.xlane.f32.xlu0 %v3809
        %v3873 = vpop.xlane.xlu0 %3872
        %3874 = vadd.xlane.f32.xlu0 %v3811
        %v3875 = vpop.xlane.xlu0 %3874
        %3876 = vadd.xlane.f32.xlu0 %v3813
        %v3877 = vpop.xlane.xlu0 %3876
        %3878 = vadd.xlane.f32.xlu0 %v3815
        %v3879 = vpop.xlane.xlu0 %3878
        %3880 = vadd.xlane.f32.xlu0 %v3817
        %v3881 = vpop.xlane.xlu0 %3880
        %3882 = vadd.xlane.f32.xlu0 %v3819
        %v3883 = vpop.xlane.xlu0 %3882
        %3884 = vadd.xlane.f32.xlu0 %v3821
        %v3885 = vpop.xlane.xlu0 %3884
        %3886 = vadd.xlane.f32.xlu0 %v3823
        %v3887 = vpop.xlane.xlu0 %3886
        %3888 = vadd.xlane.f32.xlu0 %v3825
        %v3889 = vpop.xlane.xlu0 %3888
        %3890 = vadd.xlane.f32.xlu0 %v3827
        %v3891 = vpop.xlane.xlu0 %3890
        %3892 = vadd.xlane.f32.xlu0 %v3829
        %v3893 = vpop.xlane.xlu0 %3892
        %3894 = vadd.xlane.f32.xlu0 %v3831
        %v3895 = vpop.xlane.xlu0 %3894
        %3896 = vadd.xlane.f32.xlu0 %v3833
        %v3897 = vpop.xlane.xlu0 %3896
        %3898 = vadd.xlane.f32.xlu0 %v3835
        %v3899 = vpop.xlane.xlu0 %3898
        %3900 = vadd.xlane.f32.xlu0 %v3837
        %v3901 = vpop.xlane.xlu0 %3900
        %3902 = vadd.xlane.f32.xlu0 %v3839
        %v3903 = vpop.xlane.xlu0 %3902
        %3904 = vadd.xlane.f32.xlu0 %v3841
        %v3905 = vpop.xlane.xlu0 %3904
        %3906 = vadd.xlane.f32.xlu0 %v3843
        %v3907 = vpop.xlane.xlu0 %3906
        %3908 = vadd.xlane.f32.xlu0 %v3845
        %v3909 = vpop.xlane.xlu0 %3908
        %3910 = vadd.xlane.f32.xlu0 %v3847
        %v3911 = vpop.xlane.xlu0 %3910
        %3912 = vadd.xlane.f32.xlu0 %v3849
        %v3913 = vpop.xlane.xlu0 %3912
        %3914 = vadd.xlane.f32.xlu0 %v3851
        %v3915 = vpop.xlane.xlu0 %3914
        %3916 = vadd.xlane.f32.xlu0 %v3853
        %v3917 = vpop.xlane.xlu0 %3916
        %3918 = vadd.xlane.f32.xlu0 %v3855
        %v3919 = vpop.xlane.xlu0 %3918
        %3920 = vadd.xlane.f32.xlu0 %v3857
        %v3921 = vpop.xlane.xlu0 %3920
        %3922 = vadd.xlane.f32.xlu0 %v3859
        %v3923 = vpop.xlane.xlu0 %3922
        %3924 = vadd.xlane.f32.xlu0 %v3861
        %v3925 = vpop.xlane.xlu0 %3924
        %v3926 = vrcp.pop %v3863
        %v3927 = vrcp.pop %v3865
        %v3928 = vrcp.pop %v3867
        %v3929 = vrcp.pop %v3869
        %v3930 = vrcp.pop %v3871
        %v3931 = vrcp.pop %v3873
        %v3932 = vrcp.pop %v3875
        %v3933 = vrcp.pop %v3877
        %v3934 = vrcp.pop %v3879
        %v3935 = vrcp.pop %v3881
        %v3936 = vrcp.pop %v3883
        %v3937 = vrcp.pop %v3885
        %v3938 = vrcp.pop %v3887
        %v3939 = vrcp.pop %v3889
        %v3940 = vrcp.pop %v3891
        %v3941 = vrcp.pop %v3893
        %v3942 = vrcp.pop %v3895
        %v3943 = vrcp.pop %v3897
        %v3944 = vrcp.pop %v3899
        %v3945 = vrcp.pop %v3901
        %v3946 = vrcp.pop %v3903
        %v3947 = vrcp.pop %v3905
        %v3948 = vrcp.pop %v3907
        %v3949 = vrcp.pop %v3909
        %v3950 = vrcp.pop %v3911
        %v3951 = vrcp.pop %v3913
        %v3952 = vrcp.pop %v3915
        %v3953 = vrcp.pop %v3917
        %v3954 = vrcp.pop %v3919
        %v3955 = vrcp.pop %v3921
        %v3956 = vrcp.pop %v3923
        %v3957 = vrcp.pop %v3925
        %v3958 = vmul.f32 %v3799, %v3926
        %v3959 = vmul.f32 %v3801, %v3927
        %v3960 = vmul.f32 %v3803, %v3928
        %v3961 = vmul.f32 %v3805, %v3929
        %v3962 = vmul.f32 %v3807, %v3930
        %v3963 = vmul.f32 %v3809, %v3931
        %v3964 = vmul.f32 %v3811, %v3932
        %v3965 = vmul.f32 %v3813, %v3933
        %v3966 = vmul.f32 %v3815, %v3934
        %v3967 = vmul.f32 %v3817, %v3935
        %v3968 = vmul.f32 %v3819, %v3936
        %v3969 = vmul.f32 %v3821, %v3937
        %v3970 = vmul.f32 %v3823, %v3938
        %v3971 = vmul.f32 %v3825, %v3939
        %v3972 = vmul.f32 %v3827, %v3940
        %v3973 = vmul.f32 %v3829, %v3941
        %v3974 = vmul.f32 %v3831, %v3942
        %v3975 = vmul.f32 %v3833, %v3943
        %v3976 = vmul.f32 %v3835, %v3944
        %v3977 = vmul.f32 %v3837, %v3945
        %v3978 = vmul.f32 %v3839, %v3946
        %v3979 = vmul.f32 %v3841, %v3947
        %v3980 = vmul.f32 %v3843, %v3948
        %v3981 = vmul.f32 %v3845, %v3949
        %v3982 = vmul.f32 %v3847, %v3950
        %v3983 = vmul.f32 %v3849, %v3951
        %v3984 = vmul.f32 %v3851, %v3952
        %v3985 = vmul.f32 %v3853, %v3953
        %v3986 = vmul.f32 %v3855, %v3954
        %v3987 = vmul.f32 %v3857, %v3955
        %v3988 = vmul.f32 %v3859, %v3956
        %v3989 = vmul.f32 %v3861, %v3957
        %3990 = vst [vmem:[%s453] sm:$0xff] %v3958
        %3991 = vst [vmem:[%s453 + $0x8] sm:$0xff] %v3959
        %3992 = vst [vmem:[%s453 + $0x10] sm:$0xff] %v3960
        %3993 = vst [vmem:[%s453 + $0x18] sm:$0xff] %v3961
        %3994 = vst [vmem:[%s453 + $0x20] sm:$0xff] %v3962
        %3995 = vst [vmem:[%s453 + $0x28] sm:$0xff] %v3963
        %3996 = vst [vmem:[%s453 + $0x30] sm:$0xff] %v3964
        %3997 = vst [vmem:[%s453 + $0x38] sm:$0xff] %v3965
        %3998 = vst [vmem:[%s453 + $0x40] sm:$0xff] %v3966
        %3999 = vst [vmem:[%s453 + $0x48] sm:$0xff] %v3967
        %4000 = vst [vmem:[%s453 + $0x50] sm:$0xff] %v3968
        %4001 = vst [vmem:[%s453 + $0x58] sm:$0xff] %v3969
        %4002 = vst [vmem:[%s453 + $0x60] sm:$0xff] %v3970
        %4003 = vst [vmem:[%s453 + $0x68] sm:$0xff] %v3971
        %4004 = vst [vmem:[%s453 + $0x70] sm:$0xff] %v3972
        %4005 = vst [vmem:[%s453 + $0x78] sm:$0xff] %v3973
        %4006 = vst [vmem:[%s453 + $0x80] sm:$0xff] %v3974
        %4007 = vst [vmem:[%s453 + $0x88] sm:$0xff] %v3975
        %4008 = vst [vmem:[%s453 + $0x90] sm:$0xff] %v3976
        %4009 = vst [vmem:[%s453 + $0x98] sm:$0xff] %v3977
        %4010 = vst [vmem:[%s453 + $0xa0] sm:$0xff] %v3978
        %4011 = vst [vmem:[%s453 + $0xa8] sm:$0xff] %v3979
        %4012 = vst [vmem:[%s453 + $0xb0] sm:$0xff] %v3980
        %4013 = vst [vmem:[%s453 + $0xb8] sm:$0xff] %v3981
        %4014 = vst [vmem:[%s453 + $0xc0] sm:$0xff] %v3982
        %4015 = vst [vmem:[%s453 + $0xc8] sm:$0xff] %v3983
        %4016 = vst [vmem:[%s453 + $0xd0] sm:$0xff] %v3984
        %4017 = vst [vmem:[%s453 + $0xd8] sm:$0xff] %v3985
        %4018 = vst [vmem:[%s453 + $0xe0] sm:$0xff] %v3986
        %4019 = vst [vmem:[%s453 + $0xe8] sm:$0xff] %v3987
        %4020 = vst [vmem:[%s453 + $0xf0] sm:$0xff] %v3988
        %4021 = vst [vmem:[%s453 + $0xf8] sm:$0xff] %v3989
        %s4022 = sand.u32 %s232, 1
        %s4023 = scalar_lea.sflag [#allocation4], %s4022
        %s4024 = sand.u32 %s232, 1
        %s4025 = smul.addr %s4024, 256
        %s4026 = scalar_lea.vmem [#allocation16], %s4025
        // Predicated region
        $region89: #{tpu_custom_call.1} parent=55 // pred_check
          %p4027 = pneg %p242
        $region90: #{tpu_custom_call.1} parent=55 // pred_check_branch
          %4029 = sbr.rel (%p4027) target = $region92
        $region91: #{tpu_custom_call.1} parent=55 // pred_region
          %s4030 = smul.u32 32, %s30
          %s4032 = ssub.s32 4096, 4096
          %4033 = vsyncadd %s4023, %s4032
          %s4034 = smul.addr %s4030, 128
          %s4035 = scalar_lea.hbm %s9, %s4034
          %s4036 = sshll.u32 %s4026, 4
          %s4037 = int_to_ptr.vmem [resolvable:$true] %s4036
          %4042 = dma.vmem_to_hbm [thread:$0]  %s4037, 4096, %s4035, %s4023, 128, 128, 8
        $region92: #{tpu_custom_call.1} parent=55 // pred_fallthru
          _
      $region56: #{tpu_custom_call.1} parent=5 // pred_fallthru
        _
      %p4043 = scmp.le.s32.totalorder 2, %s25
      // Predicated region
      $region93: #{tpu_custom_call.1} parent=5 // pred_check
        %p4044 = pneg %p4043
      $region94: #{tpu_custom_call.1} parent=5 // pred_check_branch
        %4046 = sbr.rel (%p4044) target = $region96
      $region95: #{tpu_custom_call.1} parent=5 // pred_region
        %s4047 = ssub.s32 %s25, 2
        // Predicated region
        $region97: #{tpu_custom_call.1} parent=95 // pred_check
          %p4048 = pneg %p248
        $region98: #{tpu_custom_call.1} parent=95 // pred_check_branch
          %4050 = sbr.rel (%p4048) target = $region100
        $region99: #{tpu_custom_call.1} parent=95 // pred_region
          %s4051 = sand.u32 %s233, 1
          %s4052 = scalar_lea.sflag [#allocation4], %s4051
          %s4053 = sand.u32 %s233, 1
          %s4054 = smul.addr %s4053, 256
          %s4055 = scalar_lea.vmem [#allocation16], %s4054
          %4056 = dma.done %s4052, 4096
        $region100: #{tpu_custom_call.1} parent=95 // pred_fallthru
          _
      $region96: #{tpu_custom_call.1} parent=5 // pred_fallthru
        _
    $region6: #{tpu_custom_call.1} parent=1 // loop_footer
      %s29 = sadd.s32 1, %s25
    $region7: #{tpu_custom_call.1} parent=1 // loop_footer_branch
      %24 = sbr.rel target = $region3
    $region8: #{tpu_custom_call.1} parent=1 // loop_exit
      _
    %4057 = vsyncpa [#allocation3], 1
    %s4058 = scalar_lea.sflag [#allocation3], 1
    %4059 = vsyncpa %s4058, 1
    %4060 = vsyncpa [#allocation6], 1
    %4061 = vsyncpa [#allocation9], 1
    %4062 = vsyncpa [#allocation12], 1
    %4063 = vsyncpa [#allocation15], 1
    %4064 = vsyncpa [#allocation4], 1
    %s4065 = scalar_lea.sflag [#allocation4], 1
    %4066 = vsyncpa %s4065, 1

// kernel: tpu_custom_call.1
$region0: #{tpu_custom_call.1}
  #allocation0 [shape = 'u32[]', space=smem, size = 0x4, offset = 0x4, fixed_abs, tag = 'smem constant byte address 0x4 - core index']
  #allocation1 [shape = 'u32[144,128]{1,0:T(1,128)}', space=vmem, size = 0x12000, scoped, tag = 'internal scratch']
  %s0 = inlined_call_operand.hbm [shape: bf16[512,256], index: 0, kind: input, shape index: {}]
  %s1 = inlined_call_operand.hbm [shape: bf16[256,256], index: 1, kind: input, shape index: {}]
  %s2 = inlined_call_operand.hbm [shape: bf16[256,256], index: 2, kind: input, shape index: {}]
  %s3 = inlined_call_operand.hbm [shape: bf16[256,256], index: 3, kind: input, shape index: {}]
  %s4 = inlined_call_operand.hbm [shape: bf16[256,256], index: 4, kind: input, shape index: {}]
  %s5 = inlined_call_operand.hbm [shape: bf16[256,128], index: 5, kind: input, shape index: {}]
  %s6 = inlined_call_operand.hbm [shape: bf16[128,128], index: 6, kind: input, shape index: {}]
  %s7 = inlined_call_operand.hbm [shape: bf16[128,128], index: 7, kind: input, shape index: {}]
  %s8 = inlined_call_operand.vmem [shape: f32[1,1408], index: 8, kind: input, shape index: {}]
  %s9 = inlined_call_operand.hbm [shape: f32[512,128], index: 9, kind: output, shape index: {}]
  %s10 = sld [smem:[#allocation0]]
  $region101: #{tpu_custom_call.1} parent=0
    _
  %s12 = ssub.s32 1, %s10
  %s13 = scalar_select 0, %s12, %s10
  $region1: #{tpu_custom_call.1} parent=0
    #allocation2 [shape = 'u8[262144]{0}', space=vmem, size = 0x40000, scoped, tag = 'input window, operand 0']
    #allocation3 [shape = 's32[2]{0}', space=sflag, size = 0x8, scoped, tag = 'scoped memory for tpu_custom_call.1']
    #allocation4 [shape = 's32[2]{0}', space=sflag, size = 0x8, scoped, tag = 'scoped memory for tpu_custom_call.1']
    #allocation5 [shape = 'u8[131072]{0}', space=vmem, size = 0x20000, scoped, tag = 'input window, operand 1, single buffered']
    #allocation6 [shape = 's32[1]{0}', space=sflag, size = 0x4, scoped, tag = 'scoped memory for tpu_custom_call.1']
    #allocation7 [shape = 'u8[131072]{0}', space=vmem, size = 0x20000, scoped, tag = 'input window, operand 2, single buffered']
    #allocation8 [shape = 'u8[131072]{0}', space=vmem, size = 0x20000, scoped, tag = 'input window, operand 3, single buffered']
    #allocation9 [shape = 's32[1]{0}', space=sflag, size = 0x4, scoped, tag = 'scoped memory for tpu_custom_call.1']
    #allocation10 [shape = 'u8[131072]{0}', space=vmem, size = 0x20000, scoped, tag = 'input window, operand 4, single buffered']
    #allocation11 [shape = 'u8[65536]{0}', space=vmem, size = 0x10000, scoped, tag = 'input window, operand 5, single buffered']
    #allocation12 [shape = 's32[1]{0}', space=sflag, size = 0x4, scoped, tag = 'scoped memory for tpu_custom_call.1']
    #allocation13 [shape = 'u8[32768]{0}', space=vmem, size = 0x8000, scoped, tag = 'input window, operand 6, single buffered']
    #allocation14 [shape = 'u8[32768]{0}', space=vmem, size = 0x8000, scoped, tag = 'input window, operand 7, single buffered']
    #allocation15 [shape = 's32[1]{0}', space=sflag, size = 0x4, scoped, tag = 'scoped memory for tpu_custom_call.1']
    #allocation16 [shape = 'u8[262144]{0}', space=vmem, size = 0x40000, scoped, tag = 'output window, operand 0']
    %14 = vsyncpa [#allocation3], 0
    %s15 = scalar_lea.sflag [#allocation3], 1
    %16 = vsyncpa %s15, 0
    %17 = vsyncpa [#allocation6], 0
    %18 = vsyncpa [#allocation9], 0
    %19 = vsyncpa [#allocation12], 0
    %20 = vsyncpa [#allocation15], 0
    %21 = vsyncpa [#allocation4], 0
    %s22 = scalar_lea.sflag [#allocation4], 1
    %23 = vsyncpa %s22, 0
    loop: start=0, step=1, limit=4
    $region2: #{tpu_custom_call.1} parent=1 // loop_pre_header
      _
    $region3: #{tpu_custom_call.1} parent=1 // loop_header
      %s25 = sphi 0, %s29
      %p26 = scmp.ge.s32.totalorder %s25, 4
      %s35 = sphi 0, %s37
      %s38 = sphi 0, %s35
      %s39 = sphi 0, %s38
      %s55 = sphi 0, %s39
      %s59 = sphi 0, %s59
      %s61 = sphi 0, %s59
      %s62 = sphi 0, %s61
      %s76 = sphi 0, %s62
      %s80 = sphi 0, %s80
      %s82 = sphi 0, %s80
      %s83 = sphi 0, %s82
      %s97 = sphi 0, %s83
      %s101 = sphi 0, %s101
      %s103 = sphi 0, %s101
      %s104 = sphi 0, %s103
      %s118 = sphi 0, %s104
      %s122 = sphi 0, %s122
      %s124 = sphi 0, %s122
      %s125 = sphi 0, %s124
      %s139 = sphi 0, %s125
      %s143 = sphi 0, %s143
      %s145 = sphi 0, %s143
      %s146 = sphi 0, %s145
      %s160 = sphi 0, %s146
      %s164 = sphi 0, %s164
      %s166 = sphi 0, %s164
      %s167 = sphi 0, %s166
      %s181 = sphi 0, %s167
      %s185 = sphi 0, %s185
      %s187 = sphi 0, %s185
      %s188 = sphi 0, %s187
      %s202 = sphi 0, %s188
      %s206 = sphi 0, %s206
      %s208 = sphi 0, %s206
      %s209 = sphi 0, %s208
      %s223 = sphi 0, %s209
      %s229 = sphi 0, %s231
      %s232 = sphi 0, %s229
      %s233 = sphi 0, %s232
      %s249 = sphi 0, %s233
    $region4: #{tpu_custom_call.1} parent=1 // loop_header_branch
      %28 = sbr.rel (%p26) target = $region8
    $region5: #{tpu_custom_call.1} parent=1 // loop_body
      %s30 = ssub.s32 %s25, 1
      %s31 = ssub.s32 %s25, 2
      %s32 = sadd.s32 %s25, 1
      %s33 = ssub.s32 %s25, %s32
      %p34 = scmp.eq.s32.totalorder %s33, 0
      %s36 = sadd.s32 %s35, 1
      %s37 = scalar_select %p34, %s35, %s36
      %p40 = pneg %p34
      %p41 = scmp.eq.s32.totalorder %s25, 1
      %p42 = por %p40, %p41
      %p43 = scmp.ne.s32.totalorder %s35, %s38
      %p44 = scmp.eq.s32.totalorder %s25, 0
      %p45 = por %p43, %p44
      %p46 = scmp.ne.s32.totalorder %s35, %s38
      %p47 = scmp.eq.s32.totalorder %s30, 1
      %p48 = por %p46, %p47
      %p49 = scmp.ne.s32.totalorder %s38, %s39
      %p50 = scmp.eq.s32.totalorder %s30, 0
      %p51 = por %p49, %p50
      %p52 = scmp.ne.s32.totalorder %s38, %s39
      %p53 = scmp.eq.s32.totalorder %s31, 1
      %p54 = por %p52, %p53
      %p56 = scmp.ne.s32.totalorder %s39, %s55
      %p57 = scmp.eq.s32.totalorder %s31, 0
      %p58 = por %p56, %p57
      %s60 = sadd.s32 %s59, 1
      %p63 = scmp.eq.s32.totalorder %s25, 1
      %p64 = scmp.ne.s32.totalorder %s59, %s61
      %p65 = scmp.eq.s32.totalorder %s25, 0
      %p66 = por %p64, %p65
      %p67 = scmp.ne.s32.totalorder %s59, %s61
      %p68 = scmp.eq.s32.totalorder %s30, 1
      %p69 = por %p67, %p68
      %p70 = scmp.ne.s32.totalorder %s61, %s62
      %p71 = scmp.eq.s32.totalorder %s30, 0
      %p72 = por %p70, %p71
      %p73 = scmp.ne.s32.totalorder %s61, %s62
      %p74 = scmp.eq.s32.totalorder %s31, 1
      %p75 = por %p73, %p74
      %p77 = scmp.ne.s32.totalorder %s62, %s76
      %p78 = scmp.eq.s32.totalorder %s31, 0
      %p79 = por %p77, %p78
      %s81 = sadd.s32 %s80, 1
      %p84 = scmp.eq.s32.totalorder %s25, 1
      %p85 = scmp.ne.s32.totalorder %s80, %s82
      %p86 = scmp.eq.s32.totalorder %s25, 0
      %p87 = por %p85, %p86
      %p88 = scmp.ne.s32.totalorder %s80, %s82
      %p89 = scmp.eq.s32.totalorder %s30, 1
      %p90 = por %p88, %p89
      %p91 = scmp.ne.s32.totalorder %s82, %s83
      %p92 = scmp.eq.s32.totalorder %s30, 0
      %p93 = por %p91, %p92
      %p94 = scmp.ne.s32.totalorder %s82, %s83
      %p95 = scmp.eq.s32.totalorder %s31, 1
      %p96 = por %p94, %p95
      %p98 = scmp.ne.s32.totalorder %s83, %s97
      %p99 = scmp.eq.s32.totalorder %s31, 0
      %p100 = por %p98, %p99
      %s102 = sadd.s32 %s101, 1
      %p105 = scmp.eq.s32.totalorder %s25, 1
      %p106 = scmp.ne.s32.totalorder %s101, %s103
      %p107 = scmp.eq.s32.totalorder %s25, 0
      %p108 = por %p106, %p107
      %p109 = scmp.ne.s32.totalorder %s101, %s103
      %p110 = scmp.eq.s32.totalorder %s30, 1
      %p111 = por %p109, %p110
      %p112 = scmp.ne.s32.totalorder %s103, %s104
      %p113 = scmp.eq.s32.totalorder %s30, 0
      %p114 = por %p112, %p113
      %p115 = scmp.ne.s32.totalorder %s103, %s104
      %p116 = scmp.eq.s32.totalorder %s31, 1
      %p117 = por %p115, %p116
      %p119 = scmp.ne.s32.totalorder %s104, %s118
      %p120 = scmp.eq.s32.totalorder %s31, 0
      %p121 = por %p119, %p120
      %s123 = sadd.s32 %s122, 1
      %p126 = scmp.eq.s32.totalorder %s25, 1
      %p127 = scmp.ne.s32.totalorder %s122, %s124
      %p128 = scmp.eq.s32.totalorder %s25, 0
      %p129 = por %p127, %p128
      %p130 = scmp.ne.s32.totalorder %s122, %s124
      %p131 = scmp.eq.s32.totalorder %s30, 1
      %p132 = por %p130, %p131
      %p133 = scmp.ne.s32.totalorder %s124, %s125
      %p134 = scmp.eq.s32.totalorder %s30, 0
      %p135 = por %p133, %p134
      %p136 = scmp.ne.s32.totalorder %s124, %s125
      %p137 = scmp.eq.s32.totalorder %s31, 1
      %p138 = por %p136, %p137
      %p140 = scmp.ne.s32.totalorder %s125, %s139
      %p141 = scmp.eq.s32.totalorder %s31, 0
      %p142 = por %p140, %p141
      %s144 = sadd.s32 %s143, 1
      %p147 = scmp.eq.s32.totalorder %s25, 1
      %p148 = scmp.ne.s32.totalorder %s143, %s145
      %p149 = scmp.eq.s32.totalorder %s25, 0
      %p150 = por %p148, %p149
      %p151 = scmp.ne.s32.totalorder %s143, %s145
      %p152 = scmp.eq.s32.totalorder %s30, 1
      %p153 = por %p151, %p152
      %p154 = scmp.ne.s32.totalorder %s145, %s146
      %p155 = scmp.eq.s32.totalorder %s30, 0
      %p156 = por %p154, %p155
      %p157 = scmp.ne.s32.totalorder %s145, %s146
      %p158 = scmp.eq.s32.totalorder %s31, 1
      %p159 = por %p157, %p158
      %p161 = scmp.ne.s32.totalorder %s146, %s160
      %p162 = scmp.eq.s32.totalorder %s31, 0
      %p163 = por %p161, %p162
      %s165 = sadd.s32 %s164, 1
      %p168 = scmp.eq.s32.totalorder %s25, 1
      %p169 = scmp.ne.s32.totalorder %s164, %s166
      %p170 = scmp.eq.s32.totalorder %s25, 0
      %p171 = por %p169, %p170
      %p172 = scmp.ne.s32.totalorder %s164, %s166
      %p173 = scmp.eq.s32.totalorder %s30, 1
      %p174 = por %p172, %p173
      %p175 = scmp.ne.s32.totalorder %s166, %s167
      %p176 = scmp.eq.s32.totalorder %s30, 0
      %p177 = por %p175, %p176
      %p178 = scmp.ne.s32.totalorder %s166, %s167
      %p179 = scmp.eq.s32.totalorder %s31, 1
      %p180 = por %p178, %p179
      %p182 = scmp.ne.s32.totalorder %s167, %s181
      %p183 = scmp.eq.s32.totalorder %s31, 0
      %p184 = por %p182, %p183
      %s186 = sadd.s32 %s185, 1
      %p189 = scmp.eq.s32.totalorder %s25, 1
      %p190 = scmp.ne.s32.totalorder %s185, %s187
      %p191 = scmp.eq.s32.totalorder %s25, 0
      %p192 = por %p190, %p191
      %p193 = scmp.ne.s32.totalorder %s185, %s187
      %p194 = scmp.eq.s32.totalorder %s30, 1
      %p195 = por %p193, %p194
      %p196 = scmp.ne.s32.totalorder %s187, %s188
      %p197 = scmp.eq.s32.totalorder %s30, 0
      %p198 = por %p196, %p197
      %p199 = scmp.ne.s32.totalorder %s187, %s188
      %p200 = scmp.eq.s32.totalorder %s31, 1
      %p201 = por %p199, %p200
      %p203 = scmp.ne.s32.totalorder %s188, %s202
      %p204 = scmp.eq.s32.totalorder %s31, 0
      %p205 = por %p203, %p204
      %s207 = sadd.s32 %s206, 1
      %p210 = scmp.eq.s32.totalorder %s25, 1
      %p211 = scmp.ne.s32.totalorder %s206, %s208
      %p212 = scmp.eq.s32.totalorder %s25, 0
      %p213 = por %p211, %p212
      %p214 = scmp.ne.s32.totalorder %s206, %s208
      %p215 = scmp.eq.s32.totalorder %s30, 1
      %p216 = por %p214, %p215
      %p217 = scmp.ne.s32.totalorder %s208, %s209
      %p218 = scmp.eq.s32.totalorder %s30, 0
      %p219 = por %p217, %p218
      %p220 = scmp.ne.s32.totalorder %s208, %s209
      %p221 = scmp.eq.s32.totalorder %s31, 1
      %p222 = por %p220, %p221
      %p224 = scmp.ne.s32.totalorder %s209, %s223
      %p225 = scmp.eq.s32.totalorder %s31, 0
      %p226 = por %p224, %p225
      %s227 = ssub.s32 %s25, %s32
      %p228 = scmp.eq.s32.totalorder %s227, 0
      %s230 = sadd.s32 %s229, 1
      %s231 = scalar_select %p228, %s229, %s230
      %p234 = pneg %p228
      %p235 = scmp.eq.s32.totalorder %s25, 1
      %p236 = por %p234, %p235
      %p237 = scmp.ne.s32.totalorder %s229, %s232
      %p238 = scmp.eq.s32.totalorder %s25, 0
      %p239 = por %p237, %p238
      %p240 = scmp.ne.s32.totalorder %s229, %s232
      %p241 = scmp.eq.s32.totalorder %s30, 1
      %p242 = por %p240, %p241
      %p243 = scmp.ne.s32.totalorder %s232, %s233
      %p244 = scmp.eq.s32.totalorder %s30, 0
      %p245 = por %p243, %p244
      %p246 = scmp.ne.s32.totalorder %s232, %s233
      %p247 = scmp.eq.s32.totalorder %s31, 1
      %p248 = por %p246, %p247
      %p250 = scmp.ne.s32.totalorder %s233, %s249
      %p251 = scmp.eq.s32.totalorder %s31, 0
      %p252 = por %p250, %p251
      %p253 = scmp.le.s32.totalorder 1, %s25
      %p254 = scmp.lt.s32.totalorder %s25, 3
      %p255 = pnand %p253, %p254
      %p256 = pneg %p255
      // Predicated region
      $region9: #{tpu_custom_call.1} parent=5 // pred_check
        _
      $region10: #{tpu_custom_call.1} parent=5 // pred_check_branch
        %258 = sbr.rel (%p255) target = $region12
      $region11: #{tpu_custom_call.1} parent=5 // pred_region
        %s259 = ssub.s32 %s25, 1
        // Predicated region
        $region13: #{tpu_custom_call.1} parent=11 // pred_check
          %p260 = pneg %p72
        $region14: #{tpu_custom_call.1} parent=11 // pred_check_branch
          %262 = sbr.rel (%p260) target = $region16
        $region15: #{tpu_custom_call.1} parent=11 // pred_region
          %s264 = ssub.s32 4096, 4096
          %265 = vsyncadd [#allocation6], %s264
          %s266 = sshll.u32 [#allocation5], 4
          %s267 = int_to_ptr.vmem [resolvable:$true] %s266
          %272 = dma.hbm_to_vmem [thread:$0]  %s1, 4096, %s267, [#allocation6], 128, 128, 8
        $region16: #{tpu_custom_call.1} parent=11 // pred_fallthru
          _
        // Predicated region
        $region17: #{tpu_custom_call.1} parent=11 // pred_check
          %p273 = pneg %p93
        $region18: #{tpu_custom_call.1} parent=11 // pred_check_branch
          %275 = sbr.rel (%p273) target = $region20
        $region19: #{tpu_custom_call.1} parent=11 // pred_region
          %s277 = ssub.s32 4096, 4096
          %278 = vsyncadd [#allocation6], %s277
          %s279 = sshll.u32 [#allocation7], 4
          %s280 = int_to_ptr.vmem [resolvable:$true] %s279
          %285 = dma.hbm_to_vmem [thread:$0]  %s2, 4096, %s280, [#allocation6], 128, 128, 8
        $region20: #{tpu_custom_call.1} parent=11 // pred_fallthru
          _
        // Predicated region
        $region21: #{tpu_custom_call.1} parent=11 // pred_check
          %p286 = pneg %p114
        $region22: #{tpu_custom_call.1} parent=11 // pred_check_branch
          %288 = sbr.rel (%p286) target = $region24
        $region23: #{tpu_custom_call.1} parent=11 // pred_region
          %s290 = ssub.s32 4096, 4096
          %291 = vsyncadd [#allocation9], %s290
          %s292 = sshll.u32 [#allocation8], 4
          %s293 = int_to_ptr.vmem [resolvable:$true] %s292
          %298 = dma.hbm_to_vmem [thread:$0]  %s3, 4096, %s293, [#allocation9], 128, 128, 8
        $region24: #{tpu_custom_call.1} parent=11 // pred_fallthru
          _
        // Predicated region
        $region25: #{tpu_custom_call.1} parent=11 // pred_check
          %p299 = pneg %p135
        $region26: #{tpu_custom_call.1} parent=11 // pred_check_branch
          %301 = sbr.rel (%p299) target = $region28
        $region27: #{tpu_custom_call.1} parent=11 // pred_region
          %s303 = ssub.s32 4096, 4096
          %304 = vsyncadd [#allocation9], %s303
          %s305 = sshll.u32 [#allocation10], 4
          %s306 = int_to_ptr.vmem [resolvable:$true] %s305
          %311 = dma.hbm_to_vmem [thread:$0]  %s4, 4096, %s306, [#allocation9], 128, 128, 8
        $region28: #{tpu_custom_call.1} parent=11 // pred_fallthru
          _
        // Predicated region
        $region29: #{tpu_custom_call.1} parent=11 // pred_check
          %p312 = pneg %p156
        $region30: #{tpu_custom_call.1} parent=11 // pred_check_branch
          %314 = sbr.rel (%p312) target = $region32
        $region31: #{tpu_custom_call.1} parent=11 // pred_region
          %s316 = ssub.s32 2048, 2048
          %317 = vsyncadd [#allocation12], %s316
          %s318 = sshll.u32 [#allocation11], 4
          %s319 = int_to_ptr.vmem [resolvable:$true] %s318
          %324 = dma.hbm_to_vmem [thread:$0]  %s5, 2048, %s319, [#allocation12], 64, 64, 4
        $region32: #{tpu_custom_call.1} parent=11 // pred_fallthru
          _
        // Predicated region
        $region33: #{tpu_custom_call.1} parent=11 // pred_check
          %p325 = pneg %p177
        $region34: #{tpu_custom_call.1} parent=11 // pred_check_branch
          %327 = sbr.rel (%p325) target = $region36
        $region35: #{tpu_custom_call.1} parent=11 // pred_region
          %s329 = ssub.s32 1024, 1024
          %330 = vsyncadd [#allocation12], %s329
          %s331 = sshll.u32 [#allocation13], 4
          %s332 = int_to_ptr.vmem [resolvable:$true] %s331
          %337 = dma.hbm_to_vmem [thread:$0]  %s6, 1024, %s332, [#allocation12], 64, 64, 4
        $region36: #{tpu_custom_call.1} parent=11 // pred_fallthru
          _
        // Predicated region
        $region37: #{tpu_custom_call.1} parent=11 // pred_check
          %p338 = pneg %p198
        $region38: #{tpu_custom_call.1} parent=11 // pred_check_branch
          %340 = sbr.rel (%p338) target = $region40
        $region39: #{tpu_custom_call.1} parent=11 // pred_region
          %s342 = ssub.s32 1024, 1024
          %343 = vsyncadd [#allocation15], %s342
          %s344 = sshll.u32 [#allocation14], 4
          %s345 = int_to_ptr.vmem [resolvable:$true] %s344
          %350 = dma.hbm_to_vmem [thread:$0]  %s7, 1024, %s345, [#allocation15], 64, 64, 4
        $region40: #{tpu_custom_call.1} parent=11 // pred_fallthru
          _
        // Predicated region
        $region41: #{tpu_custom_call.1} parent=11 // pred_check
          %p351 = pneg %p219
        $region42: #{tpu_custom_call.1} parent=11 // pred_check_branch
          %353 = sbr.rel (%p351) target = $region44
        $region43: #{tpu_custom_call.1} parent=11 // pred_region
          _
        $region44: #{tpu_custom_call.1} parent=11 // pred_fallthru
          _
      $region12: #{tpu_custom_call.1} parent=5 // pred_fallthru
        _
      %p354 = scmp.lt.s32.totalorder %s25, 2
      // Predicated region
      $region45: #{tpu_custom_call.1} parent=5 // pred_check
        %p355 = pneg %p354
      $region46: #{tpu_custom_call.1} parent=5 // pred_check_branch
        %357 = sbr.rel (%p355) target = $region48
      $region47: #{tpu_custom_call.1} parent=5 // pred_region
        // Predicated region
        $region49: #{tpu_custom_call.1} parent=47 // pred_check
          %p358 = pneg %p45
        $region50: #{tpu_custom_call.1} parent=47 // pred_check_branch
          %360 = sbr.rel (%p358) target = $region52
        $region51: #{tpu_custom_call.1} parent=47 // pred_region
          %s361 = sand.u32 %s35, 1
          %s362 = scalar_lea.sflag [#allocation3], %s361
          %s363 = sand.u32 %s35, 1
          %s364 = smul.addr %s363, 256
          %s365 = scalar_lea.vmem [#allocation2], %s364
          %s366 = smul.u32 32, %s25
          %s368 = ssub.s32 4096, 4096
          %369 = vsyncadd %s362, %s368
          %s370 = smul.addr %s366, 2
          %s371 = smul.addr %s370, 64
          %s372 = scalar_lea.hbm %s0, %s371
          %s373 = sshll.u32 %s365, 4
          %s374 = int_to_ptr.vmem [resolvable:$true] %s373
          %379 = dma.hbm_to_vmem [thread:$0]  %s372, 4096, %s374, %s362, 128, 128, 8
        $region52: #{tpu_custom_call.1} parent=47 // pred_fallthru
          _
      $region48: #{tpu_custom_call.1} parent=5 // pred_fallthru
        _
      %p380 = scmp.le.s32.totalorder 1, %s25
      %p381 = scmp.lt.s32.totalorder %s25, 3
      %p382 = pnand %p380, %p381
      %p383 = pneg %p382
      // Predicated region
      $region53: #{tpu_custom_call.1} parent=5 // pred_check
        _
      $region54: #{tpu_custom_call.1} parent=5 // pred_check_branch
        %385 = sbr.rel (%p382) target = $region56
      $region55: #{tpu_custom_call.1} parent=5 // pred_region
        %s386 = ssub.s32 %s25, 1
        %s387 = sand.u32 %s38, 1
        %s388 = scalar_lea.sflag [#allocation3], %s387
        %s389 = sand.u32 %s38, 1
        %s390 = smul.addr %s389, 256
        %s391 = scalar_lea.vmem [#allocation2], %s390
        // Predicated region
        $region57: #{tpu_custom_call.1} parent=55 // pred_check
          %p392 = pneg %p51
        $region58: #{tpu_custom_call.1} parent=55 // pred_check_branch
          %394 = sbr.rel (%p392) target = $region60
        $region59: #{tpu_custom_call.1} parent=55 // pred_region
          %395 = dma.done %s388, 4096
        $region60: #{tpu_custom_call.1} parent=55 // pred_fallthru
          _
        // Predicated region
        $region61: #{tpu_custom_call.1} parent=55 // pred_check
          %p396 = pneg %p72
        $region62: #{tpu_custom_call.1} parent=55 // pred_check_branch
          %398 = sbr.rel (%p396) target = $region64
        $region63: #{tpu_custom_call.1} parent=55 // pred_region
          %399 = dma.done [#allocation6], 4096
        $region64: #{tpu_custom_call.1} parent=55 // pred_fallthru
          _
        // Predicated region
        $region65: #{tpu_custom_call.1} parent=55 // pred_check
          %p400 = pneg %p93
        $region66: #{tpu_custom_call.1} parent=55 // pred_check_branch
          %402 = sbr.rel (%p400) target = $region68
        $region67: #{tpu_custom_call.1} parent=55 // pred_region
          %403 = dma.done [#allocation6], 4096
        $region68: #{tpu_custom_call.1} parent=55 // pred_fallthru
          _
        // Predicated region
        $region69: #{tpu_custom_call.1} parent=55 // pred_check
          %p404 = pneg %p114
        $region70: #{tpu_custom_call.1} parent=55 // pred_check_branch
          %406 = sbr.rel (%p404) target = $region72
        $region71: #{tpu_custom_call.1} parent=55 // pred_region
          %407 = dma.done [#allocation9], 4096
        $region72: #{tpu_custom_call.1} parent=55 // pred_fallthru
          _
        // Predicated region
        $region73: #{tpu_custom_call.1} parent=55 // pred_check
          %p408 = pneg %p135
        $region74: #{tpu_custom_call.1} parent=55 // pred_check_branch
          %410 = sbr.rel (%p408) target = $region76
        $region75: #{tpu_custom_call.1} parent=55 // pred_region
          %411 = dma.done [#allocation9], 4096
        $region76: #{tpu_custom_call.1} parent=55 // pred_fallthru
          _
        // Predicated region
        $region77: #{tpu_custom_call.1} parent=55 // pred_check
          %p412 = pneg %p156
        $region78: #{tpu_custom_call.1} parent=55 // pred_check_branch
          %414 = sbr.rel (%p412) target = $region80
        $region79: #{tpu_custom_call.1} parent=55 // pred_region
          %415 = dma.done [#allocation12], 2048
        $region80: #{tpu_custom_call.1} parent=55 // pred_fallthru
          _
        // Predicated region
        $region81: #{tpu_custom_call.1} parent=55 // pred_check
          %p416 = pneg %p177
        $region82: #{tpu_custom_call.1} parent=55 // pred_check_branch
          %418 = sbr.rel (%p416) target = $region84
        $region83: #{tpu_custom_call.1} parent=55 // pred_region
          %419 = dma.done [#allocation12], 1024
        $region84: #{tpu_custom_call.1} parent=55 // pred_fallthru
          _
        // Predicated region
        $region85: #{tpu_custom_call.1} parent=55 // pred_check
          %p420 = pneg %p198
        $region86: #{tpu_custom_call.1} parent=55 // pred_check_branch
          %422 = sbr.rel (%p420) target = $region88
        $region87: #{tpu_custom_call.1} parent=55 // pred_region
          %423 = dma.done [#allocation15], 1024
        $region88: #{tpu_custom_call.1} parent=55 // pred_fallthru
          _
        %s424 = sand.u32 %s38, 1
        %s425 = scalar_lea.sflag [#allocation3], %s424
        %s426 = sand.u32 %s38, 1
        %s427 = smul.addr %s426, 256
        %s428 = scalar_lea.vmem [#allocation2], %s427
        %p429 = pneg %p51
        %p430 = pneg %p48
        %p431 = pneg %p72
        %p432 = pneg %p69
        %p433 = pneg %p93
        %p434 = pneg %p90
        %p435 = pneg %p114
        %p436 = pneg %p111
        %p437 = pneg %p135
        %p438 = pneg %p132
        %p439 = pneg %p156
        %p440 = pneg %p153
        %p441 = pneg %p177
        %p442 = pneg %p174
        %p443 = pneg %p198
        %p444 = pneg %p195
        %p445 = pneg %p219
        %p446 = pneg %p216
        %p447 = pneg %p245
        %p448 = pneg %p242
        %s449 = sand.u32 %s232, 1
        %s450 = scalar_lea.sflag [#allocation4], %s449
        %s451 = sand.u32 %s232, 1
        %s452 = smul.addr %s451, 256
        %s453 = scalar_lea.vmem [#allocation16], %s452
        %s454 = smul.u32 32, %s30
        %s455 = smul.u32 32, %s30
        %v458 = vld [vmem:[%s391] sm:$0xff]
        %v459 = vld [vmem:[%s391 + $0x8] sm:$0xff]
        %v460 = vld [vmem:[%s391 + $0x10] sm:$0xff]
        %v461 = vld [vmem:[%s391 + $0x18] sm:$0xff]
        %v462 = vld [vmem:[%s391 + $0x20] sm:$0xff]
        %v463 = vld [vmem:[%s391 + $0x28] sm:$0xff]
        %v464 = vld [vmem:[%s391 + $0x30] sm:$0xff]
        %v465 = vld [vmem:[%s391 + $0x38] sm:$0xff]
        %v466 = vld [vmem:[%s391 + $0x40] sm:$0xff]
        %v467 = vld [vmem:[%s391 + $0x48] sm:$0xff]
        %v468 = vld [vmem:[%s391 + $0x50] sm:$0xff]
        %v469 = vld [vmem:[%s391 + $0x58] sm:$0xff]
        %v470 = vld [vmem:[%s391 + $0x60] sm:$0xff]
        %v471 = vld [vmem:[%s391 + $0x68] sm:$0xff]
        %v472 = vld [vmem:[%s391 + $0x70] sm:$0xff]
        %v473 = vld [vmem:[%s391 + $0x78] sm:$0xff]
        %v474 = vld [vmem:[%s391 + $0x80] sm:$0xff]
        %v475 = vld [vmem:[%s391 + $0x88] sm:$0xff]
        %v476 = vld [vmem:[%s391 + $0x90] sm:$0xff]
        %v477 = vld [vmem:[%s391 + $0x98] sm:$0xff]
        %v478 = vld [vmem:[%s391 + $0xa0] sm:$0xff]
        %v479 = vld [vmem:[%s391 + $0xa8] sm:$0xff]
        %v480 = vld [vmem:[%s391 + $0xb0] sm:$0xff]
        %v481 = vld [vmem:[%s391 + $0xb8] sm:$0xff]
        %v482 = vld [vmem:[%s391 + $0xc0] sm:$0xff]
        %v483 = vld [vmem:[%s391 + $0xc8] sm:$0xff]
        %v484 = vld [vmem:[%s391 + $0xd0] sm:$0xff]
        %v485 = vld [vmem:[%s391 + $0xd8] sm:$0xff]
        %v486 = vld [vmem:[%s391 + $0xe0] sm:$0xff]
        %v487 = vld [vmem:[%s391 + $0xe8] sm:$0xff]
        %v488 = vld [vmem:[%s391 + $0xf0] sm:$0xff]
        %v489 = vld [vmem:[%s391 + $0xf8] sm:$0xff]
        %v490 = vld [vmem:[#allocation5] sm:$0xff]
        %v491 = vld [vmem:[#allocation5 + $0x8] sm:$0xff]
        %v492 = vld [vmem:[#allocation5 + $0x10] sm:$0xff]
        %v493 = vld [vmem:[#allocation5 + $0x18] sm:$0xff]
        %v494 = vld [vmem:[#allocation5 + $0x20] sm:$0xff]
        %v495 = vld [vmem:[#allocation5 + $0x28] sm:$0xff]
        %v496 = vld [vmem:[#allocation5 + $0x30] sm:$0xff]
        %v497 = vld [vmem:[#allocation5 + $0x38] sm:$0xff]
        %v498 = vld [vmem:[#allocation5 + $0x40] sm:$0xff]
        %v499 = vld [vmem:[#allocation5 + $0x48] sm:$0xff]
        %v500 = vld [vmem:[#allocation5 + $0x50] sm:$0xff]
        %v501 = vld [vmem:[#allocation5 + $0x58] sm:$0xff]
        %v502 = vld [vmem:[#allocation5 + $0x60] sm:$0xff]
        %v503 = vld [vmem:[#allocation5 + $0x68] sm:$0xff]
        %v504 = vld [vmem:[#allocation5 + $0x70] sm:$0xff]
        %v505 = vld [vmem:[#allocation5 + $0x78] sm:$0xff]
        %v506 = vld [vmem:[#allocation5 + $0x80] sm:$0xff]
        %v507 = vld [vmem:[#allocation5 + $0x88] sm:$0xff]
        %v508 = vld [vmem:[#allocation5 + $0x90] sm:$0xff]
        %v509 = vld [vmem:[#allocation5 + $0x98] sm:$0xff]
        %v510 = vld [vmem:[#allocation5 + $0xa0] sm:$0xff]
        %v511 = vld [vmem:[#allocation5 + $0xa8] sm:$0xff]
        %v512 = vld [vmem:[#allocation5 + $0xb0] sm:$0xff]
        %v513 = vld [vmem:[#allocation5 + $0xb8] sm:$0xff]
        %v514 = vld [vmem:[#allocation5 + $0xc0] sm:$0xff]
        %v515 = vld [vmem:[#allocation5 + $0xc8] sm:$0xff]
        %v516 = vld [vmem:[#allocation5 + $0xd0] sm:$0xff]
        %v517 = vld [vmem:[#allocation5 + $0xd8] sm:$0xff]
        %v518 = vld [vmem:[#allocation5 + $0xe0] sm:$0xff]
        %v519 = vld [vmem:[#allocation5 + $0xe8] sm:$0xff]
        %v520 = vld [vmem:[#allocation5 + $0xf0] sm:$0xff]
        %v521 = vld [vmem:[#allocation5 + $0xf8] sm:$0xff]
        %v522 = vld [vmem:[%s8] sm:$0x3]
        %v524 = vlaneseq
        %v525 = vshrl.u32 %v524, 7
        %v526 = vsub.s32 0, %v525
        %v527 = vrot.slane %v522, %v526
        %v528 = vlaneseq
        %v529 = vshrl.u32 %v528, 7
        %v530 = vsub.s32 1, %v529
        %v531 = vrot.slane %v522, %v530
        %v566 = vunpack.c.l.b16 %v458
        %v567 = vunpack.c.h.b16 %v458
        %v568 = vunpack.c.l.b16 %v459
        %v569 = vunpack.c.h.b16 %v459
        %v570 = vunpack.c.l.b16 %v460
        %v571 = vunpack.c.h.b16 %v460
        %v572 = vunpack.c.l.b16 %v461
        %v573 = vunpack.c.h.b16 %v461
        %v574 = vunpack.c.l.b16 %v462
        %v575 = vunpack.c.h.b16 %v462
        %v576 = vunpack.c.l.b16 %v463
        %v577 = vunpack.c.h.b16 %v463
        %v578 = vunpack.c.l.b16 %v464
        %v579 = vunpack.c.h.b16 %v464
        %v580 = vunpack.c.l.b16 %v465
        %v581 = vunpack.c.h.b16 %v465
        %v582 = vunpack.c.l.b16 %v466
        %v583 = vunpack.c.h.b16 %v466
        %v584 = vunpack.c.l.b16 %v467
        %v585 = vunpack.c.h.b16 %v467
        %v586 = vunpack.c.l.b16 %v468
        %v587 = vunpack.c.h.b16 %v468
        %v588 = vunpack.c.l.b16 %v469
        %v589 = vunpack.c.h.b16 %v469
        %v590 = vunpack.c.l.b16 %v470
        %v591 = vunpack.c.h.b16 %v470
        %v592 = vunpack.c.l.b16 %v471
        %v593 = vunpack.c.h.b16 %v471
        %v594 = vunpack.c.l.b16 %v472
        %v595 = vunpack.c.h.b16 %v472
        %v596 = vunpack.c.l.b16 %v473
        %v597 = vunpack.c.h.b16 %v473
        %v598 = vunpack.c.l.b16 %v474
        %v599 = vunpack.c.h.b16 %v474
        %v600 = vunpack.c.l.b16 %v475
        %v601 = vunpack.c.h.b16 %v475
        %v602 = vunpack.c.l.b16 %v476
        %v603 = vunpack.c.h.b16 %v476
        %v604 = vunpack.c.l.b16 %v477
        %v605 = vunpack.c.h.b16 %v477
        %v606 = vunpack.c.l.b16 %v478
        %v607 = vunpack.c.h.b16 %v478
        %v608 = vunpack.c.l.b16 %v479
        %v609 = vunpack.c.h.b16 %v479
        %v610 = vunpack.c.l.b16 %v480
        %v611 = vunpack.c.h.b16 %v480
        %v612 = vunpack.c.l.b16 %v481
        %v613 = vunpack.c.h.b16 %v481
        %v614 = vunpack.c.l.b16 %v482
        %v615 = vunpack.c.h.b16 %v482
        %v616 = vunpack.c.l.b16 %v483
        %v617 = vunpack.c.h.b16 %v483
        %v618 = vunpack.c.l.b16 %v484
        %v619 = vunpack.c.h.b16 %v484
        %v620 = vunpack.c.l.b16 %v485
        %v621 = vunpack.c.h.b16 %v485
        %v622 = vunpack.c.l.b16 %v486
        %v623 = vunpack.c.h.b16 %v486
        %v624 = vunpack.c.l.b16 %v487
        %v625 = vunpack.c.h.b16 %v487
        %v626 = vunpack.c.l.b16 %v488
        %v627 = vunpack.c.h.b16 %v488
        %v628 = vunpack.c.l.b16 %v489
        %v629 = vunpack.c.h.b16 %v489
        %v630 = vpack.c.b16 %v568, %v566
        %v631 = vpack.c.b16 %v569, %v567
        %v632 = vpack.c.b16 %v572, %v570
        %v633 = vpack.c.b16 %v573, %v571
        %v634 = vpack.c.b16 %v576, %v574
        %v635 = vpack.c.b16 %v577, %v575
        %v636 = vpack.c.b16 %v580, %v578
        %v637 = vpack.c.b16 %v581, %v579
        %v638 = vpack.c.b16 %v584, %v582
        %v639 = vpack.c.b16 %v585, %v583
        %v640 = vpack.c.b16 %v588, %v586
        %v641 = vpack.c.b16 %v589, %v587
        %v642 = vpack.c.b16 %v592, %v590
        %v643 = vpack.c.b16 %v593, %v591
        %v644 = vpack.c.b16 %v596, %v594
        %v645 = vpack.c.b16 %v597, %v595
        %v646 = vpack.c.b16 %v600, %v598
        %v647 = vpack.c.b16 %v601, %v599
        %v648 = vpack.c.b16 %v604, %v602
        %v649 = vpack.c.b16 %v605, %v603
        %v650 = vpack.c.b16 %v608, %v606
        %v651 = vpack.c.b16 %v609, %v607
        %v652 = vpack.c.b16 %v612, %v610
        %v653 = vpack.c.b16 %v613, %v611
        %v654 = vpack.c.b16 %v616, %v614
        %v655 = vpack.c.b16 %v617, %v615
        %v656 = vpack.c.b16 %v620, %v618
        %v657 = vpack.c.b16 %v621, %v619
        %v658 = vpack.c.b16 %v624, %v622
        %v659 = vpack.c.b16 %v625, %v623
        %v660 = vpack.c.b16 %v628, %v626
        %v661 = vpack.c.b16 %v629, %v627
        %v726 = vunpack.c.l.b16 %v490
        %v727 = vunpack.c.h.b16 %v490
        %v728 = vunpack.c.l.b16 %v491
        %v729 = vunpack.c.h.b16 %v491
        %v730 = vunpack.c.l.b16 %v492
        %v731 = vunpack.c.h.b16 %v492
        %v732 = vunpack.c.l.b16 %v493
        %v733 = vunpack.c.h.b16 %v493
        %v734 = vunpack.c.l.b16 %v494
        %v735 = vunpack.c.h.b16 %v494
        %v736 = vunpack.c.l.b16 %v495
        %v737 = vunpack.c.h.b16 %v495
        %v738 = vunpack.c.l.b16 %v496
        %v739 = vunpack.c.h.b16 %v496
        %v740 = vunpack.c.l.b16 %v497
        %v741 = vunpack.c.h.b16 %v497
        %v742 = vunpack.c.l.b16 %v498
        %v743 = vunpack.c.h.b16 %v498
        %v744 = vunpack.c.l.b16 %v499
        %v745 = vunpack.c.h.b16 %v499
        %v746 = vunpack.c.l.b16 %v500
        %v747 = vunpack.c.h.b16 %v500
        %v748 = vunpack.c.l.b16 %v501
        %v749 = vunpack.c.h.b16 %v501
        %v750 = vunpack.c.l.b16 %v502
        %v751 = vunpack.c.h.b16 %v502
        %v752 = vunpack.c.l.b16 %v503
        %v753 = vunpack.c.h.b16 %v503
        %v754 = vunpack.c.l.b16 %v504
        %v755 = vunpack.c.h.b16 %v504
        %v756 = vunpack.c.l.b16 %v505
        %v757 = vunpack.c.h.b16 %v505
        %v758 = vunpack.c.l.b16 %v506
        %v759 = vunpack.c.h.b16 %v506
        %v760 = vunpack.c.l.b16 %v507
        %v761 = vunpack.c.h.b16 %v507
        %v762 = vunpack.c.l.b16 %v508
        %v763 = vunpack.c.h.b16 %v508
        %v764 = vunpack.c.l.b16 %v509
        %v765 = vunpack.c.h.b16 %v509
        %v766 = vunpack.c.l.b16 %v510
        %v767 = vunpack.c.h.b16 %v510
        %v768 = vunpack.c.l.b16 %v511
        %v769 = vunpack.c.h.b16 %v511
        %v770 = vunpack.c.l.b16 %v512
        %v771 = vunpack.c.h.b16 %v512
        %v772 = vunpack.c.l.b16 %v513
        %v773 = vunpack.c.h.b16 %v513
        %v774 = vunpack.c.l.b16 %v514
        %v775 = vunpack.c.h.b16 %v514
        %v776 = vunpack.c.l.b16 %v515
        %v777 = vunpack.c.h.b16 %v515
        %v778 = vunpack.c.l.b16 %v516
        %v779 = vunpack.c.h.b16 %v516
        %v780 = vunpack.c.l.b16 %v517
        %v781 = vunpack.c.h.b16 %v517
        %v782 = vunpack.c.l.b16 %v518
        %v783 = vunpack.c.h.b16 %v518
        %v784 = vunpack.c.l.b16 %v519
        %v785 = vunpack.c.h.b16 %v519
        %v786 = vunpack.c.l.b16 %v520
        %v787 = vunpack.c.h.b16 %v520
        %v788 = vunpack.c.l.b16 %v521
        %v789 = vunpack.c.h.b16 %v521
        %v790 = vpack.c.b16 %v728, %v726
        %v791 = vpack.c.b16 %v729, %v727
        %v792 = vpack.c.b16 %v732, %v730
        %v793 = vpack.c.b16 %v733, %v731
        %v794 = vpack.c.b16 %v736, %v734
        %v795 = vpack.c.b16 %v737, %v735
        %v796 = vpack.c.b16 %v740, %v738
        %v797 = vpack.c.b16 %v741, %v739
        %v798 = vpack.c.b16 %v744, %v742
        %v799 = vpack.c.b16 %v745, %v743
        %v800 = vpack.c.b16 %v748, %v746
        %v801 = vpack.c.b16 %v749, %v747
        %v802 = vpack.c.b16 %v752, %v750
        %v803 = vpack.c.b16 %v753, %v751
        %v804 = vpack.c.b16 %v756, %v754
        %v805 = vpack.c.b16 %v757, %v755
        %v806 = vpack.c.b16 %v760, %v758
        %v807 = vpack.c.b16 %v761, %v759
        %v808 = vpack.c.b16 %v764, %v762
        %v809 = vpack.c.b16 %v765, %v763
        %v810 = vpack.c.b16 %v768, %v766
        %v811 = vpack.c.b16 %v769, %v767
        %v812 = vpack.c.b16 %v772, %v770
        %v813 = vpack.c.b16 %v773, %v771
        %v814 = vpack.c.b16 %v776, %v774
        %v815 = vpack.c.b16 %v777, %v775
        %v816 = vpack.c.b16 %v780, %v778
        %v817 = vpack.c.b16 %v781, %v779
        %v818 = vpack.c.b16 %v784, %v782
        %v819 = vpack.c.b16 %v785, %v783
        %v820 = vpack.c.b16 %v788, %v786
        %v821 = vpack.c.b16 %v789, %v787
        %854 = vmatprep.subr.bf16.mxu0 %v805
        %855 = vmatpush1.bf16.msra.mxu0 %v804
        %856 = vmatprep.subr.bf16.mxu0 %v803
        %857 = vmatpush1.bf16.msra.mxu0 %v802
        %858 = vmatprep.subr.bf16.mxu0 %v801
        %859 = vmatpush1.bf16.msra.mxu0 %v800
        %860 = vmatprep.subr.bf16.mxu0 %v799
        %861 = vmatpush1.bf16.msra.mxu0 %v798
        %862 = vmatprep.subr.bf16.mxu0 %v797
        %863 = vmatpush1.bf16.msra.mxu0 %v796
        %864 = vmatprep.subr.bf16.mxu0 %v795
        %865 = vmatpush1.bf16.msra.mxu0 %v794
        %866 = vmatprep.subr.bf16.mxu0 %v793
        %867 = vmatpush1.bf16.msra.mxu0 %v792
        %868 = vmatprep.subr.bf16.mxu0 %v791
        %869 = vmatpush1.bf16.msra.mxu0 %v790
        %870 = vmatprep.subr.bf16.mxu0 %v821
        %871 = vmatpush2.bf16.msra.mxu0 %v820
        %872 = vmatprep.subr.bf16.mxu0 %v819
        %873 = vmatpush2.bf16.msra.mxu0 %v818
        %874 = vmatprep.subr.bf16.mxu0 %v817
        %875 = vmatpush2.bf16.msra.mxu0 %v816
        %876 = vmatprep.subr.bf16.mxu0 %v815
        %877 = vmatpush2.bf16.msra.mxu0 %v814
        %878 = vmatprep.subr.bf16.mxu0 %v813
        %879 = vmatpush2.bf16.msra.mxu0 %v812
        %880 = vmatprep.subr.bf16.mxu0 %v811
        %881 = vmatpush2.bf16.msra.mxu0 %v810
        %882 = vmatprep.subr.bf16.mxu0 %v809
        %883 = vmatpush2.bf16.msra.mxu0 %v808
        %884 = vmatprep.subr.bf16.mxu0 %v807
        %885 = vmatpush2.bf16.msra.mxu0 %v806
        %886 = vmatprep.mubr.bf16.mxu0 %v631
        %887 = vmatmul.mubr.bf16.gmra.mxu0 %v630
        %v888 = vpop.f32.mrf.mxu0
        %v889 = vadd.f32 %v527, %v888
        %v890 = vpop.f32.mrf.mxu0
        %v891 = vadd.f32 %v531, %v890
        %v892 = vpop.f32.mrf.mxu0
        %v893 = vadd.f32 %v527, %v892
        %v894 = vpop.f32.mrf.mxu0
        %v895 = vadd.f32 %v531, %v894
        %896 = vmatprep.mubr.bf16.mxu0 %v633
        %897 = vmatmul.mubr.bf16.gmra.mxu0 %v632
        %v898 = vpop.f32.mrf.mxu0
        %v899 = vadd.f32 %v527, %v898
        %v900 = vpop.f32.mrf.mxu0
        %v901 = vadd.f32 %v531, %v900
        %v902 = vpop.f32.mrf.mxu0
        %v903 = vadd.f32 %v527, %v902
        %v904 = vpop.f32.mrf.mxu0
        %v905 = vadd.f32 %v531, %v904
        %906 = vmatprep.mubr.bf16.mxu0 %v635
        %907 = vmatmul.mubr.bf16.gmra.mxu0 %v634
        %v908 = vpop.f32.mrf.mxu0
        %v909 = vadd.f32 %v527, %v908
        %v910 = vpop.f32.mrf.mxu0
        %v911 = vadd.f32 %v531, %v910
        %v912 = vpop.f32.mrf.mxu0
        %v913 = vadd.f32 %v527, %v912
        %v914 = vpop.f32.mrf.mxu0
        %v915 = vadd.f32 %v531, %v914
        %916 = vmatprep.mubr.bf16.mxu0 %v637
        %917 = vmatmul.mubr.bf16.gmra.mxu0 %v636
        %v918 = vpop.f32.mrf.mxu0
        %v919 = vadd.f32 %v527, %v918
        %v920 = vpop.f32.mrf.mxu0
        %v921 = vadd.f32 %v531, %v920
        %v922 = vpop.f32.mrf.mxu0
        %v923 = vadd.f32 %v527, %v922
        %v924 = vpop.f32.mrf.mxu0
        %v925 = vadd.f32 %v531, %v924
        %926 = vmatprep.mubr.bf16.mxu0 %v639
        %927 = vmatmul.mubr.bf16.gmra.mxu0 %v638
        %v928 = vpop.f32.mrf.mxu0
        %v929 = vadd.f32 %v527, %v928
        %v930 = vpop.f32.mrf.mxu0
        %v931 = vadd.f32 %v531, %v930
        %v932 = vpop.f32.mrf.mxu0
        %v933 = vadd.f32 %v527, %v932
        %v934 = vpop.f32.mrf.mxu0
        %v935 = vadd.f32 %v531, %v934
        %936 = vmatprep.mubr.bf16.mxu0 %v641
        %937 = vmatmul.mubr.bf16.gmra.mxu0 %v640
        %v938 = vpop.f32.mrf.mxu0
        %v939 = vadd.f32 %v527, %v938
        %v940 = vpop.f32.mrf.mxu0
        %v941 = vadd.f32 %v531, %v940
        %v942 = vpop.f32.mrf.mxu0
        %v943 = vadd.f32 %v527, %v942
        %v944 = vpop.f32.mrf.mxu0
        %v945 = vadd.f32 %v531, %v944
        %946 = vmatprep.mubr.bf16.mxu0 %v643
        %947 = vmatmul.mubr.bf16.gmra.mxu0 %v642
        %v948 = vpop.f32.mrf.mxu0
        %v949 = vadd.f32 %v527, %v948
        %v950 = vpop.f32.mrf.mxu0
        %v951 = vadd.f32 %v531, %v950
        %v952 = vpop.f32.mrf.mxu0
        %v953 = vadd.f32 %v527, %v952
        %v954 = vpop.f32.mrf.mxu0
        %v955 = vadd.f32 %v531, %v954
        %956 = vmatprep.mubr.bf16.mxu0 %v645
        %957 = vmatmul.mubr.bf16.gmra.mxu0 %v644
        %v958 = vpop.f32.mrf.mxu0
        %v959 = vadd.f32 %v527, %v958
        %v960 = vpop.f32.mrf.mxu0
        %v961 = vadd.f32 %v531, %v960
        %v962 = vpop.f32.mrf.mxu0
        %v963 = vadd.f32 %v527, %v962
        %v964 = vpop.f32.mrf.mxu0
        %v965 = vadd.f32 %v531, %v964
        %966 = vmatprep.mubr.bf16.mxu0 %v647
        %967 = vmatmul.mubr.bf16.gmra.mxu0 %v646
        %v968 = vpop.f32.mrf.mxu0
        %v969 = vadd.f32 %v527, %v968
        %v970 = vpop.f32.mrf.mxu0
        %v971 = vadd.f32 %v531, %v970
        %v972 = vpop.f32.mrf.mxu0
        %v973 = vadd.f32 %v527, %v972
        %v974 = vpop.f32.mrf.mxu0
        %v975 = vadd.f32 %v531, %v974
        %976 = vmatprep.mubr.bf16.mxu0 %v649
        %977 = vmatmul.mubr.bf16.gmra.mxu0 %v648
        %v978 = vpop.f32.mrf.mxu0
        %v979 = vadd.f32 %v527, %v978
        %v980 = vpop.f32.mrf.mxu0
        %v981 = vadd.f32 %v531, %v980
        %v982 = vpop.f32.mrf.mxu0
        %v983 = vadd.f32 %v527, %v982
        %v984 = vpop.f32.mrf.mxu0
        %v985 = vadd.f32 %v531, %v984
        %986 = vmatprep.mubr.bf16.mxu0 %v651
        %987 = vmatmul.mubr.bf16.gmra.mxu0 %v650
        %v988 = vpop.f32.mrf.mxu0
        %v989 = vadd.f32 %v527, %v988
        %v990 = vpop.f32.mrf.mxu0
        %v991 = vadd.f32 %v531, %v990
        %v992 = vpop.f32.mrf.mxu0
        %v993 = vadd.f32 %v527, %v992
        %v994 = vpop.f32.mrf.mxu0
        %v995 = vadd.f32 %v531, %v994
        %996 = vmatprep.mubr.bf16.mxu0 %v653
        %997 = vmatmul.mubr.bf16.gmra.mxu0 %v652
        %v998 = vpop.f32.mrf.mxu0
        %v999 = vadd.f32 %v527, %v998
        %v1000 = vpop.f32.mrf.mxu0
        %v1001 = vadd.f32 %v531, %v1000
        %v1002 = vpop.f32.mrf.mxu0
        %v1003 = vadd.f32 %v527, %v1002
        %v1004 = vpop.f32.mrf.mxu0
        %v1005 = vadd.f32 %v531, %v1004
        %1006 = vmatprep.mubr.bf16.mxu0 %v655
        %1007 = vmatmul.mubr.bf16.gmra.mxu0 %v654
        %v1008 = vpop.f32.mrf.mxu0
        %v1009 = vadd.f32 %v527, %v1008
        %v1010 = vpop.f32.mrf.mxu0
        %v1011 = vadd.f32 %v531, %v1010
        %v1012 = vpop.f32.mrf.mxu0
        %v1013 = vadd.f32 %v527, %v1012
        %v1014 = vpop.f32.mrf.mxu0
        %v1015 = vadd.f32 %v531, %v1014
        %1016 = vmatprep.mubr.bf16.mxu0 %v657
        %1017 = vmatmul.mubr.bf16.gmra.mxu0 %v656
        %v1018 = vpop.f32.mrf.mxu0
        %v1019 = vadd.f32 %v527, %v1018
        %v1020 = vpop.f32.mrf.mxu0
        %v1021 = vadd.f32 %v531, %v1020
        %v1022 = vpop.f32.mrf.mxu0
        %v1023 = vadd.f32 %v527, %v1022
        %v1024 = vpop.f32.mrf.mxu0
        %v1025 = vadd.f32 %v531, %v1024
        %1026 = vmatprep.mubr.bf16.mxu0 %v659
        %1027 = vmatmul.mubr.bf16.gmra.mxu0 %v658
        %v1028 = vpop.f32.mrf.mxu0
        %v1029 = vadd.f32 %v527, %v1028
        %v1030 = vpop.f32.mrf.mxu0
        %v1031 = vadd.f32 %v531, %v1030
        %v1032 = vpop.f32.mrf.mxu0
        %v1033 = vadd.f32 %v527, %v1032
        %v1034 = vpop.f32.mrf.mxu0
        %v1035 = vadd.f32 %v531, %v1034
        %1036 = vmatprep.mubr.bf16.mxu0 %v661
        %1037 = vmatmul.mubr.bf16.gmra.mxu0 %v660
        %v1038 = vpop.f32.mrf.mxu0
        %v1039 = vadd.f32 %v527, %v1038
        %v1040 = vpop.f32.mrf.mxu0
        %v1041 = vadd.f32 %v531, %v1040
        %v1042 = vpop.f32.mrf.mxu0
        %v1043 = vadd.f32 %v527, %v1042
        %v1044 = vpop.f32.mrf.mxu0
        %v1045 = vadd.f32 %v531, %v1044
        %1046 = vdwg.mxu0
        %v1047 = vpack.c.bf16 %v893, %v889
        %v1048 = vpack.c.bf16 %v895, %v891
        %v1049 = vpack.c.bf16 %v903, %v899
        %v1050 = vpack.c.bf16 %v905, %v901
        %v1051 = vpack.c.bf16 %v913, %v909
        %v1052 = vpack.c.bf16 %v915, %v911
        %v1053 = vpack.c.bf16 %v923, %v919
        %v1054 = vpack.c.bf16 %v925, %v921
        %v1055 = vpack.c.bf16 %v933, %v929
        %v1056 = vpack.c.bf16 %v935, %v931
        %v1057 = vpack.c.bf16 %v943, %v939
        %v1058 = vpack.c.bf16 %v945, %v941
        %v1059 = vpack.c.bf16 %v953, %v949
        %v1060 = vpack.c.bf16 %v955, %v951
        %v1061 = vpack.c.bf16 %v963, %v959
        %v1062 = vpack.c.bf16 %v965, %v961
        %v1063 = vpack.c.bf16 %v973, %v969
        %v1064 = vpack.c.bf16 %v975, %v971
        %v1065 = vpack.c.bf16 %v983, %v979
        %v1066 = vpack.c.bf16 %v985, %v981
        %v1067 = vpack.c.bf16 %v993, %v989
        %v1068 = vpack.c.bf16 %v995, %v991
        %v1069 = vpack.c.bf16 %v1003, %v999
        %v1070 = vpack.c.bf16 %v1005, %v1001
        %v1071 = vpack.c.bf16 %v1013, %v1009
        %v1072 = vpack.c.bf16 %v1015, %v1011
        %v1073 = vpack.c.bf16 %v1023, %v1019
        %v1074 = vpack.c.bf16 %v1025, %v1021
        %v1075 = vpack.c.bf16 %v1033, %v1029
        %v1076 = vpack.c.bf16 %v1035, %v1031
        %v1077 = vpack.c.bf16 %v1043, %v1039
        %v1078 = vpack.c.bf16 %v1045, %v1041
        %vm1079 = vcmp.ge.bf16.partialorder %v1047, 0
        %vm1080 = vcmp.ge.bf16.partialorder %v1048, 0
        %vm1081 = vcmp.ge.bf16.partialorder %v1049, 0
        %vm1082 = vcmp.ge.bf16.partialorder %v1050, 0
        %vm1083 = vcmp.ge.bf16.partialorder %v1051, 0
        %vm1084 = vcmp.ge.bf16.partialorder %v1052, 0
        %vm1085 = vcmp.ge.bf16.partialorder %v1053, 0
        %vm1086 = vcmp.ge.bf16.partialorder %v1054, 0
        %vm1087 = vcmp.ge.bf16.partialorder %v1055, 0
        %vm1088 = vcmp.ge.bf16.partialorder %v1056, 0
        %vm1089 = vcmp.ge.bf16.partialorder %v1057, 0
        %vm1090 = vcmp.ge.bf16.partialorder %v1058, 0
        %vm1091 = vcmp.ge.bf16.partialorder %v1059, 0
        %vm1092 = vcmp.ge.bf16.partialorder %v1060, 0
        %vm1093 = vcmp.ge.bf16.partialorder %v1061, 0
        %vm1094 = vcmp.ge.bf16.partialorder %v1062, 0
        %vm1095 = vcmp.ge.bf16.partialorder %v1063, 0
        %vm1096 = vcmp.ge.bf16.partialorder %v1064, 0
        %vm1097 = vcmp.ge.bf16.partialorder %v1065, 0
        %vm1098 = vcmp.ge.bf16.partialorder %v1066, 0
        %vm1099 = vcmp.ge.bf16.partialorder %v1067, 0
        %vm1100 = vcmp.ge.bf16.partialorder %v1068, 0
        %vm1101 = vcmp.ge.bf16.partialorder %v1069, 0
        %vm1102 = vcmp.ge.bf16.partialorder %v1070, 0
        %vm1103 = vcmp.ge.bf16.partialorder %v1071, 0
        %vm1104 = vcmp.ge.bf16.partialorder %v1072, 0
        %vm1105 = vcmp.ge.bf16.partialorder %v1073, 0
        %vm1106 = vcmp.ge.bf16.partialorder %v1074, 0
        %vm1107 = vcmp.ge.bf16.partialorder %v1075, 0
        %vm1108 = vcmp.ge.bf16.partialorder %v1076, 0
        %vm1109 = vcmp.ge.bf16.partialorder %v1077, 0
        %vm1110 = vcmp.ge.bf16.partialorder %v1078, 0
        %v1111 = vmul.bf16 %v1047, 1009007652
        %v1112 = vmul.bf16 %v1048, 1009007652
        %v1113 = vmul.bf16 %v1049, 1009007652
        %v1114 = vmul.bf16 %v1050, 1009007652
        %v1115 = vmul.bf16 %v1051, 1009007652
        %v1116 = vmul.bf16 %v1052, 1009007652
        %v1117 = vmul.bf16 %v1053, 1009007652
        %v1118 = vmul.bf16 %v1054, 1009007652
        %v1119 = vmul.bf16 %v1055, 1009007652
        %v1120 = vmul.bf16 %v1056, 1009007652
        %v1121 = vmul.bf16 %v1057, 1009007652
        %v1122 = vmul.bf16 %v1058, 1009007652
        %v1123 = vmul.bf16 %v1059, 1009007652
        %v1124 = vmul.bf16 %v1060, 1009007652
        %v1125 = vmul.bf16 %v1061, 1009007652
        %v1126 = vmul.bf16 %v1062, 1009007652
        %v1127 = vmul.bf16 %v1063, 1009007652
        %v1128 = vmul.bf16 %v1064, 1009007652
        %v1129 = vmul.bf16 %v1065, 1009007652
        %v1130 = vmul.bf16 %v1066, 1009007652
        %v1131 = vmul.bf16 %v1067, 1009007652
        %v1132 = vmul.bf16 %v1068, 1009007652
        %v1133 = vmul.bf16 %v1069, 1009007652
        %v1134 = vmul.bf16 %v1070, 1009007652
        %v1135 = vmul.bf16 %v1071, 1009007652
        %v1136 = vmul.bf16 %v1072, 1009007652
        %v1137 = vmul.bf16 %v1073, 1009007652
        %v1138 = vmul.bf16 %v1074, 1009007652
        %v1139 = vmul.bf16 %v1075, 1009007652
        %v1140 = vmul.bf16 %v1076, 1009007652
        %v1141 = vmul.bf16 %v1077, 1009007652
        %v1142 = vmul.bf16 %v1078, 1009007652
        %v1143 = vsel %vm1079, %v1047, %v1111
        %v1144 = vsel %vm1080, %v1048, %v1112
        %v1145 = vsel %vm1081, %v1049, %v1113
        %v1146 = vsel %vm1082, %v1050, %v1114
        %v1147 = vsel %vm1083, %v1051, %v1115
        %v1148 = vsel %vm1084, %v1052, %v1116
        %v1149 = vsel %vm1085, %v1053, %v1117
        %v1150 = vsel %vm1086, %v1054, %v1118
        %v1151 = vsel %vm1087, %v1055, %v1119
        %v1152 = vsel %vm1088, %v1056, %v1120
        %v1153 = vsel %vm1089, %v1057, %v1121
        %v1154 = vsel %vm1090, %v1058, %v1122
        %v1155 = vsel %vm1091, %v1059, %v1123
        %v1156 = vsel %vm1092, %v1060, %v1124
        %v1157 = vsel %vm1093, %v1061, %v1125
        %v1158 = vsel %vm1094, %v1062, %v1126
        %v1159 = vsel %vm1095, %v1063, %v1127
        %v1160 = vsel %vm1096, %v1064, %v1128
        %v1161 = vsel %vm1097, %v1065, %v1129
        %v1162 = vsel %vm1098, %v1066, %v1130
        %v1163 = vsel %vm1099, %v1067, %v1131
        %v1164 = vsel %vm1100, %v1068, %v1132
        %v1165 = vsel %vm1101, %v1069, %v1133
        %v1166 = vsel %vm1102, %v1070, %v1134
        %v1167 = vsel %vm1103, %v1071, %v1135
        %v1168 = vsel %vm1104, %v1072, %v1136
        %v1169 = vsel %vm1105, %v1073, %v1137
        %v1170 = vsel %vm1106, %v1074, %v1138
        %v1171 = vsel %vm1107, %v1075, %v1139
        %v1172 = vsel %vm1108, %v1076, %v1140
        %v1173 = vsel %vm1109, %v1077, %v1141
        %v1174 = vsel %vm1110, %v1078, %v1142
        %v1175 = vld [vmem:[#allocation7] sm:$0xff]
        %v1176 = vld [vmem:[#allocation7 + $0x8] sm:$0xff]
        %v1177 = vld [vmem:[#allocation7 + $0x10] sm:$0xff]
        %v1178 = vld [vmem:[#allocation7 + $0x18] sm:$0xff]
        %v1179 = vld [vmem:[#allocation7 + $0x20] sm:$0xff]
        %v1180 = vld [vmem:[#allocation7 + $0x28] sm:$0xff]
        %v1181 = vld [vmem:[#allocation7 + $0x30] sm:$0xff]
        %v1182 = vld [vmem:[#allocation7 + $0x38] sm:$0xff]
        %v1183 = vld [vmem:[#allocation7 + $0x40] sm:$0xff]
        %v1184 = vld [vmem:[#allocation7 + $0x48] sm:$0xff]
        %v1185 = vld [vmem:[#allocation7 + $0x50] sm:$0xff]
        %v1186 = vld [vmem:[#allocation7 + $0x58] sm:$0xff]
        %v1187 = vld [vmem:[#allocation7 + $0x60] sm:$0xff]
        %v1188 = vld [vmem:[#allocation7 + $0x68] sm:$0xff]
        %v1189 = vld [vmem:[#allocation7 + $0x70] sm:$0xff]
        %v1190 = vld [vmem:[#allocation7 + $0x78] sm:$0xff]
        %v1191 = vld [vmem:[#allocation7 + $0x80] sm:$0xff]
        %v1192 = vld [vmem:[#allocation7 + $0x88] sm:$0xff]
        %v1193 = vld [vmem:[#allocation7 + $0x90] sm:$0xff]
        %v1194 = vld [vmem:[#allocation7 + $0x98] sm:$0xff]
        %v1195 = vld [vmem:[#allocation7 + $0xa0] sm:$0xff]
        %v1196 = vld [vmem:[#allocation7 + $0xa8] sm:$0xff]
        %v1197 = vld [vmem:[#allocation7 + $0xb0] sm:$0xff]
        %v1198 = vld [vmem:[#allocation7 + $0xb8] sm:$0xff]
        %v1199 = vld [vmem:[#allocation7 + $0xc0] sm:$0xff]
        %v1200 = vld [vmem:[#allocation7 + $0xc8] sm:$0xff]
        %v1201 = vld [vmem:[#allocation7 + $0xd0] sm:$0xff]
        %v1202 = vld [vmem:[#allocation7 + $0xd8] sm:$0xff]
        %v1203 = vld [vmem:[#allocation7 + $0xe0] sm:$0xff]
        %v1204 = vld [vmem:[#allocation7 + $0xe8] sm:$0xff]
        %v1205 = vld [vmem:[#allocation7 + $0xf0] sm:$0xff]
        %v1206 = vld [vmem:[#allocation7 + $0xf8] sm:$0xff]
        %v1207 = vld [vmem:[%s8 + $0x2] sm:$0x3]
        %v1209 = vlaneseq
        %v1210 = vshrl.u32 %v1209, 7
        %v1211 = vsub.s32 0, %v1210
        %v1212 = vrot.slane %v1207, %v1211
        %v1213 = vlaneseq
        %v1214 = vshrl.u32 %v1213, 7
        %v1215 = vsub.s32 1, %v1214
        %v1216 = vrot.slane %v1207, %v1215
        %v1251 = vunpack.c.l.b16 %v1175
        %v1252 = vunpack.c.h.b16 %v1175
        %v1253 = vunpack.c.l.b16 %v1176
        %v1254 = vunpack.c.h.b16 %v1176
        %v1255 = vunpack.c.l.b16 %v1177
        %v1256 = vunpack.c.h.b16 %v1177
        %v1257 = vunpack.c.l.b16 %v1178
        %v1258 = vunpack.c.h.b16 %v1178
        %v1259 = vunpack.c.l.b16 %v1179
        %v1260 = vunpack.c.h.b16 %v1179
        %v1261 = vunpack.c.l.b16 %v1180
        %v1262 = vunpack.c.h.b16 %v1180
        %v1263 = vunpack.c.l.b16 %v1181
        %v1264 = vunpack.c.h.b16 %v1181
        %v1265 = vunpack.c.l.b16 %v1182
        %v1266 = vunpack.c.h.b16 %v1182
        %v1267 = vunpack.c.l.b16 %v1183
        %v1268 = vunpack.c.h.b16 %v1183
        %v1269 = vunpack.c.l.b16 %v1184
        %v1270 = vunpack.c.h.b16 %v1184
        %v1271 = vunpack.c.l.b16 %v1185
        %v1272 = vunpack.c.h.b16 %v1185
        %v1273 = vunpack.c.l.b16 %v1186
        %v1274 = vunpack.c.h.b16 %v1186
        %v1275 = vunpack.c.l.b16 %v1187
        %v1276 = vunpack.c.h.b16 %v1187
        %v1277 = vunpack.c.l.b16 %v1188
        %v1278 = vunpack.c.h.b16 %v1188
        %v1279 = vunpack.c.l.b16 %v1189
        %v1280 = vunpack.c.h.b16 %v1189
        %v1281 = vunpack.c.l.b16 %v1190
        %v1282 = vunpack.c.h.b16 %v1190
        %v1283 = vunpack.c.l.b16 %v1191
        %v1284 = vunpack.c.h.b16 %v1191
        %v1285 = vunpack.c.l.b16 %v1192
        %v1286 = vunpack.c.h.b16 %v1192
        %v1287 = vunpack.c.l.b16 %v1193
        %v1288 = vunpack.c.h.b16 %v1193
        %v1289 = vunpack.c.l.b16 %v1194
        %v1290 = vunpack.c.h.b16 %v1194
        %v1291 = vunpack.c.l.b16 %v1195
        %v1292 = vunpack.c.h.b16 %v1195
        %v1293 = vunpack.c.l.b16 %v1196
        %v1294 = vunpack.c.h.b16 %v1196
        %v1295 = vunpack.c.l.b16 %v1197
        %v1296 = vunpack.c.h.b16 %v1197
        %v1297 = vunpack.c.l.b16 %v1198
        %v1298 = vunpack.c.h.b16 %v1198
        %v1299 = vunpack.c.l.b16 %v1199
        %v1300 = vunpack.c.h.b16 %v1199
        %v1301 = vunpack.c.l.b16 %v1200
        %v1302 = vunpack.c.h.b16 %v1200
        %v1303 = vunpack.c.l.b16 %v1201
        %v1304 = vunpack.c.h.b16 %v1201
        %v1305 = vunpack.c.l.b16 %v1202
        %v1306 = vunpack.c.h.b16 %v1202
        %v1307 = vunpack.c.l.b16 %v1203
        %v1308 = vunpack.c.h.b16 %v1203
        %v1309 = vunpack.c.l.b16 %v1204
        %v1310 = vunpack.c.h.b16 %v1204
        %v1311 = vunpack.c.l.b16 %v1205
        %v1312 = vunpack.c.h.b16 %v1205
        %v1313 = vunpack.c.l.b16 %v1206
        %v1314 = vunpack.c.h.b16 %v1206
        %v1315 = vpack.c.b16 %v1253, %v1251
        %v1316 = vpack.c.b16 %v1254, %v1252
        %v1317 = vpack.c.b16 %v1257, %v1255
        %v1318 = vpack.c.b16 %v1258, %v1256
        %v1319 = vpack.c.b16 %v1261, %v1259
        %v1320 = vpack.c.b16 %v1262, %v1260
        %v1321 = vpack.c.b16 %v1265, %v1263
        %v1322 = vpack.c.b16 %v1266, %v1264
        %v1323 = vpack.c.b16 %v1269, %v1267
        %v1324 = vpack.c.b16 %v1270, %v1268
        %v1325 = vpack.c.b16 %v1273, %v1271
        %v1326 = vpack.c.b16 %v1274, %v1272
        %v1327 = vpack.c.b16 %v1277, %v1275
        %v1328 = vpack.c.b16 %v1278, %v1276
        %v1329 = vpack.c.b16 %v1281, %v1279
        %v1330 = vpack.c.b16 %v1282, %v1280
        %v1331 = vpack.c.b16 %v1285, %v1283
        %v1332 = vpack.c.b16 %v1286, %v1284
        %v1333 = vpack.c.b16 %v1289, %v1287
        %v1334 = vpack.c.b16 %v1290, %v1288
        %v1335 = vpack.c.b16 %v1293, %v1291
        %v1336 = vpack.c.b16 %v1294, %v1292
        %v1337 = vpack.c.b16 %v1297, %v1295
        %v1338 = vpack.c.b16 %v1298, %v1296
        %v1339 = vpack.c.b16 %v1301, %v1299
        %v1340 = vpack.c.b16 %v1302, %v1300
        %v1341 = vpack.c.b16 %v1305, %v1303
        %v1342 = vpack.c.b16 %v1306, %v1304
        %v1343 = vpack.c.b16 %v1309, %v1307
        %v1344 = vpack.c.b16 %v1310, %v1308
        %v1345 = vpack.c.b16 %v1313, %v1311
        %v1346 = vpack.c.b16 %v1314, %v1312
        %1379 = vmatprep.subr.bf16.mxu0 %v1330
        %1380 = vmatpush1.bf16.msra.mxu0 %v1329
        %1381 = vmatprep.subr.bf16.mxu0 %v1328
        %1382 = vmatpush1.bf16.msra.mxu0 %v1327
        %1383 = vmatprep.subr.bf16.mxu0 %v1326
        %1384 = vmatpush1.bf16.msra.mxu0 %v1325
        %1385 = vmatprep.subr.bf16.mxu0 %v1324
        %1386 = vmatpush1.bf16.msra.mxu0 %v1323
        %1387 = vmatprep.subr.bf16.mxu0 %v1322
        %1388 = vmatpush1.bf16.msra.mxu0 %v1321
        %1389 = vmatprep.subr.bf16.mxu0 %v1320
        %1390 = vmatpush1.bf16.msra.mxu0 %v1319
        %1391 = vmatprep.subr.bf16.mxu0 %v1318
        %1392 = vmatpush1.bf16.msra.mxu0 %v1317
        %1393 = vmatprep.subr.bf16.mxu0 %v1316
        %1394 = vmatpush1.bf16.msra.mxu0 %v1315
        %1395 = vmatprep.subr.bf16.mxu0 %v1346
        %1396 = vmatpush2.bf16.msra.mxu0 %v1345
        %1397 = vmatprep.subr.bf16.mxu0 %v1344
        %1398 = vmatpush2.bf16.msra.mxu0 %v1343
        %1399 = vmatprep.subr.bf16.mxu0 %v1342
        %1400 = vmatpush2.bf16.msra.mxu0 %v1341
        %1401 = vmatprep.subr.bf16.mxu0 %v1340
        %1402 = vmatpush2.bf16.msra.mxu0 %v1339
        %1403 = vmatprep.subr.bf16.mxu0 %v1338
        %1404 = vmatpush2.bf16.msra.mxu0 %v1337
        %1405 = vmatprep.subr.bf16.mxu0 %v1336
        %1406 = vmatpush2.bf16.msra.mxu0 %v1335
        %1407 = vmatprep.subr.bf16.mxu0 %v1334
        %1408 = vmatpush2.bf16.msra.mxu0 %v1333
        %1409 = vmatprep.subr.bf16.mxu0 %v1332
        %1410 = vmatpush2.bf16.msra.mxu0 %v1331
        %1411 = vmatprep.mubr.bf16.mxu0 %v1144
        %1412 = vmatmul.mubr.bf16.gmra.mxu0 %v1143
        %v1413 = vpop.f32.mrf.mxu0
        %v1414 = vadd.f32 %v1212, %v1413
        %v1415 = vpop.f32.mrf.mxu0
        %v1416 = vadd.f32 %v1216, %v1415
        %v1417 = vpop.f32.mrf.mxu0
        %v1418 = vadd.f32 %v1212, %v1417
        %v1419 = vpop.f32.mrf.mxu0
        %v1420 = vadd.f32 %v1216, %v1419
        %1421 = vmatprep.mubr.bf16.mxu0 %v1146
        %1422 = vmatmul.mubr.bf16.gmra.mxu0 %v1145
        %v1423 = vpop.f32.mrf.mxu0
        %v1424 = vadd.f32 %v1212, %v1423
        %v1425 = vpop.f32.mrf.mxu0
        %v1426 = vadd.f32 %v1216, %v1425
        %v1427 = vpop.f32.mrf.mxu0
        %v1428 = vadd.f32 %v1212, %v1427
        %v1429 = vpop.f32.mrf.mxu0
        %v1430 = vadd.f32 %v1216, %v1429
        %1431 = vmatprep.mubr.bf16.mxu0 %v1148
        %1432 = vmatmul.mubr.bf16.gmra.mxu0 %v1147
        %v1433 = vpop.f32.mrf.mxu0
        %v1434 = vadd.f32 %v1212, %v1433
        %v1435 = vpop.f32.mrf.mxu0
        %v1436 = vadd.f32 %v1216, %v1435
        %v1437 = vpop.f32.mrf.mxu0
        %v1438 = vadd.f32 %v1212, %v1437
        %v1439 = vpop.f32.mrf.mxu0
        %v1440 = vadd.f32 %v1216, %v1439
        %1441 = vmatprep.mubr.bf16.mxu0 %v1150
        %1442 = vmatmul.mubr.bf16.gmra.mxu0 %v1149
        %v1443 = vpop.f32.mrf.mxu0
        %v1444 = vadd.f32 %v1212, %v1443
        %v1445 = vpop.f32.mrf.mxu0
        %v1446 = vadd.f32 %v1216, %v1445
        %v1447 = vpop.f32.mrf.mxu0
        %v1448 = vadd.f32 %v1212, %v1447
        %v1449 = vpop.f32.mrf.mxu0
        %v1450 = vadd.f32 %v1216, %v1449
        %1451 = vmatprep.mubr.bf16.mxu0 %v1152
        %1452 = vmatmul.mubr.bf16.gmra.mxu0 %v1151
        %v1453 = vpop.f32.mrf.mxu0
        %v1454 = vadd.f32 %v1212, %v1453
        %v1455 = vpop.f32.mrf.mxu0
        %v1456 = vadd.f32 %v1216, %v1455
        %v1457 = vpop.f32.mrf.mxu0
        %v1458 = vadd.f32 %v1212, %v1457
        %v1459 = vpop.f32.mrf.mxu0
        %v1460 = vadd.f32 %v1216, %v1459
        %1461 = vmatprep.mubr.bf16.mxu0 %v1154
        %1462 = vmatmul.mubr.bf16.gmra.mxu0 %v1153
        %v1463 = vpop.f32.mrf.mxu0
        %v1464 = vadd.f32 %v1212, %v1463
        %v1465 = vpop.f32.mrf.mxu0
        %v1466 = vadd.f32 %v1216, %v1465
        %v1467 = vpop.f32.mrf.mxu0
        %v1468 = vadd.f32 %v1212, %v1467
        %v1469 = vpop.f32.mrf.mxu0
        %v1470 = vadd.f32 %v1216, %v1469
        %1471 = vmatprep.mubr.bf16.mxu0 %v1156
        %1472 = vmatmul.mubr.bf16.gmra.mxu0 %v1155
        %v1473 = vpop.f32.mrf.mxu0
        %v1474 = vadd.f32 %v1212, %v1473
        %v1475 = vpop.f32.mrf.mxu0
        %v1476 = vadd.f32 %v1216, %v1475
        %v1477 = vpop.f32.mrf.mxu0
        %v1478 = vadd.f32 %v1212, %v1477
        %v1479 = vpop.f32.mrf.mxu0
        %v1480 = vadd.f32 %v1216, %v1479
        %1481 = vmatprep.mubr.bf16.mxu0 %v1158
        %1482 = vmatmul.mubr.bf16.gmra.mxu0 %v1157
        %v1483 = vpop.f32.mrf.mxu0
        %v1484 = vadd.f32 %v1212, %v1483
        %v1485 = vpop.f32.mrf.mxu0
        %v1486 = vadd.f32 %v1216, %v1485
        %v1487 = vpop.f32.mrf.mxu0
        %v1488 = vadd.f32 %v1212, %v1487
        %v1489 = vpop.f32.mrf.mxu0
        %v1490 = vadd.f32 %v1216, %v1489
        %1491 = vmatprep.mubr.bf16.mxu0 %v1160
        %1492 = vmatmul.mubr.bf16.gmra.mxu0 %v1159
        %v1493 = vpop.f32.mrf.mxu0
        %v1494 = vadd.f32 %v1212, %v1493
        %v1495 = vpop.f32.mrf.mxu0
        %v1496 = vadd.f32 %v1216, %v1495
        %v1497 = vpop.f32.mrf.mxu0
        %v1498 = vadd.f32 %v1212, %v1497
        %v1499 = vpop.f32.mrf.mxu0
        %v1500 = vadd.f32 %v1216, %v1499
        %1501 = vmatprep.mubr.bf16.mxu0 %v1162
        %1502 = vmatmul.mubr.bf16.gmra.mxu0 %v1161
        %v1503 = vpop.f32.mrf.mxu0
        %v1504 = vadd.f32 %v1212, %v1503
        %v1505 = vpop.f32.mrf.mxu0
        %v1506 = vadd.f32 %v1216, %v1505
        %v1507 = vpop.f32.mrf.mxu0
        %v1508 = vadd.f32 %v1212, %v1507
        %v1509 = vpop.f32.mrf.mxu0
        %v1510 = vadd.f32 %v1216, %v1509
        %1511 = vmatprep.mubr.bf16.mxu0 %v1164
        %1512 = vmatmul.mubr.bf16.gmra.mxu0 %v1163
        %v1513 = vpop.f32.mrf.mxu0
        %v1514 = vadd.f32 %v1212, %v1513
        %v1515 = vpop.f32.mrf.mxu0
        %v1516 = vadd.f32 %v1216, %v1515
        %v1517 = vpop.f32.mrf.mxu0
        %v1518 = vadd.f32 %v1212, %v1517
        %v1519 = vpop.f32.mrf.mxu0
        %v1520 = vadd.f32 %v1216, %v1519
        %1521 = vmatprep.mubr.bf16.mxu0 %v1166
        %1522 = vmatmul.mubr.bf16.gmra.mxu0 %v1165
        %v1523 = vpop.f32.mrf.mxu0
        %v1524 = vadd.f32 %v1212, %v1523
        %v1525 = vpop.f32.mrf.mxu0
        %v1526 = vadd.f32 %v1216, %v1525
        %v1527 = vpop.f32.mrf.mxu0
        %v1528 = vadd.f32 %v1212, %v1527
        %v1529 = vpop.f32.mrf.mxu0
        %v1530 = vadd.f32 %v1216, %v1529
        %1531 = vmatprep.mubr.bf16.mxu0 %v1168
        %1532 = vmatmul.mubr.bf16.gmra.mxu0 %v1167
        %v1533 = vpop.f32.mrf.mxu0
        %v1534 = vadd.f32 %v1212, %v1533
        %v1535 = vpop.f32.mrf.mxu0
        %v1536 = vadd.f32 %v1216, %v1535
        %v1537 = vpop.f32.mrf.mxu0
        %v1538 = vadd.f32 %v1212, %v1537
        %v1539 = vpop.f32.mrf.mxu0
        %v1540 = vadd.f32 %v1216, %v1539
        %1541 = vmatprep.mubr.bf16.mxu0 %v1170
        %1542 = vmatmul.mubr.bf16.gmra.mxu0 %v1169
        %v1543 = vpop.f32.mrf.mxu0
        %v1544 = vadd.f32 %v1212, %v1543
        %v1545 = vpop.f32.mrf.mxu0
        %v1546 = vadd.f32 %v1216, %v1545
        %v1547 = vpop.f32.mrf.mxu0
        %v1548 = vadd.f32 %v1212, %v1547
        %v1549 = vpop.f32.mrf.mxu0
        %v1550 = vadd.f32 %v1216, %v1549
        %1551 = vmatprep.mubr.bf16.mxu0 %v1172
        %1552 = vmatmul.mubr.bf16.gmra.mxu0 %v1171
        %v1553 = vpop.f32.mrf.mxu0
        %v1554 = vadd.f32 %v1212, %v1553
        %v1555 = vpop.f32.mrf.mxu0
        %v1556 = vadd.f32 %v1216, %v1555
        %v1557 = vpop.f32.mrf.mxu0
        %v1558 = vadd.f32 %v1212, %v1557
        %v1559 = vpop.f32.mrf.mxu0
        %v1560 = vadd.f32 %v1216, %v1559
        %1561 = vmatprep.mubr.bf16.mxu0 %v1174
        %1562 = vmatmul.mubr.bf16.gmra.mxu0 %v1173
        %v1563 = vpop.f32.mrf.mxu0
        %v1564 = vadd.f32 %v1212, %v1563
        %v1565 = vpop.f32.mrf.mxu0
        %v1566 = vadd.f32 %v1216, %v1565
        %v1567 = vpop.f32.mrf.mxu0
        %v1568 = vadd.f32 %v1212, %v1567
        %v1569 = vpop.f32.mrf.mxu0
        %v1570 = vadd.f32 %v1216, %v1569
        %1571 = vdwg.mxu0
        %v1572 = vpack.c.bf16 %v1418, %v1414
        %v1573 = vpack.c.bf16 %v1420, %v1416
        %v1574 = vpack.c.bf16 %v1428, %v1424
        %v1575 = vpack.c.bf16 %v1430, %v1426
        %v1576 = vpack.c.bf16 %v1438, %v1434
        %v1577 = vpack.c.bf16 %v1440, %v1436
        %v1578 = vpack.c.bf16 %v1448, %v1444
        %v1579 = vpack.c.bf16 %v1450, %v1446
        %v1580 = vpack.c.bf16 %v1458, %v1454
        %v1581 = vpack.c.bf16 %v1460, %v1456
        %v1582 = vpack.c.bf16 %v1468, %v1464
        %v1583 = vpack.c.bf16 %v1470, %v1466
        %v1584 = vpack.c.bf16 %v1478, %v1474
        %v1585 = vpack.c.bf16 %v1480, %v1476
        %v1586 = vpack.c.bf16 %v1488, %v1484
        %v1587 = vpack.c.bf16 %v1490, %v1486
        %v1588 = vpack.c.bf16 %v1498, %v1494
        %v1589 = vpack.c.bf16 %v1500, %v1496
        %v1590 = vpack.c.bf16 %v1508, %v1504
        %v1591 = vpack.c.bf16 %v1510, %v1506
        %v1592 = vpack.c.bf16 %v1518, %v1514
        %v1593 = vpack.c.bf16 %v1520, %v1516
        %v1594 = vpack.c.bf16 %v1528, %v1524
        %v1595 = vpack.c.bf16 %v1530, %v1526
        %v1596 = vpack.c.bf16 %v1538, %v1534
        %v1597 = vpack.c.bf16 %v1540, %v1536
        %v1598 = vpack.c.bf16 %v1548, %v1544
        %v1599 = vpack.c.bf16 %v1550, %v1546
        %v1600 = vpack.c.bf16 %v1558, %v1554
        %v1601 = vpack.c.bf16 %v1560, %v1556
        %v1602 = vpack.c.bf16 %v1568, %v1564
        %v1603 = vpack.c.bf16 %v1570, %v1566
        %vm1604 = vcmp.ge.bf16.partialorder %v1572, 0
        %vm1605 = vcmp.ge.bf16.partialorder %v1573, 0
        %vm1606 = vcmp.ge.bf16.partialorder %v1574, 0
        %vm1607 = vcmp.ge.bf16.partialorder %v1575, 0
        %vm1608 = vcmp.ge.bf16.partialorder %v1576, 0
        %vm1609 = vcmp.ge.bf16.partialorder %v1577, 0
        %vm1610 = vcmp.ge.bf16.partialorder %v1578, 0
        %vm1611 = vcmp.ge.bf16.partialorder %v1579, 0
        %vm1612 = vcmp.ge.bf16.partialorder %v1580, 0
        %vm1613 = vcmp.ge.bf16.partialorder %v1581, 0
        %vm1614 = vcmp.ge.bf16.partialorder %v1582, 0
        %vm1615 = vcmp.ge.bf16.partialorder %v1583, 0
        %vm1616 = vcmp.ge.bf16.partialorder %v1584, 0
        %vm1617 = vcmp.ge.bf16.partialorder %v1585, 0
        %vm1618 = vcmp.ge.bf16.partialorder %v1586, 0
        %vm1619 = vcmp.ge.bf16.partialorder %v1587, 0
        %vm1620 = vcmp.ge.bf16.partialorder %v1588, 0
        %vm1621 = vcmp.ge.bf16.partialorder %v1589, 0
        %vm1622 = vcmp.ge.bf16.partialorder %v1590, 0
        %vm1623 = vcmp.ge.bf16.partialorder %v1591, 0
        %vm1624 = vcmp.ge.bf16.partialorder %v1592, 0
        %vm1625 = vcmp.ge.bf16.partialorder %v1593, 0
        %vm1626 = vcmp.ge.bf16.partialorder %v1594, 0
        %vm1627 = vcmp.ge.bf16.partialorder %v1595, 0
        %vm1628 = vcmp.ge.bf16.partialorder %v1596, 0
        %vm1629 = vcmp.ge.bf16.partialorder %v1597, 0
        %vm1630 = vcmp.ge.bf16.partialorder %v1598, 0
        %vm1631 = vcmp.ge.bf16.partialorder %v1599, 0
        %vm1632 = vcmp.ge.bf16.partialorder %v1600, 0
        %vm1633 = vcmp.ge.bf16.partialorder %v1601, 0
        %vm1634 = vcmp.ge.bf16.partialorder %v1602, 0
        %vm1635 = vcmp.ge.bf16.partialorder %v1603, 0
        %v1636 = vmul.bf16 %v1572, 1009007652
        %v1637 = vmul.bf16 %v1573, 1009007652
        %v1638 = vmul.bf16 %v1574, 1009007652
        %v1639 = vmul.bf16 %v1575, 1009007652
        %v1640 = vmul.bf16 %v1576, 1009007652
        %v1641 = vmul.bf16 %v1577, 1009007652
        %v1642 = vmul.bf16 %v1578, 1009007652
        %v1643 = vmul.bf16 %v1579, 1009007652
        %v1644 = vmul.bf16 %v1580, 1009007652
        %v1645 = vmul.bf16 %v1581, 1009007652
        %v1646 = vmul.bf16 %v1582, 1009007652
        %v1647 = vmul.bf16 %v1583, 1009007652
        %v1648 = vmul.bf16 %v1584, 1009007652
        %v1649 = vmul.bf16 %v1585, 1009007652
        %v1650 = vmul.bf16 %v1586, 1009007652
        %v1651 = vmul.bf16 %v1587, 1009007652
        %v1652 = vmul.bf16 %v1588, 1009007652
        %v1653 = vmul.bf16 %v1589, 1009007652
        %v1654 = vmul.bf16 %v1590, 1009007652
        %v1655 = vmul.bf16 %v1591, 1009007652
        %v1656 = vmul.bf16 %v1592, 1009007652
        %v1657 = vmul.bf16 %v1593, 1009007652
        %v1658 = vmul.bf16 %v1594, 1009007652
        %v1659 = vmul.bf16 %v1595, 1009007652
        %v1660 = vmul.bf16 %v1596, 1009007652
        %v1661 = vmul.bf16 %v1597, 1009007652
        %v1662 = vmul.bf16 %v1598, 1009007652
        %v1663 = vmul.bf16 %v1599, 1009007652
        %v1664 = vmul.bf16 %v1600, 1009007652
        %v1665 = vmul.bf16 %v1601, 1009007652
        %v1666 = vmul.bf16 %v1602, 1009007652
        %v1667 = vmul.bf16 %v1603, 1009007652
        %v1668 = vsel %vm1604, %v1572, %v1636
        %v1669 = vsel %vm1605, %v1573, %v1637
        %v1670 = vsel %vm1606, %v1574, %v1638
        %v1671 = vsel %vm1607, %v1575, %v1639
        %v1672 = vsel %vm1608, %v1576, %v1640
        %v1673 = vsel %vm1609, %v1577, %v1641
        %v1674 = vsel %vm1610, %v1578, %v1642
        %v1675 = vsel %vm1611, %v1579, %v1643
        %v1676 = vsel %vm1612, %v1580, %v1644
        %v1677 = vsel %vm1613, %v1581, %v1645
        %v1678 = vsel %vm1614, %v1582, %v1646
        %v1679 = vsel %vm1615, %v1583, %v1647
        %v1680 = vsel %vm1616, %v1584, %v1648
        %v1681 = vsel %vm1617, %v1585, %v1649
        %v1682 = vsel %vm1618, %v1586, %v1650
        %v1683 = vsel %vm1619, %v1587, %v1651
        %v1684 = vsel %vm1620, %v1588, %v1652
        %v1685 = vsel %vm1621, %v1589, %v1653
        %v1686 = vsel %vm1622, %v1590, %v1654
        %v1687 = vsel %vm1623, %v1591, %v1655
        %v1688 = vsel %vm1624, %v1592, %v1656
        %v1689 = vsel %vm1625, %v1593, %v1657
        %v1690 = vsel %vm1626, %v1594, %v1658
        %v1691 = vsel %vm1627, %v1595, %v1659
        %v1692 = vsel %vm1628, %v1596, %v1660
        %v1693 = vsel %vm1629, %v1597, %v1661
        %v1694 = vsel %vm1630, %v1598, %v1662
        %v1695 = vsel %vm1631, %v1599, %v1663
        %v1696 = vsel %vm1632, %v1600, %v1664
        %v1697 = vsel %vm1633, %v1601, %v1665
        %v1698 = vsel %vm1634, %v1602, %v1666
        %v1699 = vsel %vm1635, %v1603, %v1667
        %v1700 = vadd.bf16 %v1143, %v1668
        %v1701 = vadd.bf16 %v1144, %v1669
        %v1702 = vadd.bf16 %v1145, %v1670
        %v1703 = vadd.bf16 %v1146, %v1671
        %v1704 = vadd.bf16 %v1147, %v1672
        %v1705 = vadd.bf16 %v1148, %v1673
        %v1706 = vadd.bf16 %v1149, %v1674
        %v1707 = vadd.bf16 %v1150, %v1675
        %v1708 = vadd.bf16 %v1151, %v1676
        %v1709 = vadd.bf16 %v1152, %v1677
        %v1710 = vadd.bf16 %v1153, %v1678
        %v1711 = vadd.bf16 %v1154, %v1679
        %v1712 = vadd.bf16 %v1155, %v1680
        %v1713 = vadd.bf16 %v1156, %v1681
        %v1714 = vadd.bf16 %v1157, %v1682
        %v1715 = vadd.bf16 %v1158, %v1683
        %v1716 = vadd.bf16 %v1159, %v1684
        %v1717 = vadd.bf16 %v1160, %v1685
        %v1718 = vadd.bf16 %v1161, %v1686
        %v1719 = vadd.bf16 %v1162, %v1687
        %v1720 = vadd.bf16 %v1163, %v1688
        %v1721 = vadd.bf16 %v1164, %v1689
        %v1722 = vadd.bf16 %v1165, %v1690
        %v1723 = vadd.bf16 %v1166, %v1691
        %v1724 = vadd.bf16 %v1167, %v1692
        %v1725 = vadd.bf16 %v1168, %v1693
        %v1726 = vadd.bf16 %v1169, %v1694
        %v1727 = vadd.bf16 %v1170, %v1695
        %v1728 = vadd.bf16 %v1171, %v1696
        %v1729 = vadd.bf16 %v1172, %v1697
        %v1730 = vadd.bf16 %v1173, %v1698
        %v1731 = vadd.bf16 %v1174, %v1699
        %v1732 = vld [vmem:[#allocation8] sm:$0xff]
        %v1733 = vld [vmem:[#allocation8 + $0x8] sm:$0xff]
        %v1734 = vld [vmem:[#allocation8 + $0x10] sm:$0xff]
        %v1735 = vld [vmem:[#allocation8 + $0x18] sm:$0xff]
        %v1736 = vld [vmem:[#allocation8 + $0x20] sm:$0xff]
        %v1737 = vld [vmem:[#allocation8 + $0x28] sm:$0xff]
        %v1738 = vld [vmem:[#allocation8 + $0x30] sm:$0xff]
        %v1739 = vld [vmem:[#allocation8 + $0x38] sm:$0xff]
        %v1740 = vld [vmem:[#allocation8 + $0x40] sm:$0xff]
        %v1741 = vld [vmem:[#allocation8 + $0x48] sm:$0xff]
        %v1742 = vld [vmem:[#allocation8 + $0x50] sm:$0xff]
        %v1743 = vld [vmem:[#allocation8 + $0x58] sm:$0xff]
        %v1744 = vld [vmem:[#allocation8 + $0x60] sm:$0xff]
        %v1745 = vld [vmem:[#allocation8 + $0x68] sm:$0xff]
        %v1746 = vld [vmem:[#allocation8 + $0x70] sm:$0xff]
        %v1747 = vld [vmem:[#allocation8 + $0x78] sm:$0xff]
        %v1748 = vld [vmem:[#allocation8 + $0x80] sm:$0xff]
        %v1749 = vld [vmem:[#allocation8 + $0x88] sm:$0xff]
        %v1750 = vld [vmem:[#allocation8 + $0x90] sm:$0xff]
        %v1751 = vld [vmem:[#allocation8 + $0x98] sm:$0xff]
        %v1752 = vld [vmem:[#allocation8 + $0xa0] sm:$0xff]
        %v1753 = vld [vmem:[#allocation8 + $0xa8] sm:$0xff]
        %v1754 = vld [vmem:[#allocation8 + $0xb0] sm:$0xff]
        %v1755 = vld [vmem:[#allocation8 + $0xb8] sm:$0xff]
        %v1756 = vld [vmem:[#allocation8 + $0xc0] sm:$0xff]
        %v1757 = vld [vmem:[#allocation8 + $0xc8] sm:$0xff]
        %v1758 = vld [vmem:[#allocation8 + $0xd0] sm:$0xff]
        %v1759 = vld [vmem:[#allocation8 + $0xd8] sm:$0xff]
        %v1760 = vld [vmem:[#allocation8 + $0xe0] sm:$0xff]
        %v1761 = vld [vmem:[#allocation8 + $0xe8] sm:$0xff]
        %v1762 = vld [vmem:[#allocation8 + $0xf0] sm:$0xff]
        %v1763 = vld [vmem:[#allocation8 + $0xf8] sm:$0xff]
        %v1764 = vld [vmem:[%s8 + $0x4] sm:$0x3]
        %v1766 = vlaneseq
        %v1767 = vshrl.u32 %v1766, 7
        %v1768 = vsub.s32 0, %v1767
        %v1769 = vrot.slane %v1764, %v1768
        %v1770 = vlaneseq
        %v1771 = vshrl.u32 %v1770, 7
        %v1772 = vsub.s32 1, %v1771
        %v1773 = vrot.slane %v1764, %v1772
        %v1808 = vunpack.c.l.b16 %v1732
        %v1809 = vunpack.c.h.b16 %v1732
        %v1810 = vunpack.c.l.b16 %v1733
        %v1811 = vunpack.c.h.b16 %v1733
        %v1812 = vunpack.c.l.b16 %v1734
        %v1813 = vunpack.c.h.b16 %v1734
        %v1814 = vunpack.c.l.b16 %v1735
        %v1815 = vunpack.c.h.b16 %v1735
        %v1816 = vunpack.c.l.b16 %v1736
        %v1817 = vunpack.c.h.b16 %v1736
        %v1818 = vunpack.c.l.b16 %v1737
        %v1819 = vunpack.c.h.b16 %v1737
        %v1820 = vunpack.c.l.b16 %v1738
        %v1821 = vunpack.c.h.b16 %v1738
        %v1822 = vunpack.c.l.b16 %v1739
        %v1823 = vunpack.c.h.b16 %v1739
        %v1824 = vunpack.c.l.b16 %v1740
        %v1825 = vunpack.c.h.b16 %v1740
        %v1826 = vunpack.c.l.b16 %v1741
        %v1827 = vunpack.c.h.b16 %v1741
        %v1828 = vunpack.c.l.b16 %v1742
        %v1829 = vunpack.c.h.b16 %v1742
        %v1830 = vunpack.c.l.b16 %v1743
        %v1831 = vunpack.c.h.b16 %v1743
        %v1832 = vunpack.c.l.b16 %v1744
        %v1833 = vunpack.c.h.b16 %v1744
        %v1834 = vunpack.c.l.b16 %v1745
        %v1835 = vunpack.c.h.b16 %v1745
        %v1836 = vunpack.c.l.b16 %v1746
        %v1837 = vunpack.c.h.b16 %v1746
        %v1838 = vunpack.c.l.b16 %v1747
        %v1839 = vunpack.c.h.b16 %v1747
        %v1840 = vunpack.c.l.b16 %v1748
        %v1841 = vunpack.c.h.b16 %v1748
        %v1842 = vunpack.c.l.b16 %v1749
        %v1843 = vunpack.c.h.b16 %v1749
        %v1844 = vunpack.c.l.b16 %v1750
        %v1845 = vunpack.c.h.b16 %v1750
        %v1846 = vunpack.c.l.b16 %v1751
        %v1847 = vunpack.c.h.b16 %v1751
        %v1848 = vunpack.c.l.b16 %v1752
        %v1849 = vunpack.c.h.b16 %v1752
        %v1850 = vunpack.c.l.b16 %v1753
        %v1851 = vunpack.c.h.b16 %v1753
        %v1852 = vunpack.c.l.b16 %v1754
        %v1853 = vunpack.c.h.b16 %v1754
        %v1854 = vunpack.c.l.b16 %v1755
        %v1855 = vunpack.c.h.b16 %v1755
        %v1856 = vunpack.c.l.b16 %v1756
        %v1857 = vunpack.c.h.b16 %v1756
        %v1858 = vunpack.c.l.b16 %v1757
        %v1859 = vunpack.c.h.b16 %v1757
        %v1860 = vunpack.c.l.b16 %v1758
        %v1861 = vunpack.c.h.b16 %v1758
        %v1862 = vunpack.c.l.b16 %v1759
        %v1863 = vunpack.c.h.b16 %v1759
        %v1864 = vunpack.c.l.b16 %v1760
        %v1865 = vunpack.c.h.b16 %v1760
        %v1866 = vunpack.c.l.b16 %v1761
        %v1867 = vunpack.c.h.b16 %v1761
        %v1868 = vunpack.c.l.b16 %v1762
        %v1869 = vunpack.c.h.b16 %v1762
        %v1870 = vunpack.c.l.b16 %v1763
        %v1871 = vunpack.c.h.b16 %v1763
        %v1872 = vpack.c.b16 %v1810, %v1808
        %v1873 = vpack.c.b16 %v1811, %v1809
        %v1874 = vpack.c.b16 %v1814, %v1812
        %v1875 = vpack.c.b16 %v1815, %v1813
        %v1876 = vpack.c.b16 %v1818, %v1816
        %v1877 = vpack.c.b16 %v1819, %v1817
        %v1878 = vpack.c.b16 %v1822, %v1820
        %v1879 = vpack.c.b16 %v1823, %v1821
        %v1880 = vpack.c.b16 %v1826, %v1824
        %v1881 = vpack.c.b16 %v1827, %v1825
        %v1882 = vpack.c.b16 %v1830, %v1828
        %v1883 = vpack.c.b16 %v1831, %v1829
        %v1884 = vpack.c.b16 %v1834, %v1832
        %v1885 = vpack.c.b16 %v1835, %v1833
        %v1886 = vpack.c.b16 %v1838, %v1836
        %v1887 = vpack.c.b16 %v1839, %v1837
        %v1888 = vpack.c.b16 %v1842, %v1840
        %v1889 = vpack.c.b16 %v1843, %v1841
        %v1890 = vpack.c.b16 %v1846, %v1844
        %v1891 = vpack.c.b16 %v1847, %v1845
        %v1892 = vpack.c.b16 %v1850, %v1848
        %v1893 = vpack.c.b16 %v1851, %v1849
        %v1894 = vpack.c.b16 %v1854, %v1852
        %v1895 = vpack.c.b16 %v1855, %v1853
        %v1896 = vpack.c.b16 %v1858, %v1856
        %v1897 = vpack.c.b16 %v1859, %v1857
        %v1898 = vpack.c.b16 %v1862, %v1860
        %v1899 = vpack.c.b16 %v1863, %v1861
        %v1900 = vpack.c.b16 %v1866, %v1864
        %v1901 = vpack.c.b16 %v1867, %v1865
        %v1902 = vpack.c.b16 %v1870, %v1868
        %v1903 = vpack.c.b16 %v1871, %v1869
        %1936 = vmatprep.subr.bf16.mxu0 %v1887
        %1937 = vmatpush1.bf16.msra.mxu0 %v1886
        %1938 = vmatprep.subr.bf16.mxu0 %v1885
        %1939 = vmatpush1.bf16.msra.mxu0 %v1884
        %1940 = vmatprep.subr.bf16.mxu0 %v1883
        %1941 = vmatpush1.bf16.msra.mxu0 %v1882
        %1942 = vmatprep.subr.bf16.mxu0 %v1881
        %1943 = vmatpush1.bf16.msra.mxu0 %v1880
        %1944 = vmatprep.subr.bf16.mxu0 %v1879
        %1945 = vmatpush1.bf16.msra.mxu0 %v1878
        %1946 = vmatprep.subr.bf16.mxu0 %v1877
        %1947 = vmatpush1.bf16.msra.mxu0 %v1876
        %1948 = vmatprep.subr.bf16.mxu0 %v1875
        %1949 = vmatpush1.bf16.msra.mxu0 %v1874
        %1950 = vmatprep.subr.bf16.mxu0 %v1873
        %1951 = vmatpush1.bf16.msra.mxu0 %v1872
        %1952 = vmatprep.subr.bf16.mxu0 %v1903
        %1953 = vmatpush2.bf16.msra.mxu0 %v1902
        %1954 = vmatprep.subr.bf16.mxu0 %v1901
        %1955 = vmatpush2.bf16.msra.mxu0 %v1900
        %1956 = vmatprep.subr.bf16.mxu0 %v1899
        %1957 = vmatpush2.bf16.msra.mxu0 %v1898
        %1958 = vmatprep.subr.bf16.mxu0 %v1897
        %1959 = vmatpush2.bf16.msra.mxu0 %v1896
        %1960 = vmatprep.subr.bf16.mxu0 %v1895
        %1961 = vmatpush2.bf16.msra.mxu0 %v1894
        %1962 = vmatprep.subr.bf16.mxu0 %v1893
        %1963 = vmatpush2.bf16.msra.mxu0 %v1892
        %1964 = vmatprep.subr.bf16.mxu0 %v1891
        %1965 = vmatpush2.bf16.msra.mxu0 %v1890
        %1966 = vmatprep.subr.bf16.mxu0 %v1889
        %1967 = vmatpush2.bf16.msra.mxu0 %v1888
        %1968 = vmatprep.mubr.bf16.mxu0 %v1701
        %1969 = vmatmul.mubr.bf16.gmra.mxu0 %v1700
        %v1970 = vpop.f32.mrf.mxu0
        %v1971 = vadd.f32 %v1769, %v1970
        %v1972 = vpop.f32.mrf.mxu0
        %v1973 = vadd.f32 %v1773, %v1972
        %v1974 = vpop.f32.mrf.mxu0
        %v1975 = vadd.f32 %v1769, %v1974
        %v1976 = vpop.f32.mrf.mxu0
        %v1977 = vadd.f32 %v1773, %v1976
        %1978 = vmatprep.mubr.bf16.mxu0 %v1703
        %1979 = vmatmul.mubr.bf16.gmra.mxu0 %v1702
        %v1980 = vpop.f32.mrf.mxu0
        %v1981 = vadd.f32 %v1769, %v1980
        %v1982 = vpop.f32.mrf.mxu0
        %v1983 = vadd.f32 %v1773, %v1982
        %v1984 = vpop.f32.mrf.mxu0
        %v1985 = vadd.f32 %v1769, %v1984
        %v1986 = vpop.f32.mrf.mxu0
        %v1987 = vadd.f32 %v1773, %v1986
        %1988 = vmatprep.mubr.bf16.mxu0 %v1705
        %1989 = vmatmul.mubr.bf16.gmra.mxu0 %v1704
        %v1990 = vpop.f32.mrf.mxu0
        %v1991 = vadd.f32 %v1769, %v1990
        %v1992 = vpop.f32.mrf.mxu0
        %v1993 = vadd.f32 %v1773, %v1992
        %v1994 = vpop.f32.mrf.mxu0
        %v1995 = vadd.f32 %v1769, %v1994
        %v1996 = vpop.f32.mrf.mxu0
        %v1997 = vadd.f32 %v1773, %v1996
        %1998 = vmatprep.mubr.bf16.mxu0 %v1707
        %1999 = vmatmul.mubr.bf16.gmra.mxu0 %v1706
        %v2000 = vpop.f32.mrf.mxu0
        %v2001 = vadd.f32 %v1769, %v2000
        %v2002 = vpop.f32.mrf.mxu0
        %v2003 = vadd.f32 %v1773, %v2002
        %v2004 = vpop.f32.mrf.mxu0
        %v2005 = vadd.f32 %v1769, %v2004
        %v2006 = vpop.f32.mrf.mxu0
        %v2007 = vadd.f32 %v1773, %v2006
        %2008 = vmatprep.mubr.bf16.mxu0 %v1709
        %2009 = vmatmul.mubr.bf16.gmra.mxu0 %v1708
        %v2010 = vpop.f32.mrf.mxu0
        %v2011 = vadd.f32 %v1769, %v2010
        %v2012 = vpop.f32.mrf.mxu0
        %v2013 = vadd.f32 %v1773, %v2012
        %v2014 = vpop.f32.mrf.mxu0
        %v2015 = vadd.f32 %v1769, %v2014
        %v2016 = vpop.f32.mrf.mxu0
        %v2017 = vadd.f32 %v1773, %v2016
        %2018 = vmatprep.mubr.bf16.mxu0 %v1711
        %2019 = vmatmul.mubr.bf16.gmra.mxu0 %v1710
        %v2020 = vpop.f32.mrf.mxu0
        %v2021 = vadd.f32 %v1769, %v2020
        %v2022 = vpop.f32.mrf.mxu0
        %v2023 = vadd.f32 %v1773, %v2022
        %v2024 = vpop.f32.mrf.mxu0
        %v2025 = vadd.f32 %v1769, %v2024
        %v2026 = vpop.f32.mrf.mxu0
        %v2027 = vadd.f32 %v1773, %v2026
        %2028 = vmatprep.mubr.bf16.mxu0 %v1713
        %2029 = vmatmul.mubr.bf16.gmra.mxu0 %v1712
        %v2030 = vpop.f32.mrf.mxu0
        %v2031 = vadd.f32 %v1769, %v2030
        %v2032 = vpop.f32.mrf.mxu0
        %v2033 = vadd.f32 %v1773, %v2032
        %v2034 = vpop.f32.mrf.mxu0
        %v2035 = vadd.f32 %v1769, %v2034
        %v2036 = vpop.f32.mrf.mxu0
        %v2037 = vadd.f32 %v1773, %v2036
        %2038 = vmatprep.mubr.bf16.mxu0 %v1715
        %2039 = vmatmul.mubr.bf16.gmra.mxu0 %v1714
        %v2040 = vpop.f32.mrf.mxu0
        %v2041 = vadd.f32 %v1769, %v2040
        %v2042 = vpop.f32.mrf.mxu0
        %v2043 = vadd.f32 %v1773, %v2042
        %v2044 = vpop.f32.mrf.mxu0
        %v2045 = vadd.f32 %v1769, %v2044
        %v2046 = vpop.f32.mrf.mxu0
        %v2047 = vadd.f32 %v1773, %v2046
        %2048 = vmatprep.mubr.bf16.mxu0 %v1717
        %2049 = vmatmul.mubr.bf16.gmra.mxu0 %v1716
        %v2050 = vpop.f32.mrf.mxu0
        %v2051 = vadd.f32 %v1769, %v2050
        %v2052 = vpop.f32.mrf.mxu0
        %v2053 = vadd.f32 %v1773, %v2052
        %v2054 = vpop.f32.mrf.mxu0
        %v2055 = vadd.f32 %v1769, %v2054
        %v2056 = vpop.f32.mrf.mxu0
        %v2057 = vadd.f32 %v1773, %v2056
        %2058 = vmatprep.mubr.bf16.mxu0 %v1719
        %2059 = vmatmul.mubr.bf16.gmra.mxu0 %v1718
        %v2060 = vpop.f32.mrf.mxu0
        %v2061 = vadd.f32 %v1769, %v2060
        %v2062 = vpop.f32.mrf.mxu0
        %v2063 = vadd.f32 %v1773, %v2062
        %v2064 = vpop.f32.mrf.mxu0
        %v2065 = vadd.f32 %v1769, %v2064
        %v2066 = vpop.f32.mrf.mxu0
        %v2067 = vadd.f32 %v1773, %v2066
        %2068 = vmatprep.mubr.bf16.mxu0 %v1721
        %2069 = vmatmul.mubr.bf16.gmra.mxu0 %v1720
        %v2070 = vpop.f32.mrf.mxu0
        %v2071 = vadd.f32 %v1769, %v2070
        %v2072 = vpop.f32.mrf.mxu0
        %v2073 = vadd.f32 %v1773, %v2072
        %v2074 = vpop.f32.mrf.mxu0
        %v2075 = vadd.f32 %v1769, %v2074
        %v2076 = vpop.f32.mrf.mxu0
        %v2077 = vadd.f32 %v1773, %v2076
        %2078 = vmatprep.mubr.bf16.mxu0 %v1723
        %2079 = vmatmul.mubr.bf16.gmra.mxu0 %v1722
        %v2080 = vpop.f32.mrf.mxu0
        %v2081 = vadd.f32 %v1769, %v2080
        %v2082 = vpop.f32.mrf.mxu0
        %v2083 = vadd.f32 %v1773, %v2082
        %v2084 = vpop.f32.mrf.mxu0
        %v2085 = vadd.f32 %v1769, %v2084
        %v2086 = vpop.f32.mrf.mxu0
        %v2087 = vadd.f32 %v1773, %v2086
        %2088 = vmatprep.mubr.bf16.mxu0 %v1725
        %2089 = vmatmul.mubr.bf16.gmra.mxu0 %v1724
        %v2090 = vpop.f32.mrf.mxu0
        %v2091 = vadd.f32 %v1769, %v2090
        %v2092 = vpop.f32.mrf.mxu0
        %v2093 = vadd.f32 %v1773, %v2092
        %v2094 = vpop.f32.mrf.mxu0
        %v2095 = vadd.f32 %v1769, %v2094
        %v2096 = vpop.f32.mrf.mxu0
        %v2097 = vadd.f32 %v1773, %v2096
        %2098 = vmatprep.mubr.bf16.mxu0 %v1727
        %2099 = vmatmul.mubr.bf16.gmra.mxu0 %v1726
        %v2100 = vpop.f32.mrf.mxu0
        %v2101 = vadd.f32 %v1769, %v2100
        %v2102 = vpop.f32.mrf.mxu0
        %v2103 = vadd.f32 %v1773, %v2102
        %v2104 = vpop.f32.mrf.mxu0
        %v2105 = vadd.f32 %v1769, %v2104
        %v2106 = vpop.f32.mrf.mxu0
        %v2107 = vadd.f32 %v1773, %v2106
        %2108 = vmatprep.mubr.bf16.mxu0 %v1729
        %2109 = vmatmul.mubr.bf16.gmra.mxu0 %v1728
        %v2110 = vpop.f32.mrf.mxu0
        %v2111 = vadd.f32 %v1769, %v2110
        %v2112 = vpop.f32.mrf.mxu0
        %v2113 = vadd.f32 %v1773, %v2112
        %v2114 = vpop.f32.mrf.mxu0
        %v2115 = vadd.f32 %v1769, %v2114
        %v2116 = vpop.f32.mrf.mxu0
        %v2117 = vadd.f32 %v1773, %v2116
        %2118 = vmatprep.mubr.bf16.mxu0 %v1731
        %2119 = vmatmul.mubr.bf16.gmra.mxu0 %v1730
        %v2120 = vpop.f32.mrf.mxu0
        %v2121 = vadd.f32 %v1769, %v2120
        %v2122 = vpop.f32.mrf.mxu0
        %v2123 = vadd.f32 %v1773, %v2122
        %v2124 = vpop.f32.mrf.mxu0
        %v2125 = vadd.f32 %v1769, %v2124
        %v2126 = vpop.f32.mrf.mxu0
        %v2127 = vadd.f32 %v1773, %v2126
        %2128 = vdwg.mxu0
        %v2129 = vpack.c.bf16 %v1975, %v1971
        %v2130 = vpack.c.bf16 %v1977, %v1973
        %v2131 = vpack.c.bf16 %v1985, %v1981
        %v2132 = vpack.c.bf16 %v1987, %v1983
        %v2133 = vpack.c.bf16 %v1995, %v1991
        %v2134 = vpack.c.bf16 %v1997, %v1993
        %v2135 = vpack.c.bf16 %v2005, %v2001
        %v2136 = vpack.c.bf16 %v2007, %v2003
        %v2137 = vpack.c.bf16 %v2015, %v2011
        %v2138 = vpack.c.bf16 %v2017, %v2013
        %v2139 = vpack.c.bf16 %v2025, %v2021
        %v2140 = vpack.c.bf16 %v2027, %v2023
        %v2141 = vpack.c.bf16 %v2035, %v2031
        %v2142 = vpack.c.bf16 %v2037, %v2033
        %v2143 = vpack.c.bf16 %v2045, %v2041
        %v2144 = vpack.c.bf16 %v2047, %v2043
        %v2145 = vpack.c.bf16 %v2055, %v2051
        %v2146 = vpack.c.bf16 %v2057, %v2053
        %v2147 = vpack.c.bf16 %v2065, %v2061
        %v2148 = vpack.c.bf16 %v2067, %v2063
        %v2149 = vpack.c.bf16 %v2075, %v2071
        %v2150 = vpack.c.bf16 %v2077, %v2073
        %v2151 = vpack.c.bf16 %v2085, %v2081
        %v2152 = vpack.c.bf16 %v2087, %v2083
        %v2153 = vpack.c.bf16 %v2095, %v2091
        %v2154 = vpack.c.bf16 %v2097, %v2093
        %v2155 = vpack.c.bf16 %v2105, %v2101
        %v2156 = vpack.c.bf16 %v2107, %v2103
        %v2157 = vpack.c.bf16 %v2115, %v2111
        %v2158 = vpack.c.bf16 %v2117, %v2113
        %v2159 = vpack.c.bf16 %v2125, %v2121
        %v2160 = vpack.c.bf16 %v2127, %v2123
        %vm2161 = vcmp.ge.bf16.partialorder %v2129, 0
        %vm2162 = vcmp.ge.bf16.partialorder %v2130, 0
        %vm2163 = vcmp.ge.bf16.partialorder %v2131, 0
        %vm2164 = vcmp.ge.bf16.partialorder %v2132, 0
        %vm2165 = vcmp.ge.bf16.partialorder %v2133, 0
        %vm2166 = vcmp.ge.bf16.partialorder %v2134, 0
        %vm2167 = vcmp.ge.bf16.partialorder %v2135, 0
        %vm2168 = vcmp.ge.bf16.partialorder %v2136, 0
        %vm2169 = vcmp.ge.bf16.partialorder %v2137, 0
        %vm2170 = vcmp.ge.bf16.partialorder %v2138, 0
        %vm2171 = vcmp.ge.bf16.partialorder %v2139, 0
        %vm2172 = vcmp.ge.bf16.partialorder %v2140, 0
        %vm2173 = vcmp.ge.bf16.partialorder %v2141, 0
        %vm2174 = vcmp.ge.bf16.partialorder %v2142, 0
        %vm2175 = vcmp.ge.bf16.partialorder %v2143, 0
        %vm2176 = vcmp.ge.bf16.partialorder %v2144, 0
        %vm2177 = vcmp.ge.bf16.partialorder %v2145, 0
        %vm2178 = vcmp.ge.bf16.partialorder %v2146, 0
        %vm2179 = vcmp.ge.bf16.partialorder %v2147, 0
        %vm2180 = vcmp.ge.bf16.partialorder %v2148, 0
        %vm2181 = vcmp.ge.bf16.partialorder %v2149, 0
        %vm2182 = vcmp.ge.bf16.partialorder %v2150, 0
        %vm2183 = vcmp.ge.bf16.partialorder %v2151, 0
        %vm2184 = vcmp.ge.bf16.partialorder %v2152, 0
        %vm2185 = vcmp.ge.bf16.partialorder %v2153, 0
        %vm2186 = vcmp.ge.bf16.partialorder %v2154, 0
        %vm2187 = vcmp.ge.bf16.partialorder %v2155, 0
        %vm2188 = vcmp.ge.bf16.partialorder %v2156, 0
        %vm2189 = vcmp.ge.bf16.partialorder %v2157, 0
        %vm2190 = vcmp.ge.bf16.partialorder %v2158, 0
        %vm2191 = vcmp.ge.bf16.partialorder %v2159, 0
        %vm2192 = vcmp.ge.bf16.partialorder %v2160, 0
        %v2193 = vmul.bf16 %v2129, 1009007652
        %v2194 = vmul.bf16 %v2130, 1009007652
        %v2195 = vmul.bf16 %v2131, 1009007652
        %v2196 = vmul.bf16 %v2132, 1009007652
        %v2197 = vmul.bf16 %v2133, 1009007652
        %v2198 = vmul.bf16 %v2134, 1009007652
        %v2199 = vmul.bf16 %v2135, 1009007652
        %v2200 = vmul.bf16 %v2136, 1009007652
        %v2201 = vmul.bf16 %v2137, 1009007652
        %v2202 = vmul.bf16 %v2138, 1009007652
        %v2203 = vmul.bf16 %v2139, 1009007652
        %v2204 = vmul.bf16 %v2140, 1009007652
        %v2205 = vmul.bf16 %v2141, 1009007652
        %v2206 = vmul.bf16 %v2142, 1009007652
        %v2207 = vmul.bf16 %v2143, 1009007652
        %v2208 = vmul.bf16 %v2144, 1009007652
        %v2209 = vmul.bf16 %v2145, 1009007652
        %v2210 = vmul.bf16 %v2146, 1009007652
        %v2211 = vmul.bf16 %v2147, 1009007652
        %v2212 = vmul.bf16 %v2148, 1009007652
        %v2213 = vmul.bf16 %v2149, 1009007652
        %v2214 = vmul.bf16 %v2150, 1009007652
        %v2215 = vmul.bf16 %v2151, 1009007652
        %v2216 = vmul.bf16 %v2152, 1009007652
        %v2217 = vmul.bf16 %v2153, 1009007652
        %v2218 = vmul.bf16 %v2154, 1009007652
        %v2219 = vmul.bf16 %v2155, 1009007652
        %v2220 = vmul.bf16 %v2156, 1009007652
        %v2221 = vmul.bf16 %v2157, 1009007652
        %v2222 = vmul.bf16 %v2158, 1009007652
        %v2223 = vmul.bf16 %v2159, 1009007652
        %v2224 = vmul.bf16 %v2160, 1009007652
        %v2225 = vsel %vm2161, %v2129, %v2193
        %v2226 = vsel %vm2162, %v2130, %v2194
        %v2227 = vsel %vm2163, %v2131, %v2195
        %v2228 = vsel %vm2164, %v2132, %v2196
        %v2229 = vsel %vm2165, %v2133, %v2197
        %v2230 = vsel %vm2166, %v2134, %v2198
        %v2231 = vsel %vm2167, %v2135, %v2199
        %v2232 = vsel %vm2168, %v2136, %v2200
        %v2233 = vsel %vm2169, %v2137, %v2201
        %v2234 = vsel %vm2170, %v2138, %v2202
        %v2235 = vsel %vm2171, %v2139, %v2203
        %v2236 = vsel %vm2172, %v2140, %v2204
        %v2237 = vsel %vm2173, %v2141, %v2205
        %v2238 = vsel %vm2174, %v2142, %v2206
        %v2239 = vsel %vm2175, %v2143, %v2207
        %v2240 = vsel %vm2176, %v2144, %v2208
        %v2241 = vsel %vm2177, %v2145, %v2209
        %v2242 = vsel %vm2178, %v2146, %v2210
        %v2243 = vsel %vm2179, %v2147, %v2211
        %v2244 = vsel %vm2180, %v2148, %v2212
        %v2245 = vsel %vm2181, %v2149, %v2213
        %v2246 = vsel %vm2182, %v2150, %v2214
        %v2247 = vsel %vm2183, %v2151, %v2215
        %v2248 = vsel %vm2184, %v2152, %v2216
        %v2249 = vsel %vm2185, %v2153, %v2217
        %v2250 = vsel %vm2186, %v2154, %v2218
        %v2251 = vsel %vm2187, %v2155, %v2219
        %v2252 = vsel %vm2188, %v2156, %v2220
        %v2253 = vsel %vm2189, %v2157, %v2221
        %v2254 = vsel %vm2190, %v2158, %v2222
        %v2255 = vsel %vm2191, %v2159, %v2223
        %v2256 = vsel %vm2192, %v2160, %v2224
        %v2257 = vadd.bf16 %v1700, %v2225
        %v2258 = vadd.bf16 %v1701, %v2226
        %v2259 = vadd.bf16 %v1702, %v2227
        %v2260 = vadd.bf16 %v1703, %v2228
        %v2261 = vadd.bf16 %v1704, %v2229
        %v2262 = vadd.bf16 %v1705, %v2230
        %v2263 = vadd.bf16 %v1706, %v2231
        %v2264 = vadd.bf16 %v1707, %v2232
        %v2265 = vadd.bf16 %v1708, %v2233
        %v2266 = vadd.bf16 %v1709, %v2234
        %v2267 = vadd.bf16 %v1710, %v2235
        %v2268 = vadd.bf16 %v1711, %v2236
        %v2269 = vadd.bf16 %v1712, %v2237
        %v2270 = vadd.bf16 %v1713, %v2238
        %v2271 = vadd.bf16 %v1714, %v2239
        %v2272 = vadd.bf16 %v1715, %v2240
        %v2273 = vadd.bf16 %v1716, %v2241
        %v2274 = vadd.bf16 %v1717, %v2242
        %v2275 = vadd.bf16 %v1718, %v2243
        %v2276 = vadd.bf16 %v1719, %v2244
        %v2277 = vadd.bf16 %v1720, %v2245
        %v2278 = vadd.bf16 %v1721, %v2246
        %v2279 = vadd.bf16 %v1722, %v2247
        %v2280 = vadd.bf16 %v1723, %v2248
        %v2281 = vadd.bf16 %v1724, %v2249
        %v2282 = vadd.bf16 %v1725, %v2250
        %v2283 = vadd.bf16 %v1726, %v2251
        %v2284 = vadd.bf16 %v1727, %v2252
        %v2285 = vadd.bf16 %v1728, %v2253
        %v2286 = vadd.bf16 %v1729, %v2254
        %v2287 = vadd.bf16 %v1730, %v2255
        %v2288 = vadd.bf16 %v1731, %v2256
        %v2289 = vld [vmem:[#allocation10] sm:$0xff]
        %v2290 = vld [vmem:[#allocation10 + $0x8] sm:$0xff]
        %v2291 = vld [vmem:[#allocation10 + $0x10] sm:$0xff]
        %v2292 = vld [vmem:[#allocation10 + $0x18] sm:$0xff]
        %v2293 = vld [vmem:[#allocation10 + $0x20] sm:$0xff]
        %v2294 = vld [vmem:[#allocation10 + $0x28] sm:$0xff]
        %v2295 = vld [vmem:[#allocation10 + $0x30] sm:$0xff]
        %v2296 = vld [vmem:[#allocation10 + $0x38] sm:$0xff]
        %v2297 = vld [vmem:[#allocation10 + $0x40] sm:$0xff]
        %v2298 = vld [vmem:[#allocation10 + $0x48] sm:$0xff]
        %v2299 = vld [vmem:[#allocation10 + $0x50] sm:$0xff]
        %v2300 = vld [vmem:[#allocation10 + $0x58] sm:$0xff]
        %v2301 = vld [vmem:[#allocation10 + $0x60] sm:$0xff]
        %v2302 = vld [vmem:[#allocation10 + $0x68] sm:$0xff]
        %v2303 = vld [vmem:[#allocation10 + $0x70] sm:$0xff]
        %v2304 = vld [vmem:[#allocation10 + $0x78] sm:$0xff]
        %v2305 = vld [vmem:[#allocation10 + $0x80] sm:$0xff]
        %v2306 = vld [vmem:[#allocation10 + $0x88] sm:$0xff]
        %v2307 = vld [vmem:[#allocation10 + $0x90] sm:$0xff]
        %v2308 = vld [vmem:[#allocation10 + $0x98] sm:$0xff]
        %v2309 = vld [vmem:[#allocation10 + $0xa0] sm:$0xff]
        %v2310 = vld [vmem:[#allocation10 + $0xa8] sm:$0xff]
        %v2311 = vld [vmem:[#allocation10 + $0xb0] sm:$0xff]
        %v2312 = vld [vmem:[#allocation10 + $0xb8] sm:$0xff]
        %v2313 = vld [vmem:[#allocation10 + $0xc0] sm:$0xff]
        %v2314 = vld [vmem:[#allocation10 + $0xc8] sm:$0xff]
        %v2315 = vld [vmem:[#allocation10 + $0xd0] sm:$0xff]
        %v2316 = vld [vmem:[#allocation10 + $0xd8] sm:$0xff]
        %v2317 = vld [vmem:[#allocation10 + $0xe0] sm:$0xff]
        %v2318 = vld [vmem:[#allocation10 + $0xe8] sm:$0xff]
        %v2319 = vld [vmem:[#allocation10 + $0xf0] sm:$0xff]
        %v2320 = vld [vmem:[#allocation10 + $0xf8] sm:$0xff]
        %v2321 = vld [vmem:[%s8 + $0x6] sm:$0x3]
        %v2323 = vlaneseq
        %v2324 = vshrl.u32 %v2323, 7
        %v2325 = vsub.s32 0, %v2324
        %v2326 = vrot.slane %v2321, %v2325
        %v2327 = vlaneseq
        %v2328 = vshrl.u32 %v2327, 7
        %v2329 = vsub.s32 1, %v2328
        %v2330 = vrot.slane %v2321, %v2329
        %v2365 = vunpack.c.l.b16 %v2289
        %v2366 = vunpack.c.h.b16 %v2289
        %v2367 = vunpack.c.l.b16 %v2290
        %v2368 = vunpack.c.h.b16 %v2290
        %v2369 = vunpack.c.l.b16 %v2291
        %v2370 = vunpack.c.h.b16 %v2291
        %v2371 = vunpack.c.l.b16 %v2292
        %v2372 = vunpack.c.h.b16 %v2292
        %v2373 = vunpack.c.l.b16 %v2293
        %v2374 = vunpack.c.h.b16 %v2293
        %v2375 = vunpack.c.l.b16 %v2294
        %v2376 = vunpack.c.h.b16 %v2294
        %v2377 = vunpack.c.l.b16 %v2295
        %v2378 = vunpack.c.h.b16 %v2295
        %v2379 = vunpack.c.l.b16 %v2296
        %v2380 = vunpack.c.h.b16 %v2296
        %v2381 = vunpack.c.l.b16 %v2297
        %v2382 = vunpack.c.h.b16 %v2297
        %v2383 = vunpack.c.l.b16 %v2298
        %v2384 = vunpack.c.h.b16 %v2298
        %v2385 = vunpack.c.l.b16 %v2299
        %v2386 = vunpack.c.h.b16 %v2299
        %v2387 = vunpack.c.l.b16 %v2300
        %v2388 = vunpack.c.h.b16 %v2300
        %v2389 = vunpack.c.l.b16 %v2301
        %v2390 = vunpack.c.h.b16 %v2301
        %v2391 = vunpack.c.l.b16 %v2302
        %v2392 = vunpack.c.h.b16 %v2302
        %v2393 = vunpack.c.l.b16 %v2303
        %v2394 = vunpack.c.h.b16 %v2303
        %v2395 = vunpack.c.l.b16 %v2304
        %v2396 = vunpack.c.h.b16 %v2304
        %v2397 = vunpack.c.l.b16 %v2305
        %v2398 = vunpack.c.h.b16 %v2305
        %v2399 = vunpack.c.l.b16 %v2306
        %v2400 = vunpack.c.h.b16 %v2306
        %v2401 = vunpack.c.l.b16 %v2307
        %v2402 = vunpack.c.h.b16 %v2307
        %v2403 = vunpack.c.l.b16 %v2308
        %v2404 = vunpack.c.h.b16 %v2308
        %v2405 = vunpack.c.l.b16 %v2309
        %v2406 = vunpack.c.h.b16 %v2309
        %v2407 = vunpack.c.l.b16 %v2310
        %v2408 = vunpack.c.h.b16 %v2310
        %v2409 = vunpack.c.l.b16 %v2311
        %v2410 = vunpack.c.h.b16 %v2311
        %v2411 = vunpack.c.l.b16 %v2312
        %v2412 = vunpack.c.h.b16 %v2312
        %v2413 = vunpack.c.l.b16 %v2313
        %v2414 = vunpack.c.h.b16 %v2313
        %v2415 = vunpack.c.l.b16 %v2314
        %v2416 = vunpack.c.h.b16 %v2314
        %v2417 = vunpack.c.l.b16 %v2315
        %v2418 = vunpack.c.h.b16 %v2315
        %v2419 = vunpack.c.l.b16 %v2316
        %v2420 = vunpack.c.h.b16 %v2316
        %v2421 = vunpack.c.l.b16 %v2317
        %v2422 = vunpack.c.h.b16 %v2317
        %v2423 = vunpack.c.l.b16 %v2318
        %v2424 = vunpack.c.h.b16 %v2318
        %v2425 = vunpack.c.l.b16 %v2319
        %v2426 = vunpack.c.h.b16 %v2319
        %v2427 = vunpack.c.l.b16 %v2320
        %v2428 = vunpack.c.h.b16 %v2320
        %v2429 = vpack.c.b16 %v2367, %v2365
        %v2430 = vpack.c.b16 %v2368, %v2366
        %v2431 = vpack.c.b16 %v2371, %v2369
        %v2432 = vpack.c.b16 %v2372, %v2370
        %v2433 = vpack.c.b16 %v2375, %v2373
        %v2434 = vpack.c.b16 %v2376, %v2374
        %v2435 = vpack.c.b16 %v2379, %v2377
        %v2436 = vpack.c.b16 %v2380, %v2378
        %v2437 = vpack.c.b16 %v2383, %v2381
        %v2438 = vpack.c.b16 %v2384, %v2382
        %v2439 = vpack.c.b16 %v2387, %v2385
        %v2440 = vpack.c.b16 %v2388, %v2386
        %v2441 = vpack.c.b16 %v2391, %v2389
        %v2442 = vpack.c.b16 %v2392, %v2390
        %v2443 = vpack.c.b16 %v2395, %v2393
        %v2444 = vpack.c.b16 %v2396, %v2394
        %v2445 = vpack.c.b16 %v2399, %v2397
        %v2446 = vpack.c.b16 %v2400, %v2398
        %v2447 = vpack.c.b16 %v2403, %v2401
        %v2448 = vpack.c.b16 %v2404, %v2402
        %v2449 = vpack.c.b16 %v2407, %v2405
        %v2450 = vpack.c.b16 %v2408, %v2406
        %v2451 = vpack.c.b16 %v2411, %v2409
        %v2452 = vpack.c.b16 %v2412, %v2410
        %v2453 = vpack.c.b16 %v2415, %v2413
        %v2454 = vpack.c.b16 %v2416, %v2414
        %v2455 = vpack.c.b16 %v2419, %v2417
        %v2456 = vpack.c.b16 %v2420, %v2418
        %v2457 = vpack.c.b16 %v2423, %v2421
        %v2458 = vpack.c.b16 %v2424, %v2422
        %v2459 = vpack.c.b16 %v2427, %v2425
        %v2460 = vpack.c.b16 %v2428, %v2426
        %2493 = vmatprep.subr.bf16.mxu0 %v2444
        %2494 = vmatpush1.bf16.msra.mxu0 %v2443
        %2495 = vmatprep.subr.bf16.mxu0 %v2442
        %2496 = vmatpush1.bf16.msra.mxu0 %v2441
        %2497 = vmatprep.subr.bf16.mxu0 %v2440
        %2498 = vmatpush1.bf16.msra.mxu0 %v2439
        %2499 = vmatprep.subr.bf16.mxu0 %v2438
        %2500 = vmatpush1.bf16.msra.mxu0 %v2437
        %2501 = vmatprep.subr.bf16.mxu0 %v2436
        %2502 = vmatpush1.bf16.msra.mxu0 %v2435
        %2503 = vmatprep.subr.bf16.mxu0 %v2434
        %2504 = vmatpush1.bf16.msra.mxu0 %v2433
        %2505 = vmatprep.subr.bf16.mxu0 %v2432
        %2506 = vmatpush1.bf16.msra.mxu0 %v2431
        %2507 = vmatprep.subr.bf16.mxu0 %v2430
        %2508 = vmatpush1.bf16.msra.mxu0 %v2429
        %2509 = vmatprep.subr.bf16.mxu0 %v2460
        %2510 = vmatpush2.bf16.msra.mxu0 %v2459
        %2511 = vmatprep.subr.bf16.mxu0 %v2458
        %2512 = vmatpush2.bf16.msra.mxu0 %v2457
        %2513 = vmatprep.subr.bf16.mxu0 %v2456
        %2514 = vmatpush2.bf16.msra.mxu0 %v2455
        %2515 = vmatprep.subr.bf16.mxu0 %v2454
        %2516 = vmatpush2.bf16.msra.mxu0 %v2453
        %2517 = vmatprep.subr.bf16.mxu0 %v2452
        %2518 = vmatpush2.bf16.msra.mxu0 %v2451
        %2519 = vmatprep.subr.bf16.mxu0 %v2450
        %2520 = vmatpush2.bf16.msra.mxu0 %v2449
        %2521 = vmatprep.subr.bf16.mxu0 %v2448
        %2522 = vmatpush2.bf16.msra.mxu0 %v2447
        %2523 = vmatprep.subr.bf16.mxu0 %v2446
        %2524 = vmatpush2.bf16.msra.mxu0 %v2445
        %2525 = vmatprep.mubr.bf16.mxu0 %v2258
        %2526 = vmatmul.mubr.bf16.gmra.mxu0 %v2257
        %v2527 = vpop.f32.mrf.mxu0
        %v2528 = vadd.f32 %v2326, %v2527
        %v2529 = vpop.f32.mrf.mxu0
        %v2530 = vadd.f32 %v2330, %v2529
        %v2531 = vpop.f32.mrf.mxu0
        %v2532 = vadd.f32 %v2326, %v2531
        %v2533 = vpop.f32.mrf.mxu0
        %v2534 = vadd.f32 %v2330, %v2533
        %2535 = vmatprep.mubr.bf16.mxu0 %v2260
        %2536 = vmatmul.mubr.bf16.gmra.mxu0 %v2259
        %v2537 = vpop.f32.mrf.mxu0
        %v2538 = vadd.f32 %v2326, %v2537
        %v2539 = vpop.f32.mrf.mxu0
        %v2540 = vadd.f32 %v2330, %v2539
        %v2541 = vpop.f32.mrf.mxu0
        %v2542 = vadd.f32 %v2326, %v2541
        %v2543 = vpop.f32.mrf.mxu0
        %v2544 = vadd.f32 %v2330, %v2543
        %2545 = vmatprep.mubr.bf16.mxu0 %v2262
        %2546 = vmatmul.mubr.bf16.gmra.mxu0 %v2261
        %v2547 = vpop.f32.mrf.mxu0
        %v2548 = vadd.f32 %v2326, %v2547
        %v2549 = vpop.f32.mrf.mxu0
        %v2550 = vadd.f32 %v2330, %v2549
        %v2551 = vpop.f32.mrf.mxu0
        %v2552 = vadd.f32 %v2326, %v2551
        %v2553 = vpop.f32.mrf.mxu0
        %v2554 = vadd.f32 %v2330, %v2553
        %2555 = vmatprep.mubr.bf16.mxu0 %v2264
        %2556 = vmatmul.mubr.bf16.gmra.mxu0 %v2263
        %v2557 = vpop.f32.mrf.mxu0
        %v2558 = vadd.f32 %v2326, %v2557
        %v2559 = vpop.f32.mrf.mxu0
        %v2560 = vadd.f32 %v2330, %v2559
        %v2561 = vpop.f32.mrf.mxu0
        %v2562 = vadd.f32 %v2326, %v2561
        %v2563 = vpop.f32.mrf.mxu0
        %v2564 = vadd.f32 %v2330, %v2563
        %2565 = vmatprep.mubr.bf16.mxu0 %v2266
        %2566 = vmatmul.mubr.bf16.gmra.mxu0 %v2265
        %v2567 = vpop.f32.mrf.mxu0
        %v2568 = vadd.f32 %v2326, %v2567
        %v2569 = vpop.f32.mrf.mxu0
        %v2570 = vadd.f32 %v2330, %v2569
        %v2571 = vpop.f32.mrf.mxu0
        %v2572 = vadd.f32 %v2326, %v2571
        %v2573 = vpop.f32.mrf.mxu0
        %v2574 = vadd.f32 %v2330, %v2573
        %2575 = vmatprep.mubr.bf16.mxu0 %v2268
        %2576 = vmatmul.mubr.bf16.gmra.mxu0 %v2267
        %v2577 = vpop.f32.mrf.mxu0
        %v2578 = vadd.f32 %v2326, %v2577
        %v2579 = vpop.f32.mrf.mxu0
        %v2580 = vadd.f32 %v2330, %v2579
        %v2581 = vpop.f32.mrf.mxu0
        %v2582 = vadd.f32 %v2326, %v2581
        %v2583 = vpop.f32.mrf.mxu0
        %v2584 = vadd.f32 %v2330, %v2583
        %2585 = vmatprep.mubr.bf16.mxu0 %v2270
        %2586 = vmatmul.mubr.bf16.gmra.mxu0 %v2269
        %v2587 = vpop.f32.mrf.mxu0
        %v2588 = vadd.f32 %v2326, %v2587
        %v2589 = vpop.f32.mrf.mxu0
        %v2590 = vadd.f32 %v2330, %v2589
        %v2591 = vpop.f32.mrf.mxu0
        %v2592 = vadd.f32 %v2326, %v2591
        %v2593 = vpop.f32.mrf.mxu0
        %v2594 = vadd.f32 %v2330, %v2593
        %2595 = vmatprep.mubr.bf16.mxu0 %v2272
        %2596 = vmatmul.mubr.bf16.gmra.mxu0 %v2271
        %v2597 = vpop.f32.mrf.mxu0
        %v2598 = vadd.f32 %v2326, %v2597
        %v2599 = vpop.f32.mrf.mxu0
        %v2600 = vadd.f32 %v2330, %v2599
        %v2601 = vpop.f32.mrf.mxu0
        %v2602 = vadd.f32 %v2326, %v2601
        %v2603 = vpop.f32.mrf.mxu0
        %v2604 = vadd.f32 %v2330, %v2603
        %2605 = vmatprep.mubr.bf16.mxu0 %v2274
        %2606 = vmatmul.mubr.bf16.gmra.mxu0 %v2273
        %v2607 = vpop.f32.mrf.mxu0
        %v2608 = vadd.f32 %v2326, %v2607
        %v2609 = vpop.f32.mrf.mxu0
        %v2610 = vadd.f32 %v2330, %v2609
        %v2611 = vpop.f32.mrf.mxu0
        %v2612 = vadd.f32 %v2326, %v2611
        %v2613 = vpop.f32.mrf.mxu0
        %v2614 = vadd.f32 %v2330, %v2613
        %2615 = vmatprep.mubr.bf16.mxu0 %v2276
        %2616 = vmatmul.mubr.bf16.gmra.mxu0 %v2275
        %v2617 = vpop.f32.mrf.mxu0
        %v2618 = vadd.f32 %v2326, %v2617
        %v2619 = vpop.f32.mrf.mxu0
        %v2620 = vadd.f32 %v2330, %v2619
        %v2621 = vpop.f32.mrf.mxu0
        %v2622 = vadd.f32 %v2326, %v2621
        %v2623 = vpop.f32.mrf.mxu0
        %v2624 = vadd.f32 %v2330, %v2623
        %2625 = vmatprep.mubr.bf16.mxu0 %v2278
        %2626 = vmatmul.mubr.bf16.gmra.mxu0 %v2277
        %v2627 = vpop.f32.mrf.mxu0
        %v2628 = vadd.f32 %v2326, %v2627
        %v2629 = vpop.f32.mrf.mxu0
        %v2630 = vadd.f32 %v2330, %v2629
        %v2631 = vpop.f32.mrf.mxu0
        %v2632 = vadd.f32 %v2326, %v2631
        %v2633 = vpop.f32.mrf.mxu0
        %v2634 = vadd.f32 %v2330, %v2633
        %2635 = vmatprep.mubr.bf16.mxu0 %v2280
        %2636 = vmatmul.mubr.bf16.gmra.mxu0 %v2279
        %v2637 = vpop.f32.mrf.mxu0
        %v2638 = vadd.f32 %v2326, %v2637
        %v2639 = vpop.f32.mrf.mxu0
        %v2640 = vadd.f32 %v2330, %v2639
        %v2641 = vpop.f32.mrf.mxu0
        %v2642 = vadd.f32 %v2326, %v2641
        %v2643 = vpop.f32.mrf.mxu0
        %v2644 = vadd.f32 %v2330, %v2643
        %2645 = vmatprep.mubr.bf16.mxu0 %v2282
        %2646 = vmatmul.mubr.bf16.gmra.mxu0 %v2281
        %v2647 = vpop.f32.mrf.mxu0
        %v2648 = vadd.f32 %v2326, %v2647
        %v2649 = vpop.f32.mrf.mxu0
        %v2650 = vadd.f32 %v2330, %v2649
        %v2651 = vpop.f32.mrf.mxu0
        %v2652 = vadd.f32 %v2326, %v2651
        %v2653 = vpop.f32.mrf.mxu0
        %v2654 = vadd.f32 %v2330, %v2653
        %2655 = vmatprep.mubr.bf16.mxu0 %v2284
        %2656 = vmatmul.mubr.bf16.gmra.mxu0 %v2283
        %v2657 = vpop.f32.mrf.mxu0
        %v2658 = vadd.f32 %v2326, %v2657
        %v2659 = vpop.f32.mrf.mxu0
        %v2660 = vadd.f32 %v2330, %v2659
        %v2661 = vpop.f32.mrf.mxu0
        %v2662 = vadd.f32 %v2326, %v2661
        %v2663 = vpop.f32.mrf.mxu0
        %v2664 = vadd.f32 %v2330, %v2663
        %2665 = vmatprep.mubr.bf16.mxu0 %v2286
        %2666 = vmatmul.mubr.bf16.gmra.mxu0 %v2285
        %v2667 = vpop.f32.mrf.mxu0
        %v2668 = vadd.f32 %v2326, %v2667
        %v2669 = vpop.f32.mrf.mxu0
        %v2670 = vadd.f32 %v2330, %v2669
        %v2671 = vpop.f32.mrf.mxu0
        %v2672 = vadd.f32 %v2326, %v2671
        %v2673 = vpop.f32.mrf.mxu0
        %v2674 = vadd.f32 %v2330, %v2673
        %2675 = vmatprep.mubr.bf16.mxu0 %v2288
        %2676 = vmatmul.mubr.bf16.gmra.mxu0 %v2287
        %v2677 = vpop.f32.mrf.mxu0
        %v2678 = vadd.f32 %v2326, %v2677
        %v2679 = vpop.f32.mrf.mxu0
        %v2680 = vadd.f32 %v2330, %v2679
        %v2681 = vpop.f32.mrf.mxu0
        %v2682 = vadd.f32 %v2326, %v2681
        %v2683 = vpop.f32.mrf.mxu0
        %v2684 = vadd.f32 %v2330, %v2683
        %2685 = vdwg.mxu0
        %v2686 = vpack.c.bf16 %v2532, %v2528
        %v2687 = vpack.c.bf16 %v2534, %v2530
        %v2688 = vpack.c.bf16 %v2542, %v2538
        %v2689 = vpack.c.bf16 %v2544, %v2540
        %v2690 = vpack.c.bf16 %v2552, %v2548
        %v2691 = vpack.c.bf16 %v2554, %v2550
        %v2692 = vpack.c.bf16 %v2562, %v2558
        %v2693 = vpack.c.bf16 %v2564, %v2560
        %v2694 = vpack.c.bf16 %v2572, %v2568
        %v2695 = vpack.c.bf16 %v2574, %v2570
        %v2696 = vpack.c.bf16 %v2582, %v2578
        %v2697 = vpack.c.bf16 %v2584, %v2580
        %v2698 = vpack.c.bf16 %v2592, %v2588
        %v2699 = vpack.c.bf16 %v2594, %v2590
        %v2700 = vpack.c.bf16 %v2602, %v2598
        %v2701 = vpack.c.bf16 %v2604, %v2600
        %v2702 = vpack.c.bf16 %v2612, %v2608
        %v2703 = vpack.c.bf16 %v2614, %v2610
        %v2704 = vpack.c.bf16 %v2622, %v2618
        %v2705 = vpack.c.bf16 %v2624, %v2620
        %v2706 = vpack.c.bf16 %v2632, %v2628
        %v2707 = vpack.c.bf16 %v2634, %v2630
        %v2708 = vpack.c.bf16 %v2642, %v2638
        %v2709 = vpack.c.bf16 %v2644, %v2640
        %v2710 = vpack.c.bf16 %v2652, %v2648
        %v2711 = vpack.c.bf16 %v2654, %v2650
        %v2712 = vpack.c.bf16 %v2662, %v2658
        %v2713 = vpack.c.bf16 %v2664, %v2660
        %v2714 = vpack.c.bf16 %v2672, %v2668
        %v2715 = vpack.c.bf16 %v2674, %v2670
        %v2716 = vpack.c.bf16 %v2682, %v2678
        %v2717 = vpack.c.bf16 %v2684, %v2680
        %vm2718 = vcmp.ge.bf16.partialorder %v2686, 0
        %vm2719 = vcmp.ge.bf16.partialorder %v2687, 0
        %vm2720 = vcmp.ge.bf16.partialorder %v2688, 0
        %vm2721 = vcmp.ge.bf16.partialorder %v2689, 0
        %vm2722 = vcmp.ge.bf16.partialorder %v2690, 0
        %vm2723 = vcmp.ge.bf16.partialorder %v2691, 0
        %vm2724 = vcmp.ge.bf16.partialorder %v2692, 0
        %vm2725 = vcmp.ge.bf16.partialorder %v2693, 0
        %vm2726 = vcmp.ge.bf16.partialorder %v2694, 0
        %vm2727 = vcmp.ge.bf16.partialorder %v2695, 0
        %vm2728 = vcmp.ge.bf16.partialorder %v2696, 0
        %vm2729 = vcmp.ge.bf16.partialorder %v2697, 0
        %vm2730 = vcmp.ge.bf16.partialorder %v2698, 0
        %vm2731 = vcmp.ge.bf16.partialorder %v2699, 0
        %vm2732 = vcmp.ge.bf16.partialorder %v2700, 0
        %vm2733 = vcmp.ge.bf16.partialorder %v2701, 0
        %vm2734 = vcmp.ge.bf16.partialorder %v2702, 0
        %vm2735 = vcmp.ge.bf16.partialorder %v2703, 0
        %vm2736 = vcmp.ge.bf16.partialorder %v2704, 0
        %vm2737 = vcmp.ge.bf16.partialorder %v2705, 0
        %vm2738 = vcmp.ge.bf16.partialorder %v2706, 0
        %vm2739 = vcmp.ge.bf16.partialorder %v2707, 0
        %vm2740 = vcmp.ge.bf16.partialorder %v2708, 0
        %vm2741 = vcmp.ge.bf16.partialorder %v2709, 0
        %vm2742 = vcmp.ge.bf16.partialorder %v2710, 0
        %vm2743 = vcmp.ge.bf16.partialorder %v2711, 0
        %vm2744 = vcmp.ge.bf16.partialorder %v2712, 0
        %vm2745 = vcmp.ge.bf16.partialorder %v2713, 0
        %vm2746 = vcmp.ge.bf16.partialorder %v2714, 0
        %vm2747 = vcmp.ge.bf16.partialorder %v2715, 0
        %vm2748 = vcmp.ge.bf16.partialorder %v2716, 0
        %vm2749 = vcmp.ge.bf16.partialorder %v2717, 0
        %v2750 = vmul.bf16 %v2686, 1009007652
        %v2751 = vmul.bf16 %v2687, 1009007652
        %v2752 = vmul.bf16 %v2688, 1009007652
        %v2753 = vmul.bf16 %v2689, 1009007652
        %v2754 = vmul.bf16 %v2690, 1009007652
        %v2755 = vmul.bf16 %v2691, 1009007652
        %v2756 = vmul.bf16 %v2692, 1009007652
        %v2757 = vmul.bf16 %v2693, 1009007652
        %v2758 = vmul.bf16 %v2694, 1009007652
        %v2759 = vmul.bf16 %v2695, 1009007652
        %v2760 = vmul.bf16 %v2696, 1009007652
        %v2761 = vmul.bf16 %v2697, 1009007652
        %v2762 = vmul.bf16 %v2698, 1009007652
        %v2763 = vmul.bf16 %v2699, 1009007652
        %v2764 = vmul.bf16 %v2700, 1009007652
        %v2765 = vmul.bf16 %v2701, 1009007652
        %v2766 = vmul.bf16 %v2702, 1009007652
        %v2767 = vmul.bf16 %v2703, 1009007652
        %v2768 = vmul.bf16 %v2704, 1009007652
        %v2769 = vmul.bf16 %v2705, 1009007652
        %v2770 = vmul.bf16 %v2706, 1009007652
        %v2771 = vmul.bf16 %v2707, 1009007652
        %v2772 = vmul.bf16 %v2708, 1009007652
        %v2773 = vmul.bf16 %v2709, 1009007652
        %v2774 = vmul.bf16 %v2710, 1009007652
        %v2775 = vmul.bf16 %v2711, 1009007652
        %v2776 = vmul.bf16 %v2712, 1009007652
        %v2777 = vmul.bf16 %v2713, 1009007652
        %v2778 = vmul.bf16 %v2714, 1009007652
        %v2779 = vmul.bf16 %v2715, 1009007652
        %v2780 = vmul.bf16 %v2716, 1009007652
        %v2781 = vmul.bf16 %v2717, 1009007652
        %v2782 = vsel %vm2718, %v2686, %v2750
        %v2783 = vsel %vm2719, %v2687, %v2751
        %v2784 = vsel %vm2720, %v2688, %v2752
        %v2785 = vsel %vm2721, %v2689, %v2753
        %v2786 = vsel %vm2722, %v2690, %v2754
        %v2787 = vsel %vm2723, %v2691, %v2755
        %v2788 = vsel %vm2724, %v2692, %v2756
        %v2789 = vsel %vm2725, %v2693, %v2757
        %v2790 = vsel %vm2726, %v2694, %v2758
        %v2791 = vsel %vm2727, %v2695, %v2759
        %v2792 = vsel %vm2728, %v2696, %v2760
        %v2793 = vsel %vm2729, %v2697, %v2761
        %v2794 = vsel %vm2730, %v2698, %v2762
        %v2795 = vsel %vm2731, %v2699, %v2763
        %v2796 = vsel %vm2732, %v2700, %v2764
        %v2797 = vsel %vm2733, %v2701, %v2765
        %v2798 = vsel %vm2734, %v2702, %v2766
        %v2799 = vsel %vm2735, %v2703, %v2767
        %v2800 = vsel %vm2736, %v2704, %v2768
        %v2801 = vsel %vm2737, %v2705, %v2769
        %v2802 = vsel %vm2738, %v2706, %v2770
        %v2803 = vsel %vm2739, %v2707, %v2771
        %v2804 = vsel %vm2740, %v2708, %v2772
        %v2805 = vsel %vm2741, %v2709, %v2773
        %v2806 = vsel %vm2742, %v2710, %v2774
        %v2807 = vsel %vm2743, %v2711, %v2775
        %v2808 = vsel %vm2744, %v2712, %v2776
        %v2809 = vsel %vm2745, %v2713, %v2777
        %v2810 = vsel %vm2746, %v2714, %v2778
        %v2811 = vsel %vm2747, %v2715, %v2779
        %v2812 = vsel %vm2748, %v2716, %v2780
        %v2813 = vsel %vm2749, %v2717, %v2781
        %v2814 = vld [vmem:[#allocation11] sm:$0xf]
        %v2815 = vld [vmem:[#allocation11 + $0x4] sm:$0xf]
        %v2816 = vld [vmem:[#allocation11 + $0x8] sm:$0xf]
        %v2817 = vld [vmem:[#allocation11 + $0xc] sm:$0xf]
        %v2818 = vld [vmem:[#allocation11 + $0x10] sm:$0xf]
        %v2819 = vld [vmem:[#allocation11 + $0x14] sm:$0xf]
        %v2820 = vld [vmem:[#allocation11 + $0x18] sm:$0xf]
        %v2821 = vld [vmem:[#allocation11 + $0x1c] sm:$0xf]
        %v2822 = vld [vmem:[#allocation11 + $0x20] sm:$0xf]
        %v2823 = vld [vmem:[#allocation11 + $0x24] sm:$0xf]
        %v2824 = vld [vmem:[#allocation11 + $0x28] sm:$0xf]
        %v2825 = vld [vmem:[#allocation11 + $0x2c] sm:$0xf]
        %v2826 = vld [vmem:[#allocation11 + $0x30] sm:$0xf]
        %v2827 = vld [vmem:[#allocation11 + $0x34] sm:$0xf]
        %v2828 = vld [vmem:[#allocation11 + $0x38] sm:$0xf]
        %v2829 = vld [vmem:[#allocation11 + $0x3c] sm:$0xf]
        %v2830 = vld [vmem:[#allocation11 + $0x40] sm:$0xf]
        %v2831 = vld [vmem:[#allocation11 + $0x44] sm:$0xf]
        %v2832 = vld [vmem:[#allocation11 + $0x48] sm:$0xf]
        %v2833 = vld [vmem:[#allocation11 + $0x4c] sm:$0xf]
        %v2834 = vld [vmem:[#allocation11 + $0x50] sm:$0xf]
        %v2835 = vld [vmem:[#allocation11 + $0x54] sm:$0xf]
        %v2836 = vld [vmem:[#allocation11 + $0x58] sm:$0xf]
        %v2837 = vld [vmem:[#allocation11 + $0x5c] sm:$0xf]
        %v2838 = vld [vmem:[#allocation11 + $0x60] sm:$0xf]
        %v2839 = vld [vmem:[#allocation11 + $0x64] sm:$0xf]
        %v2840 = vld [vmem:[#allocation11 + $0x68] sm:$0xf]
        %v2841 = vld [vmem:[#allocation11 + $0x6c] sm:$0xf]
        %v2842 = vld [vmem:[#allocation11 + $0x70] sm:$0xf]
        %v2843 = vld [vmem:[#allocation11 + $0x74] sm:$0xf]
        %v2844 = vld [vmem:[#allocation11 + $0x78] sm:$0xf]
        %v2845 = vld [vmem:[#allocation11 + $0x7c] sm:$0xf]
        %v2846 = vld [vmem:[%s8 + $0x8] sm:$0x1]
        %v2848 = vlaneseq
        %v2849 = vshrl.u32 %v2848, 7
        %v2850 = vsub.s32 0, %v2849
        %v2851 = vrot.slane %v2846, %v2850
        %v2885 = vunpack.c.l.b16 %v2814
        %v2886 = vunpack.c.l.b16 %v2815
        %v2887 = vunpack.c.l.b16 %v2816
        %v2888 = vunpack.c.l.b16 %v2817
        %v2889 = vunpack.c.l.b16 %v2818
        %v2890 = vunpack.c.l.b16 %v2819
        %v2891 = vunpack.c.l.b16 %v2820
        %v2892 = vunpack.c.l.b16 %v2821
        %v2893 = vunpack.c.l.b16 %v2822
        %v2894 = vunpack.c.l.b16 %v2823
        %v2895 = vunpack.c.l.b16 %v2824
        %v2896 = vunpack.c.l.b16 %v2825
        %v2897 = vunpack.c.l.b16 %v2826
        %v2898 = vunpack.c.l.b16 %v2827
        %v2899 = vunpack.c.l.b16 %v2828
        %v2900 = vunpack.c.l.b16 %v2829
        %v2901 = vunpack.c.l.b16 %v2830
        %v2902 = vunpack.c.l.b16 %v2831
        %v2903 = vunpack.c.l.b16 %v2832
        %v2904 = vunpack.c.l.b16 %v2833
        %v2905 = vunpack.c.l.b16 %v2834
        %v2906 = vunpack.c.l.b16 %v2835
        %v2907 = vunpack.c.l.b16 %v2836
        %v2908 = vunpack.c.l.b16 %v2837
        %v2909 = vunpack.c.l.b16 %v2838
        %v2910 = vunpack.c.l.b16 %v2839
        %v2911 = vunpack.c.l.b16 %v2840
        %v2912 = vunpack.c.l.b16 %v2841
        %v2913 = vunpack.c.l.b16 %v2842
        %v2914 = vunpack.c.l.b16 %v2843
        %v2915 = vunpack.c.l.b16 %v2844
        %v2916 = vunpack.c.l.b16 %v2845
        %v2917 = vpack.c.b16 %v2886, %v2885
        %v2918 = vpack.c.b16 %v2888, %v2887
        %v2919 = vpack.c.b16 %v2890, %v2889
        %v2920 = vpack.c.b16 %v2892, %v2891
        %v2921 = vpack.c.b16 %v2894, %v2893
        %v2922 = vpack.c.b16 %v2896, %v2895
        %v2923 = vpack.c.b16 %v2898, %v2897
        %v2924 = vpack.c.b16 %v2900, %v2899
        %v2925 = vpack.c.b16 %v2902, %v2901
        %v2926 = vpack.c.b16 %v2904, %v2903
        %v2927 = vpack.c.b16 %v2906, %v2905
        %v2928 = vpack.c.b16 %v2908, %v2907
        %v2929 = vpack.c.b16 %v2910, %v2909
        %v2930 = vpack.c.b16 %v2912, %v2911
        %v2931 = vpack.c.b16 %v2914, %v2913
        %v2932 = vpack.c.b16 %v2916, %v2915
        %2949 = vmatprep.subr.bf16.mxu0 0
        %2950 = vmatpush1.bf16.msra.mxu0 %v2924
        %2951 = vmatprep.subr.bf16.mxu0 0
        %2952 = vmatpush1.bf16.msra.mxu0 %v2923
        %2953 = vmatprep.subr.bf16.mxu0 0
        %2954 = vmatpush1.bf16.msra.mxu0 %v2922
        %2955 = vmatprep.subr.bf16.mxu0 0
        %2956 = vmatpush1.bf16.msra.mxu0 %v2921
        %2957 = vmatprep.subr.bf16.mxu0 0
        %2958 = vmatpush1.bf16.msra.mxu0 %v2920
        %2959 = vmatprep.subr.bf16.mxu0 0
        %2960 = vmatpush1.bf16.msra.mxu0 %v2919
        %2961 = vmatprep.subr.bf16.mxu0 0
        %2962 = vmatpush1.bf16.msra.mxu0 %v2918
        %2963 = vmatprep.subr.bf16.mxu0 0
        %2964 = vmatpush1.bf16.msra.mxu0 %v2917
        %2965 = vmatprep.subr.bf16.mxu0 0
        %2966 = vmatpush2.bf16.msra.mxu0 %v2932
        %2967 = vmatprep.subr.bf16.mxu0 0
        %2968 = vmatpush2.bf16.msra.mxu0 %v2931
        %2969 = vmatprep.subr.bf16.mxu0 0
        %2970 = vmatpush2.bf16.msra.mxu0 %v2930
        %2971 = vmatprep.subr.bf16.mxu0 0
        %2972 = vmatpush2.bf16.msra.mxu0 %v2929
        %2973 = vmatprep.subr.bf16.mxu0 0
        %2974 = vmatpush2.bf16.msra.mxu0 %v2928
        %2975 = vmatprep.subr.bf16.mxu0 0
        %2976 = vmatpush2.bf16.msra.mxu0 %v2927
        %2977 = vmatprep.subr.bf16.mxu0 0
        %2978 = vmatpush2.bf16.msra.mxu0 %v2926
        %2979 = vmatprep.subr.bf16.mxu0 0
        %2980 = vmatpush2.bf16.msra.mxu0 %v2925
        %2981 = vmatprep.mubr.bf16.mxu0 %v2783
        %2982 = vmatmul.mubr.bf16.gmra.mxu0 %v2782
        %v2983 = vpop.f32.mrf.mxu0
        %v2984 = vadd.f32 %v2851, %v2983
        %v2985 = vpop.f32.mrf.mxu0
        %v2986 = vpop.f32.mrf.mxu0
        %v2987 = vadd.f32 %v2851, %v2986
        %v2988 = vpop.f32.mrf.mxu0
        %2989 = vmatprep.mubr.bf16.mxu0 %v2785
        %2990 = vmatmul.mubr.bf16.gmra.mxu0 %v2784
        %v2991 = vpop.f32.mrf.mxu0
        %v2992 = vadd.f32 %v2851, %v2991
        %v2993 = vpop.f32.mrf.mxu0
        %v2994 = vpop.f32.mrf.mxu0
        %v2995 = vadd.f32 %v2851, %v2994
        %v2996 = vpop.f32.mrf.mxu0
        %2997 = vmatprep.mubr.bf16.mxu0 %v2787
        %2998 = vmatmul.mubr.bf16.gmra.mxu0 %v2786
        %v2999 = vpop.f32.mrf.mxu0
        %v3000 = vadd.f32 %v2851, %v2999
        %v3001 = vpop.f32.mrf.mxu0
        %v3002 = vpop.f32.mrf.mxu0
        %v3003 = vadd.f32 %v2851, %v3002
        %v3004 = vpop.f32.mrf.mxu0
        %3005 = vmatprep.mubr.bf16.mxu0 %v2789
        %3006 = vmatmul.mubr.bf16.gmra.mxu0 %v2788
        %v3007 = vpop.f32.mrf.mxu0
        %v3008 = vadd.f32 %v2851, %v3007
        %v3009 = vpop.f32.mrf.mxu0
        %v3010 = vpop.f32.mrf.mxu0
        %v3011 = vadd.f32 %v2851, %v3010
        %v3012 = vpop.f32.mrf.mxu0
        %3013 = vmatprep.mubr.bf16.mxu0 %v2791
        %3014 = vmatmul.mubr.bf16.gmra.mxu0 %v2790
        %v3015 = vpop.f32.mrf.mxu0
        %v3016 = vadd.f32 %v2851, %v3015
        %v3017 = vpop.f32.mrf.mxu0
        %v3018 = vpop.f32.mrf.mxu0
        %v3019 = vadd.f32 %v2851, %v3018
        %v3020 = vpop.f32.mrf.mxu0
        %3021 = vmatprep.mubr.bf16.mxu0 %v2793
        %3022 = vmatmul.mubr.bf16.gmra.mxu0 %v2792
        %v3023 = vpop.f32.mrf.mxu0
        %v3024 = vadd.f32 %v2851, %v3023
        %v3025 = vpop.f32.mrf.mxu0
        %v3026 = vpop.f32.mrf.mxu0
        %v3027 = vadd.f32 %v2851, %v3026
        %v3028 = vpop.f32.mrf.mxu0
        %3029 = vmatprep.mubr.bf16.mxu0 %v2795
        %3030 = vmatmul.mubr.bf16.gmra.mxu0 %v2794
        %v3031 = vpop.f32.mrf.mxu0
        %v3032 = vadd.f32 %v2851, %v3031
        %v3033 = vpop.f32.mrf.mxu0
        %v3034 = vpop.f32.mrf.mxu0
        %v3035 = vadd.f32 %v2851, %v3034
        %v3036 = vpop.f32.mrf.mxu0
        %3037 = vmatprep.mubr.bf16.mxu0 %v2797
        %3038 = vmatmul.mubr.bf16.gmra.mxu0 %v2796
        %v3039 = vpop.f32.mrf.mxu0
        %v3040 = vadd.f32 %v2851, %v3039
        %v3041 = vpop.f32.mrf.mxu0
        %v3042 = vpop.f32.mrf.mxu0
        %v3043 = vadd.f32 %v2851, %v3042
        %v3044 = vpop.f32.mrf.mxu0
        %3045 = vmatprep.mubr.bf16.mxu0 %v2799
        %3046 = vmatmul.mubr.bf16.gmra.mxu0 %v2798
        %v3047 = vpop.f32.mrf.mxu0
        %v3048 = vadd.f32 %v2851, %v3047
        %v3049 = vpop.f32.mrf.mxu0
        %v3050 = vpop.f32.mrf.mxu0
        %v3051 = vadd.f32 %v2851, %v3050
        %v3052 = vpop.f32.mrf.mxu0
        %3053 = vmatprep.mubr.bf16.mxu0 %v2801
        %3054 = vmatmul.mubr.bf16.gmra.mxu0 %v2800
        %v3055 = vpop.f32.mrf.mxu0
        %v3056 = vadd.f32 %v2851, %v3055
        %v3057 = vpop.f32.mrf.mxu0
        %v3058 = vpop.f32.mrf.mxu0
        %v3059 = vadd.f32 %v2851, %v3058
        %v3060 = vpop.f32.mrf.mxu0
        %3061 = vmatprep.mubr.bf16.mxu0 %v2803
        %3062 = vmatmul.mubr.bf16.gmra.mxu0 %v2802
        %v3063 = vpop.f32.mrf.mxu0
        %v3064 = vadd.f32 %v2851, %v3063
        %v3065 = vpop.f32.mrf.mxu0
        %v3066 = vpop.f32.mrf.mxu0
        %v3067 = vadd.f32 %v2851, %v3066
        %v3068 = vpop.f32.mrf.mxu0
        %3069 = vmatprep.mubr.bf16.mxu0 %v2805
        %3070 = vmatmul.mubr.bf16.gmra.mxu0 %v2804
        %v3071 = vpop.f32.mrf.mxu0
        %v3072 = vadd.f32 %v2851, %v3071
        %v3073 = vpop.f32.mrf.mxu0
        %v3074 = vpop.f32.mrf.mxu0
        %v3075 = vadd.f32 %v2851, %v3074
        %v3076 = vpop.f32.mrf.mxu0
        %3077 = vmatprep.mubr.bf16.mxu0 %v2807
        %3078 = vmatmul.mubr.bf16.gmra.mxu0 %v2806
        %v3079 = vpop.f32.mrf.mxu0
        %v3080 = vadd.f32 %v2851, %v3079
        %v3081 = vpop.f32.mrf.mxu0
        %v3082 = vpop.f32.mrf.mxu0
        %v3083 = vadd.f32 %v2851, %v3082
        %v3084 = vpop.f32.mrf.mxu0
        %3085 = vmatprep.mubr.bf16.mxu0 %v2809
        %3086 = vmatmul.mubr.bf16.gmra.mxu0 %v2808
        %v3087 = vpop.f32.mrf.mxu0
        %v3088 = vadd.f32 %v2851, %v3087
        %v3089 = vpop.f32.mrf.mxu0
        %v3090 = vpop.f32.mrf.mxu0
        %v3091 = vadd.f32 %v2851, %v3090
        %v3092 = vpop.f32.mrf.mxu0
        %3093 = vmatprep.mubr.bf16.mxu0 %v2811
        %3094 = vmatmul.mubr.bf16.gmra.mxu0 %v2810
        %v3095 = vpop.f32.mrf.mxu0
        %v3096 = vadd.f32 %v2851, %v3095
        %v3097 = vpop.f32.mrf.mxu0
        %v3098 = vpop.f32.mrf.mxu0
        %v3099 = vadd.f32 %v2851, %v3098
        %v3100 = vpop.f32.mrf.mxu0
        %3101 = vmatprep.mubr.bf16.mxu0 %v2813
        %3102 = vmatmul.mubr.bf16.gmra.mxu0 %v2812
        %v3103 = vpop.f32.mrf.mxu0
        %v3104 = vadd.f32 %v2851, %v3103
        %v3105 = vpop.f32.mrf.mxu0
        %v3106 = vpop.f32.mrf.mxu0
        %v3107 = vadd.f32 %v2851, %v3106
        %v3108 = vpop.f32.mrf.mxu0
        %3109 = vdwg.mxu0
        %v3110 = vpack.c.bf16 %v2987, %v2984
        %v3111 = vpack.c.bf16 %v2995, %v2992
        %v3112 = vpack.c.bf16 %v3003, %v3000
        %v3113 = vpack.c.bf16 %v3011, %v3008
        %v3114 = vpack.c.bf16 %v3019, %v3016
        %v3115 = vpack.c.bf16 %v3027, %v3024
        %v3116 = vpack.c.bf16 %v3035, %v3032
        %v3117 = vpack.c.bf16 %v3043, %v3040
        %v3118 = vpack.c.bf16 %v3051, %v3048
        %v3119 = vpack.c.bf16 %v3059, %v3056
        %v3120 = vpack.c.bf16 %v3067, %v3064
        %v3121 = vpack.c.bf16 %v3075, %v3072
        %v3122 = vpack.c.bf16 %v3083, %v3080
        %v3123 = vpack.c.bf16 %v3091, %v3088
        %v3124 = vpack.c.bf16 %v3099, %v3096
        %v3125 = vpack.c.bf16 %v3107, %v3104
        %vm3126 = vcmp.ge.bf16.partialorder %v3110, 0
        %vm3127 = vcmp.ge.bf16.partialorder %v3111, 0
        %vm3128 = vcmp.ge.bf16.partialorder %v3112, 0
        %vm3129 = vcmp.ge.bf16.partialorder %v3113, 0
        %vm3130 = vcmp.ge.bf16.partialorder %v3114, 0
        %vm3131 = vcmp.ge.bf16.partialorder %v3115, 0
        %vm3132 = vcmp.ge.bf16.partialorder %v3116, 0
        %vm3133 = vcmp.ge.bf16.partialorder %v3117, 0
        %vm3134 = vcmp.ge.bf16.partialorder %v3118, 0
        %vm3135 = vcmp.ge.bf16.partialorder %v3119, 0
        %vm3136 = vcmp.ge.bf16.partialorder %v3120, 0
        %vm3137 = vcmp.ge.bf16.partialorder %v3121, 0
        %vm3138 = vcmp.ge.bf16.partialorder %v3122, 0
        %vm3139 = vcmp.ge.bf16.partialorder %v3123, 0
        %vm3140 = vcmp.ge.bf16.partialorder %v3124, 0
        %vm3141 = vcmp.ge.bf16.partialorder %v3125, 0
        %v3142 = vmul.bf16 %v3110, 1009007652
        %v3143 = vmul.bf16 %v3111, 1009007652
        %v3144 = vmul.bf16 %v3112, 1009007652
        %v3145 = vmul.bf16 %v3113, 1009007652
        %v3146 = vmul.bf16 %v3114, 1009007652
        %v3147 = vmul.bf16 %v3115, 1009007652
        %v3148 = vmul.bf16 %v3116, 1009007652
        %v3149 = vmul.bf16 %v3117, 1009007652
        %v3150 = vmul.bf16 %v3118, 1009007652
        %v3151 = vmul.bf16 %v3119, 1009007652
        %v3152 = vmul.bf16 %v3120, 1009007652
        %v3153 = vmul.bf16 %v3121, 1009007652
        %v3154 = vmul.bf16 %v3122, 1009007652
        %v3155 = vmul.bf16 %v3123, 1009007652
        %v3156 = vmul.bf16 %v3124, 1009007652
        %v3157 = vmul.bf16 %v3125, 1009007652
        %v3158 = vsel %vm3126, %v3110, %v3142
        %v3159 = vsel %vm3127, %v3111, %v3143
        %v3160 = vsel %vm3128, %v3112, %v3144
        %v3161 = vsel %vm3129, %v3113, %v3145
        %v3162 = vsel %vm3130, %v3114, %v3146
        %v3163 = vsel %vm3131, %v3115, %v3147
        %v3164 = vsel %vm3132, %v3116, %v3148
        %v3165 = vsel %vm3133, %v3117, %v3149
        %v3166 = vsel %vm3134, %v3118, %v3150
        %v3167 = vsel %vm3135, %v3119, %v3151
        %v3168 = vsel %vm3136, %v3120, %v3152
        %v3169 = vsel %vm3137, %v3121, %v3153
        %v3170 = vsel %vm3138, %v3122, %v3154
        %v3171 = vsel %vm3139, %v3123, %v3155
        %v3172 = vsel %vm3140, %v3124, %v3156
        %v3173 = vsel %vm3141, %v3125, %v3157
        %v3174 = vld [vmem:[#allocation13] sm:$0xf]
        %v3175 = vld [vmem:[#allocation13 + $0x4] sm:$0xf]
        %v3176 = vld [vmem:[#allocation13 + $0x8] sm:$0xf]
        %v3177 = vld [vmem:[#allocation13 + $0xc] sm:$0xf]
        %v3178 = vld [vmem:[#allocation13 + $0x10] sm:$0xf]
        %v3179 = vld [vmem:[#allocation13 + $0x14] sm:$0xf]
        %v3180 = vld [vmem:[#allocation13 + $0x18] sm:$0xf]
        %v3181 = vld [vmem:[#allocation13 + $0x1c] sm:$0xf]
        %v3182 = vld [vmem:[#allocation13 + $0x20] sm:$0xf]
        %v3183 = vld [vmem:[#allocation13 + $0x24] sm:$0xf]
        %v3184 = vld [vmem:[#allocation13 + $0x28] sm:$0xf]
        %v3185 = vld [vmem:[#allocation13 + $0x2c] sm:$0xf]
        %v3186 = vld [vmem:[#allocation13 + $0x30] sm:$0xf]
        %v3187 = vld [vmem:[#allocation13 + $0x34] sm:$0xf]
        %v3188 = vld [vmem:[#allocation13 + $0x38] sm:$0xf]
        %v3189 = vld [vmem:[#allocation13 + $0x3c] sm:$0xf]
        %v3190 = vld [vmem:[%s8 + $0x9] sm:$0x1]
        %v3192 = vlaneseq
        %v3193 = vshrl.u32 %v3192, 7
        %v3194 = vsub.s32 0, %v3193
        %v3195 = vrot.slane %v3190, %v3194
        %v3213 = vunpack.c.l.b16 %v3174
        %v3214 = vunpack.c.l.b16 %v3175
        %v3215 = vunpack.c.l.b16 %v3176
        %v3216 = vunpack.c.l.b16 %v3177
        %v3217 = vunpack.c.l.b16 %v3178
        %v3218 = vunpack.c.l.b16 %v3179
        %v3219 = vunpack.c.l.b16 %v3180
        %v3220 = vunpack.c.l.b16 %v3181
        %v3221 = vunpack.c.l.b16 %v3182
        %v3222 = vunpack.c.l.b16 %v3183
        %v3223 = vunpack.c.l.b16 %v3184
        %v3224 = vunpack.c.l.b16 %v3185
        %v3225 = vunpack.c.l.b16 %v3186
        %v3226 = vunpack.c.l.b16 %v3187
        %v3227 = vunpack.c.l.b16 %v3188
        %v3228 = vunpack.c.l.b16 %v3189
        %v3229 = vpack.c.b16 %v3214, %v3213
        %v3230 = vpack.c.b16 %v3216, %v3215
        %v3231 = vpack.c.b16 %v3218, %v3217
        %v3232 = vpack.c.b16 %v3220, %v3219
        %v3233 = vpack.c.b16 %v3222, %v3221
        %v3234 = vpack.c.b16 %v3224, %v3223
        %v3235 = vpack.c.b16 %v3226, %v3225
        %v3236 = vpack.c.b16 %v3228, %v3227
        %3245 = vmatprep.subr.bf16.mxu0 0
        %3246 = vmatpush1.bf16.msra.mxu0 %v3236
        %3247 = vmatprep.subr.bf16.mxu0 0
        %3248 = vmatpush1.bf16.msra.mxu0 %v3235
        %3249 = vmatprep.subr.bf16.mxu0 0
        %3250 = vmatpush1.bf16.msra.mxu0 %v3234
        %3251 = vmatprep.subr.bf16.mxu0 0
        %3252 = vmatpush1.bf16.msra.mxu0 %v3233
        %3253 = vmatprep.subr.bf16.mxu0 0
        %3254 = vmatpush1.bf16.msra.mxu0 %v3232
        %3255 = vmatprep.subr.bf16.mxu0 0
        %3256 = vmatpush1.bf16.msra.mxu0 %v3231
        %3257 = vmatprep.subr.bf16.mxu0 0
        %3258 = vmatpush1.bf16.msra.mxu0 %v3230
        %3259 = vmatprep.subr.bf16.mxu0 0
        %3260 = vmatpush1.bf16.msra.mxu0 %v3229
        %3261 = vmatprep.subr.bf16.mxu0 0
        %3262 = vmatpush2.bf16.msra.mxu0 0
        %3263 = vmatprep.subr.bf16.mxu0 0
        %3264 = vmatpush2.bf16.msra.mxu0 0
        %3265 = vmatprep.subr.bf16.mxu0 0
        %3266 = vmatpush2.bf16.msra.mxu0 0
        %3267 = vmatprep.subr.bf16.mxu0 0
        %3268 = vmatpush2.bf16.msra.mxu0 0
        %3269 = vmatprep.subr.bf16.mxu0 0
        %3270 = vmatpush2.bf16.msra.mxu0 0
        %3271 = vmatprep.subr.bf16.mxu0 0
        %3272 = vmatpush2.bf16.msra.mxu0 0
        %3273 = vmatprep.subr.bf16.mxu0 0
        %3274 = vmatpush2.bf16.msra.mxu0 0
        %3275 = vmatprep.subr.bf16.mxu0 0
        %3276 = vmatpush2.bf16.msra.mxu0 0
        %3277 = vmatprep.mubr.bf16.mxu0 0
        %3278 = vmatmul.mubr.bf16.gmra.mxu0 %v3158
        %v3279 = vpop.f32.mrf.mxu0
        %v3280 = vadd.f32 %v3195, %v3279
        %v3281 = vpop.f32.mrf.mxu0
        %v3282 = vpop.f32.mrf.mxu0
        %v3283 = vadd.f32 %v3195, %v3282
        %v3284 = vpop.f32.mrf.mxu0
        %3285 = vmatprep.mubr.bf16.mxu0 0
        %3286 = vmatmul.mubr.bf16.gmra.mxu0 %v3159
        %v3287 = vpop.f32.mrf.mxu0
        %v3288 = vadd.f32 %v3195, %v3287
        %v3289 = vpop.f32.mrf.mxu0
        %v3290 = vpop.f32.mrf.mxu0
        %v3291 = vadd.f32 %v3195, %v3290
        %v3292 = vpop.f32.mrf.mxu0
        %3293 = vmatprep.mubr.bf16.mxu0 0
        %3294 = vmatmul.mubr.bf16.gmra.mxu0 %v3160
        %v3295 = vpop.f32.mrf.mxu0
        %v3296 = vadd.f32 %v3195, %v3295
        %v3297 = vpop.f32.mrf.mxu0
        %v3298 = vpop.f32.mrf.mxu0
        %v3299 = vadd.f32 %v3195, %v3298
        %v3300 = vpop.f32.mrf.mxu0
        %3301 = vmatprep.mubr.bf16.mxu0 0
        %3302 = vmatmul.mubr.bf16.gmra.mxu0 %v3161
        %v3303 = vpop.f32.mrf.mxu0
        %v3304 = vadd.f32 %v3195, %v3303
        %v3305 = vpop.f32.mrf.mxu0
        %v3306 = vpop.f32.mrf.mxu0
        %v3307 = vadd.f32 %v3195, %v3306
        %v3308 = vpop.f32.mrf.mxu0
        %3309 = vmatprep.mubr.bf16.mxu0 0
        %3310 = vmatmul.mubr.bf16.gmra.mxu0 %v3162
        %v3311 = vpop.f32.mrf.mxu0
        %v3312 = vadd.f32 %v3195, %v3311
        %v3313 = vpop.f32.mrf.mxu0
        %v3314 = vpop.f32.mrf.mxu0
        %v3315 = vadd.f32 %v3195, %v3314
        %v3316 = vpop.f32.mrf.mxu0
        %3317 = vmatprep.mubr.bf16.mxu0 0
        %3318 = vmatmul.mubr.bf16.gmra.mxu0 %v3163
        %v3319 = vpop.f32.mrf.mxu0
        %v3320 = vadd.f32 %v3195, %v3319
        %v3321 = vpop.f32.mrf.mxu0
        %v3322 = vpop.f32.mrf.mxu0
        %v3323 = vadd.f32 %v3195, %v3322
        %v3324 = vpop.f32.mrf.mxu0
        %3325 = vmatprep.mubr.bf16.mxu0 0
        %3326 = vmatmul.mubr.bf16.gmra.mxu0 %v3164
        %v3327 = vpop.f32.mrf.mxu0
        %v3328 = vadd.f32 %v3195, %v3327
        %v3329 = vpop.f32.mrf.mxu0
        %v3330 = vpop.f32.mrf.mxu0
        %v3331 = vadd.f32 %v3195, %v3330
        %v3332 = vpop.f32.mrf.mxu0
        %3333 = vmatprep.mubr.bf16.mxu0 0
        %3334 = vmatmul.mubr.bf16.gmra.mxu0 %v3165
        %v3335 = vpop.f32.mrf.mxu0
        %v3336 = vadd.f32 %v3195, %v3335
        %v3337 = vpop.f32.mrf.mxu0
        %v3338 = vpop.f32.mrf.mxu0
        %v3339 = vadd.f32 %v3195, %v3338
        %v3340 = vpop.f32.mrf.mxu0
        %3341 = vmatprep.mubr.bf16.mxu0 0
        %3342 = vmatmul.mubr.bf16.gmra.mxu0 %v3166
        %v3343 = vpop.f32.mrf.mxu0
        %v3344 = vadd.f32 %v3195, %v3343
        %v3345 = vpop.f32.mrf.mxu0
        %v3346 = vpop.f32.mrf.mxu0
        %v3347 = vadd.f32 %v3195, %v3346
        %v3348 = vpop.f32.mrf.mxu0
        %3349 = vmatprep.mubr.bf16.mxu0 0
        %3350 = vmatmul.mubr.bf16.gmra.mxu0 %v3167
        %v3351 = vpop.f32.mrf.mxu0
        %v3352 = vadd.f32 %v3195, %v3351
        %v3353 = vpop.f32.mrf.mxu0
        %v3354 = vpop.f32.mrf.mxu0
        %v3355 = vadd.f32 %v3195, %v3354
        %v3356 = vpop.f32.mrf.mxu0
        %3357 = vmatprep.mubr.bf16.mxu0 0
        %3358 = vmatmul.mubr.bf16.gmra.mxu0 %v3168
        %v3359 = vpop.f32.mrf.mxu0
        %v3360 = vadd.f32 %v3195, %v3359
        %v3361 = vpop.f32.mrf.mxu0
        %v3362 = vpop.f32.mrf.mxu0
        %v3363 = vadd.f32 %v3195, %v3362
        %v3364 = vpop.f32.mrf.mxu0
        %3365 = vmatprep.mubr.bf16.mxu0 0
        %3366 = vmatmul.mubr.bf16.gmra.mxu0 %v3169
        %v3367 = vpop.f32.mrf.mxu0
        %v3368 = vadd.f32 %v3195, %v3367
        %v3369 = vpop.f32.mrf.mxu0
        %v3370 = vpop.f32.mrf.mxu0
        %v3371 = vadd.f32 %v3195, %v3370
        %v3372 = vpop.f32.mrf.mxu0
        %3373 = vmatprep.mubr.bf16.mxu0 0
        %3374 = vmatmul.mubr.bf16.gmra.mxu0 %v3170
        %v3375 = vpop.f32.mrf.mxu0
        %v3376 = vadd.f32 %v3195, %v3375
        %v3377 = vpop.f32.mrf.mxu0
        %v3378 = vpop.f32.mrf.mxu0
        %v3379 = vadd.f32 %v3195, %v3378
        %v3380 = vpop.f32.mrf.mxu0
        %3381 = vmatprep.mubr.bf16.mxu0 0
        %3382 = vmatmul.mubr.bf16.gmra.mxu0 %v3171
        %v3383 = vpop.f32.mrf.mxu0
        %v3384 = vadd.f32 %v3195, %v3383
        %v3385 = vpop.f32.mrf.mxu0
        %v3386 = vpop.f32.mrf.mxu0
        %v3387 = vadd.f32 %v3195, %v3386
        %v3388 = vpop.f32.mrf.mxu0
        %3389 = vmatprep.mubr.bf16.mxu0 0
        %3390 = vmatmul.mubr.bf16.gmra.mxu0 %v3172
        %v3391 = vpop.f32.mrf.mxu0
        %v3392 = vadd.f32 %v3195, %v3391
        %v3393 = vpop.f32.mrf.mxu0
        %v3394 = vpop.f32.mrf.mxu0
        %v3395 = vadd.f32 %v3195, %v3394
        %v3396 = vpop.f32.mrf.mxu0
        %3397 = vmatprep.mubr.bf16.mxu0 0
        %3398 = vmatmul.mubr.bf16.gmra.mxu0 %v3173
        %v3399 = vpop.f32.mrf.mxu0
        %v3400 = vadd.f32 %v3195, %v3399
        %v3401 = vpop.f32.mrf.mxu0
        %v3402 = vpop.f32.mrf.mxu0
        %v3403 = vadd.f32 %v3195, %v3402
        %v3404 = vpop.f32.mrf.mxu0
        %3405 = vdwg.mxu0
        %v3406 = vpack.c.bf16 %v3283, %v3280
        %v3407 = vpack.c.bf16 %v3291, %v3288
        %v3408 = vpack.c.bf16 %v3299, %v3296
        %v3409 = vpack.c.bf16 %v3307, %v3304
        %v3410 = vpack.c.bf16 %v3315, %v3312
        %v3411 = vpack.c.bf16 %v3323, %v3320
        %v3412 = vpack.c.bf16 %v3331, %v3328
        %v3413 = vpack.c.bf16 %v3339, %v3336
        %v3414 = vpack.c.bf16 %v3347, %v3344
        %v3415 = vpack.c.bf16 %v3355, %v3352
        %v3416 = vpack.c.bf16 %v3363, %v3360
        %v3417 = vpack.c.bf16 %v3371, %v3368
        %v3418 = vpack.c.bf16 %v3379, %v3376
        %v3419 = vpack.c.bf16 %v3387, %v3384
        %v3420 = vpack.c.bf16 %v3395, %v3392
        %v3421 = vpack.c.bf16 %v3403, %v3400
        %vm3422 = vcmp.ge.bf16.partialorder %v3406, 0
        %vm3423 = vcmp.ge.bf16.partialorder %v3407, 0
        %vm3424 = vcmp.ge.bf16.partialorder %v3408, 0
        %vm3425 = vcmp.ge.bf16.partialorder %v3409, 0
        %vm3426 = vcmp.ge.bf16.partialorder %v3410, 0
        %vm3427 = vcmp.ge.bf16.partialorder %v3411, 0
        %vm3428 = vcmp.ge.bf16.partialorder %v3412, 0
        %vm3429 = vcmp.ge.bf16.partialorder %v3413, 0
        %vm3430 = vcmp.ge.bf16.partialorder %v3414, 0
        %vm3431 = vcmp.ge.bf16.partialorder %v3415, 0
        %vm3432 = vcmp.ge.bf16.partialorder %v3416, 0
        %vm3433 = vcmp.ge.bf16.partialorder %v3417, 0
        %vm3434 = vcmp.ge.bf16.partialorder %v3418, 0
        %vm3435 = vcmp.ge.bf16.partialorder %v3419, 0
        %vm3436 = vcmp.ge.bf16.partialorder %v3420, 0
        %vm3437 = vcmp.ge.bf16.partialorder %v3421, 0
        %v3438 = vmul.bf16 %v3406, 1009007652
        %v3439 = vmul.bf16 %v3407, 1009007652
        %v3440 = vmul.bf16 %v3408, 1009007652
        %v3441 = vmul.bf16 %v3409, 1009007652
        %v3442 = vmul.bf16 %v3410, 1009007652
        %v3443 = vmul.bf16 %v3411, 1009007652
        %v3444 = vmul.bf16 %v3412, 1009007652
        %v3445 = vmul.bf16 %v3413, 1009007652
        %v3446 = vmul.bf16 %v3414, 1009007652
        %v3447 = vmul.bf16 %v3415, 1009007652
        %v3448 = vmul.bf16 %v3416, 1009007652
        %v3449 = vmul.bf16 %v3417, 1009007652
        %v3450 = vmul.bf16 %v3418, 1009007652
        %v3451 = vmul.bf16 %v3419, 1009007652
        %v3452 = vmul.bf16 %v3420, 1009007652
        %v3453 = vmul.bf16 %v3421, 1009007652
        %v3454 = vsel %vm3422, %v3406, %v3438
        %v3455 = vsel %vm3423, %v3407, %v3439
        %v3456 = vsel %vm3424, %v3408, %v3440
        %v3457 = vsel %vm3425, %v3409, %v3441
        %v3458 = vsel %vm3426, %v3410, %v3442
        %v3459 = vsel %vm3427, %v3411, %v3443
        %v3460 = vsel %vm3428, %v3412, %v3444
        %v3461 = vsel %vm3429, %v3413, %v3445
        %v3462 = vsel %vm3430, %v3414, %v3446
        %v3463 = vsel %vm3431, %v3415, %v3447
        %v3464 = vsel %vm3432, %v3416, %v3448
        %v3465 = vsel %vm3433, %v3417, %v3449
        %v3466 = vsel %vm3434, %v3418, %v3450
        %v3467 = vsel %vm3435, %v3419, %v3451
        %v3468 = vsel %vm3436, %v3420, %v3452
        %v3469 = vsel %vm3437, %v3421, %v3453
        %v3470 = vld [vmem:[#allocation14] sm:$0xf]
        %v3471 = vld [vmem:[#allocation14 + $0x4] sm:$0xf]
        %v3472 = vld [vmem:[#allocation14 + $0x8] sm:$0xf]
        %v3473 = vld [vmem:[#allocation14 + $0xc] sm:$0xf]
        %v3474 = vld [vmem:[#allocation14 + $0x10] sm:$0xf]
        %v3475 = vld [vmem:[#allocation14 + $0x14] sm:$0xf]
        %v3476 = vld [vmem:[#allocation14 + $0x18] sm:$0xf]
        %v3477 = vld [vmem:[#allocation14 + $0x1c] sm:$0xf]
        %v3478 = vld [vmem:[#allocation14 + $0x20] sm:$0xf]
        %v3479 = vld [vmem:[#allocation14 + $0x24] sm:$0xf]
        %v3480 = vld [vmem:[#allocation14 + $0x28] sm:$0xf]
        %v3481 = vld [vmem:[#allocation14 + $0x2c] sm:$0xf]
        %v3482 = vld [vmem:[#allocation14 + $0x30] sm:$0xf]
        %v3483 = vld [vmem:[#allocation14 + $0x34] sm:$0xf]
        %v3484 = vld [vmem:[#allocation14 + $0x38] sm:$0xf]
        %v3485 = vld [vmem:[#allocation14 + $0x3c] sm:$0xf]
        %v3486 = vld [vmem:[%s8 + $0xa] sm:$0x1]
        %v3488 = vlaneseq
        %v3489 = vshrl.u32 %v3488, 7
        %v3490 = vsub.s32 0, %v3489
        %v3491 = vrot.slane %v3486, %v3490
        %v3509 = vunpack.c.l.b16 %v3470
        %v3510 = vunpack.c.l.b16 %v3471
        %v3511 = vunpack.c.l.b16 %v3472
        %v3512 = vunpack.c.l.b16 %v3473
        %v3513 = vunpack.c.l.b16 %v3474
        %v3514 = vunpack.c.l.b16 %v3475
        %v3515 = vunpack.c.l.b16 %v3476
        %v3516 = vunpack.c.l.b16 %v3477
        %v3517 = vunpack.c.l.b16 %v3478
        %v3518 = vunpack.c.l.b16 %v3479
        %v3519 = vunpack.c.l.b16 %v3480
        %v3520 = vunpack.c.l.b16 %v3481
        %v3521 = vunpack.c.l.b16 %v3482
        %v3522 = vunpack.c.l.b16 %v3483
        %v3523 = vunpack.c.l.b16 %v3484
        %v3524 = vunpack.c.l.b16 %v3485
        %v3525 = vpack.c.b16 %v3510, %v3509
        %v3526 = vpack.c.b16 %v3512, %v3511
        %v3527 = vpack.c.b16 %v3514, %v3513
        %v3528 = vpack.c.b16 %v3516, %v3515
        %v3529 = vpack.c.b16 %v3518, %v3517
        %v3530 = vpack.c.b16 %v3520, %v3519
        %v3531 = vpack.c.b16 %v3522, %v3521
        %v3532 = vpack.c.b16 %v3524, %v3523
        %3541 = vmatprep.subr.bf16.mxu0 0
        %3542 = vmatpush1.bf16.msra.mxu0 %v3532
        %3543 = vmatprep.subr.bf16.mxu0 0
        %3544 = vmatpush1.bf16.msra.mxu0 %v3531
        %3545 = vmatprep.subr.bf16.mxu0 0
        %3546 = vmatpush1.bf16.msra.mxu0 %v3530
        %3547 = vmatprep.subr.bf16.mxu0 0
        %3548 = vmatpush1.bf16.msra.mxu0 %v3529
        %3549 = vmatprep.subr.bf16.mxu0 0
        %3550 = vmatpush1.bf16.msra.mxu0 %v3528
        %3551 = vmatprep.subr.bf16.mxu0 0
        %3552 = vmatpush1.bf16.msra.mxu0 %v3527
        %3553 = vmatprep.subr.bf16.mxu0 0
        %3554 = vmatpush1.bf16.msra.mxu0 %v3526
        %3555 = vmatprep.subr.bf16.mxu0 0
        %3556 = vmatpush1.bf16.msra.mxu0 %v3525
        %3557 = vmatprep.subr.bf16.mxu0 0
        %3558 = vmatpush2.bf16.msra.mxu0 0
        %3559 = vmatprep.subr.bf16.mxu0 0
        %3560 = vmatpush2.bf16.msra.mxu0 0
        %3561 = vmatprep.subr.bf16.mxu0 0
        %3562 = vmatpush2.bf16.msra.mxu0 0
        %3563 = vmatprep.subr.bf16.mxu0 0
        %3564 = vmatpush2.bf16.msra.mxu0 0
        %3565 = vmatprep.subr.bf16.mxu0 0
        %3566 = vmatpush2.bf16.msra.mxu0 0
        %3567 = vmatprep.subr.bf16.mxu0 0
        %3568 = vmatpush2.bf16.msra.mxu0 0
        %3569 = vmatprep.subr.bf16.mxu0 0
        %3570 = vmatpush2.bf16.msra.mxu0 0
        %3571 = vmatprep.subr.bf16.mxu0 0
        %3572 = vmatpush2.bf16.msra.mxu0 0
        %3573 = vmatprep.mubr.bf16.mxu0 0
        %3574 = vmatmul.mubr.bf16.gmra.mxu0 %v3454
        %v3575 = vpop.f32.mrf.mxu0
        %v3576 = vadd.f32 %v3491, %v3575
        %v3577 = vpop.f32.mrf.mxu0
        %v3578 = vpop.f32.mrf.mxu0
        %v3579 = vadd.f32 %v3491, %v3578
        %v3580 = vpop.f32.mrf.mxu0
        %3581 = vmatprep.mubr.bf16.mxu0 0
        %3582 = vmatmul.mubr.bf16.gmra.mxu0 %v3455
        %v3583 = vpop.f32.mrf.mxu0
        %v3584 = vadd.f32 %v3491, %v3583
        %v3585 = vpop.f32.mrf.mxu0
        %v3586 = vpop.f32.mrf.mxu0
        %v3587 = vadd.f32 %v3491, %v3586
        %v3588 = vpop.f32.mrf.mxu0
        %3589 = vmatprep.mubr.bf16.mxu0 0
        %3590 = vmatmul.mubr.bf16.gmra.mxu0 %v3456
        %v3591 = vpop.f32.mrf.mxu0
        %v3592 = vadd.f32 %v3491, %v3591
        %v3593 = vpop.f32.mrf.mxu0
        %v3594 = vpop.f32.mrf.mxu0
        %v3595 = vadd.f32 %v3491, %v3594
        %v3596 = vpop.f32.mrf.mxu0
        %3597 = vmatprep.mubr.bf16.mxu0 0
        %3598 = vmatmul.mubr.bf16.gmra.mxu0 %v3457
        %v3599 = vpop.f32.mrf.mxu0
        %v3600 = vadd.f32 %v3491, %v3599
        %v3601 = vpop.f32.mrf.mxu0
        %v3602 = vpop.f32.mrf.mxu0
        %v3603 = vadd.f32 %v3491, %v3602
        %v3604 = vpop.f32.mrf.mxu0
        %3605 = vmatprep.mubr.bf16.mxu0 0
        %3606 = vmatmul.mubr.bf16.gmra.mxu0 %v3458
        %v3607 = vpop.f32.mrf.mxu0
        %v3608 = vadd.f32 %v3491, %v3607
        %v3609 = vpop.f32.mrf.mxu0
        %v3610 = vpop.f32.mrf.mxu0
        %v3611 = vadd.f32 %v3491, %v3610
        %v3612 = vpop.f32.mrf.mxu0
        %3613 = vmatprep.mubr.bf16.mxu0 0
        %3614 = vmatmul.mubr.bf16.gmra.mxu0 %v3459
        %v3615 = vpop.f32.mrf.mxu0
        %v3616 = vadd.f32 %v3491, %v3615
        %v3617 = vpop.f32.mrf.mxu0
        %v3618 = vpop.f32.mrf.mxu0
        %v3619 = vadd.f32 %v3491, %v3618
        %v3620 = vpop.f32.mrf.mxu0
        %3621 = vmatprep.mubr.bf16.mxu0 0
        %3622 = vmatmul.mubr.bf16.gmra.mxu0 %v3460
        %v3623 = vpop.f32.mrf.mxu0
        %v3624 = vadd.f32 %v3491, %v3623
        %v3625 = vpop.f32.mrf.mxu0
        %v3626 = vpop.f32.mrf.mxu0
        %v3627 = vadd.f32 %v3491, %v3626
        %v3628 = vpop.f32.mrf.mxu0
        %3629 = vmatprep.mubr.bf16.mxu0 0
        %3630 = vmatmul.mubr.bf16.gmra.mxu0 %v3461
        %v3631 = vpop.f32.mrf.mxu0
        %v3632 = vadd.f32 %v3491, %v3631
        %v3633 = vpop.f32.mrf.mxu0
        %v3634 = vpop.f32.mrf.mxu0
        %v3635 = vadd.f32 %v3491, %v3634
        %v3636 = vpop.f32.mrf.mxu0
        %3637 = vmatprep.mubr.bf16.mxu0 0
        %3638 = vmatmul.mubr.bf16.gmra.mxu0 %v3462
        %v3639 = vpop.f32.mrf.mxu0
        %v3640 = vadd.f32 %v3491, %v3639
        %v3641 = vpop.f32.mrf.mxu0
        %v3642 = vpop.f32.mrf.mxu0
        %v3643 = vadd.f32 %v3491, %v3642
        %v3644 = vpop.f32.mrf.mxu0
        %3645 = vmatprep.mubr.bf16.mxu0 0
        %3646 = vmatmul.mubr.bf16.gmra.mxu0 %v3463
        %v3647 = vpop.f32.mrf.mxu0
        %v3648 = vadd.f32 %v3491, %v3647
        %v3649 = vpop.f32.mrf.mxu0
        %v3650 = vpop.f32.mrf.mxu0
        %v3651 = vadd.f32 %v3491, %v3650
        %v3652 = vpop.f32.mrf.mxu0
        %3653 = vmatprep.mubr.bf16.mxu0 0
        %3654 = vmatmul.mubr.bf16.gmra.mxu0 %v3464
        %v3655 = vpop.f32.mrf.mxu0
        %v3656 = vadd.f32 %v3491, %v3655
        %v3657 = vpop.f32.mrf.mxu0
        %v3658 = vpop.f32.mrf.mxu0
        %v3659 = vadd.f32 %v3491, %v3658
        %v3660 = vpop.f32.mrf.mxu0
        %3661 = vmatprep.mubr.bf16.mxu0 0
        %3662 = vmatmul.mubr.bf16.gmra.mxu0 %v3465
        %v3663 = vpop.f32.mrf.mxu0
        %v3664 = vadd.f32 %v3491, %v3663
        %v3665 = vpop.f32.mrf.mxu0
        %v3666 = vpop.f32.mrf.mxu0
        %v3667 = vadd.f32 %v3491, %v3666
        %v3668 = vpop.f32.mrf.mxu0
        %3669 = vmatprep.mubr.bf16.mxu0 0
        %3670 = vmatmul.mubr.bf16.gmra.mxu0 %v3466
        %v3671 = vpop.f32.mrf.mxu0
        %v3672 = vadd.f32 %v3491, %v3671
        %v3673 = vpop.f32.mrf.mxu0
        %v3674 = vpop.f32.mrf.mxu0
        %v3675 = vadd.f32 %v3491, %v3674
        %v3676 = vpop.f32.mrf.mxu0
        %3677 = vmatprep.mubr.bf16.mxu0 0
        %3678 = vmatmul.mubr.bf16.gmra.mxu0 %v3467
        %v3679 = vpop.f32.mrf.mxu0
        %v3680 = vadd.f32 %v3491, %v3679
        %v3681 = vpop.f32.mrf.mxu0
        %v3682 = vpop.f32.mrf.mxu0
        %v3683 = vadd.f32 %v3491, %v3682
        %v3684 = vpop.f32.mrf.mxu0
        %3685 = vmatprep.mubr.bf16.mxu0 0
        %3686 = vmatmul.mubr.bf16.gmra.mxu0 %v3468
        %v3687 = vpop.f32.mrf.mxu0
        %v3688 = vadd.f32 %v3491, %v3687
        %v3689 = vpop.f32.mrf.mxu0
        %v3690 = vpop.f32.mrf.mxu0
        %v3691 = vadd.f32 %v3491, %v3690
        %v3692 = vpop.f32.mrf.mxu0
        %3693 = vmatprep.mubr.bf16.mxu0 0
        %3694 = vmatmul.mubr.bf16.gmra.mxu0 %v3469
        %v3695 = vpop.f32.mrf.mxu0
        %v3696 = vadd.f32 %v3491, %v3695
        %v3697 = vpop.f32.mrf.mxu0
        %v3698 = vpop.f32.mrf.mxu0
        %v3699 = vadd.f32 %v3491, %v3698
        %v3700 = vpop.f32.mrf.mxu0
        %3701 = vdwg.mxu0
        %3702 = vmax.xlane.f32.xlu0 %v3576
        %v3703 = vpop.xlane.xlu0 %3702
        %3704 = vmax.xlane.f32.xlu0 %v3579
        %v3705 = vpop.xlane.xlu0 %3704
        %3706 = vmax.xlane.f32.xlu0 %v3584
        %v3707 = vpop.xlane.xlu0 %3706
        %3708 = vmax.xlane.f32.xlu0 %v3587
        %v3709 = vpop.xlane.xlu0 %3708
        %3710 = vmax.xlane.f32.xlu0 %v3592
        %v3711 = vpop.xlane.xlu0 %3710
        %3712 = vmax.xlane.f32.xlu0 %v3595
        %v3713 = vpop.xlane.xlu0 %3712
        %3714 = vmax.xlane.f32.xlu0 %v3600
        %v3715 = vpop.xlane.xlu0 %3714
        %3716 = vmax.xlane.f32.xlu0 %v3603
        %v3717 = vpop.xlane.xlu0 %3716
        %3718 = vmax.xlane.f32.xlu0 %v3608
        %v3719 = vpop.xlane.xlu0 %3718
        %3720 = vmax.xlane.f32.xlu0 %v3611
        %v3721 = vpop.xlane.xlu0 %3720
        %3722 = vmax.xlane.f32.xlu0 %v3616
        %v3723 = vpop.xlane.xlu0 %3722
        %3724 = vmax.xlane.f32.xlu0 %v3619
        %v3725 = vpop.xlane.xlu0 %3724
        %3726 = vmax.xlane.f32.xlu0 %v3624
        %v3727 = vpop.xlane.xlu0 %3726
        %3728 = vmax.xlane.f32.xlu0 %v3627
        %v3729 = vpop.xlane.xlu0 %3728
        %3730 = vmax.xlane.f32.xlu0 %v3632
        %v3731 = vpop.xlane.xlu0 %3730
        %3732 = vmax.xlane.f32.xlu0 %v3635
        %v3733 = vpop.xlane.xlu0 %3732
        %3734 = vmax.xlane.f32.xlu0 %v3640
        %v3735 = vpop.xlane.xlu0 %3734
        %3736 = vmax.xlane.f32.xlu0 %v3643
        %v3737 = vpop.xlane.xlu0 %3736
        %3738 = vmax.xlane.f32.xlu0 %v3648
        %v3739 = vpop.xlane.xlu0 %3738
        %3740 = vmax.xlane.f32.xlu0 %v3651
        %v3741 = vpop.xlane.xlu0 %3740
        %3742 = vmax.xlane.f32.xlu0 %v3656
        %v3743 = vpop.xlane.xlu0 %3742
        %3744 = vmax.xlane.f32.xlu0 %v3659
        %v3745 = vpop.xlane.xlu0 %3744
        %3746 = vmax.xlane.f32.xlu0 %v3664
        %v3747 = vpop.xlane.xlu0 %3746
        %3748 = vmax.xlane.f32.xlu0 %v3667
        %v3749 = vpop.xlane.xlu0 %3748
        %3750 = vmax.xlane.f32.xlu0 %v3672
        %v3751 = vpop.xlane.xlu0 %3750
        %3752 = vmax.xlane.f32.xlu0 %v3675
        %v3753 = vpop.xlane.xlu0 %3752
        %3754 = vmax.xlane.f32.xlu0 %v3680
        %v3755 = vpop.xlane.xlu0 %3754
        %3756 = vmax.xlane.f32.xlu0 %v3683
        %v3757 = vpop.xlane.xlu0 %3756
        %3758 = vmax.xlane.f32.xlu0 %v3688
        %v3759 = vpop.xlane.xlu0 %3758
        %3760 = vmax.xlane.f32.xlu0 %v3691
        %v3761 = vpop.xlane.xlu0 %3760
        %3762 = vmax.xlane.f32.xlu0 %v3696
        %v3763 = vpop.xlane.xlu0 %3762
        %3764 = vmax.xlane.f32.xlu0 %v3699
        %v3765 = vpop.xlane.xlu0 %3764
        %v3766 = vsub.f32 %v3576, %v3703
        %v3767 = vsub.f32 %v3579, %v3705
        %v3768 = vsub.f32 %v3584, %v3707
        %v3769 = vsub.f32 %v3587, %v3709
        %v3770 = vsub.f32 %v3592, %v3711
        %v3771 = vsub.f32 %v3595, %v3713
        %v3772 = vsub.f32 %v3600, %v3715
        %v3773 = vsub.f32 %v3603, %v3717
        %v3774 = vsub.f32 %v3608, %v3719
        %v3775 = vsub.f32 %v3611, %v3721
        %v3776 = vsub.f32 %v3616, %v3723
        %v3777 = vsub.f32 %v3619, %v3725
        %v3778 = vsub.f32 %v3624, %v3727
        %v3779 = vsub.f32 %v3627, %v3729
        %v3780 = vsub.f32 %v3632, %v3731
        %v3781 = vsub.f32 %v3635, %v3733
        %v3782 = vsub.f32 %v3640, %v3735
        %v3783 = vsub.f32 %v3643, %v3737
        %v3784 = vsub.f32 %v3648, %v3739
        %v3785 = vsub.f32 %v3651, %v3741
        %v3786 = vsub.f32 %v3656, %v3743
        %v3787 = vsub.f32 %v3659, %v3745
        %v3788 = vsub.f32 %v3664, %v3747
        %v3789 = vsub.f32 %v3667, %v3749
        %v3790 = vsub.f32 %v3672, %v3751
        %v3791 = vsub.f32 %v3675, %v3753
        %v3792 = vsub.f32 %v3680, %v3755
        %v3793 = vsub.f32 %v3683, %v3757
        %v3794 = vsub.f32 %v3688, %v3759
        %v3795 = vsub.f32 %v3691, %v3761
        %v3796 = vsub.f32 %v3696, %v3763
        %v3797 = vsub.f32 %v3699, %v3765
        %v3798 = vmul.f32 %v3766, 1.442695
        %v3799 = vpow.pop %v3798
        %v3800 = vmul.f32 %v3767, 1.442695
        %v3801 = vpow.pop %v3800
        %v3802 = vmul.f32 %v3768, 1.442695
        %v3803 = vpow.pop %v3802
        %v3804 = vmul.f32 %v3769, 1.442695
        %v3805 = vpow.pop %v3804
        %v3806 = vmul.f32 %v3770, 1.442695
        %v3807 = vpow.pop %v3806
        %v3808 = vmul.f32 %v3771, 1.442695
        %v3809 = vpow.pop %v3808
        %v3810 = vmul.f32 %v3772, 1.442695
        %v3811 = vpow.pop %v3810
        %v3812 = vmul.f32 %v3773, 1.442695
        %v3813 = vpow.pop %v3812
        %v3814 = vmul.f32 %v3774, 1.442695
        %v3815 = vpow.pop %v3814
        %v3816 = vmul.f32 %v3775, 1.442695
        %v3817 = vpow.pop %v3816
        %v3818 = vmul.f32 %v3776, 1.442695
        %v3819 = vpow.pop %v3818
        %v3820 = vmul.f32 %v3777, 1.442695
        %v3821 = vpow.pop %v3820
        %v3822 = vmul.f32 %v3778, 1.442695
        %v3823 = vpow.pop %v3822
        %v3824 = vmul.f32 %v3779, 1.442695
        %v3825 = vpow.pop %v3824
        %v3826 = vmul.f32 %v3780, 1.442695
        %v3827 = vpow.pop %v3826
        %v3828 = vmul.f32 %v3781, 1.442695
        %v3829 = vpow.pop %v3828
        %v3830 = vmul.f32 %v3782, 1.442695
        %v3831 = vpow.pop %v3830
        %v3832 = vmul.f32 %v3783, 1.442695
        %v3833 = vpow.pop %v3832
        %v3834 = vmul.f32 %v3784, 1.442695
        %v3835 = vpow.pop %v3834
        %v3836 = vmul.f32 %v3785, 1.442695
        %v3837 = vpow.pop %v3836
        %v3838 = vmul.f32 %v3786, 1.442695
        %v3839 = vpow.pop %v3838
        %v3840 = vmul.f32 %v3787, 1.442695
        %v3841 = vpow.pop %v3840
        %v3842 = vmul.f32 %v3788, 1.442695
        %v3843 = vpow.pop %v3842
        %v3844 = vmul.f32 %v3789, 1.442695
        %v3845 = vpow.pop %v3844
        %v3846 = vmul.f32 %v3790, 1.442695
        %v3847 = vpow.pop %v3846
        %v3848 = vmul.f32 %v3791, 1.442695
        %v3849 = vpow.pop %v3848
        %v3850 = vmul.f32 %v3792, 1.442695
        %v3851 = vpow.pop %v3850
        %v3852 = vmul.f32 %v3793, 1.442695
        %v3853 = vpow.pop %v3852
        %v3854 = vmul.f32 %v3794, 1.442695
        %v3855 = vpow.pop %v3854
        %v3856 = vmul.f32 %v3795, 1.442695
        %v3857 = vpow.pop %v3856
        %v3858 = vmul.f32 %v3796, 1.442695
        %v3859 = vpow.pop %v3858
        %v3860 = vmul.f32 %v3797, 1.442695
        %v3861 = vpow.pop %v3860
        %3862 = vadd.xlane.f32.xlu0 %v3799
        %v3863 = vpop.xlane.xlu0 %3862
        %3864 = vadd.xlane.f32.xlu0 %v3801
        %v3865 = vpop.xlane.xlu0 %3864
        %3866 = vadd.xlane.f32.xlu0 %v3803
        %v3867 = vpop.xlane.xlu0 %3866
        %3868 = vadd.xlane.f32.xlu0 %v3805
        %v3869 = vpop.xlane.xlu0 %3868
        %3870 = vadd.xlane.f32.xlu0 %v3807
        %v3871 = vpop.xlane.xlu0 %3870
        %3872 = vadd.xlane.f32.xlu0 %v3809
        %v3873 = vpop.xlane.xlu0 %3872
        %3874 = vadd.xlane.f32.xlu0 %v3811
        %v3875 = vpop.xlane.xlu0 %3874
        %3876 = vadd.xlane.f32.xlu0 %v3813
        %v3877 = vpop.xlane.xlu0 %3876
        %3878 = vadd.xlane.f32.xlu0 %v3815
        %v3879 = vpop.xlane.xlu0 %3878
        %3880 = vadd.xlane.f32.xlu0 %v3817
        %v3881 = vpop.xlane.xlu0 %3880
        %3882 = vadd.xlane.f32.xlu0 %v3819
        %v3883 = vpop.xlane.xlu0 %3882
        %3884 = vadd.xlane.f32.xlu0 %v3821
        %v3885 = vpop.xlane.xlu0 %3884
        %3886 = vadd.xlane.f32.xlu0 %v3823
        %v3887 = vpop.xlane.xlu0 %3886
        %3888 = vadd.xlane.f32.xlu0 %v3825
        %v3889 = vpop.xlane.xlu0 %3888
        %3890 = vadd.xlane.f32.xlu0 %v3827
        %v3891 = vpop.xlane.xlu0 %3890
        %3892 = vadd.xlane.f32.xlu0 %v3829
        %v3893 = vpop.xlane.xlu0 %3892
        %3894 = vadd.xlane.f32.xlu0 %v3831
        %v3895 = vpop.xlane.xlu0 %3894
        %3896 = vadd.xlane.f32.xlu0 %v3833
        %v3897 = vpop.xlane.xlu0 %3896
        %3898 = vadd.xlane.f32.xlu0 %v3835
        %v3899 = vpop.xlane.xlu0 %3898
        %3900 = vadd.xlane.f32.xlu0 %v3837
        %v3901 = vpop.xlane.xlu0 %3900
        %3902 = vadd.xlane.f32.xlu0 %v3839
        %v3903 = vpop.xlane.xlu0 %3902
        %3904 = vadd.xlane.f32.xlu0 %v3841
        %v3905 = vpop.xlane.xlu0 %3904
        %3906 = vadd.xlane.f32.xlu0 %v3843
        %v3907 = vpop.xlane.xlu0 %3906
        %3908 = vadd.xlane.f32.xlu0 %v3845
        %v3909 = vpop.xlane.xlu0 %3908
        %3910 = vadd.xlane.f32.xlu0 %v3847
        %v3911 = vpop.xlane.xlu0 %3910
        %3912 = vadd.xlane.f32.xlu0 %v3849
        %v3913 = vpop.xlane.xlu0 %3912
        %3914 = vadd.xlane.f32.xlu0 %v3851
        %v3915 = vpop.xlane.xlu0 %3914
        %3916 = vadd.xlane.f32.xlu0 %v3853
        %v3917 = vpop.xlane.xlu0 %3916
        %3918 = vadd.xlane.f32.xlu0 %v3855
        %v3919 = vpop.xlane.xlu0 %3918
        %3920 = vadd.xlane.f32.xlu0 %v3857
        %v3921 = vpop.xlane.xlu0 %3920
        %3922 = vadd.xlane.f32.xlu0 %v3859
        %v3923 = vpop.xlane.xlu0 %3922
        %3924 = vadd.xlane.f32.xlu0 %v3861
        %v3925 = vpop.xlane.xlu0 %3924
        %v3926 = vrcp.pop %v3863
        %v3927 = vrcp.pop %v3865
        %v3928 = vrcp.pop %v3867
        %v3929 = vrcp.pop %v3869
        %v3930 = vrcp.pop %v3871
        %v3931 = vrcp.pop %v3873
        %v3932 = vrcp.pop %v3875
        %v3933 = vrcp.pop %v3877
        %v3934 = vrcp.pop %v3879
        %v3935 = vrcp.pop %v3881
        %v3936 = vrcp.pop %v3883
        %v3937 = vrcp.pop %v3885
        %v3938 = vrcp.pop %v3887
        %v3939 = vrcp.pop %v3889
        %v3940 = vrcp.pop %v3891
        %v3941 = vrcp.pop %v3893
        %v3942 = vrcp.pop %v3895
        %v3943 = vrcp.pop %v3897
        %v3944 = vrcp.pop %v3899
        %v3945 = vrcp.pop %v3901
        %v3946 = vrcp.pop %v3903
        %v3947 = vrcp.pop %v3905
        %v3948 = vrcp.pop %v3907
        %v3949 = vrcp.pop %v3909
        %v3950 = vrcp.pop %v3911
        %v3951 = vrcp.pop %v3913
        %v3952 = vrcp.pop %v3915
        %v3953 = vrcp.pop %v3917
        %v3954 = vrcp.pop %v3919
        %v3955 = vrcp.pop %v3921
        %v3956 = vrcp.pop %v3923
        %v3957 = vrcp.pop %v3925
        %v3958 = vmul.f32 %v3799, %v3926
        %v3959 = vmul.f32 %v3801, %v3927
        %v3960 = vmul.f32 %v3803, %v3928
        %v3961 = vmul.f32 %v3805, %v3929
        %v3962 = vmul.f32 %v3807, %v3930
        %v3963 = vmul.f32 %v3809, %v3931
        %v3964 = vmul.f32 %v3811, %v3932
        %v3965 = vmul.f32 %v3813, %v3933
        %v3966 = vmul.f32 %v3815, %v3934
        %v3967 = vmul.f32 %v3817, %v3935
        %v3968 = vmul.f32 %v3819, %v3936
        %v3969 = vmul.f32 %v3821, %v3937
        %v3970 = vmul.f32 %v3823, %v3938
        %v3971 = vmul.f32 %v3825, %v3939
        %v3972 = vmul.f32 %v3827, %v3940
        %v3973 = vmul.f32 %v3829, %v3941
        %v3974 = vmul.f32 %v3831, %v3942
        %v3975 = vmul.f32 %v3833, %v3943
        %v3976 = vmul.f32 %v3835, %v3944
        %v3977 = vmul.f32 %v3837, %v3945
        %v3978 = vmul.f32 %v3839, %v3946
        %v3979 = vmul.f32 %v3841, %v3947
        %v3980 = vmul.f32 %v3843, %v3948
        %v3981 = vmul.f32 %v3845, %v3949
        %v3982 = vmul.f32 %v3847, %v3950
        %v3983 = vmul.f32 %v3849, %v3951
        %v3984 = vmul.f32 %v3851, %v3952
        %v3985 = vmul.f32 %v3853, %v3953
        %v3986 = vmul.f32 %v3855, %v3954
        %v3987 = vmul.f32 %v3857, %v3955
        %v3988 = vmul.f32 %v3859, %v3956
        %v3989 = vmul.f32 %v3861, %v3957
        %3990 = vst [vmem:[%s453] sm:$0xff] %v3958
        %3991 = vst [vmem:[%s453 + $0x8] sm:$0xff] %v3959
        %3992 = vst [vmem:[%s453 + $0x10] sm:$0xff] %v3960
        %3993 = vst [vmem:[%s453 + $0x18] sm:$0xff] %v3961
        %3994 = vst [vmem:[%s453 + $0x20] sm:$0xff] %v3962
        %3995 = vst [vmem:[%s453 + $0x28] sm:$0xff] %v3963
        %3996 = vst [vmem:[%s453 + $0x30] sm:$0xff] %v3964
        %3997 = vst [vmem:[%s453 + $0x38] sm:$0xff] %v3965
        %3998 = vst [vmem:[%s453 + $0x40] sm:$0xff] %v3966
        %3999 = vst [vmem:[%s453 + $0x48] sm:$0xff] %v3967
        %4000 = vst [vmem:[%s453 + $0x50] sm:$0xff] %v3968
        %4001 = vst [vmem:[%s453 + $0x58] sm:$0xff] %v3969
        %4002 = vst [vmem:[%s453 + $0x60] sm:$0xff] %v3970
        %4003 = vst [vmem:[%s453 + $0x68] sm:$0xff] %v3971
        %4004 = vst [vmem:[%s453 + $0x70] sm:$0xff] %v3972
        %4005 = vst [vmem:[%s453 + $0x78] sm:$0xff] %v3973
        %4006 = vst [vmem:[%s453 + $0x80] sm:$0xff] %v3974
        %4007 = vst [vmem:[%s453 + $0x88] sm:$0xff] %v3975
        %4008 = vst [vmem:[%s453 + $0x90] sm:$0xff] %v3976
        %4009 = vst [vmem:[%s453 + $0x98] sm:$0xff] %v3977
        %4010 = vst [vmem:[%s453 + $0xa0] sm:$0xff] %v3978
        %4011 = vst [vmem:[%s453 + $0xa8] sm:$0xff] %v3979
        %4012 = vst [vmem:[%s453 + $0xb0] sm:$0xff] %v3980
        %4013 = vst [vmem:[%s453 + $0xb8] sm:$0xff] %v3981
        %4014 = vst [vmem:[%s453 + $0xc0] sm:$0xff] %v3982
        %4015 = vst [vmem:[%s453 + $0xc8] sm:$0xff] %v3983
        %4016 = vst [vmem:[%s453 + $0xd0] sm:$0xff] %v3984
        %4017 = vst [vmem:[%s453 + $0xd8] sm:$0xff] %v3985
        %4018 = vst [vmem:[%s453 + $0xe0] sm:$0xff] %v3986
        %4019 = vst [vmem:[%s453 + $0xe8] sm:$0xff] %v3987
        %4020 = vst [vmem:[%s453 + $0xf0] sm:$0xff] %v3988
        %4021 = vst [vmem:[%s453 + $0xf8] sm:$0xff] %v3989
        %s4022 = sand.u32 %s232, 1
        %s4023 = scalar_lea.sflag [#allocation4], %s4022
        %s4024 = sand.u32 %s232, 1
        %s4025 = smul.addr %s4024, 256
        %s4026 = scalar_lea.vmem [#allocation16], %s4025
        // Predicated region
        $region89: #{tpu_custom_call.1} parent=55 // pred_check
          %p4027 = pneg %p242
        $region90: #{tpu_custom_call.1} parent=55 // pred_check_branch
          %4029 = sbr.rel (%p4027) target = $region92
        $region91: #{tpu_custom_call.1} parent=55 // pred_region
          %s4030 = smul.u32 32, %s30
          %s4032 = ssub.s32 4096, 4096
          %4033 = vsyncadd %s4023, %s4032
          %s4034 = smul.addr %s4030, 128
          %s4035 = scalar_lea.hbm %s9, %s4034
          %s4036 = sshll.u32 %s4026, 4
          %s4037 = int_to_ptr.vmem [resolvable:$true] %s4036
          %4042 = dma.vmem_to_hbm [thread:$0]  %s4037, 4096, %s4035, %s4023, 128, 128, 8
        $region92: #{tpu_custom_call.1} parent=55 // pred_fallthru
          _
      $region56: #{tpu_custom_call.1} parent=5 // pred_fallthru
        _
      %p4043 = scmp.le.s32.totalorder 2, %s25
      // Predicated region
      $region93: #{tpu_custom_call.1} parent=5 // pred_check
        %p4044 = pneg %p4043
      $region94: #{tpu_custom_call.1} parent=5 // pred_check_branch
        %4046 = sbr.rel (%p4044) target = $region96
      $region95: #{tpu_custom_call.1} parent=5 // pred_region
        %s4047 = ssub.s32 %s25, 2
        // Predicated region
        $region97: #{tpu_custom_call.1} parent=95 // pred_check
          %p4048 = pneg %p248
        $region98: #{tpu_custom_call.1} parent=95 // pred_check_branch
          %4050 = sbr.rel (%p4048) target = $region100
        $region99: #{tpu_custom_call.1} parent=95 // pred_region
          %s4051 = sand.u32 %s233, 1
          %s4052 = scalar_lea.sflag [#allocation4], %s4051
          %s4053 = sand.u32 %s233, 1
          %s4054 = smul.addr %s4053, 256
          %s4055 = scalar_lea.vmem [#allocation16], %s4054
          %4056 = dma.done %s4052, 4096
        $region100: #{tpu_custom_call.1} parent=95 // pred_fallthru
          _
      $region96: #{tpu_custom_call.1} parent=5 // pred_fallthru
        _
    $region6: #{tpu_custom_call.1} parent=1 // loop_footer
      %s29 = sadd.s32 1, %s25
    $region7: #{tpu_custom_call.1} parent=1 // loop_footer_branch
      %24 = sbr.rel target = $region3
    $region8: #{tpu_custom_call.1} parent=1 // loop_exit
      _
    %4057 = vsyncpa [#allocation3], 1
    %s4058 = scalar_lea.sflag [#allocation3], 1
    %4059 = vsyncpa %s4058, 1
    %4060 = vsyncpa [#allocation6], 1
    %4061 = vsyncpa [#allocation9], 1
    %4062 = vsyncpa [#allocation12], 1
    %4063 = vsyncpa [#allocation15], 1
    %4064 = vsyncpa [#allocation4], 1
    %s4065 = scalar_lea.sflag [#allocation4], 1
    %4066 = vsyncpa %s4065, 1

</llo_original>
